<compile_context>
chip_gen: v7x
topology: tpu7x:2x2x1
jax: 0.10.0
libtpu: 0.0.40
codegen_flags: <defaults>
</compile_context>

<pallas_src>
import jax
import jax.numpy as jnp
from jax.experimental import pallas as pl
from jax.experimental.pallas import tpu as pltpu


# Whole-array-in-VMEM spec (all operands here are tiny: <= ~1 MiB each).
_VMEM = pl.BlockSpec(memory_space=pltpu.MemorySpace.VMEM)


# ----------------------------- Pallas kernels -----------------------------

def _conv_relu_pool_kernel(p_ref, w_ref, b_ref, o_ref):
    """Fused Conv3d + ReLU + MaxPool3d on im2col patches.

    p_ref: (Q, K, P)  patches, one (K, P) slab per max-pool window offset.
    w_ref: (C_out, K) flattened conv weight (feature order c_in, dt, dh, dw).
    b_ref: (C_out, 1) bias.
    o_ref: (C_out, P) pooled + ReLU'd activations (P = lane axis, dense).
    """
    w = w_ref[...]
    acc = jnp.dot(w, p_ref[0], preferred_element_type=jnp.float32)
    for q in range(1, p_ref.shape[0]):          # static loop over pool offsets
        acc = jnp.maximum(acc, jnp.dot(w, p_ref[q],
                                       preferred_element_type=jnp.float32))
    # relu(max(conv)) == max(relu(conv)) since relu is monotone elementwise.
    o_ref[...] = jnp.maximum(acc + b_ref[...], 0.0)


def _m1_head_kernel(x_ref, w1_ref, b1_ref, w2_ref, b2_ref,
                    w3_ref, b3_ref, w4_ref, b4_ref, o_ref):
    """Fused MLP head of SSBDModel1: 32 -> 128 -> 64 -> 16 -> 1."""
    h = jnp.dot(x_ref[...], w1_ref[...], preferred_element_type=jnp.float32) + b1_ref[...]
    h = jnp.maximum(h, 0.0)
    h = jnp.dot(h, w2_ref[...], preferred_element_type=jnp.float32) + b2_ref[...]
    h = jnp.maximum(h, 0.0)
    h = jnp.dot(h, w3_ref[...], preferred_element_type=jnp.float32) + b3_ref[...]
    h = jnp.maximum(h, 0.0)
    o_ref[...] = jnp.dot(h, w4_ref[...], preferred_element_type=jnp.float32) + b4_ref[...]


def _m2_kernel(x_ref, we_ref, be_ref, wih_ref, whh_ref, bl_ref,
               w1_ref, b1_ref, w2_ref, b2_ref, w3_ref, b3_ref, o_ref):
    """Fused SSBDModel2 (movenet path): embed -> LSTM -> 128 -> 8 -> 3.

    x_ref:   (T, F)        per-frame movenet features.
    we/be:   (F, H), (1,H) embedding.
    wih:     (H, 4H)       LSTM input weights (gate order i,f,g,o along cols).
    whh:     (4, H, H)     LSTM recurrent weights, one block per gate.
    bl:      (1, 4H)       summed LSTM bias (b_ih + b_hh, PyTorch convention).
    """
    T = x_ref.shape[0]
    H = whh_ref.shape[1]

    # Embedding for all frames at once: (T,F)@(F,H).
    emb = jnp.dot(x_ref[...], we_ref[...], preferred_element_type=jnp.float32) + be_ref[...]

    # Batched LSTM input projection for every timestep in ONE (T,H)@(H,4H)
    # matmul; per-gate split is done once here, outside the recurrence.
    xp = jnp.dot(emb, wih_ref[...], preferred_element_type=jnp.float32) + bl_ref[...]
    xi = xp[:, 0 * H:1 * H]
    xf = xp[:, 1 * H:2 * H]
    xg = xp[:, 2 * H:3 * H]
    xo = xp[:, 3 * H:4 * H]

    whh_i = whh_ref[0]
    whh_f = whh_ref[1]
    whh_g = whh_ref[2]
    whh_o = whh_ref[3]

    h = jnp.zeros((1, H), jnp.float32)
    c = jnp.zeros((1, H), jnp.float32)
    # Fully unrolled recurrence (T is small & static): only the h @ w_hh
    # matmuls remain per step, and each gate is its own aligned (1,H) block.
    for t in range(T):
        gi = xi[t:t + 1, :] + jnp.dot(h, whh_i, preferred_element_type=jnp.float32)
        gf = xf[t:t + 1, :] + jnp.dot(h, whh_f, preferred_element_type=jnp.float32)
        gg = xg[t:t + 1, :] + jnp.dot(h, whh_g, preferred_element_type=jnp.float32)
        go = xo[t:t + 1, :] + jnp.dot(h, whh_o, preferred_element_type=jnp.float32)
        c = jax.nn.sigmoid(gf) * c + jax.nn.sigmoid(gi) * jnp.tanh(gg)
        h = jax.nn.sigmoid(go) * jnp.tanh(c)

    # Fused classifier head: H -> 128 -> 8 -> 3.
    z = jnp.dot(h, w1_ref[...], preferred_element_type=jnp.float32) + b1_ref[...]
    z = jnp.maximum(z, 0.0)
    z = jnp.dot(z, w2_ref[...], preferred_element_type=jnp.float32) + b2_ref[...]
    z = jnp.maximum(z, 0.0)
    o_ref[...] = jnp.dot(z, w3_ref[...], preferred_element_type=jnp.float32) + b3_ref[...]


# --------------------------- pallas_call wrappers ---------------------------

def conv_relu_pool_pallas(patches, w2, b):
    Q, K, P = patches.shape
    c_out = w2.shape[0]
    return pl.pallas_call(
        _conv_relu_pool_kernel,
        out_shape=jax.ShapeDtypeStruct((c_out, P), jnp.float32),
        in_specs=[_VMEM] * 3,
        out_specs=_VMEM,
    )(patches, w2, b.reshape(c_out, 1))


def m1_head_pallas(flat, p):
    return pl.pallas_call(
        _m1_head_kernel,
        out_shape=jax.ShapeDtypeStruct((1, 1), jnp.float32),
        in_specs=[_VMEM] * 9,
        out_specs=_VMEM,
    )(flat,
      p["fc1_w"], p["fc1_b"].reshape(1, -1),
      p["fc2_w"], p["fc2_b"].reshape(1, -1),
      p["fc3_w"], p["fc3_b"].reshape(1, -1),
      p["fc4_w"], p["fc4_b"].reshape(1, -1))


def m2_pallas(seq, p):
    return pl.pallas_call(
        _m2_kernel,
        out_shape=jax.ShapeDtypeStruct((1, 3), jnp.float32),
        in_specs=[_VMEM] * 12,
        out_specs=_VMEM,
    )(seq,
      p["embed_w"], p["embed_b"].reshape(1, -1),
      p["lstm_wih"], p["lstm_whh"], p["lstm_b"].reshape(1, -1),
      p["m2fc1_w"], p["m2fc1_b"].reshape(1, -1),
      p["m2fc2_w"], p["m2fc2_b"].reshape(1, -1),
      p["m2fc3_w"], p["m2fc3_b"].reshape(1, -1))


# ------------------------------- JAX glue ----------------------------------

def _im2col_pool_offsets(x, ksz, pool):
    """Pool-offset-grouped im2col for valid stride-1 Conv3d + floor max-pool.

    x: (C, T, H, W).  Returns (patches, pooled_spatial) where
    patches: (Q, K, P) with Q = prod(pool) pool-window offsets,
             K = C*prod(ksz) features in PyTorch weight order (c, dt, dh, dw),
             P = pooled output positions (t, h, w) row-major.
    """
    C, T, H, W = x.shape
    kT, kH, kW = ksz
    pt, ph, pw = pool
    To, Ho, Wo = T - kT + 1, H - kH + 1, W - kW + 1
    Tp, Hp, Wp = To // pt, Ho // ph, Wo // pw            # floor mode pooling
    P = Tp * Hp * Wp
    offsets = []
    for qt in range(pt):
        for qh in range(ph):
            for qw in range(pw):
                taps = []
                for dt in range(kT):
                    for dh in range(kH):
                        for dw in range(kW):
                            t0, h0, w0 = qt + dt, qh + dh, qw + dw
                            sl = x[:,
                                   t0:t0 + (Tp - 1) * pt + 1:pt,
                                   h0:h0 + (Hp - 1) * ph + 1:ph,
                                   w0:w0 + (Wp - 1) * pw + 1:pw]   # (C,Tp,Hp,Wp)
                            taps.append(sl.reshape(C, P))
                # (C, k^3, P) -> (C*k^3, P): feature order (c, dt, dh, dw).
                offsets.append(jnp.stack(taps, axis=1).reshape(C * kT * kH * kW, P))
    return jnp.stack(offsets, axis=0), (Tp, Hp, Wp)


# ------------------------------- the models --------------------------------

def m1_forward(p, vid):
    """SSBDModel1: two fused Conv3d+ReLU+MaxPool3d stages, then fused MLP head."""
    x = vid[0]                                            # (3, T, H, W), batch=1
    c1 = p["conv1_w"].shape[0]
    pat1, sp1 = _im2col_pool_offsets(x, (3, 3, 3), (1, 3, 3))
    y1 = conv_relu_pool_pallas(pat1, p["conv1_w"].reshape(c1, -1), p["conv1_b"])
    x1 = y1.reshape((c1,) + sp1)                          # (16, 6, 6, 6)

    c2 = p["conv2_w"].shape[0]
    pat2, _ = _im2col_pool_offsets(x1, (3, 3, 3), (1, 3, 3))
    y2 = conv_relu_pool_pallas(pat2, p["conv2_w"].reshape(c2, -1), p["conv2_b"])
    flat = y2.reshape(1, -1)                              # (1, 32), (c, t) order
    return m1_head_pallas(flat, p)                        # (1, 1) logit


def m2_forward(p, movenet_x):
    """SSBDModel2 (use_movenet=True path), fully fused in one kernel."""
    # TODO(synk): pretrained ResNet18 per-frame visual branch not replicated.
    # TODO(synk): num_lstm_layers=32 simplified to a single LSTM layer.
    seq = movenet_x[0]                                    # (n_frames, feat)
    return m2_pallas(seq, p)                              # (1, 3) logits


def pipeline_forward(p, vid, movenet_x):
    # TODO(synk): on v7x the independent m1/m2 branches could run concurrently
    # on the two TensorCores via pl.core_map; kept single-core for portability.
    logit_m1 = m1_forward(p, vid)                         # (1, 1)
    prob_action = jax.nn.sigmoid(logit_m1[0, 0])
    logits_m2 = m2_forward(p, movenet_x)                  # (1, 3)
    probs = jax.nn.softmax(logits_m2, axis=1)
    pred = jnp.argmax(probs, axis=1)[0].astype(jnp.int32)
    # PyTorch's data-dependent `if prob_action > 0.5` + host int() -> select.
    return jnp.where(prob_action > 0.5, pred + 1, jnp.int32(0))


# ------------------------------ parameters ---------------------------------

def init_params(key, *, flat_dim, movenet_feat):
    names_shapes = [
        ("conv1_w", (16, 3, 3, 3, 3)), ("conv1_b", (16,)),
        ("conv2_w", (8, 16, 3, 3, 3)), ("conv2_b", (8,)),
        ("fc1_w", (flat_dim, 128)), ("fc1_b", (128,)),
        ("fc2_w", (128, 64)), ("fc2_b", (64,)),
        ("fc3_w", (64, 16)), ("fc3_b", (16,)),
        ("fc4_w", (16, 1)), ("fc4_b", (1,)),
        ("embed_w", (movenet_feat, 64)), ("embed_b", (64,)),
        # LSTM: wih = weight_ih^T (E, 4H), whh = per-gate blocks (4, H, H)
        # (whh[g] = weight_hh[g*H:(g+1)*H, :]^T), lstm_b = b_ih + b_hh summed.
        ("lstm_wih", (64, 4 * 64)), ("lstm_whh", (4, 64, 64)), ("lstm_b", (4 * 64,)),
        ("m2fc1_w", (64, 128)), ("m2fc1_b", (128,)),
        ("m2fc2_w", (128, 8)), ("m2fc2_b", (8,)),
        ("m2fc3_w", (8, 3)), ("m2fc3_b", (3,)),
    ]
    keys = jax.random.split(key, len(names_shapes))
    return {n: 0.05 * jax.random.normal(k, s, jnp.float32)
            for (n, s), k in zip(names_shapes, keys)}


# --------------------------------- main -------------------------------------

if __name__ == "__main__":
    # Small shapes consistent with the module: video (N=1, C=3, T=8, H=20, W=20)
    # -> conv1 (16,6,18,18) -> pool (16,6,6,6) -> conv2 (8,4,4,4) -> pool
    # (8,4,1,1) -> flat = 32.  MoveNet: 8 frames x 34 feats (17 kpts * (x, y)).
    T, H, W = 8, 20, 20
    n_frames, movenet_feat = 8, 34
    flat_dim = 8 * (T - 4) * (((H - 2) // 3 - 2) // 3) * (((W - 2) // 3 - 2) // 3)  # 32

    key = jax.random.PRNGKey(0)
    kp, kv, km = jax.random.split(key, 3)
    params = init_params(kp, flat_dim=flat_dim, movenet_feat=movenet_feat)
    vid = jax.random.normal(kv, (1, 3, T, H, W), jnp.float32)
    movenet_x = jax.random.normal(km, (1, n_frames, movenet_feat), jnp.float32)

    fwd = jax.jit(lambda v, m: pipeline_forward(params, v, m))
    out = fwd(vid, movenet_x)
    jax.block_until_ready(out)
    assert out.dtype == jnp.int32 and out.shape == ()
    print("KERNEL_OK")
</pallas_src>

<mosaic_0001>
module attributes {stable_mosaic.version = 11 : i64} {
  func.func @_m2_kernel(%arg0: memref<8x34xf32, #tpu.memory_space<vmem>>, %arg1: memref<34x64xf32, #tpu.memory_space<vmem>>, %arg2: memref<1x64xf32, #tpu.memory_space<vmem>>, %arg3: memref<64x256xf32, #tpu.memory_space<vmem>>, %arg4: memref<4x64x64xf32, #tpu.memory_space<vmem>>, %arg5: memref<1x256xf32, #tpu.memory_space<vmem>>, %arg6: memref<64x128xf32, #tpu.memory_space<vmem>>, %arg7: memref<1x128xf32, #tpu.memory_space<vmem>>, %arg8: memref<128x8xf32, #tpu.memory_space<vmem>>, %arg9: memref<1x8xf32, #tpu.memory_space<vmem>>, %arg10: memref<8x3xf32, #tpu.memory_space<vmem>>, %arg11: memref<1x3xf32, #tpu.memory_space<vmem>>, %arg12: memref<1x3xf32, #tpu.memory_space<vmem>>) attributes {dimension_semantics = [], scalar_prefetch = 0 : i64, scratch_operands = 0 : i64, tpu.core_type = #tpu.core_type<tc>} {
    %c0 = arith.constant 0 : index
    %c0_0 = arith.constant 0 : index
    %0 = vector.load %arg0[%c0, %c0_0] : memref<8x34xf32, #tpu.memory_space<vmem>>, vector<8x34xf32>
    %c0_1 = arith.constant 0 : index
    %c0_2 = arith.constant 0 : index
    %1 = vector.load %arg1[%c0_1, %c0_2] : memref<34x64xf32, #tpu.memory_space<vmem>>, vector<34x64xf32>
    %cst = arith.constant dense<0.000000e+00> : vector<8x64xf32>
    %2 = tpu.matmul %0, %1, %cst {dimension_numbers = #tpu.dot_dimension_numbers<[1], [0], [0], [1], [0, 0, 1, 1], [], []>} : vector<8x34xf32>, vector<34x64xf32>, vector<8x64xf32> -> vector<8x64xf32>
    %c0_3 = arith.constant 0 : index
    %c0_4 = arith.constant 0 : index
    %3 = vector.load %arg2[%c0_3, %c0_4] : memref<1x64xf32, #tpu.memory_space<vmem>>, vector<1x64xf32>
    %4 = vector.broadcast %3 : vector<1x64xf32> to vector<8x64xf32>
    %5 = arith.addf %2, %4 : vector<8x64xf32>
    %c0_5 = arith.constant 0 : index
    %c0_6 = arith.constant 0 : index
    %6 = vector.load %arg3[%c0_5, %c0_6] : memref<64x256xf32, #tpu.memory_space<vmem>>, vector<64x256xf32>
    %cst_7 = arith.constant dense<0.000000e+00> : vector<8x256xf32>
    %7 = tpu.matmul %5, %6, %cst_7 {dimension_numbers = #tpu.dot_dimension_numbers<[1], [0], [0], [1], [0, 0, 1, 1], [], []>} : vector<8x64xf32>, vector<64x256xf32>, vector<8x256xf32> -> vector<8x256xf32>
    %c0_8 = arith.constant 0 : index
    %c0_9 = arith.constant 0 : index
    %8 = vector.load %arg5[%c0_8, %c0_9] : memref<1x256xf32, #tpu.memory_space<vmem>>, vector<1x256xf32>
    %9 = vector.broadcast %8 : vector<1x256xf32> to vector<8x256xf32>
    %10 = arith.addf %7, %9 : vector<8x256xf32>
    %11 = vector.extract_strided_slice %10 {offsets = [0, 0], sizes = [8, 64], strides = [1, 1]} : vector<8x256xf32> to vector<8x64xf32>
    %12 = vector.extract_strided_slice %10 {offsets = [0, 64], sizes = [8, 64], strides = [1, 1]} : vector<8x256xf32> to vector<8x64xf32>
    %13 = vector.extract_strided_slice %10 {offsets = [0, 128], sizes = [8, 64], strides = [1, 1]} : vector<8x256xf32> to vector<8x64xf32>
    %14 = vector.extract_strided_slice %10 {offsets = [0, 192], sizes = [8, 64], strides = [1, 1]} : vector<8x256xf32> to vector<8x64xf32>
    %c0_10 = arith.constant 0 : index
    %c0_11 = arith.constant 0 : index
    %c0_12 = arith.constant 0 : index
    %15 = vector.load %arg4[%c0_10, %c0_11, %c0_12] : memref<4x64x64xf32, #tpu.memory_space<vmem>>, vector<1x64x64xf32>
    %16 = vector.shape_cast %15 : vector<1x64x64xf32> to vector<64x64xf32>
    %c1 = arith.constant 1 : index
    %c0_13 = arith.constant 0 : index
    %c0_14 = arith.constant 0 : index
    %17 = vector.load %arg4[%c1, %c0_13, %c0_14] : memref<4x64x64xf32, #tpu.memory_space<vmem>>, vector<1x64x64xf32>
    %18 = vector.shape_cast %17 : vector<1x64x64xf32> to vector<64x64xf32>
    %c2 = arith.constant 2 : index
    %c0_15 = arith.constant 0 : index
    %c0_16 = arith.constant 0 : index
    %19 = vector.load %arg4[%c2, %c0_15, %c0_16] : memref<4x64x64xf32, #tpu.memory_space<vmem>>, vector<1x64x64xf32>
    %20 = vector.shape_cast %19 : vector<1x64x64xf32> to vector<64x64xf32>
    %c3 = arith.constant 3 : index
    %c0_17 = arith.constant 0 : index
    %c0_18 = arith.constant 0 : index
    %21 = vector.load %arg4[%c3, %c0_17, %c0_18] : memref<4x64x64xf32, #tpu.memory_space<vmem>>, vector<1x64x64xf32>
    %22 = vector.shape_cast %21 : vector<1x64x64xf32> to vector<64x64xf32>
    %cst_19 = arith.constant 0.000000e+00 : f32
    %23 = vector.broadcast %cst_19 : f32 to vector<1x64xf32>
    %cst_20 = arith.constant 0.000000e+00 : f32
    %24 = vector.broadcast %cst_20 : f32 to vector<1x64xf32>
    %25 = vector.extract_strided_slice %11 {offsets = [0, 0], sizes = [1, 64], strides = [1, 1]} : vector<8x64xf32> to vector<1x64xf32>
    %cst_21 = arith.constant dense<0.000000e+00> : vector<1x64xf32>
    %26 = tpu.matmul %23, %16, %cst_21 {dimension_numbers = #tpu.dot_dimension_numbers<[1], [0], [0], [1], [0, 0, 1, 1], [], []>} : vector<1x64xf32>, vector<64x64xf32>, vector<1x64xf32> -> vector<1x64xf32>
    %27 = arith.addf %25, %26 : vector<1x64xf32>
    %28 = vector.extract_strided_slice %12 {offsets = [0, 0], sizes = [1, 64], strides = [1, 1]} : vector<8x64xf32> to vector<1x64xf32>
    %cst_22 = arith.constant dense<0.000000e+00> : vector<1x64xf32>
    %29 = tpu.matmul %23, %18, %cst_22 {dimension_numbers = #tpu.dot_dimension_numbers<[1], [0], [0], [1], [0, 0, 1, 1], [], []>} : vector<1x64xf32>, vector<64x64xf32>, vector<1x64xf32> -> vector<1x64xf32>
    %30 = arith.addf %28, %29 : vector<1x64xf32>
    %31 = vector.extract_strided_slice %13 {offsets = [0, 0], sizes = [1, 64], strides = [1, 1]} : vector<8x64xf32> to vector<1x64xf32>
    %cst_23 = arith.constant dense<0.000000e+00> : vector<1x64xf32>
    %32 = tpu.matmul %23, %20, %cst_23 {dimension_numbers = #tpu.dot_dimension_numbers<[1], [0], [0], [1], [0, 0, 1, 1], [], []>} : vector<1x64xf32>, vector<64x64xf32>, vector<1x64xf32> -> vector<1x64xf32>
    %33 = arith.addf %31, %32 : vector<1x64xf32>
    %34 = vector.extract_strided_slice %14 {offsets = [0, 0], sizes = [1, 64], strides = [1, 1]} : vector<8x64xf32> to vector<1x64xf32>
    %cst_24 = arith.constant dense<0.000000e+00> : vector<1x64xf32>
    %35 = tpu.matmul %23, %22, %cst_24 {dimension_numbers = #tpu.dot_dimension_numbers<[1], [0], [0], [1], [0, 0, 1, 1], [], []>} : vector<1x64xf32>, vector<64x64xf32>, vector<1x64xf32> -> vector<1x64xf32>
    %36 = arith.addf %34, %35 : vector<1x64xf32>
    %37 = arith.negf %30 : vector<1x64xf32>
    %38 = math.exp %37 : vector<1x64xf32>
    %cst_25 = arith.constant 1.000000e+00 : f32
    %39 = vector.broadcast %cst_25 : f32 to vector<1x64xf32>
    %40 = arith.addf %39, %38 : vector<1x64xf32>
    %41 = arith.divf %39, %40 : vector<1x64xf32>
    %42 = arith.mulf %41, %24 : vector<1x64xf32>
    %43 = arith.negf %27 : vector<1x64xf32>
    %44 = math.exp %43 : vector<1x64xf32>
    %cst_26 = arith.constant 1.000000e+00 : f32
    %45 = vector.broadcast %cst_26 : f32 to vector<1x64xf32>
    %46 = arith.addf %45, %44 : vector<1x64xf32>
    %47 = arith.divf %45, %46 : vector<1x64xf32>
    %48 = math.tanh %33 : vector<1x64xf32>
    %49 = arith.mulf %47, %48 : vector<1x64xf32>
    %50 = arith.addf %42, %49 : vector<1x64xf32>
    %51 = arith.negf %36 : vector<1x64xf32>
    %52 = math.exp %51 : vector<1x64xf32>
    %cst_27 = arith.constant 1.000000e+00 : f32
    %53 = vector.broadcast %cst_27 : f32 to vector<1x64xf32>
    %54 = arith.addf %53, %52 : vector<1x64xf32>
    %55 = arith.divf %53, %54 : vector<1x64xf32>
    %56 = math.tanh %50 : vector<1x64xf32>
    %57 = arith.mulf %55, %56 : vector<1x64xf32>
    %58 = vector.extract_strided_slice %11 {offsets = [1, 0], sizes = [1, 64], strides = [1, 1]} : vector<8x64xf32> to vector<1x64xf32>
    %cst_28 = arith.constant dense<0.000000e+00> : vector<1x64xf32>
    %59 = tpu.matmul %57, %16, %cst_28 {dimension_numbers = #tpu.dot_dimension_numbers<[1], [0], [0], [1], [0, 0, 1, 1], [], []>} : vector<1x64xf32>, vector<64x64xf32>, vector<1x64xf32> -> vector<1x64xf32>
    %60 = arith.addf %58, %59 : vector<1x64xf32>
    %61 = vector.extract_strided_slice %12 {offsets = [1, 0], sizes = [1, 64], strides = [1, 1]} : vector<8x64xf32> to vector<1x64xf32>
    %cst_29 = arith.constant dense<0.000000e+00> : vector<1x64xf32>
    %62 = tpu.matmul %57, %18, %cst_29 {dimension_numbers = #tpu.dot_dimension_numbers<[1], [0], [0], [1], [0, 0, 1, 1], [], []>} : vector<1x64xf32>, vector<64x64xf32>, vector<1x64xf32> -> vector<1x64xf32>
    %63 = arith.addf %61, %62 : vector<1x64xf32>
    %64 = vector.extract_strided_slice %13 {offsets = [1, 0], sizes = [1, 64], strides = [1, 1]} : vector<8x64xf32> to vector<1x64xf32>
    %cst_30 = arith.constant dense<0.000000e+00> : vector<1x64xf32>
    %65 = tpu.matmul %57, %20, %cst_30 {dimension_numbers = #tpu.dot_dimension_numbers<[1], [0], [0], [1], [0, 0, 1, 1], [], []>} : vector<1x64xf32>, vector<64x64xf32>, vector<1x64xf32> -> vector<1x64xf32>
    %66 = arith.addf %64, %65 : vector<1x64xf32>
    %67 = vector.extract_strided_slice %14 {offsets = [1, 0], sizes = [1, 64], strides = [1, 1]} : vector<8x64xf32> to vector<1x64xf32>
    %cst_31 = arith.constant dense<0.000000e+00> : vector<1x64xf32>
    %68 = tpu.matmul %57, %22, %cst_31 {dimension_numbers = #tpu.dot_dimension_numbers<[1], [0], [0], [1], [0, 0, 1, 1], [], []>} : vector<1x64xf32>, vector<64x64xf32>, vector<1x64xf32> -> vector<1x64xf32>
    %69 = arith.addf %67, %68 : vector<1x64xf32>
    %70 = arith.negf %63 : vector<1x64xf32>
    %71 = math.exp %70 : vector<1x64xf32>
    %cst_32 = arith.constant 1.000000e+00 : f32
    %72 = vector.broadcast %cst_32 : f32 to vector<1x64xf32>
    %73 = arith.addf %72, %71 : vector<1x64xf32>
    %74 = arith.divf %72, %73 : vector<1x64xf32>
    %75 = arith.mulf %74, %50 : vector<1x64xf32>
    %76 = arith.negf %60 : vector<1x64xf32>
    %77 = math.exp %76 : vector<1x64xf32>
    %cst_33 = arith.constant 1.000000e+00 : f32
    %78 = vector.broadcast %cst_33 : f32 to vector<1x64xf32>
    %79 = arith.addf %78, %77 : vector<1x64xf32>
    %80 = arith.divf %78, %79 : vector<1x64xf32>
    %81 = math.tanh %66 : vector<1x64xf32>
    %82 = arith.mulf %80, %81 : vector<1x64xf32>
    %83 = arith.addf %75, %82 : vector<1x64xf32>
    %84 = arith.negf %69 : vector<1x64xf32>
    %85 = math.exp %84 : vector<1x64xf32>
    %cst_34 = arith.constant 1.000000e+00 : f32
    %86 = vector.broadcast %cst_34 : f32 to vector<1x64xf32>
    %87 = arith.addf %86, %85 : vector<1x64xf32>
    %88 = arith.divf %86, %87 : vector<1x64xf32>
    %89 = math.tanh %83 : vector<1x64xf32>
    %90 = arith.mulf %88, %89 : vector<1x64xf32>
    %91 = vector.extract_strided_slice %11 {offsets = [2, 0], sizes = [1, 64], strides = [1, 1]} : vector<8x64xf32> to vector<1x64xf32>
    %cst_35 = arith.constant dense<0.000000e+00> : vector<1x64xf32>
    %92 = tpu.matmul %90, %16, %cst_35 {dimension_numbers = #tpu.dot_dimension_numbers<[1], [0], [0], [1], [0, 0, 1, 1], [], []>} : vector<1x64xf32>, vector<64x64xf32>, vector<1x64xf32> -> vector<1x64xf32>
    %93 = arith.addf %91, %92 : vector<1x64xf32>
    %94 = vector.extract_strided_slice %12 {offsets = [2, 0], sizes = [1, 64], strides = [1, 1]} : vector<8x64xf32> to vector<1x64xf32>
    %cst_36 = arith.constant dense<0.000000e+00> : vector<1x64xf32>
    %95 = tpu.matmul %90, %18, %cst_36 {dimension_numbers = #tpu.dot_dimension_numbers<[1], [0], [0], [1], [0, 0, 1, 1], [], []>} : vector<1x64xf32>, vector<64x64xf32>, vector<1x64xf32> -> vector<1x64xf32>
    %96 = arith.addf %94, %95 : vector<1x64xf32>
    %97 = vector.extract_strided_slice %13 {offsets = [2, 0], sizes = [1, 64], strides = [1, 1]} : vector<8x64xf32> to vector<1x64xf32>
    %cst_37 = arith.constant dense<0.000000e+00> : vector<1x64xf32>
    %98 = tpu.matmul %90, %20, %cst_37 {dimension_numbers = #tpu.dot_dimension_numbers<[1], [0], [0], [1], [0, 0, 1, 1], [], []>} : vector<1x64xf32>, vector<64x64xf32>, vector<1x64xf32> -> vector<1x64xf32>
    %99 = arith.addf %97, %98 : vector<1x64xf32>
    %100 = vector.extract_strided_slice %14 {offsets = [2, 0], sizes = [1, 64], strides = [1, 1]} : vector<8x64xf32> to vector<1x64xf32>
    %cst_38 = arith.constant dense<0.000000e+00> : vector<1x64xf32>
    %101 = tpu.matmul %90, %22, %cst_38 {dimension_numbers = #tpu.dot_dimension_numbers<[1], [0], [0], [1], [0, 0, 1, 1], [], []>} : vector<1x64xf32>, vector<64x64xf32>, vector<1x64xf32> -> vector<1x64xf32>
    %102 = arith.addf %100, %101 : vector<1x64xf32>
    %103 = arith.negf %96 : vector<1x64xf32>
    %104 = math.exp %103 : vector<1x64xf32>
    %cst_39 = arith.constant 1.000000e+00 : f32
    %105 = vector.broadcast %cst_39 : f32 to vector<1x64xf32>
    %106 = arith.addf %105, %104 : vector<1x64xf32>
    %107 = arith.divf %105, %106 : vector<1x64xf32>
    %108 = arith.mulf %107, %83 : vector<1x64xf32>
    %109 = arith.negf %93 : vector<1x64xf32>
    %110 = math.exp %109 : vector<1x64xf32>
    %cst_40 = arith.constant 1.000000e+00 : f32
    %111 = vector.broadcast %cst_40 : f32 to vector<1x64xf32>
    %112 = arith.addf %111, %110 : vector<1x64xf32>
    %113 = arith.divf %111, %112 : vector<1x64xf32>
    %114 = math.tanh %99 : vector<1x64xf32>
    %115 = arith.mulf %113, %114 : vector<1x64xf32>
    %116 = arith.addf %108, %115 : vector<1x64xf32>
    %117 = arith.negf %102 : vector<1x64xf32>
    %118 = math.exp %117 : vector<1x64xf32>
    %cst_41 = arith.constant 1.000000e+00 : f32
    %119 = vector.broadcast %cst_41 : f32 to vector<1x64xf32>
    %120 = arith.addf %119, %118 : vector<1x64xf32>
    %121 = arith.divf %119, %120 : vector<1x64xf32>
    %122 = math.tanh %116 : vector<1x64xf32>
    %123 = arith.mulf %121, %122 : vector<1x64xf32>
    %124 = vector.extract_strided_slice %11 {offsets = [3, 0], sizes = [1, 64], strides = [1, 1]} : vector<8x64xf32> to vector<1x64xf32>
    %cst_42 = arith.constant dense<0.000000e+00> : vector<1x64xf32>
    %125 = tpu.matmul %123, %16, %cst_42 {dimension_numbers = #tpu.dot_dimension_numbers<[1], [0], [0], [1], [0, 0, 1, 1], [], []>} : vector<1x64xf32>, vector<64x64xf32>, vector<1x64xf32> -> vector<1x64xf32>
    %126 = arith.addf %124, %125 : vector<1x64xf32>
    %127 = vector.extract_strided_slice %12 {offsets = [3, 0], sizes = [1, 64], strides = [1, 1]} : vector<8x64xf32> to vector<1x64xf32>
    %cst_43 = arith.constant dense<0.000000e+00> : vector<1x64xf32>
    %128 = tpu.matmul %123, %18, %cst_43 {dimension_numbers = #tpu.dot_dimension_numbers<[1], [0], [0], [1], [0, 0, 1, 1], [], []>} : vector<1x64xf32>, vector<64x64xf32>, vector<1x64xf32> -> vector<1x64xf32>
    %129 = arith.addf %127, %128 : vector<1x64xf32>
    %130 = vector.extract_strided_slice %13 {offsets = [3, 0], sizes = [1, 64], strides = [1, 1]} : vector<8x64xf32> to vector<1x64xf32>
    %cst_44 = arith.constant dense<0.000000e+00> : vector<1x64xf32>
    %131 = tpu.matmul %123, %20, %cst_44 {dimension_numbers = #tpu.dot_dimension_numbers<[1], [0], [0], [1], [0, 0, 1, 1], [], []>} : vector<1x64xf32>, vector<64x64xf32>, vector<1x64xf32> -> vector<1x64xf32>
    %132 = arith.addf %130, %131 : vector<1x64xf32>
    %133 = vector.extract_strided_slice %14 {offsets = [3, 0], sizes = [1, 64], strides = [1, 1]} : vector<8x64xf32> to vector<1x64xf32>
    %cst_45 = arith.constant dense<0.000000e+00> : vector<1x64xf32>
    %134 = tpu.matmul %123, %22, %cst_45 {dimension_numbers = #tpu.dot_dimension_numbers<[1], [0], [0], [1], [0, 0, 1, 1], [], []>} : vector<1x64xf32>, vector<64x64xf32>, vector<1x64xf32> -> vector<1x64xf32>
    %135 = arith.addf %133, %134 : vector<1x64xf32>
    %136 = arith.negf %129 : vector<1x64xf32>
    %137 = math.exp %136 : vector<1x64xf32>
    %cst_46 = arith.constant 1.000000e+00 : f32
    %138 = vector.broadcast %cst_46 : f32 to vector<1x64xf32>
    %139 = arith.addf %138, %137 : vector<1x64xf32>
    %140 = arith.divf %138, %139 : vector<1x64xf32>
    %141 = arith.mulf %140, %116 : vector<1x64xf32>
    %142 = arith.negf %126 : vector<1x64xf32>
    %143 = math.exp %142 : vector<1x64xf32>
    %cst_47 = arith.constant 1.000000e+00 : f32
    %144 = vector.broadcast %cst_47 : f32 to vector<1x64xf32>
    %145 = arith.addf %144, %143 : vector<1x64xf32>
    %146 = arith.divf %144, %145 : vector<1x64xf32>
    %147 = math.tanh %132 : vector<1x64xf32>
    %148 = arith.mulf %146, %147 : vector<1x64xf32>
    %149 = arith.addf %141, %148 : vector<1x64xf32>
    %150 = arith.negf %135 : vector<1x64xf32>
    %151 = math.exp %150 : vector<1x64xf32>
    %cst_48 = arith.constant 1.000000e+00 : f32
    %152 = vector.broadcast %cst_48 : f32 to vector<1x64xf32>
    %153 = arith.addf %152, %151 : vector<1x64xf32>
    %154 = arith.divf %152, %153 : vector<1x64xf32>
    %155 = math.tanh %149 : vector<1x64xf32>
    %156 = arith.mulf %154, %155 : vector<1x64xf32>
    %157 = vector.extract_strided_slice %11 {offsets = [4, 0], sizes = [1, 64], strides = [1, 1]} : vector<8x64xf32> to vector<1x64xf32>
    %cst_49 = arith.constant dense<0.000000e+00> : vector<1x64xf32>
    %158 = tpu.matmul %156, %16, %cst_49 {dimension_numbers = #tpu.dot_dimension_numbers<[1], [0], [0], [1], [0, 0, 1, 1], [], []>} : vector<1x64xf32>, vector<64x64xf32>, vector<1x64xf32> -> vector<1x64xf32>
    %159 = arith.addf %157, %158 : vector<1x64xf32>
    %160 = vector.extract_strided_slice %12 {offsets = [4, 0], sizes = [1, 64], strides = [1, 1]} : vector<8x64xf32> to vector<1x64xf32>
    %cst_50 = arith.constant dense<0.000000e+00> : vector<1x64xf32>
    %161 = tpu.matmul %156, %18, %cst_50 {dimension_numbers = #tpu.dot_dimension_numbers<[1], [0], [0], [1], [0, 0, 1, 1], [], []>} : vector<1x64xf32>, vector<64x64xf32>, vector<1x64xf32> -> vector<1x64xf32>
    %162 = arith.addf %160, %161 : vector<1x64xf32>
    %163 = vector.extract_strided_slice %13 {offsets = [4, 0], sizes = [1, 64], strides = [1, 1]} : vector<8x64xf32> to vector<1x64xf32>
    %cst_51 = arith.constant dense<0.000000e+00> : vector<1x64xf32>
    %164 = tpu.matmul %156, %20, %cst_51 {dimension_numbers = #tpu.dot_dimension_numbers<[1], [0], [0], [1], [0, 0, 1, 1], [], []>} : vector<1x64xf32>, vector<64x64xf32>, vector<1x64xf32> -> vector<1x64xf32>
    %165 = arith.addf %163, %164 : vector<1x64xf32>
    %166 = vector.extract_strided_slice %14 {offsets = [4, 0], sizes = [1, 64], strides = [1, 1]} : vector<8x64xf32> to vector<1x64xf32>
    %cst_52 = arith.constant dense<0.000000e+00> : vector<1x64xf32>
    %167 = tpu.matmul %156, %22, %cst_52 {dimension_numbers = #tpu.dot_dimension_numbers<[1], [0], [0], [1], [0, 0, 1, 1], [], []>} : vector<1x64xf32>, vector<64x64xf32>, vector<1x64xf32> -> vector<1x64xf32>
    %168 = arith.addf %166, %167 : vector<1x64xf32>
    %169 = arith.negf %162 : vector<1x64xf32>
    %170 = math.exp %169 : vector<1x64xf32>
    %cst_53 = arith.constant 1.000000e+00 : f32
    %171 = vector.broadcast %cst_53 : f32 to vector<1x64xf32>
    %172 = arith.addf %171, %170 : vector<1x64xf32>
    %173 = arith.divf %171, %172 : vector<1x64xf32>
    %174 = arith.mulf %173, %149 : vector<1x64xf32>
    %175 = arith.negf %159 : vector<1x64xf32>
    %176 = math.exp %175 : vector<1x64xf32>
    %cst_54 = arith.constant 1.000000e+00 : f32
    %177 = vector.broadcast %cst_54 : f32 to vector<1x64xf32>
    %178 = arith.addf %177, %176 : vector<1x64xf32>
    %179 = arith.divf %177, %178 : vector<1x64xf32>
    %180 = math.tanh %165 : vector<1x64xf32>
    %181 = arith.mulf %179, %180 : vector<1x64xf32>
    %182 = arith.addf %174, %181 : vector<1x64xf32>
    %183 = arith.negf %168 : vector<1x64xf32>
    %184 = math.exp %183 : vector<1x64xf32>
    %cst_55 = arith.constant 1.000000e+00 : f32
    %185 = vector.broadcast %cst_55 : f32 to vector<1x64xf32>
    %186 = arith.addf %185, %184 : vector<1x64xf32>
    %187 = arith.divf %185, %186 : vector<1x64xf32>
    %188 = math.tanh %182 : vector<1x64xf32>
    %189 = arith.mulf %187, %188 : vector<1x64xf32>
    %190 = vector.extract_strided_slice %11 {offsets = [5, 0], sizes = [1, 64], strides = [1, 1]} : vector<8x64xf32> to vector<1x64xf32>
    %cst_56 = arith.constant dense<0.000000e+00> : vector<1x64xf32>
    %191 = tpu.matmul %189, %16, %cst_56 {dimension_numbers = #tpu.dot_dimension_numbers<[1], [0], [0], [1], [0, 0, 1, 1], [], []>} : vector<1x64xf32>, vector<64x64xf32>, vector<1x64xf32> -> vector<1x64xf32>
    %192 = arith.addf %190, %191 : vector<1x64xf32>
    %193 = vector.extract_strided_slice %12 {offsets = [5, 0], sizes = [1, 64], strides = [1, 1]} : vector<8x64xf32> to vector<1x64xf32>
    %cst_57 = arith.constant dense<0.000000e+00> : vector<1x64xf32>
    %194 = tpu.matmul %189, %18, %cst_57 {dimension_numbers = #tpu.dot_dimension_numbers<[1], [0], [0], [1], [0, 0, 1, 1], [], []>} : vector<1x64xf32>, vector<64x64xf32>, vector<1x64xf32> -> vector<1x64xf32>
    %195 = arith.addf %193, %194 : vector<1x64xf32>
    %196 = vector.extract_strided_slice %13 {offsets = [5, 0], sizes = [1, 64], strides = [1, 1]} : vector<8x64xf32> to vector<1x64xf32>
    %cst_58 = arith.constant dense<0.000000e+00> : vector<1x64xf32>
    %197 = tpu.matmul %189, %20, %cst_58 {dimension_numbers = #tpu.dot_dimension_numbers<[1], [0], [0], [1], [0, 0, 1, 1], [], []>} : vector<1x64xf32>, vector<64x64xf32>, vector<1x64xf32> -> vector<1x64xf32>
    %198 = arith.addf %196, %197 : vector<1x64xf32>
    %199 = vector.extract_strided_slice %14 {offsets = [5, 0], sizes = [1, 64], strides = [1, 1]} : vector<8x64xf32> to vector<1x64xf32>
    %cst_59 = arith.constant dense<0.000000e+00> : vector<1x64xf32>
    %200 = tpu.matmul %189, %22, %cst_59 {dimension_numbers = #tpu.dot_dimension_numbers<[1], [0], [0], [1], [0, 0, 1, 1], [], []>} : vector<1x64xf32>, vector<64x64xf32>, vector<1x64xf32> -> vector<1x64xf32>
    %201 = arith.addf %199, %200 : vector<1x64xf32>
    %202 = arith.negf %195 : vector<1x64xf32>
    %203 = math.exp %202 : vector<1x64xf32>
    %cst_60 = arith.constant 1.000000e+00 : f32
    %204 = vector.broadcast %cst_60 : f32 to vector<1x64xf32>
    %205 = arith.addf %204, %203 : vector<1x64xf32>
    %206 = arith.divf %204, %205 : vector<1x64xf32>
    %207 = arith.mulf %206, %182 : vector<1x64xf32>
    %208 = arith.negf %192 : vector<1x64xf32>
    %209 = math.exp %208 : vector<1x64xf32>
    %cst_61 = arith.constant 1.000000e+00 : f32
    %210 = vector.broadcast %cst_61 : f32 to vector<1x64xf32>
    %211 = arith.addf %210, %209 : vector<1x64xf32>
    %212 = arith.divf %210, %211 : vector<1x64xf32>
    %213 = math.tanh %198 : vector<1x64xf32>
    %214 = arith.mulf %212, %213 : vector<1x64xf32>
    %215 = arith.addf %207, %214 : vector<1x64xf32>
    %216 = arith.negf %201 : vector<1x64xf32>
    %217 = math.exp %216 : vector<1x64xf32>
    %cst_62 = arith.constant 1.000000e+00 : f32
    %218 = vector.broadcast %cst_62 : f32 to vector<1x64xf32>
    %219 = arith.addf %218, %217 : vector<1x64xf32>
    %220 = arith.divf %218, %219 : vector<1x64xf32>
    %221 = math.tanh %215 : vector<1x64xf32>
    %222 = arith.mulf %220, %221 : vector<1x64xf32>
    %223 = vector.extract_strided_slice %11 {offsets = [6, 0], sizes = [1, 64], strides = [1, 1]} : vector<8x64xf32> to vector<1x64xf32>
    %cst_63 = arith.constant dense<0.000000e+00> : vector<1x64xf32>
    %224 = tpu.matmul %222, %16, %cst_63 {dimension_numbers = #tpu.dot_dimension_numbers<[1], [0], [0], [1], [0, 0, 1, 1], [], []>} : vector<1x64xf32>, vector<64x64xf32>, vector<1x64xf32> -> vector<1x64xf32>
    %225 = arith.addf %223, %224 : vector<1x64xf32>
    %226 = vector.extract_strided_slice %12 {offsets = [6, 0], sizes = [1, 64], strides = [1, 1]} : vector<8x64xf32> to vector<1x64xf32>
    %cst_64 = arith.constant dense<0.000000e+00> : vector<1x64xf32>
    %227 = tpu.matmul %222, %18, %cst_64 {dimension_numbers = #tpu.dot_dimension_numbers<[1], [0], [0], [1], [0, 0, 1, 1], [], []>} : vector<1x64xf32>, vector<64x64xf32>, vector<1x64xf32> -> vector<1x64xf32>
    %228 = arith.addf %226, %227 : vector<1x64xf32>
    %229 = vector.extract_strided_slice %13 {offsets = [6, 0], sizes = [1, 64], strides = [1, 1]} : vector<8x64xf32> to vector<1x64xf32>
    %cst_65 = arith.constant dense<0.000000e+00> : vector<1x64xf32>
    %230 = tpu.matmul %222, %20, %cst_65 {dimension_numbers = #tpu.dot_dimension_numbers<[1], [0], [0], [1], [0, 0, 1, 1], [], []>} : vector<1x64xf32>, vector<64x64xf32>, vector<1x64xf32> -> vector<1x64xf32>
    %231 = arith.addf %229, %230 : vector<1x64xf32>
    %232 = vector.extract_strided_slice %14 {offsets = [6, 0], sizes = [1, 64], strides = [1, 1]} : vector<8x64xf32> to vector<1x64xf32>
    %cst_66 = arith.constant dense<0.000000e+00> : vector<1x64xf32>
    %233 = tpu.matmul %222, %22, %cst_66 {dimension_numbers = #tpu.dot_dimension_numbers<[1], [0], [0], [1], [0, 0, 1, 1], [], []>} : vector<1x64xf32>, vector<64x64xf32>, vector<1x64xf32> -> vector<1x64xf32>
    %234 = arith.addf %232, %233 : vector<1x64xf32>
    %235 = arith.negf %228 : vector<1x64xf32>
    %236 = math.exp %235 : vector<1x64xf32>
    %cst_67 = arith.constant 1.000000e+00 : f32
    %237 = vector.broadcast %cst_67 : f32 to vector<1x64xf32>
    %238 = arith.addf %237, %236 : vector<1x64xf32>
    %239 = arith.divf %237, %238 : vector<1x64xf32>
    %240 = arith.mulf %239, %215 : vector<1x64xf32>
    %241 = arith.negf %225 : vector<1x64xf32>
    %242 = math.exp %241 : vector<1x64xf32>
    %cst_68 = arith.constant 1.000000e+00 : f32
    %243 = vector.broadcast %cst_68 : f32 to vector<1x64xf32>
    %244 = arith.addf %243, %242 : vector<1x64xf32>
    %245 = arith.divf %243, %244 : vector<1x64xf32>
    %246 = math.tanh %231 : vector<1x64xf32>
    %247 = arith.mulf %245, %246 : vector<1x64xf32>
    %248 = arith.addf %240, %247 : vector<1x64xf32>
    %249 = arith.negf %234 : vector<1x64xf32>
    %250 = math.exp %249 : vector<1x64xf32>
    %cst_69 = arith.constant 1.000000e+00 : f32
    %251 = vector.broadcast %cst_69 : f32 to vector<1x64xf32>
    %252 = arith.addf %251, %250 : vector<1x64xf32>
    %253 = arith.divf %251, %252 : vector<1x64xf32>
    %254 = math.tanh %248 : vector<1x64xf32>
    %255 = arith.mulf %253, %254 : vector<1x64xf32>
    %256 = vector.extract_strided_slice %11 {offsets = [7, 0], sizes = [1, 64], strides = [1, 1]} : vector<8x64xf32> to vector<1x64xf32>
    %cst_70 = arith.constant dense<0.000000e+00> : vector<1x64xf32>
    %257 = tpu.matmul %255, %16, %cst_70 {dimension_numbers = #tpu.dot_dimension_numbers<[1], [0], [0], [1], [0, 0, 1, 1], [], []>} : vector<1x64xf32>, vector<64x64xf32>, vector<1x64xf32> -> vector<1x64xf32>
    %258 = arith.addf %256, %257 : vector<1x64xf32>
    %259 = vector.extract_strided_slice %12 {offsets = [7, 0], sizes = [1, 64], strides = [1, 1]} : vector<8x64xf32> to vector<1x64xf32>
    %cst_71 = arith.constant dense<0.000000e+00> : vector<1x64xf32>
    %260 = tpu.matmul %255, %18, %cst_71 {dimension_numbers = #tpu.dot_dimension_numbers<[1], [0], [0], [1], [0, 0, 1, 1], [], []>} : vector<1x64xf32>, vector<64x64xf32>, vector<1x64xf32> -> vector<1x64xf32>
    %261 = arith.addf %259, %260 : vector<1x64xf32>
    %262 = vector.extract_strided_slice %13 {offsets = [7, 0], sizes = [1, 64], strides = [1, 1]} : vector<8x64xf32> to vector<1x64xf32>
    %cst_72 = arith.constant dense<0.000000e+00> : vector<1x64xf32>
    %263 = tpu.matmul %255, %20, %cst_72 {dimension_numbers = #tpu.dot_dimension_numbers<[1], [0], [0], [1], [0, 0, 1, 1], [], []>} : vector<1x64xf32>, vector<64x64xf32>, vector<1x64xf32> -> vector<1x64xf32>
    %264 = arith.addf %262, %263 : vector<1x64xf32>
    %265 = vector.extract_strided_slice %14 {offsets = [7, 0], sizes = [1, 64], strides = [1, 1]} : vector<8x64xf32> to vector<1x64xf32>
    %cst_73 = arith.constant dense<0.000000e+00> : vector<1x64xf32>
    %266 = tpu.matmul %255, %22, %cst_73 {dimension_numbers = #tpu.dot_dimension_numbers<[1], [0], [0], [1], [0, 0, 1, 1], [], []>} : vector<1x64xf32>, vector<64x64xf32>, vector<1x64xf32> -> vector<1x64xf32>
    %267 = arith.addf %265, %266 : vector<1x64xf32>
    %268 = arith.negf %261 : vector<1x64xf32>
    %269 = math.exp %268 : vector<1x64xf32>
    %cst_74 = arith.constant 1.000000e+00 : f32
    %270 = vector.broadcast %cst_74 : f32 to vector<1x64xf32>
    %271 = arith.addf %270, %269 : vector<1x64xf32>
    %272 = arith.divf %270, %271 : vector<1x64xf32>
    %273 = arith.mulf %272, %248 : vector<1x64xf32>
    %274 = arith.negf %258 : vector<1x64xf32>
    %275 = math.exp %274 : vector<1x64xf32>
    %cst_75 = arith.constant 1.000000e+00 : f32
    %276 = vector.broadcast %cst_75 : f32 to vector<1x64xf32>
    %277 = arith.addf %276, %275 : vector<1x64xf32>
    %278 = arith.divf %276, %277 : vector<1x64xf32>
    %279 = math.tanh %264 : vector<1x64xf32>
    %280 = arith.mulf %278, %279 : vector<1x64xf32>
    %281 = arith.addf %273, %280 : vector<1x64xf32>
    %282 = arith.negf %267 : vector<1x64xf32>
    %283 = math.exp %282 : vector<1x64xf32>
    %cst_76 = arith.constant 1.000000e+00 : f32
    %284 = vector.broadcast %cst_76 : f32 to vector<1x64xf32>
    %285 = arith.addf %284, %283 : vector<1x64xf32>
    %286 = arith.divf %284, %285 : vector<1x64xf32>
    %287 = math.tanh %281 : vector<1x64xf32>
    %288 = arith.mulf %286, %287 : vector<1x64xf32>
    %c0_77 = arith.constant 0 : index
    %c0_78 = arith.constant 0 : index
    %289 = vector.load %arg6[%c0_77, %c0_78] : memref<64x128xf32, #tpu.memory_space<vmem>>, vector<64x128xf32>
    %cst_79 = arith.constant dense<0.000000e+00> : vector<1x128xf32>
    %290 = tpu.matmul %288, %289, %cst_79 {dimension_numbers = #tpu.dot_dimension_numbers<[1], [0], [0], [1], [0, 0, 1, 1], [], []>} : vector<1x64xf32>, vector<64x128xf32>, vector<1x128xf32> -> vector<1x128xf32>
    %c0_80 = arith.constant 0 : index
    %c0_81 = arith.constant 0 : index
    %291 = vector.load %arg7[%c0_80, %c0_81] : memref<1x128xf32, #tpu.memory_space<vmem>>, vector<1x128xf32>
    %292 = arith.addf %290, %291 : vector<1x128xf32>
    %cst_82 = arith.constant 0.000000e+00 : f32
    %293 = vector.broadcast %cst_82 : f32 to vector<1x128xf32>
    %294 = arith.maximumf %292, %293 : vector<1x128xf32>
    %c0_83 = arith.constant 0 : index
    %c0_84 = arith.constant 0 : index
    %295 = vector.load %arg8[%c0_83, %c0_84] : memref<128x8xf32, #tpu.memory_space<vmem>>, vector<128x8xf32>
    %cst_85 = arith.constant dense<0.000000e+00> : vector<1x8xf32>
    %296 = tpu.matmul %294, %295, %cst_85 {dimension_numbers = #tpu.dot_dimension_numbers<[1], [0], [0], [1], [0, 0, 1, 1], [], []>} : vector<1x128xf32>, vector<128x8xf32>, vector<1x8xf32> -> vector<1x8xf32>
    %c0_86 = arith.constant 0 : index
    %c0_87 = arith.constant 0 : index
    %297 = vector.load %arg9[%c0_86, %c0_87] : memref<1x8xf32, #tpu.memory_space<vmem>>, vector<1x8xf32>
    %298 = arith.addf %296, %297 : vector<1x8xf32>
    %cst_88 = arith.constant 0.000000e+00 : f32
    %299 = vector.broadcast %cst_88 : f32 to vector<1x8xf32>
    %300 = arith.maximumf %298, %299 : vector<1x8xf32>
    %c0_89 = arith.constant 0 : index
    %c0_90 = arith.constant 0 : index
    %301 = vector.load %arg10[%c0_89, %c0_90] : memref<8x3xf32, #tpu.memory_space<vmem>>, vector<8x3xf32>
    %cst_91 = arith.constant dense<0.000000e+00> : vector<1x3xf32>
    %302 = tpu.matmul %300, %301, %cst_91 {dimension_numbers = #tpu.dot_dimension_numbers<[1], [0], [0], [1], [0, 0, 1, 1], [], []>} : vector<1x8xf32>, vector<8x3xf32>, vector<1x3xf32> -> vector<1x3xf32>
    %c0_92 = arith.constant 0 : index
    %c0_93 = arith.constant 0 : index
    %303 = vector.load %arg11[%c0_92, %c0_93] : memref<1x3xf32, #tpu.memory_space<vmem>>, vector<1x3xf32>
    %304 = arith.addf %302, %303 : vector<1x3xf32>
    %c0_94 = arith.constant 0 : index
    %c0_95 = arith.constant 0 : index
    %305 = vector.load %arg12[%c0_94, %c0_95] : memref<1x3xf32, #tpu.memory_space<vmem>>, vector<1x3xf32>
    tpu.vector_store %arg12[%c0_94, %c0_95], %304 {strides = array<i32>} : memref<1x3xf32, #tpu.memory_space<vmem>>, vector<1x3xf32>,
    return
  }
}

module attributes {stable_mosaic.version = 11 : i64} {
  func.func @_conv_relu_pool_kernel(%arg0: memref<9x81x216xf32, #tpu.memory_space<vmem>>, %arg1: memref<16x81xf32, #tpu.memory_space<vmem>>, %arg2: memref<16x1xf32, #tpu.memory_space<vmem>>, %arg3: memref<16x216xf32, #tpu.memory_space<vmem>>) attributes {dimension_semantics = [], scalar_prefetch = 0 : i64, scratch_operands = 0 : i64, tpu.core_type = #tpu.core_type<tc>} {
    %c0 = arith.constant 0 : index
    %c0_0 = arith.constant 0 : index
    %0 = vector.load %arg1[%c0, %c0_0] : memref<16x81xf32, #tpu.memory_space<vmem>>, vector<16x81xf32>
    %c0_1 = arith.constant 0 : index
    %c0_2 = arith.constant 0 : index
    %c0_3 = arith.constant 0 : index
    %1 = vector.load %arg0[%c0_1, %c0_2, %c0_3] : memref<9x81x216xf32, #tpu.memory_space<vmem>>, vector<1x81x216xf32>
    %2 = vector.shape_cast %1 : vector<1x81x216xf32> to vector<81x216xf32>
    %cst = arith.constant dense<0.000000e+00> : vector<16x216xf32>
    %3 = tpu.matmul %0, %2, %cst {dimension_numbers = #tpu.dot_dimension_numbers<[1], [0], [0], [1], [0, 0, 1, 1], [], []>} : vector<16x81xf32>, vector<81x216xf32>, vector<16x216xf32> -> vector<16x216xf32>
    %c1 = arith.constant 1 : index
    %c0_4 = arith.constant 0 : index
    %c0_5 = arith.constant 0 : index
    %4 = vector.load %arg0[%c1, %c0_4, %c0_5] : memref<9x81x216xf32, #tpu.memory_space<vmem>>, vector<1x81x216xf32>
    %5 = vector.shape_cast %4 : vector<1x81x216xf32> to vector<81x216xf32>
    %cst_6 = arith.constant dense<0.000000e+00> : vector<16x216xf32>
    %6 = tpu.matmul %0, %5, %cst_6 {dimension_numbers = #tpu.dot_dimension_numbers<[1], [0], [0], [1], [0, 0, 1, 1], [], []>} : vector<16x81xf32>, vector<81x216xf32>, vector<16x216xf32> -> vector<16x216xf32>
    %7 = arith.maximumf %3, %6 : vector<16x216xf32>
    %c2 = arith.constant 2 : index
    %c0_7 = arith.constant 0 : index
    %c0_8 = arith.constant 0 : index
    %8 = vector.load %arg0[%c2, %c0_7, %c0_8] : memref<9x81x216xf32, #tpu.memory_space<vmem>>, vector<1x81x216xf32>
    %9 = vector.shape_cast %8 : vector<1x81x216xf32> to vector<81x216xf32>
    %cst_9 = arith.constant dense<0.000000e+00> : vector<16x216xf32>
    %10 = tpu.matmul %0, %9, %cst_9 {dimension_numbers = #tpu.dot_dimension_numbers<[1], [0], [0], [1], [0, 0, 1, 1], [], []>} : vector<16x81xf32>, vector<81x216xf32>, vector<16x216xf32> -> vector<16x216xf32>
    %11 = arith.maximumf %7, %10 : vector<16x216xf32>
    %c3 = arith.constant 3 : index
    %c0_10 = arith.constant 0 : index
    %c0_11 = arith.constant 0 : index
    %12 = vector.load %arg0[%c3, %c0_10, %c0_11] : memref<9x81x216xf32, #tpu.memory_space<vmem>>, vector<1x81x216xf32>
    %13 = vector.shape_cast %12 : vector<1x81x216xf32> to vector<81x216xf32>
    %cst_12 = arith.constant dense<0.000000e+00> : vector<16x216xf32>
    %14 = tpu.matmul %0, %13, %cst_12 {dimension_numbers = #tpu.dot_dimension_numbers<[1], [0], [0], [1], [0, 0, 1, 1], [], []>} : vector<16x81xf32>, vector<81x216xf32>, vector<16x216xf32> -> vector<16x216xf32>
    %15 = arith.maximumf %11, %14 : vector<16x216xf32>
    %c4 = arith.constant 4 : index
    %c0_13 = arith.constant 0 : index
    %c0_14 = arith.constant 0 : index
    %16 = vector.load %arg0[%c4, %c0_13, %c0_14] : memref<9x81x216xf32, #tpu.memory_space<vmem>>, vector<1x81x216xf32>
    %17 = vector.shape_cast %16 : vector<1x81x216xf32> to vector<81x216xf32>
    %cst_15 = arith.constant dense<0.000000e+00> : vector<16x216xf32>
    %18 = tpu.matmul %0, %17, %cst_15 {dimension_numbers = #tpu.dot_dimension_numbers<[1], [0], [0], [1], [0, 0, 1, 1], [], []>} : vector<16x81xf32>, vector<81x216xf32>, vector<16x216xf32> -> vector<16x216xf32>
    %19 = arith.maximumf %15, %18 : vector<16x216xf32>
    %c5 = arith.constant 5 : index
    %c0_16 = arith.constant 0 : index
    %c0_17 = arith.constant 0 : index
    %20 = vector.load %arg0[%c5, %c0_16, %c0_17] : memref<9x81x216xf32, #tpu.memory_space<vmem>>, vector<1x81x216xf32>
    %21 = vector.shape_cast %20 : vector<1x81x216xf32> to vector<81x216xf32>
    %cst_18 = arith.constant dense<0.000000e+00> : vector<16x216xf32>
    %22 = tpu.matmul %0, %21, %cst_18 {dimension_numbers = #tpu.dot_dimension_numbers<[1], [0], [0], [1], [0, 0, 1, 1], [], []>} : vector<16x81xf32>, vector<81x216xf32>, vector<16x216xf32> -> vector<16x216xf32>
    %23 = arith.maximumf %19, %22 : vector<16x216xf32>
    %c6 = arith.constant 6 : index
    %c0_19 = arith.constant 0 : index
    %c0_20 = arith.constant 0 : index
    %24 = vector.load %arg0[%c6, %c0_19, %c0_20] : memref<9x81x216xf32, #tpu.memory_space<vmem>>, vector<1x81x216xf32>
    %25 = vector.shape_cast %24 : vector<1x81x216xf32> to vector<81x216xf32>
    %cst_21 = arith.constant dense<0.000000e+00> : vector<16x216xf32>
    %26 = tpu.matmul %0, %25, %cst_21 {dimension_numbers = #tpu.dot_dimension_numbers<[1], [0], [0], [1], [0, 0, 1, 1], [], []>} : vector<16x81xf32>, vector<81x216xf32>, vector<16x216xf32> -> vector<16x216xf32>
    %27 = arith.maximumf %23, %26 : vector<16x216xf32>
    %c7 = arith.constant 7 : index
    %c0_22 = arith.constant 0 : index
    %c0_23 = arith.constant 0 : index
    %28 = vector.load %arg0[%c7, %c0_22, %c0_23] : memref<9x81x216xf32, #tpu.memory_space<vmem>>, vector<1x81x216xf32>
    %29 = vector.shape_cast %28 : vector<1x81x216xf32> to vector<81x216xf32>
    %cst_24 = arith.constant dense<0.000000e+00> : vector<16x216xf32>
    %30 = tpu.matmul %0, %29, %cst_24 {dimension_numbers = #tpu.dot_dimension_numbers<[1], [0], [0], [1], [0, 0, 1, 1], [], []>} : vector<16x81xf32>, vector<81x216xf32>, vector<16x216xf32> -> vector<16x216xf32>
    %31 = arith.maximumf %27, %30 : vector<16x216xf32>
    %c8 = arith.constant 8 : index
    %c0_25 = arith.constant 0 : index
    %c0_26 = arith.constant 0 : index
    %32 = vector.load %arg0[%c8, %c0_25, %c0_26] : memref<9x81x216xf32, #tpu.memory_space<vmem>>, vector<1x81x216xf32>
    %33 = vector.shape_cast %32 : vector<1x81x216xf32> to vector<81x216xf32>
    %cst_27 = arith.constant dense<0.000000e+00> : vector<16x216xf32>
    %34 = tpu.matmul %0, %33, %cst_27 {dimension_numbers = #tpu.dot_dimension_numbers<[1], [0], [0], [1], [0, 0, 1, 1], [], []>} : vector<16x81xf32>, vector<81x216xf32>, vector<16x216xf32> -> vector<16x216xf32>
    %35 = arith.maximumf %31, %34 : vector<16x216xf32>
    %c0_28 = arith.constant 0 : index
    %c0_29 = arith.constant 0 : index
    %36 = vector.load %arg2[%c0_28, %c0_29] : memref<16x1xf32, #tpu.memory_space<vmem>>, vector<16x1xf32>
    %37 = vector.broadcast %36 : vector<16x1xf32> to vector<16x216xf32>
    %38 = arith.addf %35, %37 : vector<16x216xf32>
    %cst_30 = arith.constant 0.000000e+00 : f32
    %39 = vector.broadcast %cst_30 : f32 to vector<16x216xf32>
    %40 = arith.maximumf %38, %39 : vector<16x216xf32>
    %c0_31 = arith.constant 0 : index
    %c0_32 = arith.constant 0 : index
    %41 = vector.load %arg3[%c0_31, %c0_32] : memref<16x216xf32, #tpu.memory_space<vmem>>, vector<16x216xf32>
    tpu.vector_store %arg3[%c0_31, %c0_32], %40 {strides = array<i32>} : memref<16x216xf32, #tpu.memory_space<vmem>>, vector<16x216xf32>,
    return
  }
}

module attributes {stable_mosaic.version = 11 : i64} {
  func.func @_conv_relu_pool_kernel(%arg0: memref<9x432x4xf32, #tpu.memory_space<vmem>>, %arg1: memref<8x432xf32, #tpu.memory_space<vmem>>, %arg2: memref<8x1xf32, #tpu.memory_space<vmem>>, %arg3: memref<8x4xf32, #tpu.memory_space<vmem>>) attributes {dimension_semantics = [], scalar_prefetch = 0 : i64, scratch_operands = 0 : i64, tpu.core_type = #tpu.core_type<tc>} {
    %c0 = arith.constant 0 : index
    %c0_0 = arith.constant 0 : index
    %0 = vector.load %arg1[%c0, %c0_0] : memref<8x432xf32, #tpu.memory_space<vmem>>, vector<8x432xf32>
    %c0_1 = arith.constant 0 : index
    %c0_2 = arith.constant 0 : index
    %c0_3 = arith.constant 0 : index
    %1 = vector.load %arg0[%c0_1, %c0_2, %c0_3] : memref<9x432x4xf32, #tpu.memory_space<vmem>>, vector<1x432x4xf32>
    %2 = vector.shape_cast %1 : vector<1x432x4xf32> to vector<432x4xf32>
    %cst = arith.constant dense<0.000000e+00> : vector<8x4xf32>
    %3 = tpu.matmul %0, %2, %cst {dimension_numbers = #tpu.dot_dimension_numbers<[1], [0], [0], [1], [0, 0, 1, 1], [], []>} : vector<8x432xf32>, vector<432x4xf32>, vector<8x4xf32> -> vector<8x4xf32>
    %c1 = arith.constant 1 : index
    %c0_4 = arith.constant 0 : index
    %c0_5 = arith.constant 0 : index
    %4 = vector.load %arg0[%c1, %c0_4, %c0_5] : memref<9x432x4xf32, #tpu.memory_space<vmem>>, vector<1x432x4xf32>
    %5 = vector.shape_cast %4 : vector<1x432x4xf32> to vector<432x4xf32>
    %cst_6 = arith.constant dense<0.000000e+00> : vector<8x4xf32>
    %6 = tpu.matmul %0, %5, %cst_6 {dimension_numbers = #tpu.dot_dimension_numbers<[1], [0], [0], [1], [0, 0, 1, 1], [], []>} : vector<8x432xf32>, vector<432x4xf32>, vector<8x4xf32> -> vector<8x4xf32>
    %7 = arith.maximumf %3, %6 : vector<8x4xf32>
    %c2 = arith.constant 2 : index
    %c0_7 = arith.constant 0 : index
    %c0_8 = arith.constant 0 : index
    %8 = vector.load %arg0[%c2, %c0_7, %c0_8] : memref<9x432x4xf32, #tpu.memory_space<vmem>>, vector<1x432x4xf32>
    %9 = vector.shape_cast %8 : vector<1x432x4xf32> to vector<432x4xf32>
    %cst_9 = arith.constant dense<0.000000e+00> : vector<8x4xf32>
    %10 = tpu.matmul %0, %9, %cst_9 {dimension_numbers = #tpu.dot_dimension_numbers<[1], [0], [0], [1], [0, 0, 1, 1], [], []>} : vector<8x432xf32>, vector<432x4xf32>, vector<8x4xf32> -> vector<8x4xf32>
    %11 = arith.maximumf %7, %10 : vector<8x4xf32>
    %c3 = arith.constant 3 : index
    %c0_10 = arith.constant 0 : index
    %c0_11 = arith.constant 0 : index
    %12 = vector.load %arg0[%c3, %c0_10, %c0_11] : memref<9x432x4xf32, #tpu.memory_space<vmem>>, vector<1x432x4xf32>
    %13 = vector.shape_cast %12 : vector<1x432x4xf32> to vector<432x4xf32>
    %cst_12 = arith.constant dense<0.000000e+00> : vector<8x4xf32>
    %14 = tpu.matmul %0, %13, %cst_12 {dimension_numbers = #tpu.dot_dimension_numbers<[1], [0], [0], [1], [0, 0, 1, 1], [], []>} : vector<8x432xf32>, vector<432x4xf32>, vector<8x4xf32> -> vector<8x4xf32>
    %15 = arith.maximumf %11, %14 : vector<8x4xf32>
    %c4 = arith.constant 4 : index
    %c0_13 = arith.constant 0 : index
    %c0_14 = arith.constant 0 : index
    %16 = vector.load %arg0[%c4, %c0_13, %c0_14] : memref<9x432x4xf32, #tpu.memory_space<vmem>>, vector<1x432x4xf32>
    %17 = vector.shape_cast %16 : vector<1x432x4xf32> to vector<432x4xf32>
    %cst_15 = arith.constant dense<0.000000e+00> : vector<8x4xf32>
    %18 = tpu.matmul %0, %17, %cst_15 {dimension_numbers = #tpu.dot_dimension_numbers<[1], [0], [0], [1], [0, 0, 1, 1], [], []>} : vector<8x432xf32>, vector<432x4xf32>, vector<8x4xf32> -> vector<8x4xf32>
    %19 = arith.maximumf %15, %18 : vector<8x4xf32>
    %c5 = arith.constant 5 : index
    %c0_16 = arith.constant 0 : index
    %c0_17 = arith.constant 0 : index
    %20 = vector.load %arg0[%c5, %c0_16, %c0_17] : memref<9x432x4xf32, #tpu.memory_space<vmem>>, vector<1x432x4xf32>
    %21 = vector.shape_cast %20 : vector<1x432x4xf32> to vector<432x4xf32>
    %cst_18 = arith.constant dense<0.000000e+00> : vector<8x4xf32>
    %22 = tpu.matmul %0, %21, %cst_18 {dimension_numbers = #tpu.dot_dimension_numbers<[1], [0], [0], [1], [0, 0, 1, 1], [], []>} : vector<8x432xf32>, vector<432x4xf32>, vector<8x4xf32> -> vector<8x4xf32>
    %23 = arith.maximumf %19, %22 : vector<8x4xf32>
    %c6 = arith.constant 6 : index
    %c0_19 = arith.constant 0 : index
    %c0_20 = arith.constant 0 : index
    %24 = vector.load %arg0[%c6, %c0_19, %c0_20] : memref<9x432x4xf32, #tpu.memory_space<vmem>>, vector<1x432x4xf32>
    %25 = vector.shape_cast %24 : vector<1x432x4xf32> to vector<432x4xf32>
    %cst_21 = arith.constant dense<0.000000e+00> : vector<8x4xf32>
    %26 = tpu.matmul %0, %25, %cst_21 {dimension_numbers = #tpu.dot_dimension_numbers<[1], [0], [0], [1], [0, 0, 1, 1], [], []>} : vector<8x432xf32>, vector<432x4xf32>, vector<8x4xf32> -> vector<8x4xf32>
    %27 = arith.maximumf %23, %26 : vector<8x4xf32>
    %c7 = arith.constant 7 : index
    %c0_22 = arith.constant 0 : index
    %c0_23 = arith.constant 0 : index
    %28 = vector.load %arg0[%c7, %c0_22, %c0_23] : memref<9x432x4xf32, #tpu.memory_space<vmem>>, vector<1x432x4xf32>
    %29 = vector.shape_cast %28 : vector<1x432x4xf32> to vector<432x4xf32>
    %cst_24 = arith.constant dense<0.000000e+00> : vector<8x4xf32>
    %30 = tpu.matmul %0, %29, %cst_24 {dimension_numbers = #tpu.dot_dimension_numbers<[1], [0], [0], [1], [0, 0, 1, 1], [], []>} : vector<8x432xf32>, vector<432x4xf32>, vector<8x4xf32> -> vector<8x4xf32>
    %31 = arith.maximumf %27, %30 : vector<8x4xf32>
    %c8 = arith.constant 8 : index
    %c0_25 = arith.constant 0 : index
    %c0_26 = arith.constant 0 : index
    %32 = vector.load %arg0[%c8, %c0_25, %c0_26] : memref<9x432x4xf32, #tpu.memory_space<vmem>>, vector<1x432x4xf32>
    %33 = vector.shape_cast %32 : vector<1x432x4xf32> to vector<432x4xf32>
    %cst_27 = arith.constant dense<0.000000e+00> : vector<8x4xf32>
    %34 = tpu.matmul %0, %33, %cst_27 {dimension_numbers = #tpu.dot_dimension_numbers<[1], [0], [0], [1], [0, 0, 1, 1], [], []>} : vector<8x432xf32>, vector<432x4xf32>, vector<8x4xf32> -> vector<8x4xf32>
    %35 = arith.maximumf %31, %34 : vector<8x4xf32>
    %c0_28 = arith.constant 0 : index
    %c0_29 = arith.constant 0 : index
    %36 = vector.load %arg2[%c0_28, %c0_29] : memref<8x1xf32, #tpu.memory_space<vmem>>, vector<8x1xf32>
    %37 = vector.broadcast %36 : vector<8x1xf32> to vector<8x4xf32>
    %38 = arith.addf %35, %37 : vector<8x4xf32>
    %cst_30 = arith.constant 0.000000e+00 : f32
    %39 = vector.broadcast %cst_30 : f32 to vector<8x4xf32>
    %40 = arith.maximumf %38, %39 : vector<8x4xf32>
    %c0_31 = arith.constant 0 : index
    %c0_32 = arith.constant 0 : index
    %41 = vector.load %arg3[%c0_31, %c0_32] : memref<8x4xf32, #tpu.memory_space<vmem>>, vector<8x4xf32>
    tpu.vector_store %arg3[%c0_31, %c0_32], %40 {strides = array<i32>} : memref<8x4xf32, #tpu.memory_space<vmem>>, vector<8x4xf32>,
    return
  }
}

module attributes {stable_mosaic.version = 11 : i64} {
  func.func @_m1_head_kernel(%arg0: memref<1x32xf32, #tpu.memory_space<vmem>>, %arg1: memref<32x128xf32, #tpu.memory_space<vmem>>, %arg2: memref<1x128xf32, #tpu.memory_space<vmem>>, %arg3: memref<128x64xf32, #tpu.memory_space<vmem>>, %arg4: memref<1x64xf32, #tpu.memory_space<vmem>>, %arg5: memref<64x16xf32, #tpu.memory_space<vmem>>, %arg6: memref<1x16xf32, #tpu.memory_space<vmem>>, %arg7: memref<16x1xf32, #tpu.memory_space<vmem>>, %arg8: memref<1x1xf32, #tpu.memory_space<vmem>>, %arg9: memref<1x1xf32, #tpu.memory_space<vmem>>) attributes {dimension_semantics = [], scalar_prefetch = 0 : i64, scratch_operands = 0 : i64, tpu.core_type = #tpu.core_type<tc>} {
    %c0 = arith.constant 0 : index
    %c0_0 = arith.constant 0 : index
    %0 = vector.load %arg0[%c0, %c0_0] : memref<1x32xf32, #tpu.memory_space<vmem>>, vector<1x32xf32>
    %c0_1 = arith.constant 0 : index
    %c0_2 = arith.constant 0 : index
    %1 = vector.load %arg1[%c0_1, %c0_2] : memref<32x128xf32, #tpu.memory_space<vmem>>, vector<32x128xf32>
    %cst = arith.constant dense<0.000000e+00> : vector<1x128xf32>
    %2 = tpu.matmul %0, %1, %cst {dimension_numbers = #tpu.dot_dimension_numbers<[1], [0], [0], [1], [0, 0, 1, 1], [], []>} : vector<1x32xf32>, vector<32x128xf32>, vector<1x128xf32> -> vector<1x128xf32>
    %c0_3 = arith.constant 0 : index
    %c0_4 = arith.constant 0 : index
    %3 = vector.load %arg2[%c0_3, %c0_4] : memref<1x128xf32, #tpu.memory_space<vmem>>, vector<1x128xf32>
    %4 = arith.addf %2, %3 : vector<1x128xf32>
    %cst_5 = arith.constant 0.000000e+00 : f32
    %5 = vector.broadcast %cst_5 : f32 to vector<1x128xf32>
    %6 = arith.maximumf %4, %5 : vector<1x128xf32>
    %c0_6 = arith.constant 0 : index
    %c0_7 = arith.constant 0 : index
    %7 = vector.load %arg3[%c0_6, %c0_7] : memref<128x64xf32, #tpu.memory_space<vmem>>, vector<128x64xf32>
    %cst_8 = arith.constant dense<0.000000e+00> : vector<1x64xf32>
    %8 = tpu.matmul %6, %7, %cst_8 {dimension_numbers = #tpu.dot_dimension_numbers<[1], [0], [0], [1], [0, 0, 1, 1], [], []>} : vector<1x128xf32>, vector<128x64xf32>, vector<1x64xf32> -> vector<1x64xf32>
    %c0_9 = arith.constant 0 : index
    %c0_10 = arith.constant 0 : index
    %9 = vector.load %arg4[%c0_9, %c0_10] : memref<1x64xf32, #tpu.memory_space<vmem>>, vector<1x64xf32>
    %10 = arith.addf %8, %9 : vector<1x64xf32>
    %cst_11 = arith.constant 0.000000e+00 : f32
    %11 = vector.broadcast %cst_11 : f32 to vector<1x64xf32>
    %12 = arith.maximumf %10, %11 : vector<1x64xf32>
    %c0_12 = arith.constant 0 : index
    %c0_13 = arith.constant 0 : index
    %13 = vector.load %arg5[%c0_12, %c0_13] : memref<64x16xf32, #tpu.memory_space<vmem>>, vector<64x16xf32>
    %cst_14 = arith.constant dense<0.000000e+00> : vector<1x16xf32>
    %14 = tpu.matmul %12, %13, %cst_14 {dimension_numbers = #tpu.dot_dimension_numbers<[1], [0], [0], [1], [0, 0, 1, 1], [], []>} : vector<1x64xf32>, vector<64x16xf32>, vector<1x16xf32> -> vector<1x16xf32>
    %c0_15 = arith.constant 0 : index
    %c0_16 = arith.constant 0 : index
    %15 = vector.load %arg6[%c0_15, %c0_16] : memref<1x16xf32, #tpu.memory_space<vmem>>, vector<1x16xf32>
    %16 = arith.addf %14, %15 : vector<1x16xf32>
    %cst_17 = arith.constant 0.000000e+00 : f32
    %17 = vector.broadcast %cst_17 : f32 to vector<1x16xf32>
    %18 = arith.maximumf %16, %17 : vector<1x16xf32>
    %c0_18 = arith.constant 0 : index
    %c0_19 = arith.constant 0 : index
    %19 = vector.load %arg7[%c0_18, %c0_19] : memref<16x1xf32, #tpu.memory_space<vmem>>, vector<16x1xf32>
    %cst_20 = arith.constant dense<0.000000e+00> : vector<1x1xf32>
    %20 = tpu.matmul %18, %19, %cst_20 {dimension_numbers = #tpu.dot_dimension_numbers<[1], [0], [0], [1], [0, 0, 1, 1], [], []>} : vector<1x16xf32>, vector<16x1xf32>, vector<1x1xf32> -> vector<1x1xf32>
    %c0_21 = arith.constant 0 : index
    %c0_22 = arith.constant 0 : index
    %21 = vector.load %arg8[%c0_21, %c0_22] : memref<1x1xf32, #tpu.memory_space<vmem>>, vector<1x1xf32>
    %22 = arith.addf %20, %21 : vector<1x1xf32>
    %c0_23 = arith.constant 0 : index
    %c0_24 = arith.constant 0 : index
    %23 = vector.load %arg9[%c0_23, %c0_24] : memref<1x1xf32, #tpu.memory_space<vmem>>, vector<1x1xf32>
    tpu.vector_store %arg9[%c0_23, %c0_24], %22 {strides = array<i32>} : memref<1x1xf32, #tpu.memory_space<vmem>>, vector<1x1xf32>,
    return
  }
}

</mosaic_0001>

<llo_original>
// kernel: _lambda_.7
$region0: #{_lambda_.7}
  #allocation0 [shape = 'u32[]', space=smem, size = 0x4, offset = 0x4, fixed_abs, tag = 'smem constant byte address 0x4 - core index']
  #allocation1 [shape = 'u32[144,128]{1,0:T(1,128)}', space=vmem, size = 0x12000, scoped, tag = 'internal scratch']
  %s0 = inlined_call_operand.hbm [shape: f32[8,34], index: 0, kind: input, shape index: {}]
  %s1 = inlined_call_operand.hbm [shape: f32[34,64], index: 1, kind: input, shape index: {}]
  %s2 = inlined_call_operand.hbm [shape: f32[1,64], index: 2, kind: input, shape index: {}]
  %s3 = inlined_call_operand.hbm [shape: f32[64,256], index: 3, kind: input, shape index: {}]
  %s4 = inlined_call_operand.hbm [shape: f32[4,64,64], index: 4, kind: input, shape index: {}]
  %s5 = inlined_call_operand.hbm [shape: f32[1,256], index: 5, kind: input, shape index: {}]
  %s6 = inlined_call_operand.hbm [shape: f32[64,128], index: 6, kind: input, shape index: {}]
  %s7 = inlined_call_operand.hbm [shape: f32[1,128], index: 7, kind: input, shape index: {}]
  %s8 = inlined_call_operand.hbm [shape: f32[128,8], index: 8, kind: input, shape index: {}]
  %s9 = inlined_call_operand.hbm [shape: f32[1,8], index: 9, kind: input, shape index: {}]
  %s10 = inlined_call_operand.hbm [shape: f32[8,3], index: 10, kind: input, shape index: {}]
  %s11 = inlined_call_operand.hbm [shape: f32[1,3], index: 11, kind: input, shape index: {}]
  %s12 = inlined_call_operand.vmem [shape: f32[1,3], index: 12, kind: output, shape index: {}]
  %s13 = sld [smem:[#allocation0]]
  $region106: #{_lambda_.7} parent=0
    _
  %s15 = ssub.s32 1, %s13
  %s16 = scalar_select 0, %s15, %s13
  $region1: #{_lambda_.7} parent=0
    #allocation2 [shape = 'u8[4096]{0}', space=vmem, size = 0x1000, scoped, tag = 'input window, operand 0, single buffered']
    #allocation3 [shape = 's32[1]{0}', space=sflag, size = 0x4, scoped, tag = 'scoped memory for _lambda_.7']
    #allocation4 [shape = 'u8[20480]{0}', space=vmem, size = 0x5000, scoped, tag = 'input window, operand 1, single buffered']
    #allocation5 [shape = 's32[1]{0}', space=sflag, size = 0x4, scoped, tag = 'scoped memory for _lambda_.7']
    #allocation6 [shape = 'u8[512]{0}', space=vmem, size = 0x400, scoped, tag = 'input window, operand 2, single buffered']
    #allocation7 [shape = 'u8[65536]{0}', space=vmem, size = 0x10000, scoped, tag = 'input window, operand 3, single buffered']
    #allocation8 [shape = 's32[1]{0}', space=sflag, size = 0x4, scoped, tag = 'scoped memory for _lambda_.7']
    #allocation9 [shape = 'u8[131072]{0}', space=vmem, size = 0x20000, scoped, tag = 'input window, operand 4, single buffered']
    #allocation10 [shape = 'u8[1024]{0}', space=vmem, size = 0x400, scoped, tag = 'input window, operand 5, single buffered']
    #allocation11 [shape = 's32[1]{0}', space=sflag, size = 0x4, scoped, tag = 'scoped memory for _lambda_.7']
    #allocation12 [shape = 'u8[32768]{0}', space=vmem, size = 0x8000, scoped, tag = 'input window, operand 6, single buffered']
    #allocation13 [shape = 'u8[512]{0}', space=vmem, size = 0x400, scoped, tag = 'input window, operand 7, single buffered']
    #allocation14 [shape = 's32[1]{0}', space=sflag, size = 0x4, scoped, tag = 'scoped memory for _lambda_.7']
    #allocation15 [shape = 'u8[65536]{0}', space=vmem, size = 0x10000, scoped, tag = 'input window, operand 8, single buffered']
    #allocation16 [shape = 'u8[512]{0}', space=vmem, size = 0x400, scoped, tag = 'input window, operand 9, single buffered']
    #allocation17 [shape = 's32[1]{0}', space=sflag, size = 0x4, scoped, tag = 'scoped memory for _lambda_.7']
    #allocation18 [shape = 'u8[4096]{0}', space=vmem, size = 0x1000, scoped, tag = 'input window, operand 10, single buffered']
    #allocation19 [shape = 'u8[512]{0}', space=vmem, size = 0x400, scoped, tag = 'input window, operand 11, single buffered']
    #allocation20 [shape = 's32[1]{0}', space=sflag, size = 0x4, scoped, tag = 'scoped memory for _lambda_.7']
    %17 = vsyncpa [#allocation3], 0
    %18 = vsyncpa [#allocation5], 0
    %19 = vsyncpa [#allocation8], 0
    %20 = vsyncpa [#allocation11], 0
    %21 = vsyncpa [#allocation14], 0
    %22 = vsyncpa [#allocation17], 0
    %23 = vsyncpa [#allocation20], 0
    // Predicated region
    $region2: #{_lambda_.7} parent=1 // pred_check
      _
    $region3: #{_lambda_.7} parent=1 // pred_check_branch
      %25 = sbr.rel (0) target = $region5
    $region4: #{_lambda_.7} parent=1 // pred_region
      %s27 = ssub.s32 128, 128
      %28 = vsyncadd [#allocation3], %s27
      %s30 = sshll.u32 [#allocation2], 4
      %s31 = int_to_ptr.vmem [resolvable:$true] %s30
      %33 = dma.hbm_to_vmem [thread:$0]  %s0, 128, %s31, [#allocation3]
    $region5: #{_lambda_.7} parent=1 // pred_fallthru
      _
    // Predicated region
    $region6: #{_lambda_.7} parent=1 // pred_check
      _
    $region7: #{_lambda_.7} parent=1 // pred_check_branch
      %35 = sbr.rel (0) target = $region9
    $region8: #{_lambda_.7} parent=1 // pred_region
      %s37 = ssub.s32 640, 640
      %38 = vsyncadd [#allocation5], %s37
      %s39 = sshll.u32 [#allocation4], 4
      %s40 = int_to_ptr.vmem [resolvable:$true] %s39
      %45 = dma.hbm_to_vmem [thread:$0]  %s1, 640, %s40, [#allocation5], 128, 128, 8
    $region9: #{_lambda_.7} parent=1 // pred_fallthru
      _
    // Predicated region
    $region10: #{_lambda_.7} parent=1 // pred_check
      _
    $region11: #{_lambda_.7} parent=1 // pred_check_branch
      %47 = sbr.rel (0) target = $region13
    $region12: #{_lambda_.7} parent=1 // pred_region
      %s49 = ssub.s32 16, 16
      %50 = vsyncadd [#allocation5], %s49
      %s52 = sshll.u32 [#allocation6], 4
      %s53 = int_to_ptr.vmem [resolvable:$true] %s52
      %55 = dma.hbm_to_vmem [thread:$0]  %s2, 16, %s53, [#allocation5]
    $region13: #{_lambda_.7} parent=1 // pred_fallthru
      _
    // Predicated region
    $region14: #{_lambda_.7} parent=1 // pred_check
      _
    $region15: #{_lambda_.7} parent=1 // pred_check_branch
      %57 = sbr.rel (0) target = $region17
    $region16: #{_lambda_.7} parent=1 // pred_region
      %s59 = ssub.s32 2048, 2048
      %60 = vsyncadd [#allocation8], %s59
      %s61 = sshll.u32 [#allocation7], 4
      %s62 = int_to_ptr.vmem [resolvable:$true] %s61
      %67 = dma.hbm_to_vmem [thread:$0]  %s3, 2048, %s62, [#allocation8], 256, 256, 16
    $region17: #{_lambda_.7} parent=1 // pred_fallthru
      _
    // Predicated region
    $region18: #{_lambda_.7} parent=1 // pred_check
      _
    $region19: #{_lambda_.7} parent=1 // pred_check_branch
      %69 = sbr.rel (0) target = $region21
    $region20: #{_lambda_.7} parent=1 // pred_region
      %s71 = ssub.s32 4096, 4096
      %72 = vsyncadd [#allocation8], %s71
      %s73 = sshll.u32 [#allocation9], 4
      %s74 = int_to_ptr.vmem [resolvable:$true] %s73
      %79 = dma.hbm_to_vmem [thread:$0]  %s4, 4096, %s74, [#allocation8], 128, 128, 8
    $region21: #{_lambda_.7} parent=1 // pred_fallthru
      _
    // Predicated region
    $region22: #{_lambda_.7} parent=1 // pred_check
      _
    $region23: #{_lambda_.7} parent=1 // pred_check_branch
      %81 = sbr.rel (0) target = $region25
    $region24: #{_lambda_.7} parent=1 // pred_region
      %s83 = ssub.s32 32, 32
      %84 = vsyncadd [#allocation11], %s83
      %s86 = sshll.u32 [#allocation10], 4
      %s87 = int_to_ptr.vmem [resolvable:$true] %s86
      %89 = dma.hbm_to_vmem [thread:$0]  %s5, 32, %s87, [#allocation11]
    $region25: #{_lambda_.7} parent=1 // pred_fallthru
      _
    // Predicated region
    $region26: #{_lambda_.7} parent=1 // pred_check
      _
    $region27: #{_lambda_.7} parent=1 // pred_check_branch
      %91 = sbr.rel (0) target = $region29
    $region28: #{_lambda_.7} parent=1 // pred_region
      %s93 = ssub.s32 1024, 1024
      %94 = vsyncadd [#allocation11], %s93
      %s95 = sshll.u32 [#allocation12], 4
      %s96 = int_to_ptr.vmem [resolvable:$true] %s95
      %101 = dma.hbm_to_vmem [thread:$0]  %s6, 1024, %s96, [#allocation11], 128, 128, 8
    $region29: #{_lambda_.7} parent=1 // pred_fallthru
      _
    // Predicated region
    $region30: #{_lambda_.7} parent=1 // pred_check
      _
    $region31: #{_lambda_.7} parent=1 // pred_check_branch
      %103 = sbr.rel (0) target = $region33
    $region32: #{_lambda_.7} parent=1 // pred_region
      %s105 = ssub.s32 16, 16
      %106 = vsyncadd [#allocation14], %s105
      %s108 = sshll.u32 [#allocation13], 4
      %s109 = int_to_ptr.vmem [resolvable:$true] %s108
      %111 = dma.hbm_to_vmem [thread:$0]  %s7, 16, %s109, [#allocation14]
    $region33: #{_lambda_.7} parent=1 // pred_fallthru
      _
    // Predicated region
    $region34: #{_lambda_.7} parent=1 // pred_check
      _
    $region35: #{_lambda_.7} parent=1 // pred_check_branch
      %113 = sbr.rel (0) target = $region37
    $region36: #{_lambda_.7} parent=1 // pred_region
      %s115 = ssub.s32 2048, 2048
      %116 = vsyncadd [#allocation14], %s115
      %s117 = sshll.u32 [#allocation15], 4
      %s118 = int_to_ptr.vmem [resolvable:$true] %s117
      %123 = dma.hbm_to_vmem [thread:$0]  %s8, 2048, %s118, [#allocation14], 128, 128, 8
    $region37: #{_lambda_.7} parent=1 // pred_fallthru
      _
    // Predicated region
    $region38: #{_lambda_.7} parent=1 // pred_check
      _
    $region39: #{_lambda_.7} parent=1 // pred_check_branch
      %125 = sbr.rel (0) target = $region41
    $region40: #{_lambda_.7} parent=1 // pred_region
      %s127 = ssub.s32 16, 16
      %128 = vsyncadd [#allocation17], %s127
      %s130 = sshll.u32 [#allocation16], 4
      %s131 = int_to_ptr.vmem [resolvable:$true] %s130
      %133 = dma.hbm_to_vmem [thread:$0]  %s9, 16, %s131, [#allocation17]
    $region41: #{_lambda_.7} parent=1 // pred_fallthru
      _
    // Predicated region
    $region42: #{_lambda_.7} parent=1 // pred_check
      _
    $region43: #{_lambda_.7} parent=1 // pred_check_branch
      %135 = sbr.rel (0) target = $region45
    $region44: #{_lambda_.7} parent=1 // pred_region
      %s137 = ssub.s32 128, 128
      %138 = vsyncadd [#allocation17], %s137
      %s140 = sshll.u32 [#allocation18], 4
      %s141 = int_to_ptr.vmem [resolvable:$true] %s140
      %143 = dma.hbm_to_vmem [thread:$0]  %s10, 128, %s141, [#allocation17]
    $region45: #{_lambda_.7} parent=1 // pred_fallthru
      _
    // Predicated region
    $region46: #{_lambda_.7} parent=1 // pred_check
      _
    $region47: #{_lambda_.7} parent=1 // pred_check_branch
      %145 = sbr.rel (0) target = $region49
    $region48: #{_lambda_.7} parent=1 // pred_region
      %s147 = ssub.s32 16, 16
      %148 = vsyncadd [#allocation20], %s147
      %s150 = sshll.u32 [#allocation19], 4
      %s151 = int_to_ptr.vmem [resolvable:$true] %s150
      %153 = dma.hbm_to_vmem [thread:$0]  %s11, 16, %s151, [#allocation20]
    $region49: #{_lambda_.7} parent=1 // pred_fallthru
      _
    // Predicated region
    $region50: #{_lambda_.7} parent=1 // pred_check
      _
    $region51: #{_lambda_.7} parent=1 // pred_check_branch
      %155 = sbr.rel (0) target = $region53
    $region52: #{_lambda_.7} parent=1 // pred_region
      %156 = dma.done [#allocation3], 128
    $region53: #{_lambda_.7} parent=1 // pred_fallthru
      _
    // Predicated region
    $region54: #{_lambda_.7} parent=1 // pred_check
      _
    $region55: #{_lambda_.7} parent=1 // pred_check_branch
      %158 = sbr.rel (0) target = $region57
    $region56: #{_lambda_.7} parent=1 // pred_region
      %159 = dma.done [#allocation5], 640
    $region57: #{_lambda_.7} parent=1 // pred_fallthru
      _
    // Predicated region
    $region58: #{_lambda_.7} parent=1 // pred_check
      _
    $region59: #{_lambda_.7} parent=1 // pred_check_branch
      %161 = sbr.rel (0) target = $region61
    $region60: #{_lambda_.7} parent=1 // pred_region
      %162 = dma.done [#allocation5], 16
    $region61: #{_lambda_.7} parent=1 // pred_fallthru
      _
    // Predicated region
    $region62: #{_lambda_.7} parent=1 // pred_check
      _
    $region63: #{_lambda_.7} parent=1 // pred_check_branch
      %164 = sbr.rel (0) target = $region65
    $region64: #{_lambda_.7} parent=1 // pred_region
      %165 = dma.done [#allocation8], 2048
    $region65: #{_lambda_.7} parent=1 // pred_fallthru
      _
    // Predicated region
    $region66: #{_lambda_.7} parent=1 // pred_check
      _
    $region67: #{_lambda_.7} parent=1 // pred_check_branch
      %167 = sbr.rel (0) target = $region69
    $region68: #{_lambda_.7} parent=1 // pred_region
      %168 = dma.done [#allocation8], 4096
    $region69: #{_lambda_.7} parent=1 // pred_fallthru
      _
    // Predicated region
    $region70: #{_lambda_.7} parent=1 // pred_check
      _
    $region71: #{_lambda_.7} parent=1 // pred_check_branch
      %170 = sbr.rel (0) target = $region73
    $region72: #{_lambda_.7} parent=1 // pred_region
      %171 = dma.done [#allocation11], 32
    $region73: #{_lambda_.7} parent=1 // pred_fallthru
      _
    // Predicated region
    $region74: #{_lambda_.7} parent=1 // pred_check
      _
    $region75: #{_lambda_.7} parent=1 // pred_check_branch
      %173 = sbr.rel (0) target = $region77
    $region76: #{_lambda_.7} parent=1 // pred_region
      %174 = dma.done [#allocation11], 1024
    $region77: #{_lambda_.7} parent=1 // pred_fallthru
      _
    // Predicated region
    $region78: #{_lambda_.7} parent=1 // pred_check
      _
    $region79: #{_lambda_.7} parent=1 // pred_check_branch
      %176 = sbr.rel (0) target = $region81
    $region80: #{_lambda_.7} parent=1 // pred_region
      %177 = dma.done [#allocation14], 16
    $region81: #{_lambda_.7} parent=1 // pred_fallthru
      _
    // Predicated region
    $region82: #{_lambda_.7} parent=1 // pred_check
      _
    $region83: #{_lambda_.7} parent=1 // pred_check_branch
      %179 = sbr.rel (0) target = $region85
    $region84: #{_lambda_.7} parent=1 // pred_region
      %180 = dma.done [#allocation14], 2048
    $region85: #{_lambda_.7} parent=1 // pred_fallthru
      _
    // Predicated region
    $region86: #{_lambda_.7} parent=1 // pred_check
      _
    $region87: #{_lambda_.7} parent=1 // pred_check_branch
      %182 = sbr.rel (0) target = $region89
    $region88: #{_lambda_.7} parent=1 // pred_region
      %183 = dma.done [#allocation17], 16
    $region89: #{_lambda_.7} parent=1 // pred_fallthru
      _
    // Predicated region
    $region90: #{_lambda_.7} parent=1 // pred_check
      _
    $region91: #{_lambda_.7} parent=1 // pred_check_branch
      %185 = sbr.rel (0) target = $region93
    $region92: #{_lambda_.7} parent=1 // pred_region
      %186 = dma.done [#allocation17], 128
    $region93: #{_lambda_.7} parent=1 // pred_fallthru
      _
    // Predicated region
    $region94: #{_lambda_.7} parent=1 // pred_check
      _
    $region95: #{_lambda_.7} parent=1 // pred_check_branch
      %188 = sbr.rel (0) target = $region97
    $region96: #{_lambda_.7} parent=1 // pred_region
      %189 = dma.done [#allocation20], 16
    $region97: #{_lambda_.7} parent=1 // pred_fallthru
      _
    %v190 = vld [vmem:[#allocation2] sm:$0xff]
    %v191 = vld [vmem:[#allocation4] sm:$0xff]
    %v192 = vld [vmem:[#allocation4 + $0x8] sm:$0xff]
    %v193 = vld [vmem:[#allocation4 + $0x10] sm:$0xff]
    %v194 = vld [vmem:[#allocation4 + $0x18] sm:$0xff]
    %v195 = vld [vmem:[#allocation4 + $0x20] sm:$0x3]
    %v196 = vld [vmem:[#allocation6] sm:$0x1]
    %v198 = vlaneseq
    %v199 = vshrl.u32 %v198, 7
    %v200 = vsub.s32 0, %v199
    %v201 = vrot.slane %v196, %v200
    %vm203 = vcmask 277504
    %v205 = vsel %vm203, %v190, 0
    %vm207 = vcmask 1041408
    %v209 = vsel %vm207, %v195, 0
    %211 = vmatprep.subr.mxu0 0.0
    %212 = vmatpush1.msra.mxu0 %v191
    %213 = vmatprep.subr.mxu0 0.0
    %214 = vmatpush1.msra.mxu0 %v192
    %215 = vmatprep.subr.mxu0 0.0
    %216 = vmatpush1.msra.mxu0 %v193
    %217 = vmatprep.subr.mxu0 0.0
    %218 = vmatpush1.msra.mxu0 %v194
    %219 = vmatprep.subr.mxu0 0.0
    %220 = vmatpush1.msra.mxu0 %v209
    %221 = vmatprep.subr.mxu0 0.0
    %222 = vmatpush1.msra.mxu0 0.0
    %223 = vmatprep.subr.mxu0 0.0
    %224 = vmatpush1.msra.mxu0 0.0
    %225 = vmatprep.subr.mxu0 0.0
    %226 = vmatpush1.msra.mxu0 0.0
    %227 = vmatprep.subr.mxu0 0.0
    %228 = vmatpush1.msra.mxu0 0.0
    %229 = vmatprep.subr.mxu0 0.0
    %230 = vmatpush1.msra.mxu0 0.0
    %231 = vmatprep.subr.mxu0 0.0
    %232 = vmatpush1.msra.mxu0 0.0
    %233 = vmatprep.subr.mxu0 0.0
    %234 = vmatpush1.msra.mxu0 0.0
    %235 = vmatprep.subr.mxu0 0.0
    %236 = vmatpush1.msra.mxu0 0.0
    %237 = vmatprep.subr.mxu0 0.0
    %238 = vmatpush1.msra.mxu0 0.0
    %239 = vmatprep.subr.mxu0 0.0
    %240 = vmatpush1.msra.mxu0 0.0
    %241 = vmatprep.subr.mxu0 0.0
    %242 = vmatpush1.msra.mxu0 0.0
    %243 = vmatprep.subr.mxu0 0.0
    %244 = vmatpush1.msra.mxu0 0.0
    %245 = vmatprep.subr.mxu0 0.0
    %246 = vmatpush1.msra.mxu0 0.0
    %247 = vmatprep.subr.mxu0 0.0
    %248 = vmatpush1.msra.mxu0 0.0
    %249 = vmatprep.subr.mxu0 0.0
    %250 = vmatpush1.msra.mxu0 0.0
    %251 = vmatprep.subr.mxu0 0.0
    %252 = vmatpush1.msra.mxu0 0.0
    %253 = vmatprep.subr.mxu0 0.0
    %254 = vmatpush1.msra.mxu0 0.0
    %255 = vmatprep.subr.mxu0 0.0
    %256 = vmatpush1.msra.mxu0 0.0
    %257 = vmatprep.subr.mxu0 0.0
    %258 = vmatpush1.msra.mxu0 0.0
    %259 = vmatprep.subr.mxu0 0.0
    %260 = vmatpush1.msra.mxu0 0.0
    %261 = vmatprep.subr.mxu0 0.0
    %262 = vmatpush1.msra.mxu0 0.0
    %263 = vmatprep.subr.mxu0 0.0
    %264 = vmatpush1.msra.mxu0 0.0
    %265 = vmatprep.subr.mxu0 0.0
    %266 = vmatpush1.msra.mxu0 0.0
    %267 = vmatprep.subr.mxu0 0.0
    %268 = vmatpush1.msra.mxu0 0.0
    %269 = vmatprep.subr.mxu0 0.0
    %270 = vmatpush1.msra.mxu0 0.0
    %271 = vmatprep.subr.mxu0 0.0
    %272 = vmatpush1.msra.mxu0 0.0
    %273 = vmatprep.subr.mxu0 0.0
    %274 = vmatpush1.msra.mxu0 0.0
    %275 = vmatprep.mubr.f32.mxu0 0.0
    %276 = vmatmul.mubr.f32.gmra.mrb[0].mxu0 %v205
    %v277 = vpop.f32.mrb[0].mxu0
    %v278 = vadd.f32 %v201, %v277
    %v279 = vpop.f32.mrb[0].mxu0
    %280 = vdwg.mxu0
    %v281 = vld [vmem:[#allocation7] sm:$0xff]
    %v282 = vld [vmem:[#allocation7 + $0x8] sm:$0xff]
    %v283 = vld [vmem:[#allocation7 + $0x10] sm:$0xff]
    %v284 = vld [vmem:[#allocation7 + $0x18] sm:$0xff]
    %v285 = vld [vmem:[#allocation7 + $0x20] sm:$0xff]
    %v286 = vld [vmem:[#allocation7 + $0x28] sm:$0xff]
    %v287 = vld [vmem:[#allocation7 + $0x30] sm:$0xff]
    %v288 = vld [vmem:[#allocation7 + $0x38] sm:$0xff]
    %v289 = vld [vmem:[#allocation7 + $0x40] sm:$0xff]
    %v290 = vld [vmem:[#allocation7 + $0x48] sm:$0xff]
    %v291 = vld [vmem:[#allocation7 + $0x50] sm:$0xff]
    %v292 = vld [vmem:[#allocation7 + $0x58] sm:$0xff]
    %v293 = vld [vmem:[#allocation7 + $0x60] sm:$0xff]
    %v294 = vld [vmem:[#allocation7 + $0x68] sm:$0xff]
    %v295 = vld [vmem:[#allocation7 + $0x70] sm:$0xff]
    %v296 = vld [vmem:[#allocation7 + $0x78] sm:$0xff]
    %v297 = vld [vmem:[#allocation10] sm:$0x3]
    %v299 = vlaneseq
    %v300 = vshrl.u32 %v299, 7
    %v301 = vsub.s32 0, %v300
    %v302 = vrot.slane %v297, %v301
    %v303 = vlaneseq
    %v304 = vshrl.u32 %v303, 7
    %v305 = vsub.s32 1, %v304
    %v306 = vrot.slane %v297, %v305
    %vm309 = vcmask 523264
    %v311 = vsel %vm309, %v278, 0
    %313 = vmatprep.subr.mxu0 %v282
    %314 = vmatpush1.msra.mxu0 %v281
    %315 = vmatprep.subr.mxu0 %v284
    %316 = vmatpush1.msra.mxu0 %v283
    %317 = vmatprep.subr.mxu0 %v286
    %318 = vmatpush1.msra.mxu0 %v285
    %319 = vmatprep.subr.mxu0 %v288
    %320 = vmatpush1.msra.mxu0 %v287
    %321 = vmatprep.subr.mxu0 %v290
    %322 = vmatpush1.msra.mxu0 %v289
    %323 = vmatprep.subr.mxu0 %v292
    %324 = vmatpush1.msra.mxu0 %v291
    %325 = vmatprep.subr.mxu0 %v294
    %326 = vmatpush1.msra.mxu0 %v293
    %327 = vmatprep.subr.mxu0 %v296
    %328 = vmatpush1.msra.mxu0 %v295
    %329 = vmatprep.subr.mxu0 0.0
    %330 = vmatpush1.msra.mxu0 0.0
    %331 = vmatprep.subr.mxu0 0.0
    %332 = vmatpush1.msra.mxu0 0.0
    %333 = vmatprep.subr.mxu0 0.0
    %334 = vmatpush1.msra.mxu0 0.0
    %335 = vmatprep.subr.mxu0 0.0
    %336 = vmatpush1.msra.mxu0 0.0
    %337 = vmatprep.subr.mxu0 0.0
    %338 = vmatpush1.msra.mxu0 0.0
    %339 = vmatprep.subr.mxu0 0.0
    %340 = vmatpush1.msra.mxu0 0.0
    %341 = vmatprep.subr.mxu0 0.0
    %342 = vmatpush1.msra.mxu0 0.0
    %343 = vmatprep.subr.mxu0 0.0
    %344 = vmatpush1.msra.mxu0 0.0
    %345 = vmatprep.subr.mxu0 0.0
    %346 = vmatpush1.msra.mxu0 0.0
    %347 = vmatprep.subr.mxu0 0.0
    %348 = vmatpush1.msra.mxu0 0.0
    %349 = vmatprep.subr.mxu0 0.0
    %350 = vmatpush1.msra.mxu0 0.0
    %351 = vmatprep.subr.mxu0 0.0
    %352 = vmatpush1.msra.mxu0 0.0
    %353 = vmatprep.subr.mxu0 0.0
    %354 = vmatpush1.msra.mxu0 0.0
    %355 = vmatprep.subr.mxu0 0.0
    %356 = vmatpush1.msra.mxu0 0.0
    %357 = vmatprep.subr.mxu0 0.0
    %358 = vmatpush1.msra.mxu0 0.0
    %359 = vmatprep.subr.mxu0 0.0
    %360 = vmatpush1.msra.mxu0 0.0
    %361 = vmatprep.subr.mxu0 0.0
    %362 = vmatpush1.msra.mxu0 0.0
    %363 = vmatprep.subr.mxu0 0.0
    %364 = vmatpush1.msra.mxu0 0.0
    %365 = vmatprep.subr.mxu0 0.0
    %366 = vmatpush1.msra.mxu0 0.0
    %367 = vmatprep.subr.mxu0 0.0
    %368 = vmatpush1.msra.mxu0 0.0
    %369 = vmatprep.subr.mxu0 0.0
    %370 = vmatpush1.msra.mxu0 0.0
    %371 = vmatprep.subr.mxu0 0.0
    %372 = vmatpush1.msra.mxu0 0.0
    %373 = vmatprep.subr.mxu0 0.0
    %374 = vmatpush1.msra.mxu0 0.0
    %375 = vmatprep.subr.mxu0 0.0
    %376 = vmatpush1.msra.mxu0 0.0
    %377 = vmatprep.mubr.f32.mxu0 0.0
    %378 = vmatmul.mubr.f32.gmra.mrb[0].mxu0 %v311
    %v379 = vpop.f32.mrb[0].mxu0
    %v380 = vadd.f32 %v302, %v379
    %v381 = vpop.f32.mrb[0].mxu0
    %v382 = vadd.f32 %v306, %v381
    %383 = vdwg.mxu0
    %v384 = vld [vmem:[#allocation9] sm:$0xff]
    %v385 = vld [vmem:[#allocation9 + $0x8] sm:$0xff]
    %v386 = vld [vmem:[#allocation9 + $0x10] sm:$0xff]
    %v387 = vld [vmem:[#allocation9 + $0x18] sm:$0xff]
    %v388 = vld [vmem:[#allocation9 + $0x20] sm:$0xff]
    %v389 = vld [vmem:[#allocation9 + $0x28] sm:$0xff]
    %v390 = vld [vmem:[#allocation9 + $0x30] sm:$0xff]
    %v391 = vld [vmem:[#allocation9 + $0x38] sm:$0xff]
    %s392 = scalar_lea.vmem [#allocation9], 64
    %v393 = vld [vmem:[%s392] sm:$0xff]
    %v394 = vld [vmem:[%s392 + $0x8] sm:$0xff]
    %v395 = vld [vmem:[%s392 + $0x10] sm:$0xff]
    %v396 = vld [vmem:[%s392 + $0x18] sm:$0xff]
    %v397 = vld [vmem:[%s392 + $0x20] sm:$0xff]
    %v398 = vld [vmem:[%s392 + $0x28] sm:$0xff]
    %v399 = vld [vmem:[%s392 + $0x30] sm:$0xff]
    %v400 = vld [vmem:[%s392 + $0x38] sm:$0xff]
    %s401 = scalar_lea.vmem [#allocation9], 128
    %v402 = vld [vmem:[%s401] sm:$0xff]
    %v403 = vld [vmem:[%s401 + $0x8] sm:$0xff]
    %v404 = vld [vmem:[%s401 + $0x10] sm:$0xff]
    %v405 = vld [vmem:[%s401 + $0x18] sm:$0xff]
    %v406 = vld [vmem:[%s401 + $0x20] sm:$0xff]
    %v407 = vld [vmem:[%s401 + $0x28] sm:$0xff]
    %v408 = vld [vmem:[%s401 + $0x30] sm:$0xff]
    %v409 = vld [vmem:[%s401 + $0x38] sm:$0xff]
    %s410 = scalar_lea.vmem [#allocation9], 192
    %v411 = vld [vmem:[%s410] sm:$0xff]
    %v412 = vld [vmem:[%s410 + $0x8] sm:$0xff]
    %v413 = vld [vmem:[%s410 + $0x10] sm:$0xff]
    %v414 = vld [vmem:[%s410 + $0x18] sm:$0xff]
    %v415 = vld [vmem:[%s410 + $0x20] sm:$0xff]
    %v416 = vld [vmem:[%s410 + $0x28] sm:$0xff]
    %v417 = vld [vmem:[%s410 + $0x30] sm:$0xff]
    %v418 = vld [vmem:[%s410 + $0x38] sm:$0xff]
    %v420 = vsel %vm309, 0.0, 0
    %422 = vmatprep.subr.mxu0 0.0
    %423 = vmatpush1.msra.mxu0 %v384
    %424 = vmatprep.subr.mxu0 0.0
    %425 = vmatpush1.msra.mxu0 %v385
    %426 = vmatprep.subr.mxu0 0.0
    %427 = vmatpush1.msra.mxu0 %v386
    %428 = vmatprep.subr.mxu0 0.0
    %429 = vmatpush1.msra.mxu0 %v387
    %430 = vmatprep.subr.mxu0 0.0
    %431 = vmatpush1.msra.mxu0 %v388
    %432 = vmatprep.subr.mxu0 0.0
    %433 = vmatpush1.msra.mxu0 %v389
    %434 = vmatprep.subr.mxu0 0.0
    %435 = vmatpush1.msra.mxu0 %v390
    %436 = vmatprep.subr.mxu0 0.0
    %437 = vmatpush1.msra.mxu0 %v391
    %438 = vmatprep.subr.mxu0 0.0
    %439 = vmatpush1.msra.mxu0 0.0
    %440 = vmatprep.subr.mxu0 0.0
    %441 = vmatpush1.msra.mxu0 0.0
    %442 = vmatprep.subr.mxu0 0.0
    %443 = vmatpush1.msra.mxu0 0.0
    %444 = vmatprep.subr.mxu0 0.0
    %445 = vmatpush1.msra.mxu0 0.0
    %446 = vmatprep.subr.mxu0 0.0
    %447 = vmatpush1.msra.mxu0 0.0
    %448 = vmatprep.subr.mxu0 0.0
    %449 = vmatpush1.msra.mxu0 0.0
    %450 = vmatprep.subr.mxu0 0.0
    %451 = vmatpush1.msra.mxu0 0.0
    %452 = vmatprep.subr.mxu0 0.0
    %453 = vmatpush1.msra.mxu0 0.0
    %454 = vmatprep.subr.mxu0 0.0
    %455 = vmatpush1.msra.mxu0 0.0
    %456 = vmatprep.subr.mxu0 0.0
    %457 = vmatpush1.msra.mxu0 0.0
    %458 = vmatprep.subr.mxu0 0.0
    %459 = vmatpush1.msra.mxu0 0.0
    %460 = vmatprep.subr.mxu0 0.0
    %461 = vmatpush1.msra.mxu0 0.0
    %462 = vmatprep.subr.mxu0 0.0
    %463 = vmatpush1.msra.mxu0 0.0
    %464 = vmatprep.subr.mxu0 0.0
    %465 = vmatpush1.msra.mxu0 0.0
    %466 = vmatprep.subr.mxu0 0.0
    %467 = vmatpush1.msra.mxu0 0.0
    %468 = vmatprep.subr.mxu0 0.0
    %469 = vmatpush1.msra.mxu0 0.0
    %470 = vmatprep.subr.mxu0 0.0
    %471 = vmatpush1.msra.mxu0 0.0
    %472 = vmatprep.subr.mxu0 0.0
    %473 = vmatpush1.msra.mxu0 0.0
    %474 = vmatprep.subr.mxu0 0.0
    %475 = vmatpush1.msra.mxu0 0.0
    %476 = vmatprep.subr.mxu0 0.0
    %477 = vmatpush1.msra.mxu0 0.0
    %478 = vmatprep.subr.mxu0 0.0
    %479 = vmatpush1.msra.mxu0 0.0
    %480 = vmatprep.subr.mxu0 0.0
    %481 = vmatpush1.msra.mxu0 0.0
    %482 = vmatprep.subr.mxu0 0.0
    %483 = vmatpush1.msra.mxu0 0.0
    %484 = vmatprep.subr.mxu0 0.0
    %485 = vmatpush1.msra.mxu0 0.0
    %486 = vmatprep.mubr.f32.mxu0 0.0
    %487 = vmatmul.mubr.f32.gmra.mrb[0].mxu0 %v420
    %v488 = vpop.f32.mrb[0].mxu0
    %v489 = vadd.f32 0.0, %v488
    %v490 = vpop.f32.mrb[0].mxu0
    %491 = vdwg.mxu0
    %v492 = vadd.f32 %v380, %v489
    %493 = vmatprep.subr.mxu0 0.0
    %494 = vmatpush1.msra.mxu0 %v393
    %495 = vmatprep.subr.mxu0 0.0
    %496 = vmatpush1.msra.mxu0 %v394
    %497 = vmatprep.subr.mxu0 0.0
    %498 = vmatpush1.msra.mxu0 %v395
    %499 = vmatprep.subr.mxu0 0.0
    %500 = vmatpush1.msra.mxu0 %v396
    %501 = vmatprep.subr.mxu0 0.0
    %502 = vmatpush1.msra.mxu0 %v397
    %503 = vmatprep.subr.mxu0 0.0
    %504 = vmatpush1.msra.mxu0 %v398
    %505 = vmatprep.subr.mxu0 0.0
    %506 = vmatpush1.msra.mxu0 %v399
    %507 = vmatprep.subr.mxu0 0.0
    %508 = vmatpush1.msra.mxu0 %v400
    %509 = vmatprep.subr.mxu0 0.0
    %510 = vmatpush1.msra.mxu0 0.0
    %511 = vmatprep.subr.mxu0 0.0
    %512 = vmatpush1.msra.mxu0 0.0
    %513 = vmatprep.subr.mxu0 0.0
    %514 = vmatpush1.msra.mxu0 0.0
    %515 = vmatprep.subr.mxu0 0.0
    %516 = vmatpush1.msra.mxu0 0.0
    %517 = vmatprep.subr.mxu0 0.0
    %518 = vmatpush1.msra.mxu0 0.0
    %519 = vmatprep.subr.mxu0 0.0
    %520 = vmatpush1.msra.mxu0 0.0
    %521 = vmatprep.subr.mxu0 0.0
    %522 = vmatpush1.msra.mxu0 0.0
    %523 = vmatprep.subr.mxu0 0.0
    %524 = vmatpush1.msra.mxu0 0.0
    %525 = vmatprep.subr.mxu0 0.0
    %526 = vmatpush1.msra.mxu0 0.0
    %527 = vmatprep.subr.mxu0 0.0
    %528 = vmatpush1.msra.mxu0 0.0
    %529 = vmatprep.subr.mxu0 0.0
    %530 = vmatpush1.msra.mxu0 0.0
    %531 = vmatprep.subr.mxu0 0.0
    %532 = vmatpush1.msra.mxu0 0.0
    %533 = vmatprep.subr.mxu0 0.0
    %534 = vmatpush1.msra.mxu0 0.0
    %535 = vmatprep.subr.mxu0 0.0
    %536 = vmatpush1.msra.mxu0 0.0
    %537 = vmatprep.subr.mxu0 0.0
    %538 = vmatpush1.msra.mxu0 0.0
    %539 = vmatprep.subr.mxu0 0.0
    %540 = vmatpush1.msra.mxu0 0.0
    %541 = vmatprep.subr.mxu0 0.0
    %542 = vmatpush1.msra.mxu0 0.0
    %543 = vmatprep.subr.mxu0 0.0
    %544 = vmatpush1.msra.mxu0 0.0
    %545 = vmatprep.subr.mxu0 0.0
    %546 = vmatpush1.msra.mxu0 0.0
    %547 = vmatprep.subr.mxu0 0.0
    %548 = vmatpush1.msra.mxu0 0.0
    %549 = vmatprep.subr.mxu0 0.0
    %550 = vmatpush1.msra.mxu0 0.0
    %551 = vmatprep.subr.mxu0 0.0
    %552 = vmatpush1.msra.mxu0 0.0
    %553 = vmatprep.subr.mxu0 0.0
    %554 = vmatpush1.msra.mxu0 0.0
    %555 = vmatprep.subr.mxu0 0.0
    %556 = vmatpush1.msra.mxu0 0.0
    %557 = vmatprep.mubr.f32.mxu0 0.0
    %558 = vmatmul.mubr.f32.gmra.mrb[0].mxu0 %v420
    %v559 = vpop.f32.mrb[0].mxu0
    %v560 = vadd.f32 0.0, %v559
    %v561 = vpop.f32.mrb[0].mxu0
    %562 = vdwg.mxu0
    %564 = vrot.lane.b32.xlu0 %v560, 64
    %v565 = vpop.permute.xlu0 %564
    %v567 = vadd.f32 %v380, %v565
    %568 = vmatprep.subr.mxu0 0.0
    %569 = vmatpush1.msra.mxu0 %v402
    %570 = vmatprep.subr.mxu0 0.0
    %571 = vmatpush1.msra.mxu0 %v403
    %572 = vmatprep.subr.mxu0 0.0
    %573 = vmatpush1.msra.mxu0 %v404
    %574 = vmatprep.subr.mxu0 0.0
    %575 = vmatpush1.msra.mxu0 %v405
    %576 = vmatprep.subr.mxu0 0.0
    %577 = vmatpush1.msra.mxu0 %v406
    %578 = vmatprep.subr.mxu0 0.0
    %579 = vmatpush1.msra.mxu0 %v407
    %580 = vmatprep.subr.mxu0 0.0
    %581 = vmatpush1.msra.mxu0 %v408
    %582 = vmatprep.subr.mxu0 0.0
    %583 = vmatpush1.msra.mxu0 %v409
    %584 = vmatprep.subr.mxu0 0.0
    %585 = vmatpush1.msra.mxu0 0.0
    %586 = vmatprep.subr.mxu0 0.0
    %587 = vmatpush1.msra.mxu0 0.0
    %588 = vmatprep.subr.mxu0 0.0
    %589 = vmatpush1.msra.mxu0 0.0
    %590 = vmatprep.subr.mxu0 0.0
    %591 = vmatpush1.msra.mxu0 0.0
    %592 = vmatprep.subr.mxu0 0.0
    %593 = vmatpush1.msra.mxu0 0.0
    %594 = vmatprep.subr.mxu0 0.0
    %595 = vmatpush1.msra.mxu0 0.0
    %596 = vmatprep.subr.mxu0 0.0
    %597 = vmatpush1.msra.mxu0 0.0
    %598 = vmatprep.subr.mxu0 0.0
    %599 = vmatpush1.msra.mxu0 0.0
    %600 = vmatprep.subr.mxu0 0.0
    %601 = vmatpush1.msra.mxu0 0.0
    %602 = vmatprep.subr.mxu0 0.0
    %603 = vmatpush1.msra.mxu0 0.0
    %604 = vmatprep.subr.mxu0 0.0
    %605 = vmatpush1.msra.mxu0 0.0
    %606 = vmatprep.subr.mxu0 0.0
    %607 = vmatpush1.msra.mxu0 0.0
    %608 = vmatprep.subr.mxu0 0.0
    %609 = vmatpush1.msra.mxu0 0.0
    %610 = vmatprep.subr.mxu0 0.0
    %611 = vmatpush1.msra.mxu0 0.0
    %612 = vmatprep.subr.mxu0 0.0
    %613 = vmatpush1.msra.mxu0 0.0
    %614 = vmatprep.subr.mxu0 0.0
    %615 = vmatpush1.msra.mxu0 0.0
    %616 = vmatprep.subr.mxu0 0.0
    %617 = vmatpush1.msra.mxu0 0.0
    %618 = vmatprep.subr.mxu0 0.0
    %619 = vmatpush1.msra.mxu0 0.0
    %620 = vmatprep.subr.mxu0 0.0
    %621 = vmatpush1.msra.mxu0 0.0
    %622 = vmatprep.subr.mxu0 0.0
    %623 = vmatpush1.msra.mxu0 0.0
    %624 = vmatprep.subr.mxu0 0.0
    %625 = vmatpush1.msra.mxu0 0.0
    %626 = vmatprep.subr.mxu0 0.0
    %627 = vmatpush1.msra.mxu0 0.0
    %628 = vmatprep.subr.mxu0 0.0
    %629 = vmatpush1.msra.mxu0 0.0
    %630 = vmatprep.subr.mxu0 0.0
    %631 = vmatpush1.msra.mxu0 0.0
    %632 = vmatprep.mubr.f32.mxu0 0.0
    %633 = vmatmul.mubr.f32.gmra.mrb[0].mxu0 %v420
    %v634 = vpop.f32.mrb[0].mxu0
    %v635 = vadd.f32 0.0, %v634
    %v636 = vpop.f32.mrb[0].mxu0
    %637 = vdwg.mxu0
    %v638 = vadd.f32 %v382, %v635
    %639 = vmatprep.subr.mxu0 0.0
    %640 = vmatpush1.msra.mxu0 %v411
    %641 = vmatprep.subr.mxu0 0.0
    %642 = vmatpush1.msra.mxu0 %v412
    %643 = vmatprep.subr.mxu0 0.0
    %644 = vmatpush1.msra.mxu0 %v413
    %645 = vmatprep.subr.mxu0 0.0
    %646 = vmatpush1.msra.mxu0 %v414
    %647 = vmatprep.subr.mxu0 0.0
    %648 = vmatpush1.msra.mxu0 %v415
    %649 = vmatprep.subr.mxu0 0.0
    %650 = vmatpush1.msra.mxu0 %v416
    %651 = vmatprep.subr.mxu0 0.0
    %652 = vmatpush1.msra.mxu0 %v417
    %653 = vmatprep.subr.mxu0 0.0
    %654 = vmatpush1.msra.mxu0 %v418
    %655 = vmatprep.subr.mxu0 0.0
    %656 = vmatpush1.msra.mxu0 0.0
    %657 = vmatprep.subr.mxu0 0.0
    %658 = vmatpush1.msra.mxu0 0.0
    %659 = vmatprep.subr.mxu0 0.0
    %660 = vmatpush1.msra.mxu0 0.0
    %661 = vmatprep.subr.mxu0 0.0
    %662 = vmatpush1.msra.mxu0 0.0
    %663 = vmatprep.subr.mxu0 0.0
    %664 = vmatpush1.msra.mxu0 0.0
    %665 = vmatprep.subr.mxu0 0.0
    %666 = vmatpush1.msra.mxu0 0.0
    %667 = vmatprep.subr.mxu0 0.0
    %668 = vmatpush1.msra.mxu0 0.0
    %669 = vmatprep.subr.mxu0 0.0
    %670 = vmatpush1.msra.mxu0 0.0
    %671 = vmatprep.subr.mxu0 0.0
    %672 = vmatpush1.msra.mxu0 0.0
    %673 = vmatprep.subr.mxu0 0.0
    %674 = vmatpush1.msra.mxu0 0.0
    %675 = vmatprep.subr.mxu0 0.0
    %676 = vmatpush1.msra.mxu0 0.0
    %677 = vmatprep.subr.mxu0 0.0
    %678 = vmatpush1.msra.mxu0 0.0
    %679 = vmatprep.subr.mxu0 0.0
    %680 = vmatpush1.msra.mxu0 0.0
    %681 = vmatprep.subr.mxu0 0.0
    %682 = vmatpush1.msra.mxu0 0.0
    %683 = vmatprep.subr.mxu0 0.0
    %684 = vmatpush1.msra.mxu0 0.0
    %685 = vmatprep.subr.mxu0 0.0
    %686 = vmatpush1.msra.mxu0 0.0
    %687 = vmatprep.subr.mxu0 0.0
    %688 = vmatpush1.msra.mxu0 0.0
    %689 = vmatprep.subr.mxu0 0.0
    %690 = vmatpush1.msra.mxu0 0.0
    %691 = vmatprep.subr.mxu0 0.0
    %692 = vmatpush1.msra.mxu0 0.0
    %693 = vmatprep.subr.mxu0 0.0
    %694 = vmatpush1.msra.mxu0 0.0
    %695 = vmatprep.subr.mxu0 0.0
    %696 = vmatpush1.msra.mxu0 0.0
    %697 = vmatprep.subr.mxu0 0.0
    %698 = vmatpush1.msra.mxu0 0.0
    %699 = vmatprep.subr.mxu0 0.0
    %700 = vmatpush1.msra.mxu0 0.0
    %701 = vmatprep.subr.mxu0 0.0
    %702 = vmatpush1.msra.mxu0 0.0
    %703 = vmatprep.mubr.f32.mxu0 0.0
    %704 = vmatmul.mubr.f32.gmra.mrb[0].mxu0 %v420
    %v705 = vpop.f32.mrb[0].mxu0
    %v706 = vadd.f32 0.0, %v705
    %v707 = vpop.f32.mrb[0].mxu0
    %708 = vdwg.mxu0
    %710 = vrot.lane.b32.xlu0 %v706, 64
    %v711 = vpop.permute.xlu0 %710
    %v713 = vadd.f32 %v382, %v711
    %v714 = vxor.u32 %v567, 2147483648
    %v715 = vmul.f32 %v714, 1.442695
    %v716 = vpow.pop %v715
    %v717 = vadd.f32 %v716, 1.0
    %v718 = vrcp.pop %v717
    %v719 = vmul.f32 1.0, %v718
    %v720 = vmul.f32 %v719, 0.0
    %v721 = vxor.u32 %v492, 2147483648
    %v722 = vmul.f32 %v721, 1.442695
    %v723 = vpow.pop %v722
    %v724 = vadd.f32 %v723, 1.0
    %v725 = vrcp.pop %v724
    %v726 = vmul.f32 1.0, %v725
    %v727 = vtanh.pop %v638
    %v728 = vmul.f32 %v726, %v727
    %730 = vrot.lane.b32.xlu0 %v728, 64
    %v731 = vpop.permute.xlu0 %730
    %v733 = vadd.f32 %v720, %v731
    %v734 = vxor.u32 %v713, 2147483648
    %v735 = vmul.f32 %v734, 1.442695
    %v736 = vpow.pop %v735
    %v737 = vadd.f32 %v736, 1.0
    %v738 = vrcp.pop %v737
    %v739 = vmul.f32 1.0, %v738
    %v740 = vtanh.pop %v733
    %v741 = vmul.f32 %v739, %v740
    %743 = vrot.lane.b32.xlu0 %v741, 64
    %v744 = vpop.permute.xlu0 %743
    %v745 = vsel %vm309, %v744, 0
    %747 = vmatprep.subr.mxu0 0.0
    %748 = vmatpush1.msra.mxu0 %v384
    %749 = vmatprep.subr.mxu0 0.0
    %750 = vmatpush1.msra.mxu0 %v385
    %751 = vmatprep.subr.mxu0 0.0
    %752 = vmatpush1.msra.mxu0 %v386
    %753 = vmatprep.subr.mxu0 0.0
    %754 = vmatpush1.msra.mxu0 %v387
    %755 = vmatprep.subr.mxu0 0.0
    %756 = vmatpush1.msra.mxu0 %v388
    %757 = vmatprep.subr.mxu0 0.0
    %758 = vmatpush1.msra.mxu0 %v389
    %759 = vmatprep.subr.mxu0 0.0
    %760 = vmatpush1.msra.mxu0 %v390
    %761 = vmatprep.subr.mxu0 0.0
    %762 = vmatpush1.msra.mxu0 %v391
    %763 = vmatprep.subr.mxu0 0.0
    %764 = vmatpush1.msra.mxu0 0.0
    %765 = vmatprep.subr.mxu0 0.0
    %766 = vmatpush1.msra.mxu0 0.0
    %767 = vmatprep.subr.mxu0 0.0
    %768 = vmatpush1.msra.mxu0 0.0
    %769 = vmatprep.subr.mxu0 0.0
    %770 = vmatpush1.msra.mxu0 0.0
    %771 = vmatprep.subr.mxu0 0.0
    %772 = vmatpush1.msra.mxu0 0.0
    %773 = vmatprep.subr.mxu0 0.0
    %774 = vmatpush1.msra.mxu0 0.0
    %775 = vmatprep.subr.mxu0 0.0
    %776 = vmatpush1.msra.mxu0 0.0
    %777 = vmatprep.subr.mxu0 0.0
    %778 = vmatpush1.msra.mxu0 0.0
    %779 = vmatprep.subr.mxu0 0.0
    %780 = vmatpush1.msra.mxu0 0.0
    %781 = vmatprep.subr.mxu0 0.0
    %782 = vmatpush1.msra.mxu0 0.0
    %783 = vmatprep.subr.mxu0 0.0
    %784 = vmatpush1.msra.mxu0 0.0
    %785 = vmatprep.subr.mxu0 0.0
    %786 = vmatpush1.msra.mxu0 0.0
    %787 = vmatprep.subr.mxu0 0.0
    %788 = vmatpush1.msra.mxu0 0.0
    %789 = vmatprep.subr.mxu0 0.0
    %790 = vmatpush1.msra.mxu0 0.0
    %791 = vmatprep.subr.mxu0 0.0
    %792 = vmatpush1.msra.mxu0 0.0
    %793 = vmatprep.subr.mxu0 0.0
    %794 = vmatpush1.msra.mxu0 0.0
    %795 = vmatprep.subr.mxu0 0.0
    %796 = vmatpush1.msra.mxu0 0.0
    %797 = vmatprep.subr.mxu0 0.0
    %798 = vmatpush1.msra.mxu0 0.0
    %799 = vmatprep.subr.mxu0 0.0
    %800 = vmatpush1.msra.mxu0 0.0
    %801 = vmatprep.subr.mxu0 0.0
    %802 = vmatpush1.msra.mxu0 0.0
    %803 = vmatprep.subr.mxu0 0.0
    %804 = vmatpush1.msra.mxu0 0.0
    %805 = vmatprep.subr.mxu0 0.0
    %806 = vmatpush1.msra.mxu0 0.0
    %807 = vmatprep.subr.mxu0 0.0
    %808 = vmatpush1.msra.mxu0 0.0
    %809 = vmatprep.subr.mxu0 0.0
    %810 = vmatpush1.msra.mxu0 0.0
    %811 = vmatprep.mubr.f32.mxu0 0.0
    %812 = vmatmul.mubr.f32.gmra.mrb[0].mxu0 %v745
    %v813 = vpop.f32.mrb[0].mxu0
    %v814 = vadd.f32 0.0, %v813
    %v815 = vpop.f32.mrb[0].mxu0
    %816 = vdwg.mxu0
    %v818 = vrot.slane %v814, 7
    %v820 = vadd.f32 %v380, %v818
    %821 = vmatprep.subr.mxu0 0.0
    %822 = vmatpush1.msra.mxu0 %v393
    %823 = vmatprep.subr.mxu0 0.0
    %824 = vmatpush1.msra.mxu0 %v394
    %825 = vmatprep.subr.mxu0 0.0
    %826 = vmatpush1.msra.mxu0 %v395
    %827 = vmatprep.subr.mxu0 0.0
    %828 = vmatpush1.msra.mxu0 %v396
    %829 = vmatprep.subr.mxu0 0.0
    %830 = vmatpush1.msra.mxu0 %v397
    %831 = vmatprep.subr.mxu0 0.0
    %832 = vmatpush1.msra.mxu0 %v398
    %833 = vmatprep.subr.mxu0 0.0
    %834 = vmatpush1.msra.mxu0 %v399
    %835 = vmatprep.subr.mxu0 0.0
    %836 = vmatpush1.msra.mxu0 %v400
    %837 = vmatprep.subr.mxu0 0.0
    %838 = vmatpush1.msra.mxu0 0.0
    %839 = vmatprep.subr.mxu0 0.0
    %840 = vmatpush1.msra.mxu0 0.0
    %841 = vmatprep.subr.mxu0 0.0
    %842 = vmatpush1.msra.mxu0 0.0
    %843 = vmatprep.subr.mxu0 0.0
    %844 = vmatpush1.msra.mxu0 0.0
    %845 = vmatprep.subr.mxu0 0.0
    %846 = vmatpush1.msra.mxu0 0.0
    %847 = vmatprep.subr.mxu0 0.0
    %848 = vmatpush1.msra.mxu0 0.0
    %849 = vmatprep.subr.mxu0 0.0
    %850 = vmatpush1.msra.mxu0 0.0
    %851 = vmatprep.subr.mxu0 0.0
    %852 = vmatpush1.msra.mxu0 0.0
    %853 = vmatprep.subr.mxu0 0.0
    %854 = vmatpush1.msra.mxu0 0.0
    %855 = vmatprep.subr.mxu0 0.0
    %856 = vmatpush1.msra.mxu0 0.0
    %857 = vmatprep.subr.mxu0 0.0
    %858 = vmatpush1.msra.mxu0 0.0
    %859 = vmatprep.subr.mxu0 0.0
    %860 = vmatpush1.msra.mxu0 0.0
    %861 = vmatprep.subr.mxu0 0.0
    %862 = vmatpush1.msra.mxu0 0.0
    %863 = vmatprep.subr.mxu0 0.0
    %864 = vmatpush1.msra.mxu0 0.0
    %865 = vmatprep.subr.mxu0 0.0
    %866 = vmatpush1.msra.mxu0 0.0
    %867 = vmatprep.subr.mxu0 0.0
    %868 = vmatpush1.msra.mxu0 0.0
    %869 = vmatprep.subr.mxu0 0.0
    %870 = vmatpush1.msra.mxu0 0.0
    %871 = vmatprep.subr.mxu0 0.0
    %872 = vmatpush1.msra.mxu0 0.0
    %873 = vmatprep.subr.mxu0 0.0
    %874 = vmatpush1.msra.mxu0 0.0
    %875 = vmatprep.subr.mxu0 0.0
    %876 = vmatpush1.msra.mxu0 0.0
    %877 = vmatprep.subr.mxu0 0.0
    %878 = vmatpush1.msra.mxu0 0.0
    %879 = vmatprep.subr.mxu0 0.0
    %880 = vmatpush1.msra.mxu0 0.0
    %881 = vmatprep.subr.mxu0 0.0
    %882 = vmatpush1.msra.mxu0 0.0
    %883 = vmatprep.subr.mxu0 0.0
    %884 = vmatpush1.msra.mxu0 0.0
    %885 = vmatprep.mubr.f32.mxu0 0.0
    %886 = vmatmul.mubr.f32.gmra.mrb[0].mxu0 %v745
    %v887 = vpop.f32.mrb[0].mxu0
    %v888 = vadd.f32 0.0, %v887
    %v889 = vpop.f32.mrb[0].mxu0
    %890 = vdwg.mxu0
    %v892 = vrot.slane %v888, 7
    %893 = vrot.lane.b32.xlu0 %v892, 64
    %v894 = vpop.permute.xlu0 %893
    %v896 = vadd.f32 %v380, %v894
    %897 = vmatprep.subr.mxu0 0.0
    %898 = vmatpush1.msra.mxu0 %v402
    %899 = vmatprep.subr.mxu0 0.0
    %900 = vmatpush1.msra.mxu0 %v403
    %901 = vmatprep.subr.mxu0 0.0
    %902 = vmatpush1.msra.mxu0 %v404
    %903 = vmatprep.subr.mxu0 0.0
    %904 = vmatpush1.msra.mxu0 %v405
    %905 = vmatprep.subr.mxu0 0.0
    %906 = vmatpush1.msra.mxu0 %v406
    %907 = vmatprep.subr.mxu0 0.0
    %908 = vmatpush1.msra.mxu0 %v407
    %909 = vmatprep.subr.mxu0 0.0
    %910 = vmatpush1.msra.mxu0 %v408
    %911 = vmatprep.subr.mxu0 0.0
    %912 = vmatpush1.msra.mxu0 %v409
    %913 = vmatprep.subr.mxu0 0.0
    %914 = vmatpush1.msra.mxu0 0.0
    %915 = vmatprep.subr.mxu0 0.0
    %916 = vmatpush1.msra.mxu0 0.0
    %917 = vmatprep.subr.mxu0 0.0
    %918 = vmatpush1.msra.mxu0 0.0
    %919 = vmatprep.subr.mxu0 0.0
    %920 = vmatpush1.msra.mxu0 0.0
    %921 = vmatprep.subr.mxu0 0.0
    %922 = vmatpush1.msra.mxu0 0.0
    %923 = vmatprep.subr.mxu0 0.0
    %924 = vmatpush1.msra.mxu0 0.0
    %925 = vmatprep.subr.mxu0 0.0
    %926 = vmatpush1.msra.mxu0 0.0
    %927 = vmatprep.subr.mxu0 0.0
    %928 = vmatpush1.msra.mxu0 0.0
    %929 = vmatprep.subr.mxu0 0.0
    %930 = vmatpush1.msra.mxu0 0.0
    %931 = vmatprep.subr.mxu0 0.0
    %932 = vmatpush1.msra.mxu0 0.0
    %933 = vmatprep.subr.mxu0 0.0
    %934 = vmatpush1.msra.mxu0 0.0
    %935 = vmatprep.subr.mxu0 0.0
    %936 = vmatpush1.msra.mxu0 0.0
    %937 = vmatprep.subr.mxu0 0.0
    %938 = vmatpush1.msra.mxu0 0.0
    %939 = vmatprep.subr.mxu0 0.0
    %940 = vmatpush1.msra.mxu0 0.0
    %941 = vmatprep.subr.mxu0 0.0
    %942 = vmatpush1.msra.mxu0 0.0
    %943 = vmatprep.subr.mxu0 0.0
    %944 = vmatpush1.msra.mxu0 0.0
    %945 = vmatprep.subr.mxu0 0.0
    %946 = vmatpush1.msra.mxu0 0.0
    %947 = vmatprep.subr.mxu0 0.0
    %948 = vmatpush1.msra.mxu0 0.0
    %949 = vmatprep.subr.mxu0 0.0
    %950 = vmatpush1.msra.mxu0 0.0
    %951 = vmatprep.subr.mxu0 0.0
    %952 = vmatpush1.msra.mxu0 0.0
    %953 = vmatprep.subr.mxu0 0.0
    %954 = vmatpush1.msra.mxu0 0.0
    %955 = vmatprep.subr.mxu0 0.0
    %956 = vmatpush1.msra.mxu0 0.0
    %957 = vmatprep.subr.mxu0 0.0
    %958 = vmatpush1.msra.mxu0 0.0
    %959 = vmatprep.subr.mxu0 0.0
    %960 = vmatpush1.msra.mxu0 0.0
    %961 = vmatprep.mubr.f32.mxu0 0.0
    %962 = vmatmul.mubr.f32.gmra.mrb[0].mxu0 %v745
    %v963 = vpop.f32.mrb[0].mxu0
    %v964 = vadd.f32 0.0, %v963
    %v965 = vpop.f32.mrb[0].mxu0
    %966 = vdwg.mxu0
    %v968 = vrot.slane %v964, 7
    %v970 = vadd.f32 %v382, %v968
    %971 = vmatprep.subr.mxu0 0.0
    %972 = vmatpush1.msra.mxu0 %v411
    %973 = vmatprep.subr.mxu0 0.0
    %974 = vmatpush1.msra.mxu0 %v412
    %975 = vmatprep.subr.mxu0 0.0
    %976 = vmatpush1.msra.mxu0 %v413
    %977 = vmatprep.subr.mxu0 0.0
    %978 = vmatpush1.msra.mxu0 %v414
    %979 = vmatprep.subr.mxu0 0.0
    %980 = vmatpush1.msra.mxu0 %v415
    %981 = vmatprep.subr.mxu0 0.0
    %982 = vmatpush1.msra.mxu0 %v416
    %983 = vmatprep.subr.mxu0 0.0
    %984 = vmatpush1.msra.mxu0 %v417
    %985 = vmatprep.subr.mxu0 0.0
    %986 = vmatpush1.msra.mxu0 %v418
    %987 = vmatprep.subr.mxu0 0.0
    %988 = vmatpush1.msra.mxu0 0.0
    %989 = vmatprep.subr.mxu0 0.0
    %990 = vmatpush1.msra.mxu0 0.0
    %991 = vmatprep.subr.mxu0 0.0
    %992 = vmatpush1.msra.mxu0 0.0
    %993 = vmatprep.subr.mxu0 0.0
    %994 = vmatpush1.msra.mxu0 0.0
    %995 = vmatprep.subr.mxu0 0.0
    %996 = vmatpush1.msra.mxu0 0.0
    %997 = vmatprep.subr.mxu0 0.0
    %998 = vmatpush1.msra.mxu0 0.0
    %999 = vmatprep.subr.mxu0 0.0
    %1000 = vmatpush1.msra.mxu0 0.0
    %1001 = vmatprep.subr.mxu0 0.0
    %1002 = vmatpush1.msra.mxu0 0.0
    %1003 = vmatprep.subr.mxu0 0.0
    %1004 = vmatpush1.msra.mxu0 0.0
    %1005 = vmatprep.subr.mxu0 0.0
    %1006 = vmatpush1.msra.mxu0 0.0
    %1007 = vmatprep.subr.mxu0 0.0
    %1008 = vmatpush1.msra.mxu0 0.0
    %1009 = vmatprep.subr.mxu0 0.0
    %1010 = vmatpush1.msra.mxu0 0.0
    %1011 = vmatprep.subr.mxu0 0.0
    %1012 = vmatpush1.msra.mxu0 0.0
    %1013 = vmatprep.subr.mxu0 0.0
    %1014 = vmatpush1.msra.mxu0 0.0
    %1015 = vmatprep.subr.mxu0 0.0
    %1016 = vmatpush1.msra.mxu0 0.0
    %1017 = vmatprep.subr.mxu0 0.0
    %1018 = vmatpush1.msra.mxu0 0.0
    %1019 = vmatprep.subr.mxu0 0.0
    %1020 = vmatpush1.msra.mxu0 0.0
    %1021 = vmatprep.subr.mxu0 0.0
    %1022 = vmatpush1.msra.mxu0 0.0
    %1023 = vmatprep.subr.mxu0 0.0
    %1024 = vmatpush1.msra.mxu0 0.0
    %1025 = vmatprep.subr.mxu0 0.0
    %1026 = vmatpush1.msra.mxu0 0.0
    %1027 = vmatprep.subr.mxu0 0.0
    %1028 = vmatpush1.msra.mxu0 0.0
    %1029 = vmatprep.subr.mxu0 0.0
    %1030 = vmatpush1.msra.mxu0 0.0
    %1031 = vmatprep.subr.mxu0 0.0
    %1032 = vmatpush1.msra.mxu0 0.0
    %1033 = vmatprep.subr.mxu0 0.0
    %1034 = vmatpush1.msra.mxu0 0.0
    %1035 = vmatprep.mubr.f32.mxu0 0.0
    %1036 = vmatmul.mubr.f32.gmra.mrb[0].mxu0 %v745
    %v1037 = vpop.f32.mrb[0].mxu0
    %v1038 = vadd.f32 0.0, %v1037
    %v1039 = vpop.f32.mrb[0].mxu0
    %1040 = vdwg.mxu0
    %v1042 = vrot.slane %v1038, 7
    %1043 = vrot.lane.b32.xlu0 %v1042, 64
    %v1044 = vpop.permute.xlu0 %1043
    %v1046 = vadd.f32 %v382, %v1044
    %v1047 = vxor.u32 %v896, 2147483648
    %v1048 = vmul.f32 %v1047, 1.442695
    %v1049 = vpow.pop %v1048
    %v1050 = vadd.f32 %v1049, 1.0
    %v1051 = vrcp.pop %v1050
    %v1052 = vmul.f32 1.0, %v1051
    %v1054 = vrot.slane %v733, 7
    %v1056 = vmul.f32 %v1052, %v1054
    %v1057 = vxor.u32 %v820, 2147483648
    %v1058 = vmul.f32 %v1057, 1.442695
    %v1059 = vpow.pop %v1058
    %v1060 = vadd.f32 %v1059, 1.0
    %v1061 = vrcp.pop %v1060
    %v1062 = vmul.f32 1.0, %v1061
    %v1063 = vtanh.pop %v970
    %v1064 = vmul.f32 %v1062, %v1063
    %1066 = vrot.lane.b32.xlu0 %v1064, 64
    %v1067 = vpop.permute.xlu0 %1066
    %v1069 = vadd.f32 %v1056, %v1067
    %v1070 = vxor.u32 %v1046, 2147483648
    %v1071 = vmul.f32 %v1070, 1.442695
    %v1072 = vpow.pop %v1071
    %v1073 = vadd.f32 %v1072, 1.0
    %v1074 = vrcp.pop %v1073
    %v1075 = vmul.f32 1.0, %v1074
    %v1076 = vtanh.pop %v1069
    %v1077 = vmul.f32 %v1075, %v1076
    %v1079 = vrot.slane %v1077, 1
    %1080 = vrot.lane.b32.xlu0 %v1079, 64
    %v1081 = vpop.permute.xlu0 %1080
    %v1082 = vsel %vm309, %v1081, 0
    %1084 = vmatprep.subr.mxu0 0.0
    %1085 = vmatpush1.msra.mxu0 %v384
    %1086 = vmatprep.subr.mxu0 0.0
    %1087 = vmatpush1.msra.mxu0 %v385
    %1088 = vmatprep.subr.mxu0 0.0
    %1089 = vmatpush1.msra.mxu0 %v386
    %1090 = vmatprep.subr.mxu0 0.0
    %1091 = vmatpush1.msra.mxu0 %v387
    %1092 = vmatprep.subr.mxu0 0.0
    %1093 = vmatpush1.msra.mxu0 %v388
    %1094 = vmatprep.subr.mxu0 0.0
    %1095 = vmatpush1.msra.mxu0 %v389
    %1096 = vmatprep.subr.mxu0 0.0
    %1097 = vmatpush1.msra.mxu0 %v390
    %1098 = vmatprep.subr.mxu0 0.0
    %1099 = vmatpush1.msra.mxu0 %v391
    %1100 = vmatprep.subr.mxu0 0.0
    %1101 = vmatpush1.msra.mxu0 0.0
    %1102 = vmatprep.subr.mxu0 0.0
    %1103 = vmatpush1.msra.mxu0 0.0
    %1104 = vmatprep.subr.mxu0 0.0
    %1105 = vmatpush1.msra.mxu0 0.0
    %1106 = vmatprep.subr.mxu0 0.0
    %1107 = vmatpush1.msra.mxu0 0.0
    %1108 = vmatprep.subr.mxu0 0.0
    %1109 = vmatpush1.msra.mxu0 0.0
    %1110 = vmatprep.subr.mxu0 0.0
    %1111 = vmatpush1.msra.mxu0 0.0
    %1112 = vmatprep.subr.mxu0 0.0
    %1113 = vmatpush1.msra.mxu0 0.0
    %1114 = vmatprep.subr.mxu0 0.0
    %1115 = vmatpush1.msra.mxu0 0.0
    %1116 = vmatprep.subr.mxu0 0.0
    %1117 = vmatpush1.msra.mxu0 0.0
    %1118 = vmatprep.subr.mxu0 0.0
    %1119 = vmatpush1.msra.mxu0 0.0
    %1120 = vmatprep.subr.mxu0 0.0
    %1121 = vmatpush1.msra.mxu0 0.0
    %1122 = vmatprep.subr.mxu0 0.0
    %1123 = vmatpush1.msra.mxu0 0.0
    %1124 = vmatprep.subr.mxu0 0.0
    %1125 = vmatpush1.msra.mxu0 0.0
    %1126 = vmatprep.subr.mxu0 0.0
    %1127 = vmatpush1.msra.mxu0 0.0
    %1128 = vmatprep.subr.mxu0 0.0
    %1129 = vmatpush1.msra.mxu0 0.0
    %1130 = vmatprep.subr.mxu0 0.0
    %1131 = vmatpush1.msra.mxu0 0.0
    %1132 = vmatprep.subr.mxu0 0.0
    %1133 = vmatpush1.msra.mxu0 0.0
    %1134 = vmatprep.subr.mxu0 0.0
    %1135 = vmatpush1.msra.mxu0 0.0
    %1136 = vmatprep.subr.mxu0 0.0
    %1137 = vmatpush1.msra.mxu0 0.0
    %1138 = vmatprep.subr.mxu0 0.0
    %1139 = vmatpush1.msra.mxu0 0.0
    %1140 = vmatprep.subr.mxu0 0.0
    %1141 = vmatpush1.msra.mxu0 0.0
    %1142 = vmatprep.subr.mxu0 0.0
    %1143 = vmatpush1.msra.mxu0 0.0
    %1144 = vmatprep.subr.mxu0 0.0
    %1145 = vmatpush1.msra.mxu0 0.0
    %1146 = vmatprep.subr.mxu0 0.0
    %1147 = vmatpush1.msra.mxu0 0.0
    %1148 = vmatprep.mubr.f32.mxu0 0.0
    %1149 = vmatmul.mubr.f32.gmra.mrb[0].mxu0 %v1082
    %v1150 = vpop.f32.mrb[0].mxu0
    %v1151 = vadd.f32 0.0, %v1150
    %v1152 = vpop.f32.mrb[0].mxu0
    %1153 = vdwg.mxu0
    %v1155 = vrot.slane %v1151, 6
    %v1157 = vadd.f32 %v380, %v1155
    %1158 = vmatprep.subr.mxu0 0.0
    %1159 = vmatpush1.msra.mxu0 %v393
    %1160 = vmatprep.subr.mxu0 0.0
    %1161 = vmatpush1.msra.mxu0 %v394
    %1162 = vmatprep.subr.mxu0 0.0
    %1163 = vmatpush1.msra.mxu0 %v395
    %1164 = vmatprep.subr.mxu0 0.0
    %1165 = vmatpush1.msra.mxu0 %v396
    %1166 = vmatprep.subr.mxu0 0.0
    %1167 = vmatpush1.msra.mxu0 %v397
    %1168 = vmatprep.subr.mxu0 0.0
    %1169 = vmatpush1.msra.mxu0 %v398
    %1170 = vmatprep.subr.mxu0 0.0
    %1171 = vmatpush1.msra.mxu0 %v399
    %1172 = vmatprep.subr.mxu0 0.0
    %1173 = vmatpush1.msra.mxu0 %v400
    %1174 = vmatprep.subr.mxu0 0.0
    %1175 = vmatpush1.msra.mxu0 0.0
    %1176 = vmatprep.subr.mxu0 0.0
    %1177 = vmatpush1.msra.mxu0 0.0
    %1178 = vmatprep.subr.mxu0 0.0
    %1179 = vmatpush1.msra.mxu0 0.0
    %1180 = vmatprep.subr.mxu0 0.0
    %1181 = vmatpush1.msra.mxu0 0.0
    %1182 = vmatprep.subr.mxu0 0.0
    %1183 = vmatpush1.msra.mxu0 0.0
    %1184 = vmatprep.subr.mxu0 0.0
    %1185 = vmatpush1.msra.mxu0 0.0
    %1186 = vmatprep.subr.mxu0 0.0
    %1187 = vmatpush1.msra.mxu0 0.0
    %1188 = vmatprep.subr.mxu0 0.0
    %1189 = vmatpush1.msra.mxu0 0.0
    %1190 = vmatprep.subr.mxu0 0.0
    %1191 = vmatpush1.msra.mxu0 0.0
    %1192 = vmatprep.subr.mxu0 0.0
    %1193 = vmatpush1.msra.mxu0 0.0
    %1194 = vmatprep.subr.mxu0 0.0
    %1195 = vmatpush1.msra.mxu0 0.0
    %1196 = vmatprep.subr.mxu0 0.0
    %1197 = vmatpush1.msra.mxu0 0.0
    %1198 = vmatprep.subr.mxu0 0.0
    %1199 = vmatpush1.msra.mxu0 0.0
    %1200 = vmatprep.subr.mxu0 0.0
    %1201 = vmatpush1.msra.mxu0 0.0
    %1202 = vmatprep.subr.mxu0 0.0
    %1203 = vmatpush1.msra.mxu0 0.0
    %1204 = vmatprep.subr.mxu0 0.0
    %1205 = vmatpush1.msra.mxu0 0.0
    %1206 = vmatprep.subr.mxu0 0.0
    %1207 = vmatpush1.msra.mxu0 0.0
    %1208 = vmatprep.subr.mxu0 0.0
    %1209 = vmatpush1.msra.mxu0 0.0
    %1210 = vmatprep.subr.mxu0 0.0
    %1211 = vmatpush1.msra.mxu0 0.0
    %1212 = vmatprep.subr.mxu0 0.0
    %1213 = vmatpush1.msra.mxu0 0.0
    %1214 = vmatprep.subr.mxu0 0.0
    %1215 = vmatpush1.msra.mxu0 0.0
    %1216 = vmatprep.subr.mxu0 0.0
    %1217 = vmatpush1.msra.mxu0 0.0
    %1218 = vmatprep.subr.mxu0 0.0
    %1219 = vmatpush1.msra.mxu0 0.0
    %1220 = vmatprep.subr.mxu0 0.0
    %1221 = vmatpush1.msra.mxu0 0.0
    %1222 = vmatprep.mubr.f32.mxu0 0.0
    %1223 = vmatmul.mubr.f32.gmra.mrb[0].mxu0 %v1082
    %v1224 = vpop.f32.mrb[0].mxu0
    %v1225 = vadd.f32 0.0, %v1224
    %v1226 = vpop.f32.mrb[0].mxu0
    %1227 = vdwg.mxu0
    %v1229 = vrot.slane %v1225, 6
    %1230 = vrot.lane.b32.xlu0 %v1229, 64
    %v1231 = vpop.permute.xlu0 %1230
    %v1233 = vadd.f32 %v380, %v1231
    %1234 = vmatprep.subr.mxu0 0.0
    %1235 = vmatpush1.msra.mxu0 %v402
    %1236 = vmatprep.subr.mxu0 0.0
    %1237 = vmatpush1.msra.mxu0 %v403
    %1238 = vmatprep.subr.mxu0 0.0
    %1239 = vmatpush1.msra.mxu0 %v404
    %1240 = vmatprep.subr.mxu0 0.0
    %1241 = vmatpush1.msra.mxu0 %v405
    %1242 = vmatprep.subr.mxu0 0.0
    %1243 = vmatpush1.msra.mxu0 %v406
    %1244 = vmatprep.subr.mxu0 0.0
    %1245 = vmatpush1.msra.mxu0 %v407
    %1246 = vmatprep.subr.mxu0 0.0
    %1247 = vmatpush1.msra.mxu0 %v408
    %1248 = vmatprep.subr.mxu0 0.0
    %1249 = vmatpush1.msra.mxu0 %v409
    %1250 = vmatprep.subr.mxu0 0.0
    %1251 = vmatpush1.msra.mxu0 0.0
    %1252 = vmatprep.subr.mxu0 0.0
    %1253 = vmatpush1.msra.mxu0 0.0
    %1254 = vmatprep.subr.mxu0 0.0
    %1255 = vmatpush1.msra.mxu0 0.0
    %1256 = vmatprep.subr.mxu0 0.0
    %1257 = vmatpush1.msra.mxu0 0.0
    %1258 = vmatprep.subr.mxu0 0.0
    %1259 = vmatpush1.msra.mxu0 0.0
    %1260 = vmatprep.subr.mxu0 0.0
    %1261 = vmatpush1.msra.mxu0 0.0
    %1262 = vmatprep.subr.mxu0 0.0
    %1263 = vmatpush1.msra.mxu0 0.0
    %1264 = vmatprep.subr.mxu0 0.0
    %1265 = vmatpush1.msra.mxu0 0.0
    %1266 = vmatprep.subr.mxu0 0.0
    %1267 = vmatpush1.msra.mxu0 0.0
    %1268 = vmatprep.subr.mxu0 0.0
    %1269 = vmatpush1.msra.mxu0 0.0
    %1270 = vmatprep.subr.mxu0 0.0
    %1271 = vmatpush1.msra.mxu0 0.0
    %1272 = vmatprep.subr.mxu0 0.0
    %1273 = vmatpush1.msra.mxu0 0.0
    %1274 = vmatprep.subr.mxu0 0.0
    %1275 = vmatpush1.msra.mxu0 0.0
    %1276 = vmatprep.subr.mxu0 0.0
    %1277 = vmatpush1.msra.mxu0 0.0
    %1278 = vmatprep.subr.mxu0 0.0
    %1279 = vmatpush1.msra.mxu0 0.0
    %1280 = vmatprep.subr.mxu0 0.0
    %1281 = vmatpush1.msra.mxu0 0.0
    %1282 = vmatprep.subr.mxu0 0.0
    %1283 = vmatpush1.msra.mxu0 0.0
    %1284 = vmatprep.subr.mxu0 0.0
    %1285 = vmatpush1.msra.mxu0 0.0
    %1286 = vmatprep.subr.mxu0 0.0
    %1287 = vmatpush1.msra.mxu0 0.0
    %1288 = vmatprep.subr.mxu0 0.0
    %1289 = vmatpush1.msra.mxu0 0.0
    %1290 = vmatprep.subr.mxu0 0.0
    %1291 = vmatpush1.msra.mxu0 0.0
    %1292 = vmatprep.subr.mxu0 0.0
    %1293 = vmatpush1.msra.mxu0 0.0
    %1294 = vmatprep.subr.mxu0 0.0
    %1295 = vmatpush1.msra.mxu0 0.0
    %1296 = vmatprep.subr.mxu0 0.0
    %1297 = vmatpush1.msra.mxu0 0.0
    %1298 = vmatprep.mubr.f32.mxu0 0.0
    %1299 = vmatmul.mubr.f32.gmra.mrb[0].mxu0 %v1082
    %v1300 = vpop.f32.mrb[0].mxu0
    %v1301 = vadd.f32 0.0, %v1300
    %v1302 = vpop.f32.mrb[0].mxu0
    %1303 = vdwg.mxu0
    %v1305 = vrot.slane %v1301, 6
    %v1307 = vadd.f32 %v382, %v1305
    %1308 = vmatprep.subr.mxu0 0.0
    %1309 = vmatpush1.msra.mxu0 %v411
    %1310 = vmatprep.subr.mxu0 0.0
    %1311 = vmatpush1.msra.mxu0 %v412
    %1312 = vmatprep.subr.mxu0 0.0
    %1313 = vmatpush1.msra.mxu0 %v413
    %1314 = vmatprep.subr.mxu0 0.0
    %1315 = vmatpush1.msra.mxu0 %v414
    %1316 = vmatprep.subr.mxu0 0.0
    %1317 = vmatpush1.msra.mxu0 %v415
    %1318 = vmatprep.subr.mxu0 0.0
    %1319 = vmatpush1.msra.mxu0 %v416
    %1320 = vmatprep.subr.mxu0 0.0
    %1321 = vmatpush1.msra.mxu0 %v417
    %1322 = vmatprep.subr.mxu0 0.0
    %1323 = vmatpush1.msra.mxu0 %v418
    %1324 = vmatprep.subr.mxu0 0.0
    %1325 = vmatpush1.msra.mxu0 0.0
    %1326 = vmatprep.subr.mxu0 0.0
    %1327 = vmatpush1.msra.mxu0 0.0
    %1328 = vmatprep.subr.mxu0 0.0
    %1329 = vmatpush1.msra.mxu0 0.0
    %1330 = vmatprep.subr.mxu0 0.0
    %1331 = vmatpush1.msra.mxu0 0.0
    %1332 = vmatprep.subr.mxu0 0.0
    %1333 = vmatpush1.msra.mxu0 0.0
    %1334 = vmatprep.subr.mxu0 0.0
    %1335 = vmatpush1.msra.mxu0 0.0
    %1336 = vmatprep.subr.mxu0 0.0
    %1337 = vmatpush1.msra.mxu0 0.0
    %1338 = vmatprep.subr.mxu0 0.0
    %1339 = vmatpush1.msra.mxu0 0.0
    %1340 = vmatprep.subr.mxu0 0.0
    %1341 = vmatpush1.msra.mxu0 0.0
    %1342 = vmatprep.subr.mxu0 0.0
    %1343 = vmatpush1.msra.mxu0 0.0
    %1344 = vmatprep.subr.mxu0 0.0
    %1345 = vmatpush1.msra.mxu0 0.0
    %1346 = vmatprep.subr.mxu0 0.0
    %1347 = vmatpush1.msra.mxu0 0.0
    %1348 = vmatprep.subr.mxu0 0.0
    %1349 = vmatpush1.msra.mxu0 0.0
    %1350 = vmatprep.subr.mxu0 0.0
    %1351 = vmatpush1.msra.mxu0 0.0
    %1352 = vmatprep.subr.mxu0 0.0
    %1353 = vmatpush1.msra.mxu0 0.0
    %1354 = vmatprep.subr.mxu0 0.0
    %1355 = vmatpush1.msra.mxu0 0.0
    %1356 = vmatprep.subr.mxu0 0.0
    %1357 = vmatpush1.msra.mxu0 0.0
    %1358 = vmatprep.subr.mxu0 0.0
    %1359 = vmatpush1.msra.mxu0 0.0
    %1360 = vmatprep.subr.mxu0 0.0
    %1361 = vmatpush1.msra.mxu0 0.0
    %1362 = vmatprep.subr.mxu0 0.0
    %1363 = vmatpush1.msra.mxu0 0.0
    %1364 = vmatprep.subr.mxu0 0.0
    %1365 = vmatpush1.msra.mxu0 0.0
    %1366 = vmatprep.subr.mxu0 0.0
    %1367 = vmatpush1.msra.mxu0 0.0
    %1368 = vmatprep.subr.mxu0 0.0
    %1369 = vmatpush1.msra.mxu0 0.0
    %1370 = vmatprep.subr.mxu0 0.0
    %1371 = vmatpush1.msra.mxu0 0.0
    %1372 = vmatprep.mubr.f32.mxu0 0.0
    %1373 = vmatmul.mubr.f32.gmra.mrb[0].mxu0 %v1082
    %v1374 = vpop.f32.mrb[0].mxu0
    %v1375 = vadd.f32 0.0, %v1374
    %v1376 = vpop.f32.mrb[0].mxu0
    %1377 = vdwg.mxu0
    %v1379 = vrot.slane %v1375, 6
    %1380 = vrot.lane.b32.xlu0 %v1379, 64
    %v1381 = vpop.permute.xlu0 %1380
    %v1383 = vadd.f32 %v382, %v1381
    %v1384 = vxor.u32 %v1233, 2147483648
    %v1385 = vmul.f32 %v1384, 1.442695
    %v1386 = vpow.pop %v1385
    %v1387 = vadd.f32 %v1386, 1.0
    %v1388 = vrcp.pop %v1387
    %v1389 = vmul.f32 1.0, %v1388
    %v1391 = vrot.slane %v1069, 7
    %v1393 = vmul.f32 %v1389, %v1391
    %v1394 = vxor.u32 %v1157, 2147483648
    %v1395 = vmul.f32 %v1394, 1.442695
    %v1396 = vpow.pop %v1395
    %v1397 = vadd.f32 %v1396, 1.0
    %v1398 = vrcp.pop %v1397
    %v1399 = vmul.f32 1.0, %v1398
    %v1400 = vtanh.pop %v1307
    %v1401 = vmul.f32 %v1399, %v1400
    %1403 = vrot.lane.b32.xlu0 %v1401, 64
    %v1404 = vpop.permute.xlu0 %1403
    %v1406 = vadd.f32 %v1393, %v1404
    %v1407 = vxor.u32 %v1383, 2147483648
    %v1408 = vmul.f32 %v1407, 1.442695
    %v1409 = vpow.pop %v1408
    %v1410 = vadd.f32 %v1409, 1.0
    %v1411 = vrcp.pop %v1410
    %v1412 = vmul.f32 1.0, %v1411
    %v1413 = vtanh.pop %v1406
    %v1414 = vmul.f32 %v1412, %v1413
    %v1416 = vrot.slane %v1414, 2
    %1417 = vrot.lane.b32.xlu0 %v1416, 64
    %v1418 = vpop.permute.xlu0 %1417
    %v1419 = vsel %vm309, %v1418, 0
    %1421 = vmatprep.subr.mxu0 0.0
    %1422 = vmatpush1.msra.mxu0 %v384
    %1423 = vmatprep.subr.mxu0 0.0
    %1424 = vmatpush1.msra.mxu0 %v385
    %1425 = vmatprep.subr.mxu0 0.0
    %1426 = vmatpush1.msra.mxu0 %v386
    %1427 = vmatprep.subr.mxu0 0.0
    %1428 = vmatpush1.msra.mxu0 %v387
    %1429 = vmatprep.subr.mxu0 0.0
    %1430 = vmatpush1.msra.mxu0 %v388
    %1431 = vmatprep.subr.mxu0 0.0
    %1432 = vmatpush1.msra.mxu0 %v389
    %1433 = vmatprep.subr.mxu0 0.0
    %1434 = vmatpush1.msra.mxu0 %v390
    %1435 = vmatprep.subr.mxu0 0.0
    %1436 = vmatpush1.msra.mxu0 %v391
    %1437 = vmatprep.subr.mxu0 0.0
    %1438 = vmatpush1.msra.mxu0 0.0
    %1439 = vmatprep.subr.mxu0 0.0
    %1440 = vmatpush1.msra.mxu0 0.0
    %1441 = vmatprep.subr.mxu0 0.0
    %1442 = vmatpush1.msra.mxu0 0.0
    %1443 = vmatprep.subr.mxu0 0.0
    %1444 = vmatpush1.msra.mxu0 0.0
    %1445 = vmatprep.subr.mxu0 0.0
    %1446 = vmatpush1.msra.mxu0 0.0
    %1447 = vmatprep.subr.mxu0 0.0
    %1448 = vmatpush1.msra.mxu0 0.0
    %1449 = vmatprep.subr.mxu0 0.0
    %1450 = vmatpush1.msra.mxu0 0.0
    %1451 = vmatprep.subr.mxu0 0.0
    %1452 = vmatpush1.msra.mxu0 0.0
    %1453 = vmatprep.subr.mxu0 0.0
    %1454 = vmatpush1.msra.mxu0 0.0
    %1455 = vmatprep.subr.mxu0 0.0
    %1456 = vmatpush1.msra.mxu0 0.0
    %1457 = vmatprep.subr.mxu0 0.0
    %1458 = vmatpush1.msra.mxu0 0.0
    %1459 = vmatprep.subr.mxu0 0.0
    %1460 = vmatpush1.msra.mxu0 0.0
    %1461 = vmatprep.subr.mxu0 0.0
    %1462 = vmatpush1.msra.mxu0 0.0
    %1463 = vmatprep.subr.mxu0 0.0
    %1464 = vmatpush1.msra.mxu0 0.0
    %1465 = vmatprep.subr.mxu0 0.0
    %1466 = vmatpush1.msra.mxu0 0.0
    %1467 = vmatprep.subr.mxu0 0.0
    %1468 = vmatpush1.msra.mxu0 0.0
    %1469 = vmatprep.subr.mxu0 0.0
    %1470 = vmatpush1.msra.mxu0 0.0
    %1471 = vmatprep.subr.mxu0 0.0
    %1472 = vmatpush1.msra.mxu0 0.0
    %1473 = vmatprep.subr.mxu0 0.0
    %1474 = vmatpush1.msra.mxu0 0.0
    %1475 = vmatprep.subr.mxu0 0.0
    %1476 = vmatpush1.msra.mxu0 0.0
    %1477 = vmatprep.subr.mxu0 0.0
    %1478 = vmatpush1.msra.mxu0 0.0
    %1479 = vmatprep.subr.mxu0 0.0
    %1480 = vmatpush1.msra.mxu0 0.0
    %1481 = vmatprep.subr.mxu0 0.0
    %1482 = vmatpush1.msra.mxu0 0.0
    %1483 = vmatprep.subr.mxu0 0.0
    %1484 = vmatpush1.msra.mxu0 0.0
    %1485 = vmatprep.mubr.f32.mxu0 0.0
    %1486 = vmatmul.mubr.f32.gmra.mrb[0].mxu0 %v1419
    %v1487 = vpop.f32.mrb[0].mxu0
    %v1488 = vadd.f32 0.0, %v1487
    %v1489 = vpop.f32.mrb[0].mxu0
    %1490 = vdwg.mxu0
    %v1492 = vrot.slane %v1488, 5
    %v1494 = vadd.f32 %v380, %v1492
    %1495 = vmatprep.subr.mxu0 0.0
    %1496 = vmatpush1.msra.mxu0 %v393
    %1497 = vmatprep.subr.mxu0 0.0
    %1498 = vmatpush1.msra.mxu0 %v394
    %1499 = vmatprep.subr.mxu0 0.0
    %1500 = vmatpush1.msra.mxu0 %v395
    %1501 = vmatprep.subr.mxu0 0.0
    %1502 = vmatpush1.msra.mxu0 %v396
    %1503 = vmatprep.subr.mxu0 0.0
    %1504 = vmatpush1.msra.mxu0 %v397
    %1505 = vmatprep.subr.mxu0 0.0
    %1506 = vmatpush1.msra.mxu0 %v398
    %1507 = vmatprep.subr.mxu0 0.0
    %1508 = vmatpush1.msra.mxu0 %v399
    %1509 = vmatprep.subr.mxu0 0.0
    %1510 = vmatpush1.msra.mxu0 %v400
    %1511 = vmatprep.subr.mxu0 0.0
    %1512 = vmatpush1.msra.mxu0 0.0
    %1513 = vmatprep.subr.mxu0 0.0
    %1514 = vmatpush1.msra.mxu0 0.0
    %1515 = vmatprep.subr.mxu0 0.0
    %1516 = vmatpush1.msra.mxu0 0.0
    %1517 = vmatprep.subr.mxu0 0.0
    %1518 = vmatpush1.msra.mxu0 0.0
    %1519 = vmatprep.subr.mxu0 0.0
    %1520 = vmatpush1.msra.mxu0 0.0
    %1521 = vmatprep.subr.mxu0 0.0
    %1522 = vmatpush1.msra.mxu0 0.0
    %1523 = vmatprep.subr.mxu0 0.0
    %1524 = vmatpush1.msra.mxu0 0.0
    %1525 = vmatprep.subr.mxu0 0.0
    %1526 = vmatpush1.msra.mxu0 0.0
    %1527 = vmatprep.subr.mxu0 0.0
    %1528 = vmatpush1.msra.mxu0 0.0
    %1529 = vmatprep.subr.mxu0 0.0
    %1530 = vmatpush1.msra.mxu0 0.0
    %1531 = vmatprep.subr.mxu0 0.0
    %1532 = vmatpush1.msra.mxu0 0.0
    %1533 = vmatprep.subr.mxu0 0.0
    %1534 = vmatpush1.msra.mxu0 0.0
    %1535 = vmatprep.subr.mxu0 0.0
    %1536 = vmatpush1.msra.mxu0 0.0
    %1537 = vmatprep.subr.mxu0 0.0
    %1538 = vmatpush1.msra.mxu0 0.0
    %1539 = vmatprep.subr.mxu0 0.0
    %1540 = vmatpush1.msra.mxu0 0.0
    %1541 = vmatprep.subr.mxu0 0.0
    %1542 = vmatpush1.msra.mxu0 0.0
    %1543 = vmatprep.subr.mxu0 0.0
    %1544 = vmatpush1.msra.mxu0 0.0
    %1545 = vmatprep.subr.mxu0 0.0
    %1546 = vmatpush1.msra.mxu0 0.0
    %1547 = vmatprep.subr.mxu0 0.0
    %1548 = vmatpush1.msra.mxu0 0.0
    %1549 = vmatprep.subr.mxu0 0.0
    %1550 = vmatpush1.msra.mxu0 0.0
    %1551 = vmatprep.subr.mxu0 0.0
    %1552 = vmatpush1.msra.mxu0 0.0
    %1553 = vmatprep.subr.mxu0 0.0
    %1554 = vmatpush1.msra.mxu0 0.0
    %1555 = vmatprep.subr.mxu0 0.0
    %1556 = vmatpush1.msra.mxu0 0.0
    %1557 = vmatprep.subr.mxu0 0.0
    %1558 = vmatpush1.msra.mxu0 0.0
    %1559 = vmatprep.mubr.f32.mxu0 0.0
    %1560 = vmatmul.mubr.f32.gmra.mrb[0].mxu0 %v1419
    %v1561 = vpop.f32.mrb[0].mxu0
    %v1562 = vadd.f32 0.0, %v1561
    %v1563 = vpop.f32.mrb[0].mxu0
    %1564 = vdwg.mxu0
    %v1566 = vrot.slane %v1562, 5
    %1567 = vrot.lane.b32.xlu0 %v1566, 64
    %v1568 = vpop.permute.xlu0 %1567
    %v1570 = vadd.f32 %v380, %v1568
    %1571 = vmatprep.subr.mxu0 0.0
    %1572 = vmatpush1.msra.mxu0 %v402
    %1573 = vmatprep.subr.mxu0 0.0
    %1574 = vmatpush1.msra.mxu0 %v403
    %1575 = vmatprep.subr.mxu0 0.0
    %1576 = vmatpush1.msra.mxu0 %v404
    %1577 = vmatprep.subr.mxu0 0.0
    %1578 = vmatpush1.msra.mxu0 %v405
    %1579 = vmatprep.subr.mxu0 0.0
    %1580 = vmatpush1.msra.mxu0 %v406
    %1581 = vmatprep.subr.mxu0 0.0
    %1582 = vmatpush1.msra.mxu0 %v407
    %1583 = vmatprep.subr.mxu0 0.0
    %1584 = vmatpush1.msra.mxu0 %v408
    %1585 = vmatprep.subr.mxu0 0.0
    %1586 = vmatpush1.msra.mxu0 %v409
    %1587 = vmatprep.subr.mxu0 0.0
    %1588 = vmatpush1.msra.mxu0 0.0
    %1589 = vmatprep.subr.mxu0 0.0
    %1590 = vmatpush1.msra.mxu0 0.0
    %1591 = vmatprep.subr.mxu0 0.0
    %1592 = vmatpush1.msra.mxu0 0.0
    %1593 = vmatprep.subr.mxu0 0.0
    %1594 = vmatpush1.msra.mxu0 0.0
    %1595 = vmatprep.subr.mxu0 0.0
    %1596 = vmatpush1.msra.mxu0 0.0
    %1597 = vmatprep.subr.mxu0 0.0
    %1598 = vmatpush1.msra.mxu0 0.0
    %1599 = vmatprep.subr.mxu0 0.0
    %1600 = vmatpush1.msra.mxu0 0.0
    %1601 = vmatprep.subr.mxu0 0.0
    %1602 = vmatpush1.msra.mxu0 0.0
    %1603 = vmatprep.subr.mxu0 0.0
    %1604 = vmatpush1.msra.mxu0 0.0
    %1605 = vmatprep.subr.mxu0 0.0
    %1606 = vmatpush1.msra.mxu0 0.0
    %1607 = vmatprep.subr.mxu0 0.0
    %1608 = vmatpush1.msra.mxu0 0.0
    %1609 = vmatprep.subr.mxu0 0.0
    %1610 = vmatpush1.msra.mxu0 0.0
    %1611 = vmatprep.subr.mxu0 0.0
    %1612 = vmatpush1.msra.mxu0 0.0
    %1613 = vmatprep.subr.mxu0 0.0
    %1614 = vmatpush1.msra.mxu0 0.0
    %1615 = vmatprep.subr.mxu0 0.0
    %1616 = vmatpush1.msra.mxu0 0.0
    %1617 = vmatprep.subr.mxu0 0.0
    %1618 = vmatpush1.msra.mxu0 0.0
    %1619 = vmatprep.subr.mxu0 0.0
    %1620 = vmatpush1.msra.mxu0 0.0
    %1621 = vmatprep.subr.mxu0 0.0
    %1622 = vmatpush1.msra.mxu0 0.0
    %1623 = vmatprep.subr.mxu0 0.0
    %1624 = vmatpush1.msra.mxu0 0.0
    %1625 = vmatprep.subr.mxu0 0.0
    %1626 = vmatpush1.msra.mxu0 0.0
    %1627 = vmatprep.subr.mxu0 0.0
    %1628 = vmatpush1.msra.mxu0 0.0
    %1629 = vmatprep.subr.mxu0 0.0
    %1630 = vmatpush1.msra.mxu0 0.0
    %1631 = vmatprep.subr.mxu0 0.0
    %1632 = vmatpush1.msra.mxu0 0.0
    %1633 = vmatprep.subr.mxu0 0.0
    %1634 = vmatpush1.msra.mxu0 0.0
    %1635 = vmatprep.mubr.f32.mxu0 0.0
    %1636 = vmatmul.mubr.f32.gmra.mrb[0].mxu0 %v1419
    %v1637 = vpop.f32.mrb[0].mxu0
    %v1638 = vadd.f32 0.0, %v1637
    %v1639 = vpop.f32.mrb[0].mxu0
    %1640 = vdwg.mxu0
    %v1642 = vrot.slane %v1638, 5
    %v1644 = vadd.f32 %v382, %v1642
    %1645 = vmatprep.subr.mxu0 0.0
    %1646 = vmatpush1.msra.mxu0 %v411
    %1647 = vmatprep.subr.mxu0 0.0
    %1648 = vmatpush1.msra.mxu0 %v412
    %1649 = vmatprep.subr.mxu0 0.0
    %1650 = vmatpush1.msra.mxu0 %v413
    %1651 = vmatprep.subr.mxu0 0.0
    %1652 = vmatpush1.msra.mxu0 %v414
    %1653 = vmatprep.subr.mxu0 0.0
    %1654 = vmatpush1.msra.mxu0 %v415
    %1655 = vmatprep.subr.mxu0 0.0
    %1656 = vmatpush1.msra.mxu0 %v416
    %1657 = vmatprep.subr.mxu0 0.0
    %1658 = vmatpush1.msra.mxu0 %v417
    %1659 = vmatprep.subr.mxu0 0.0
    %1660 = vmatpush1.msra.mxu0 %v418
    %1661 = vmatprep.subr.mxu0 0.0
    %1662 = vmatpush1.msra.mxu0 0.0
    %1663 = vmatprep.subr.mxu0 0.0
    %1664 = vmatpush1.msra.mxu0 0.0
    %1665 = vmatprep.subr.mxu0 0.0
    %1666 = vmatpush1.msra.mxu0 0.0
    %1667 = vmatprep.subr.mxu0 0.0
    %1668 = vmatpush1.msra.mxu0 0.0
    %1669 = vmatprep.subr.mxu0 0.0
    %1670 = vmatpush1.msra.mxu0 0.0
    %1671 = vmatprep.subr.mxu0 0.0
    %1672 = vmatpush1.msra.mxu0 0.0
    %1673 = vmatprep.subr.mxu0 0.0
    %1674 = vmatpush1.msra.mxu0 0.0
    %1675 = vmatprep.subr.mxu0 0.0
    %1676 = vmatpush1.msra.mxu0 0.0
    %1677 = vmatprep.subr.mxu0 0.0
    %1678 = vmatpush1.msra.mxu0 0.0
    %1679 = vmatprep.subr.mxu0 0.0
    %1680 = vmatpush1.msra.mxu0 0.0
    %1681 = vmatprep.subr.mxu0 0.0
    %1682 = vmatpush1.msra.mxu0 0.0
    %1683 = vmatprep.subr.mxu0 0.0
    %1684 = vmatpush1.msra.mxu0 0.0
    %1685 = vmatprep.subr.mxu0 0.0
    %1686 = vmatpush1.msra.mxu0 0.0
    %1687 = vmatprep.subr.mxu0 0.0
    %1688 = vmatpush1.msra.mxu0 0.0
    %1689 = vmatprep.subr.mxu0 0.0
    %1690 = vmatpush1.msra.mxu0 0.0
    %1691 = vmatprep.subr.mxu0 0.0
    %1692 = vmatpush1.msra.mxu0 0.0
    %1693 = vmatprep.subr.mxu0 0.0
    %1694 = vmatpush1.msra.mxu0 0.0
    %1695 = vmatprep.subr.mxu0 0.0
    %1696 = vmatpush1.msra.mxu0 0.0
    %1697 = vmatprep.subr.mxu0 0.0
    %1698 = vmatpush1.msra.mxu0 0.0
    %1699 = vmatprep.subr.mxu0 0.0
    %1700 = vmatpush1.msra.mxu0 0.0
    %1701 = vmatprep.subr.mxu0 0.0
    %1702 = vmatpush1.msra.mxu0 0.0
    %1703 = vmatprep.subr.mxu0 0.0
    %1704 = vmatpush1.msra.mxu0 0.0
    %1705 = vmatprep.subr.mxu0 0.0
    %1706 = vmatpush1.msra.mxu0 0.0
    %1707 = vmatprep.subr.mxu0 0.0
    %1708 = vmatpush1.msra.mxu0 0.0
    %1709 = vmatprep.mubr.f32.mxu0 0.0
    %1710 = vmatmul.mubr.f32.gmra.mrb[0].mxu0 %v1419
    %v1711 = vpop.f32.mrb[0].mxu0
    %v1712 = vadd.f32 0.0, %v1711
    %v1713 = vpop.f32.mrb[0].mxu0
    %1714 = vdwg.mxu0
    %v1716 = vrot.slane %v1712, 5
    %1717 = vrot.lane.b32.xlu0 %v1716, 64
    %v1718 = vpop.permute.xlu0 %1717
    %v1720 = vadd.f32 %v382, %v1718
    %v1721 = vxor.u32 %v1570, 2147483648
    %v1722 = vmul.f32 %v1721, 1.442695
    %v1723 = vpow.pop %v1722
    %v1724 = vadd.f32 %v1723, 1.0
    %v1725 = vrcp.pop %v1724
    %v1726 = vmul.f32 1.0, %v1725
    %v1728 = vrot.slane %v1406, 7
    %v1730 = vmul.f32 %v1726, %v1728
    %v1731 = vxor.u32 %v1494, 2147483648
    %v1732 = vmul.f32 %v1731, 1.442695
    %v1733 = vpow.pop %v1732
    %v1734 = vadd.f32 %v1733, 1.0
    %v1735 = vrcp.pop %v1734
    %v1736 = vmul.f32 1.0, %v1735
    %v1737 = vtanh.pop %v1644
    %v1738 = vmul.f32 %v1736, %v1737
    %1740 = vrot.lane.b32.xlu0 %v1738, 64
    %v1741 = vpop.permute.xlu0 %1740
    %v1743 = vadd.f32 %v1730, %v1741
    %v1744 = vxor.u32 %v1720, 2147483648
    %v1745 = vmul.f32 %v1744, 1.442695
    %v1746 = vpow.pop %v1745
    %v1747 = vadd.f32 %v1746, 1.0
    %v1748 = vrcp.pop %v1747
    %v1749 = vmul.f32 1.0, %v1748
    %v1750 = vtanh.pop %v1743
    %v1751 = vmul.f32 %v1749, %v1750
    %v1753 = vrot.slane %v1751, 3
    %1754 = vrot.lane.b32.xlu0 %v1753, 64
    %v1755 = vpop.permute.xlu0 %1754
    %v1756 = vsel %vm309, %v1755, 0
    %1758 = vmatprep.subr.mxu0 0.0
    %1759 = vmatpush1.msra.mxu0 %v384
    %1760 = vmatprep.subr.mxu0 0.0
    %1761 = vmatpush1.msra.mxu0 %v385
    %1762 = vmatprep.subr.mxu0 0.0
    %1763 = vmatpush1.msra.mxu0 %v386
    %1764 = vmatprep.subr.mxu0 0.0
    %1765 = vmatpush1.msra.mxu0 %v387
    %1766 = vmatprep.subr.mxu0 0.0
    %1767 = vmatpush1.msra.mxu0 %v388
    %1768 = vmatprep.subr.mxu0 0.0
    %1769 = vmatpush1.msra.mxu0 %v389
    %1770 = vmatprep.subr.mxu0 0.0
    %1771 = vmatpush1.msra.mxu0 %v390
    %1772 = vmatprep.subr.mxu0 0.0
    %1773 = vmatpush1.msra.mxu0 %v391
    %1774 = vmatprep.subr.mxu0 0.0
    %1775 = vmatpush1.msra.mxu0 0.0
    %1776 = vmatprep.subr.mxu0 0.0
    %1777 = vmatpush1.msra.mxu0 0.0
    %1778 = vmatprep.subr.mxu0 0.0
    %1779 = vmatpush1.msra.mxu0 0.0
    %1780 = vmatprep.subr.mxu0 0.0
    %1781 = vmatpush1.msra.mxu0 0.0
    %1782 = vmatprep.subr.mxu0 0.0
    %1783 = vmatpush1.msra.mxu0 0.0
    %1784 = vmatprep.subr.mxu0 0.0
    %1785 = vmatpush1.msra.mxu0 0.0
    %1786 = vmatprep.subr.mxu0 0.0
    %1787 = vmatpush1.msra.mxu0 0.0
    %1788 = vmatprep.subr.mxu0 0.0
    %1789 = vmatpush1.msra.mxu0 0.0
    %1790 = vmatprep.subr.mxu0 0.0
    %1791 = vmatpush1.msra.mxu0 0.0
    %1792 = vmatprep.subr.mxu0 0.0
    %1793 = vmatpush1.msra.mxu0 0.0
    %1794 = vmatprep.subr.mxu0 0.0
    %1795 = vmatpush1.msra.mxu0 0.0
    %1796 = vmatprep.subr.mxu0 0.0
    %1797 = vmatpush1.msra.mxu0 0.0
    %1798 = vmatprep.subr.mxu0 0.0
    %1799 = vmatpush1.msra.mxu0 0.0
    %1800 = vmatprep.subr.mxu0 0.0
    %1801 = vmatpush1.msra.mxu0 0.0
    %1802 = vmatprep.subr.mxu0 0.0
    %1803 = vmatpush1.msra.mxu0 0.0
    %1804 = vmatprep.subr.mxu0 0.0
    %1805 = vmatpush1.msra.mxu0 0.0
    %1806 = vmatprep.subr.mxu0 0.0
    %1807 = vmatpush1.msra.mxu0 0.0
    %1808 = vmatprep.subr.mxu0 0.0
    %1809 = vmatpush1.msra.mxu0 0.0
    %1810 = vmatprep.subr.mxu0 0.0
    %1811 = vmatpush1.msra.mxu0 0.0
    %1812 = vmatprep.subr.mxu0 0.0
    %1813 = vmatpush1.msra.mxu0 0.0
    %1814 = vmatprep.subr.mxu0 0.0
    %1815 = vmatpush1.msra.mxu0 0.0
    %1816 = vmatprep.subr.mxu0 0.0
    %1817 = vmatpush1.msra.mxu0 0.0
    %1818 = vmatprep.subr.mxu0 0.0
    %1819 = vmatpush1.msra.mxu0 0.0
    %1820 = vmatprep.subr.mxu0 0.0
    %1821 = vmatpush1.msra.mxu0 0.0
    %1822 = vmatprep.mubr.f32.mxu0 0.0
    %1823 = vmatmul.mubr.f32.gmra.mrb[0].mxu0 %v1756
    %v1824 = vpop.f32.mrb[0].mxu0
    %v1825 = vadd.f32 0.0, %v1824
    %v1826 = vpop.f32.mrb[0].mxu0
    %1827 = vdwg.mxu0
    %v1829 = vrot.slane %v1825, 4
    %v1831 = vadd.f32 %v380, %v1829
    %1832 = vmatprep.subr.mxu0 0.0
    %1833 = vmatpush1.msra.mxu0 %v393
    %1834 = vmatprep.subr.mxu0 0.0
    %1835 = vmatpush1.msra.mxu0 %v394
    %1836 = vmatprep.subr.mxu0 0.0
    %1837 = vmatpush1.msra.mxu0 %v395
    %1838 = vmatprep.subr.mxu0 0.0
    %1839 = vmatpush1.msra.mxu0 %v396
    %1840 = vmatprep.subr.mxu0 0.0
    %1841 = vmatpush1.msra.mxu0 %v397
    %1842 = vmatprep.subr.mxu0 0.0
    %1843 = vmatpush1.msra.mxu0 %v398
    %1844 = vmatprep.subr.mxu0 0.0
    %1845 = vmatpush1.msra.mxu0 %v399
    %1846 = vmatprep.subr.mxu0 0.0
    %1847 = vmatpush1.msra.mxu0 %v400
    %1848 = vmatprep.subr.mxu0 0.0
    %1849 = vmatpush1.msra.mxu0 0.0
    %1850 = vmatprep.subr.mxu0 0.0
    %1851 = vmatpush1.msra.mxu0 0.0
    %1852 = vmatprep.subr.mxu0 0.0
    %1853 = vmatpush1.msra.mxu0 0.0
    %1854 = vmatprep.subr.mxu0 0.0
    %1855 = vmatpush1.msra.mxu0 0.0
    %1856 = vmatprep.subr.mxu0 0.0
    %1857 = vmatpush1.msra.mxu0 0.0
    %1858 = vmatprep.subr.mxu0 0.0
    %1859 = vmatpush1.msra.mxu0 0.0
    %1860 = vmatprep.subr.mxu0 0.0
    %1861 = vmatpush1.msra.mxu0 0.0
    %1862 = vmatprep.subr.mxu0 0.0
    %1863 = vmatpush1.msra.mxu0 0.0
    %1864 = vmatprep.subr.mxu0 0.0
    %1865 = vmatpush1.msra.mxu0 0.0
    %1866 = vmatprep.subr.mxu0 0.0
    %1867 = vmatpush1.msra.mxu0 0.0
    %1868 = vmatprep.subr.mxu0 0.0
    %1869 = vmatpush1.msra.mxu0 0.0
    %1870 = vmatprep.subr.mxu0 0.0
    %1871 = vmatpush1.msra.mxu0 0.0
    %1872 = vmatprep.subr.mxu0 0.0
    %1873 = vmatpush1.msra.mxu0 0.0
    %1874 = vmatprep.subr.mxu0 0.0
    %1875 = vmatpush1.msra.mxu0 0.0
    %1876 = vmatprep.subr.mxu0 0.0
    %1877 = vmatpush1.msra.mxu0 0.0
    %1878 = vmatprep.subr.mxu0 0.0
    %1879 = vmatpush1.msra.mxu0 0.0
    %1880 = vmatprep.subr.mxu0 0.0
    %1881 = vmatpush1.msra.mxu0 0.0
    %1882 = vmatprep.subr.mxu0 0.0
    %1883 = vmatpush1.msra.mxu0 0.0
    %1884 = vmatprep.subr.mxu0 0.0
    %1885 = vmatpush1.msra.mxu0 0.0
    %1886 = vmatprep.subr.mxu0 0.0
    %1887 = vmatpush1.msra.mxu0 0.0
    %1888 = vmatprep.subr.mxu0 0.0
    %1889 = vmatpush1.msra.mxu0 0.0
    %1890 = vmatprep.subr.mxu0 0.0
    %1891 = vmatpush1.msra.mxu0 0.0
    %1892 = vmatprep.subr.mxu0 0.0
    %1893 = vmatpush1.msra.mxu0 0.0
    %1894 = vmatprep.subr.mxu0 0.0
    %1895 = vmatpush1.msra.mxu0 0.0
    %1896 = vmatprep.mubr.f32.mxu0 0.0
    %1897 = vmatmul.mubr.f32.gmra.mrb[0].mxu0 %v1756
    %v1898 = vpop.f32.mrb[0].mxu0
    %v1899 = vadd.f32 0.0, %v1898
    %v1900 = vpop.f32.mrb[0].mxu0
    %1901 = vdwg.mxu0
    %v1903 = vrot.slane %v1899, 4
    %1904 = vrot.lane.b32.xlu0 %v1903, 64
    %v1905 = vpop.permute.xlu0 %1904
    %v1907 = vadd.f32 %v380, %v1905
    %1908 = vmatprep.subr.mxu0 0.0
    %1909 = vmatpush1.msra.mxu0 %v402
    %1910 = vmatprep.subr.mxu0 0.0
    %1911 = vmatpush1.msra.mxu0 %v403
    %1912 = vmatprep.subr.mxu0 0.0
    %1913 = vmatpush1.msra.mxu0 %v404
    %1914 = vmatprep.subr.mxu0 0.0
    %1915 = vmatpush1.msra.mxu0 %v405
    %1916 = vmatprep.subr.mxu0 0.0
    %1917 = vmatpush1.msra.mxu0 %v406
    %1918 = vmatprep.subr.mxu0 0.0
    %1919 = vmatpush1.msra.mxu0 %v407
    %1920 = vmatprep.subr.mxu0 0.0
    %1921 = vmatpush1.msra.mxu0 %v408
    %1922 = vmatprep.subr.mxu0 0.0
    %1923 = vmatpush1.msra.mxu0 %v409
    %1924 = vmatprep.subr.mxu0 0.0
    %1925 = vmatpush1.msra.mxu0 0.0
    %1926 = vmatprep.subr.mxu0 0.0
    %1927 = vmatpush1.msra.mxu0 0.0
    %1928 = vmatprep.subr.mxu0 0.0
    %1929 = vmatpush1.msra.mxu0 0.0
    %1930 = vmatprep.subr.mxu0 0.0
    %1931 = vmatpush1.msra.mxu0 0.0
    %1932 = vmatprep.subr.mxu0 0.0
    %1933 = vmatpush1.msra.mxu0 0.0
    %1934 = vmatprep.subr.mxu0 0.0
    %1935 = vmatpush1.msra.mxu0 0.0
    %1936 = vmatprep.subr.mxu0 0.0
    %1937 = vmatpush1.msra.mxu0 0.0
    %1938 = vmatprep.subr.mxu0 0.0
    %1939 = vmatpush1.msra.mxu0 0.0
    %1940 = vmatprep.subr.mxu0 0.0
    %1941 = vmatpush1.msra.mxu0 0.0
    %1942 = vmatprep.subr.mxu0 0.0
    %1943 = vmatpush1.msra.mxu0 0.0
    %1944 = vmatprep.subr.mxu0 0.0
    %1945 = vmatpush1.msra.mxu0 0.0
    %1946 = vmatprep.subr.mxu0 0.0
    %1947 = vmatpush1.msra.mxu0 0.0
    %1948 = vmatprep.subr.mxu0 0.0
    %1949 = vmatpush1.msra.mxu0 0.0
    %1950 = vmatprep.subr.mxu0 0.0
    %1951 = vmatpush1.msra.mxu0 0.0
    %1952 = vmatprep.subr.mxu0 0.0
    %1953 = vmatpush1.msra.mxu0 0.0
    %1954 = vmatprep.subr.mxu0 0.0
    %1955 = vmatpush1.msra.mxu0 0.0
    %1956 = vmatprep.subr.mxu0 0.0
    %1957 = vmatpush1.msra.mxu0 0.0
    %1958 = vmatprep.subr.mxu0 0.0
    %1959 = vmatpush1.msra.mxu0 0.0
    %1960 = vmatprep.subr.mxu0 0.0
    %1961 = vmatpush1.msra.mxu0 0.0
    %1962 = vmatprep.subr.mxu0 0.0
    %1963 = vmatpush1.msra.mxu0 0.0
    %1964 = vmatprep.subr.mxu0 0.0
    %1965 = vmatpush1.msra.mxu0 0.0
    %1966 = vmatprep.subr.mxu0 0.0
    %1967 = vmatpush1.msra.mxu0 0.0
    %1968 = vmatprep.subr.mxu0 0.0
    %1969 = vmatpush1.msra.mxu0 0.0
    %1970 = vmatprep.subr.mxu0 0.0
    %1971 = vmatpush1.msra.mxu0 0.0
    %1972 = vmatprep.mubr.f32.mxu0 0.0
    %1973 = vmatmul.mubr.f32.gmra.mrb[0].mxu0 %v1756
    %v1974 = vpop.f32.mrb[0].mxu0
    %v1975 = vadd.f32 0.0, %v1974
    %v1976 = vpop.f32.mrb[0].mxu0
    %1977 = vdwg.mxu0
    %v1979 = vrot.slane %v1975, 4
    %v1981 = vadd.f32 %v382, %v1979
    %1982 = vmatprep.subr.mxu0 0.0
    %1983 = vmatpush1.msra.mxu0 %v411
    %1984 = vmatprep.subr.mxu0 0.0
    %1985 = vmatpush1.msra.mxu0 %v412
    %1986 = vmatprep.subr.mxu0 0.0
    %1987 = vmatpush1.msra.mxu0 %v413
    %1988 = vmatprep.subr.mxu0 0.0
    %1989 = vmatpush1.msra.mxu0 %v414
    %1990 = vmatprep.subr.mxu0 0.0
    %1991 = vmatpush1.msra.mxu0 %v415
    %1992 = vmatprep.subr.mxu0 0.0
    %1993 = vmatpush1.msra.mxu0 %v416
    %1994 = vmatprep.subr.mxu0 0.0
    %1995 = vmatpush1.msra.mxu0 %v417
    %1996 = vmatprep.subr.mxu0 0.0
    %1997 = vmatpush1.msra.mxu0 %v418
    %1998 = vmatprep.subr.mxu0 0.0
    %1999 = vmatpush1.msra.mxu0 0.0
    %2000 = vmatprep.subr.mxu0 0.0
    %2001 = vmatpush1.msra.mxu0 0.0
    %2002 = vmatprep.subr.mxu0 0.0
    %2003 = vmatpush1.msra.mxu0 0.0
    %2004 = vmatprep.subr.mxu0 0.0
    %2005 = vmatpush1.msra.mxu0 0.0
    %2006 = vmatprep.subr.mxu0 0.0
    %2007 = vmatpush1.msra.mxu0 0.0
    %2008 = vmatprep.subr.mxu0 0.0
    %2009 = vmatpush1.msra.mxu0 0.0
    %2010 = vmatprep.subr.mxu0 0.0
    %2011 = vmatpush1.msra.mxu0 0.0
    %2012 = vmatprep.subr.mxu0 0.0
    %2013 = vmatpush1.msra.mxu0 0.0
    %2014 = vmatprep.subr.mxu0 0.0
    %2015 = vmatpush1.msra.mxu0 0.0
    %2016 = vmatprep.subr.mxu0 0.0
    %2017 = vmatpush1.msra.mxu0 0.0
    %2018 = vmatprep.subr.mxu0 0.0
    %2019 = vmatpush1.msra.mxu0 0.0
    %2020 = vmatprep.subr.mxu0 0.0
    %2021 = vmatpush1.msra.mxu0 0.0
    %2022 = vmatprep.subr.mxu0 0.0
    %2023 = vmatpush1.msra.mxu0 0.0
    %2024 = vmatprep.subr.mxu0 0.0
    %2025 = vmatpush1.msra.mxu0 0.0
    %2026 = vmatprep.subr.mxu0 0.0
    %2027 = vmatpush1.msra.mxu0 0.0
    %2028 = vmatprep.subr.mxu0 0.0
    %2029 = vmatpush1.msra.mxu0 0.0
    %2030 = vmatprep.subr.mxu0 0.0
    %2031 = vmatpush1.msra.mxu0 0.0
    %2032 = vmatprep.subr.mxu0 0.0
    %2033 = vmatpush1.msra.mxu0 0.0
    %2034 = vmatprep.subr.mxu0 0.0
    %2035 = vmatpush1.msra.mxu0 0.0
    %2036 = vmatprep.subr.mxu0 0.0
    %2037 = vmatpush1.msra.mxu0 0.0
    %2038 = vmatprep.subr.mxu0 0.0
    %2039 = vmatpush1.msra.mxu0 0.0
    %2040 = vmatprep.subr.mxu0 0.0
    %2041 = vmatpush1.msra.mxu0 0.0
    %2042 = vmatprep.subr.mxu0 0.0
    %2043 = vmatpush1.msra.mxu0 0.0
    %2044 = vmatprep.subr.mxu0 0.0
    %2045 = vmatpush1.msra.mxu0 0.0
    %2046 = vmatprep.mubr.f32.mxu0 0.0
    %2047 = vmatmul.mubr.f32.gmra.mrb[0].mxu0 %v1756
    %v2048 = vpop.f32.mrb[0].mxu0
    %v2049 = vadd.f32 0.0, %v2048
    %v2050 = vpop.f32.mrb[0].mxu0
    %2051 = vdwg.mxu0
    %v2053 = vrot.slane %v2049, 4
    %2054 = vrot.lane.b32.xlu0 %v2053, 64
    %v2055 = vpop.permute.xlu0 %2054
    %v2057 = vadd.f32 %v382, %v2055
    %v2058 = vxor.u32 %v1907, 2147483648
    %v2059 = vmul.f32 %v2058, 1.442695
    %v2060 = vpow.pop %v2059
    %v2061 = vadd.f32 %v2060, 1.0
    %v2062 = vrcp.pop %v2061
    %v2063 = vmul.f32 1.0, %v2062
    %v2065 = vrot.slane %v1743, 7
    %v2067 = vmul.f32 %v2063, %v2065
    %v2068 = vxor.u32 %v1831, 2147483648
    %v2069 = vmul.f32 %v2068, 1.442695
    %v2070 = vpow.pop %v2069
    %v2071 = vadd.f32 %v2070, 1.0
    %v2072 = vrcp.pop %v2071
    %v2073 = vmul.f32 1.0, %v2072
    %v2074 = vtanh.pop %v1981
    %v2075 = vmul.f32 %v2073, %v2074
    %2077 = vrot.lane.b32.xlu0 %v2075, 64
    %v2078 = vpop.permute.xlu0 %2077
    %v2080 = vadd.f32 %v2067, %v2078
    %v2081 = vxor.u32 %v2057, 2147483648
    %v2082 = vmul.f32 %v2081, 1.442695
    %v2083 = vpow.pop %v2082
    %v2084 = vadd.f32 %v2083, 1.0
    %v2085 = vrcp.pop %v2084
    %v2086 = vmul.f32 1.0, %v2085
    %v2087 = vtanh.pop %v2080
    %v2088 = vmul.f32 %v2086, %v2087
    %v2090 = vrot.slane %v2088, 4
    %2091 = vrot.lane.b32.xlu0 %v2090, 64
    %v2092 = vpop.permute.xlu0 %2091
    %v2093 = vsel %vm309, %v2092, 0
    %2095 = vmatprep.subr.mxu0 0.0
    %2096 = vmatpush1.msra.mxu0 %v384
    %2097 = vmatprep.subr.mxu0 0.0
    %2098 = vmatpush1.msra.mxu0 %v385
    %2099 = vmatprep.subr.mxu0 0.0
    %2100 = vmatpush1.msra.mxu0 %v386
    %2101 = vmatprep.subr.mxu0 0.0
    %2102 = vmatpush1.msra.mxu0 %v387
    %2103 = vmatprep.subr.mxu0 0.0
    %2104 = vmatpush1.msra.mxu0 %v388
    %2105 = vmatprep.subr.mxu0 0.0
    %2106 = vmatpush1.msra.mxu0 %v389
    %2107 = vmatprep.subr.mxu0 0.0
    %2108 = vmatpush1.msra.mxu0 %v390
    %2109 = vmatprep.subr.mxu0 0.0
    %2110 = vmatpush1.msra.mxu0 %v391
    %2111 = vmatprep.subr.mxu0 0.0
    %2112 = vmatpush1.msra.mxu0 0.0
    %2113 = vmatprep.subr.mxu0 0.0
    %2114 = vmatpush1.msra.mxu0 0.0
    %2115 = vmatprep.subr.mxu0 0.0
    %2116 = vmatpush1.msra.mxu0 0.0
    %2117 = vmatprep.subr.mxu0 0.0
    %2118 = vmatpush1.msra.mxu0 0.0
    %2119 = vmatprep.subr.mxu0 0.0
    %2120 = vmatpush1.msra.mxu0 0.0
    %2121 = vmatprep.subr.mxu0 0.0
    %2122 = vmatpush1.msra.mxu0 0.0
    %2123 = vmatprep.subr.mxu0 0.0
    %2124 = vmatpush1.msra.mxu0 0.0
    %2125 = vmatprep.subr.mxu0 0.0
    %2126 = vmatpush1.msra.mxu0 0.0
    %2127 = vmatprep.subr.mxu0 0.0
    %2128 = vmatpush1.msra.mxu0 0.0
    %2129 = vmatprep.subr.mxu0 0.0
    %2130 = vmatpush1.msra.mxu0 0.0
    %2131 = vmatprep.subr.mxu0 0.0
    %2132 = vmatpush1.msra.mxu0 0.0
    %2133 = vmatprep.subr.mxu0 0.0
    %2134 = vmatpush1.msra.mxu0 0.0
    %2135 = vmatprep.subr.mxu0 0.0
    %2136 = vmatpush1.msra.mxu0 0.0
    %2137 = vmatprep.subr.mxu0 0.0
    %2138 = vmatpush1.msra.mxu0 0.0
    %2139 = vmatprep.subr.mxu0 0.0
    %2140 = vmatpush1.msra.mxu0 0.0
    %2141 = vmatprep.subr.mxu0 0.0
    %2142 = vmatpush1.msra.mxu0 0.0
    %2143 = vmatprep.subr.mxu0 0.0
    %2144 = vmatpush1.msra.mxu0 0.0
    %2145 = vmatprep.subr.mxu0 0.0
    %2146 = vmatpush1.msra.mxu0 0.0
    %2147 = vmatprep.subr.mxu0 0.0
    %2148 = vmatpush1.msra.mxu0 0.0
    %2149 = vmatprep.subr.mxu0 0.0
    %2150 = vmatpush1.msra.mxu0 0.0
    %2151 = vmatprep.subr.mxu0 0.0
    %2152 = vmatpush1.msra.mxu0 0.0
    %2153 = vmatprep.subr.mxu0 0.0
    %2154 = vmatpush1.msra.mxu0 0.0
    %2155 = vmatprep.subr.mxu0 0.0
    %2156 = vmatpush1.msra.mxu0 0.0
    %2157 = vmatprep.subr.mxu0 0.0
    %2158 = vmatpush1.msra.mxu0 0.0
    %2159 = vmatprep.mubr.f32.mxu0 0.0
    %2160 = vmatmul.mubr.f32.gmra.mrb[0].mxu0 %v2093
    %v2161 = vpop.f32.mrb[0].mxu0
    %v2162 = vadd.f32 0.0, %v2161
    %v2163 = vpop.f32.mrb[0].mxu0
    %2164 = vdwg.mxu0
    %v2166 = vrot.slane %v2162, 3
    %v2168 = vadd.f32 %v380, %v2166
    %2169 = vmatprep.subr.mxu0 0.0
    %2170 = vmatpush1.msra.mxu0 %v393
    %2171 = vmatprep.subr.mxu0 0.0
    %2172 = vmatpush1.msra.mxu0 %v394
    %2173 = vmatprep.subr.mxu0 0.0
    %2174 = vmatpush1.msra.mxu0 %v395
    %2175 = vmatprep.subr.mxu0 0.0
    %2176 = vmatpush1.msra.mxu0 %v396
    %2177 = vmatprep.subr.mxu0 0.0
    %2178 = vmatpush1.msra.mxu0 %v397
    %2179 = vmatprep.subr.mxu0 0.0
    %2180 = vmatpush1.msra.mxu0 %v398
    %2181 = vmatprep.subr.mxu0 0.0
    %2182 = vmatpush1.msra.mxu0 %v399
    %2183 = vmatprep.subr.mxu0 0.0
    %2184 = vmatpush1.msra.mxu0 %v400
    %2185 = vmatprep.subr.mxu0 0.0
    %2186 = vmatpush1.msra.mxu0 0.0
    %2187 = vmatprep.subr.mxu0 0.0
    %2188 = vmatpush1.msra.mxu0 0.0
    %2189 = vmatprep.subr.mxu0 0.0
    %2190 = vmatpush1.msra.mxu0 0.0
    %2191 = vmatprep.subr.mxu0 0.0
    %2192 = vmatpush1.msra.mxu0 0.0
    %2193 = vmatprep.subr.mxu0 0.0
    %2194 = vmatpush1.msra.mxu0 0.0
    %2195 = vmatprep.subr.mxu0 0.0
    %2196 = vmatpush1.msra.mxu0 0.0
    %2197 = vmatprep.subr.mxu0 0.0
    %2198 = vmatpush1.msra.mxu0 0.0
    %2199 = vmatprep.subr.mxu0 0.0
    %2200 = vmatpush1.msra.mxu0 0.0
    %2201 = vmatprep.subr.mxu0 0.0
    %2202 = vmatpush1.msra.mxu0 0.0
    %2203 = vmatprep.subr.mxu0 0.0
    %2204 = vmatpush1.msra.mxu0 0.0
    %2205 = vmatprep.subr.mxu0 0.0
    %2206 = vmatpush1.msra.mxu0 0.0
    %2207 = vmatprep.subr.mxu0 0.0
    %2208 = vmatpush1.msra.mxu0 0.0
    %2209 = vmatprep.subr.mxu0 0.0
    %2210 = vmatpush1.msra.mxu0 0.0
    %2211 = vmatprep.subr.mxu0 0.0
    %2212 = vmatpush1.msra.mxu0 0.0
    %2213 = vmatprep.subr.mxu0 0.0
    %2214 = vmatpush1.msra.mxu0 0.0
    %2215 = vmatprep.subr.mxu0 0.0
    %2216 = vmatpush1.msra.mxu0 0.0
    %2217 = vmatprep.subr.mxu0 0.0
    %2218 = vmatpush1.msra.mxu0 0.0
    %2219 = vmatprep.subr.mxu0 0.0
    %2220 = vmatpush1.msra.mxu0 0.0
    %2221 = vmatprep.subr.mxu0 0.0
    %2222 = vmatpush1.msra.mxu0 0.0
    %2223 = vmatprep.subr.mxu0 0.0
    %2224 = vmatpush1.msra.mxu0 0.0
    %2225 = vmatprep.subr.mxu0 0.0
    %2226 = vmatpush1.msra.mxu0 0.0
    %2227 = vmatprep.subr.mxu0 0.0
    %2228 = vmatpush1.msra.mxu0 0.0
    %2229 = vmatprep.subr.mxu0 0.0
    %2230 = vmatpush1.msra.mxu0 0.0
    %2231 = vmatprep.subr.mxu0 0.0
    %2232 = vmatpush1.msra.mxu0 0.0
    %2233 = vmatprep.mubr.f32.mxu0 0.0
    %2234 = vmatmul.mubr.f32.gmra.mrb[0].mxu0 %v2093
    %v2235 = vpop.f32.mrb[0].mxu0
    %v2236 = vadd.f32 0.0, %v2235
    %v2237 = vpop.f32.mrb[0].mxu0
    %2238 = vdwg.mxu0
    %v2240 = vrot.slane %v2236, 3
    %2241 = vrot.lane.b32.xlu0 %v2240, 64
    %v2242 = vpop.permute.xlu0 %2241
    %v2244 = vadd.f32 %v380, %v2242
    %2245 = vmatprep.subr.mxu0 0.0
    %2246 = vmatpush1.msra.mxu0 %v402
    %2247 = vmatprep.subr.mxu0 0.0
    %2248 = vmatpush1.msra.mxu0 %v403
    %2249 = vmatprep.subr.mxu0 0.0
    %2250 = vmatpush1.msra.mxu0 %v404
    %2251 = vmatprep.subr.mxu0 0.0
    %2252 = vmatpush1.msra.mxu0 %v405
    %2253 = vmatprep.subr.mxu0 0.0
    %2254 = vmatpush1.msra.mxu0 %v406
    %2255 = vmatprep.subr.mxu0 0.0
    %2256 = vmatpush1.msra.mxu0 %v407
    %2257 = vmatprep.subr.mxu0 0.0
    %2258 = vmatpush1.msra.mxu0 %v408
    %2259 = vmatprep.subr.mxu0 0.0
    %2260 = vmatpush1.msra.mxu0 %v409
    %2261 = vmatprep.subr.mxu0 0.0
    %2262 = vmatpush1.msra.mxu0 0.0
    %2263 = vmatprep.subr.mxu0 0.0
    %2264 = vmatpush1.msra.mxu0 0.0
    %2265 = vmatprep.subr.mxu0 0.0
    %2266 = vmatpush1.msra.mxu0 0.0
    %2267 = vmatprep.subr.mxu0 0.0
    %2268 = vmatpush1.msra.mxu0 0.0
    %2269 = vmatprep.subr.mxu0 0.0
    %2270 = vmatpush1.msra.mxu0 0.0
    %2271 = vmatprep.subr.mxu0 0.0
    %2272 = vmatpush1.msra.mxu0 0.0
    %2273 = vmatprep.subr.mxu0 0.0
    %2274 = vmatpush1.msra.mxu0 0.0
    %2275 = vmatprep.subr.mxu0 0.0
    %2276 = vmatpush1.msra.mxu0 0.0
    %2277 = vmatprep.subr.mxu0 0.0
    %2278 = vmatpush1.msra.mxu0 0.0
    %2279 = vmatprep.subr.mxu0 0.0
    %2280 = vmatpush1.msra.mxu0 0.0
    %2281 = vmatprep.subr.mxu0 0.0
    %2282 = vmatpush1.msra.mxu0 0.0
    %2283 = vmatprep.subr.mxu0 0.0
    %2284 = vmatpush1.msra.mxu0 0.0
    %2285 = vmatprep.subr.mxu0 0.0
    %2286 = vmatpush1.msra.mxu0 0.0
    %2287 = vmatprep.subr.mxu0 0.0
    %2288 = vmatpush1.msra.mxu0 0.0
    %2289 = vmatprep.subr.mxu0 0.0
    %2290 = vmatpush1.msra.mxu0 0.0
    %2291 = vmatprep.subr.mxu0 0.0
    %2292 = vmatpush1.msra.mxu0 0.0
    %2293 = vmatprep.subr.mxu0 0.0
    %2294 = vmatpush1.msra.mxu0 0.0
    %2295 = vmatprep.subr.mxu0 0.0
    %2296 = vmatpush1.msra.mxu0 0.0
    %2297 = vmatprep.subr.mxu0 0.0
    %2298 = vmatpush1.msra.mxu0 0.0
    %2299 = vmatprep.subr.mxu0 0.0
    %2300 = vmatpush1.msra.mxu0 0.0
    %2301 = vmatprep.subr.mxu0 0.0
    %2302 = vmatpush1.msra.mxu0 0.0
    %2303 = vmatprep.subr.mxu0 0.0
    %2304 = vmatpush1.msra.mxu0 0.0
    %2305 = vmatprep.subr.mxu0 0.0
    %2306 = vmatpush1.msra.mxu0 0.0
    %2307 = vmatprep.subr.mxu0 0.0
    %2308 = vmatpush1.msra.mxu0 0.0
    %2309 = vmatprep.mubr.f32.mxu0 0.0
    %2310 = vmatmul.mubr.f32.gmra.mrb[0].mxu0 %v2093
    %v2311 = vpop.f32.mrb[0].mxu0
    %v2312 = vadd.f32 0.0, %v2311
    %v2313 = vpop.f32.mrb[0].mxu0
    %2314 = vdwg.mxu0
    %v2316 = vrot.slane %v2312, 3
    %v2318 = vadd.f32 %v382, %v2316
    %2319 = vmatprep.subr.mxu0 0.0
    %2320 = vmatpush1.msra.mxu0 %v411
    %2321 = vmatprep.subr.mxu0 0.0
    %2322 = vmatpush1.msra.mxu0 %v412
    %2323 = vmatprep.subr.mxu0 0.0
    %2324 = vmatpush1.msra.mxu0 %v413
    %2325 = vmatprep.subr.mxu0 0.0
    %2326 = vmatpush1.msra.mxu0 %v414
    %2327 = vmatprep.subr.mxu0 0.0
    %2328 = vmatpush1.msra.mxu0 %v415
    %2329 = vmatprep.subr.mxu0 0.0
    %2330 = vmatpush1.msra.mxu0 %v416
    %2331 = vmatprep.subr.mxu0 0.0
    %2332 = vmatpush1.msra.mxu0 %v417
    %2333 = vmatprep.subr.mxu0 0.0
    %2334 = vmatpush1.msra.mxu0 %v418
    %2335 = vmatprep.subr.mxu0 0.0
    %2336 = vmatpush1.msra.mxu0 0.0
    %2337 = vmatprep.subr.mxu0 0.0
    %2338 = vmatpush1.msra.mxu0 0.0
    %2339 = vmatprep.subr.mxu0 0.0
    %2340 = vmatpush1.msra.mxu0 0.0
    %2341 = vmatprep.subr.mxu0 0.0
    %2342 = vmatpush1.msra.mxu0 0.0
    %2343 = vmatprep.subr.mxu0 0.0
    %2344 = vmatpush1.msra.mxu0 0.0
    %2345 = vmatprep.subr.mxu0 0.0
    %2346 = vmatpush1.msra.mxu0 0.0
    %2347 = vmatprep.subr.mxu0 0.0
    %2348 = vmatpush1.msra.mxu0 0.0
    %2349 = vmatprep.subr.mxu0 0.0
    %2350 = vmatpush1.msra.mxu0 0.0
    %2351 = vmatprep.subr.mxu0 0.0
    %2352 = vmatpush1.msra.mxu0 0.0
    %2353 = vmatprep.subr.mxu0 0.0
    %2354 = vmatpush1.msra.mxu0 0.0
    %2355 = vmatprep.subr.mxu0 0.0
    %2356 = vmatpush1.msra.mxu0 0.0
    %2357 = vmatprep.subr.mxu0 0.0
    %2358 = vmatpush1.msra.mxu0 0.0
    %2359 = vmatprep.subr.mxu0 0.0
    %2360 = vmatpush1.msra.mxu0 0.0
    %2361 = vmatprep.subr.mxu0 0.0
    %2362 = vmatpush1.msra.mxu0 0.0
    %2363 = vmatprep.subr.mxu0 0.0
    %2364 = vmatpush1.msra.mxu0 0.0
    %2365 = vmatprep.subr.mxu0 0.0
    %2366 = vmatpush1.msra.mxu0 0.0
    %2367 = vmatprep.subr.mxu0 0.0
    %2368 = vmatpush1.msra.mxu0 0.0
    %2369 = vmatprep.subr.mxu0 0.0
    %2370 = vmatpush1.msra.mxu0 0.0
    %2371 = vmatprep.subr.mxu0 0.0
    %2372 = vmatpush1.msra.mxu0 0.0
    %2373 = vmatprep.subr.mxu0 0.0
    %2374 = vmatpush1.msra.mxu0 0.0
    %2375 = vmatprep.subr.mxu0 0.0
    %2376 = vmatpush1.msra.mxu0 0.0
    %2377 = vmatprep.subr.mxu0 0.0
    %2378 = vmatpush1.msra.mxu0 0.0
    %2379 = vmatprep.subr.mxu0 0.0
    %2380 = vmatpush1.msra.mxu0 0.0
    %2381 = vmatprep.subr.mxu0 0.0
    %2382 = vmatpush1.msra.mxu0 0.0
    %2383 = vmatprep.mubr.f32.mxu0 0.0
    %2384 = vmatmul.mubr.f32.gmra.mrb[0].mxu0 %v2093
    %v2385 = vpop.f32.mrb[0].mxu0
    %v2386 = vadd.f32 0.0, %v2385
    %v2387 = vpop.f32.mrb[0].mxu0
    %2388 = vdwg.mxu0
    %v2390 = vrot.slane %v2386, 3
    %2391 = vrot.lane.b32.xlu0 %v2390, 64
    %v2392 = vpop.permute.xlu0 %2391
    %v2394 = vadd.f32 %v382, %v2392
    %v2395 = vxor.u32 %v2244, 2147483648
    %v2396 = vmul.f32 %v2395, 1.442695
    %v2397 = vpow.pop %v2396
    %v2398 = vadd.f32 %v2397, 1.0
    %v2399 = vrcp.pop %v2398
    %v2400 = vmul.f32 1.0, %v2399
    %v2402 = vrot.slane %v2080, 7
    %v2404 = vmul.f32 %v2400, %v2402
    %v2405 = vxor.u32 %v2168, 2147483648
    %v2406 = vmul.f32 %v2405, 1.442695
    %v2407 = vpow.pop %v2406
    %v2408 = vadd.f32 %v2407, 1.0
    %v2409 = vrcp.pop %v2408
    %v2410 = vmul.f32 1.0, %v2409
    %v2411 = vtanh.pop %v2318
    %v2412 = vmul.f32 %v2410, %v2411
    %2414 = vrot.lane.b32.xlu0 %v2412, 64
    %v2415 = vpop.permute.xlu0 %2414
    %v2417 = vadd.f32 %v2404, %v2415
    %v2418 = vxor.u32 %v2394, 2147483648
    %v2419 = vmul.f32 %v2418, 1.442695
    %v2420 = vpow.pop %v2419
    %v2421 = vadd.f32 %v2420, 1.0
    %v2422 = vrcp.pop %v2421
    %v2423 = vmul.f32 1.0, %v2422
    %v2424 = vtanh.pop %v2417
    %v2425 = vmul.f32 %v2423, %v2424
    %v2427 = vrot.slane %v2425, 5
    %2428 = vrot.lane.b32.xlu0 %v2427, 64
    %v2429 = vpop.permute.xlu0 %2428
    %v2430 = vsel %vm309, %v2429, 0
    %2432 = vmatprep.subr.mxu0 0.0
    %2433 = vmatpush1.msra.mxu0 %v384
    %2434 = vmatprep.subr.mxu0 0.0
    %2435 = vmatpush1.msra.mxu0 %v385
    %2436 = vmatprep.subr.mxu0 0.0
    %2437 = vmatpush1.msra.mxu0 %v386
    %2438 = vmatprep.subr.mxu0 0.0
    %2439 = vmatpush1.msra.mxu0 %v387
    %2440 = vmatprep.subr.mxu0 0.0
    %2441 = vmatpush1.msra.mxu0 %v388
    %2442 = vmatprep.subr.mxu0 0.0
    %2443 = vmatpush1.msra.mxu0 %v389
    %2444 = vmatprep.subr.mxu0 0.0
    %2445 = vmatpush1.msra.mxu0 %v390
    %2446 = vmatprep.subr.mxu0 0.0
    %2447 = vmatpush1.msra.mxu0 %v391
    %2448 = vmatprep.subr.mxu0 0.0
    %2449 = vmatpush1.msra.mxu0 0.0
    %2450 = vmatprep.subr.mxu0 0.0
    %2451 = vmatpush1.msra.mxu0 0.0
    %2452 = vmatprep.subr.mxu0 0.0
    %2453 = vmatpush1.msra.mxu0 0.0
    %2454 = vmatprep.subr.mxu0 0.0
    %2455 = vmatpush1.msra.mxu0 0.0
    %2456 = vmatprep.subr.mxu0 0.0
    %2457 = vmatpush1.msra.mxu0 0.0
    %2458 = vmatprep.subr.mxu0 0.0
    %2459 = vmatpush1.msra.mxu0 0.0
    %2460 = vmatprep.subr.mxu0 0.0
    %2461 = vmatpush1.msra.mxu0 0.0
    %2462 = vmatprep.subr.mxu0 0.0
    %2463 = vmatpush1.msra.mxu0 0.0
    %2464 = vmatprep.subr.mxu0 0.0
    %2465 = vmatpush1.msra.mxu0 0.0
    %2466 = vmatprep.subr.mxu0 0.0
    %2467 = vmatpush1.msra.mxu0 0.0
    %2468 = vmatprep.subr.mxu0 0.0
    %2469 = vmatpush1.msra.mxu0 0.0
    %2470 = vmatprep.subr.mxu0 0.0
    %2471 = vmatpush1.msra.mxu0 0.0
    %2472 = vmatprep.subr.mxu0 0.0
    %2473 = vmatpush1.msra.mxu0 0.0
    %2474 = vmatprep.subr.mxu0 0.0
    %2475 = vmatpush1.msra.mxu0 0.0
    %2476 = vmatprep.subr.mxu0 0.0
    %2477 = vmatpush1.msra.mxu0 0.0
    %2478 = vmatprep.subr.mxu0 0.0
    %2479 = vmatpush1.msra.mxu0 0.0
    %2480 = vmatprep.subr.mxu0 0.0
    %2481 = vmatpush1.msra.mxu0 0.0
    %2482 = vmatprep.subr.mxu0 0.0
    %2483 = vmatpush1.msra.mxu0 0.0
    %2484 = vmatprep.subr.mxu0 0.0
    %2485 = vmatpush1.msra.mxu0 0.0
    %2486 = vmatprep.subr.mxu0 0.0
    %2487 = vmatpush1.msra.mxu0 0.0
    %2488 = vmatprep.subr.mxu0 0.0
    %2489 = vmatpush1.msra.mxu0 0.0
    %2490 = vmatprep.subr.mxu0 0.0
    %2491 = vmatpush1.msra.mxu0 0.0
    %2492 = vmatprep.subr.mxu0 0.0
    %2493 = vmatpush1.msra.mxu0 0.0
    %2494 = vmatprep.subr.mxu0 0.0
    %2495 = vmatpush1.msra.mxu0 0.0
    %2496 = vmatprep.mubr.f32.mxu0 0.0
    %2497 = vmatmul.mubr.f32.gmra.mrb[0].mxu0 %v2430
    %v2498 = vpop.f32.mrb[0].mxu0
    %v2499 = vadd.f32 0.0, %v2498
    %v2500 = vpop.f32.mrb[0].mxu0
    %2501 = vdwg.mxu0
    %v2503 = vrot.slane %v2499, 2
    %v2505 = vadd.f32 %v380, %v2503
    %2506 = vmatprep.subr.mxu0 0.0
    %2507 = vmatpush1.msra.mxu0 %v393
    %2508 = vmatprep.subr.mxu0 0.0
    %2509 = vmatpush1.msra.mxu0 %v394
    %2510 = vmatprep.subr.mxu0 0.0
    %2511 = vmatpush1.msra.mxu0 %v395
    %2512 = vmatprep.subr.mxu0 0.0
    %2513 = vmatpush1.msra.mxu0 %v396
    %2514 = vmatprep.subr.mxu0 0.0
    %2515 = vmatpush1.msra.mxu0 %v397
    %2516 = vmatprep.subr.mxu0 0.0
    %2517 = vmatpush1.msra.mxu0 %v398
    %2518 = vmatprep.subr.mxu0 0.0
    %2519 = vmatpush1.msra.mxu0 %v399
    %2520 = vmatprep.subr.mxu0 0.0
    %2521 = vmatpush1.msra.mxu0 %v400
    %2522 = vmatprep.subr.mxu0 0.0
    %2523 = vmatpush1.msra.mxu0 0.0
    %2524 = vmatprep.subr.mxu0 0.0
    %2525 = vmatpush1.msra.mxu0 0.0
    %2526 = vmatprep.subr.mxu0 0.0
    %2527 = vmatpush1.msra.mxu0 0.0
    %2528 = vmatprep.subr.mxu0 0.0
    %2529 = vmatpush1.msra.mxu0 0.0
    %2530 = vmatprep.subr.mxu0 0.0
    %2531 = vmatpush1.msra.mxu0 0.0
    %2532 = vmatprep.subr.mxu0 0.0
    %2533 = vmatpush1.msra.mxu0 0.0
    %2534 = vmatprep.subr.mxu0 0.0
    %2535 = vmatpush1.msra.mxu0 0.0
    %2536 = vmatprep.subr.mxu0 0.0
    %2537 = vmatpush1.msra.mxu0 0.0
    %2538 = vmatprep.subr.mxu0 0.0
    %2539 = vmatpush1.msra.mxu0 0.0
    %2540 = vmatprep.subr.mxu0 0.0
    %2541 = vmatpush1.msra.mxu0 0.0
    %2542 = vmatprep.subr.mxu0 0.0
    %2543 = vmatpush1.msra.mxu0 0.0
    %2544 = vmatprep.subr.mxu0 0.0
    %2545 = vmatpush1.msra.mxu0 0.0
    %2546 = vmatprep.subr.mxu0 0.0
    %2547 = vmatpush1.msra.mxu0 0.0
    %2548 = vmatprep.subr.mxu0 0.0
    %2549 = vmatpush1.msra.mxu0 0.0
    %2550 = vmatprep.subr.mxu0 0.0
    %2551 = vmatpush1.msra.mxu0 0.0
    %2552 = vmatprep.subr.mxu0 0.0
    %2553 = vmatpush1.msra.mxu0 0.0
    %2554 = vmatprep.subr.mxu0 0.0
    %2555 = vmatpush1.msra.mxu0 0.0
    %2556 = vmatprep.subr.mxu0 0.0
    %2557 = vmatpush1.msra.mxu0 0.0
    %2558 = vmatprep.subr.mxu0 0.0
    %2559 = vmatpush1.msra.mxu0 0.0
    %2560 = vmatprep.subr.mxu0 0.0
    %2561 = vmatpush1.msra.mxu0 0.0
    %2562 = vmatprep.subr.mxu0 0.0
    %2563 = vmatpush1.msra.mxu0 0.0
    %2564 = vmatprep.subr.mxu0 0.0
    %2565 = vmatpush1.msra.mxu0 0.0
    %2566 = vmatprep.subr.mxu0 0.0
    %2567 = vmatpush1.msra.mxu0 0.0
    %2568 = vmatprep.subr.mxu0 0.0
    %2569 = vmatpush1.msra.mxu0 0.0
    %2570 = vmatprep.mubr.f32.mxu0 0.0
    %2571 = vmatmul.mubr.f32.gmra.mrb[0].mxu0 %v2430
    %v2572 = vpop.f32.mrb[0].mxu0
    %v2573 = vadd.f32 0.0, %v2572
    %v2574 = vpop.f32.mrb[0].mxu0
    %2575 = vdwg.mxu0
    %v2577 = vrot.slane %v2573, 2
    %2578 = vrot.lane.b32.xlu0 %v2577, 64
    %v2579 = vpop.permute.xlu0 %2578
    %v2581 = vadd.f32 %v380, %v2579
    %2582 = vmatprep.subr.mxu0 0.0
    %2583 = vmatpush1.msra.mxu0 %v402
    %2584 = vmatprep.subr.mxu0 0.0
    %2585 = vmatpush1.msra.mxu0 %v403
    %2586 = vmatprep.subr.mxu0 0.0
    %2587 = vmatpush1.msra.mxu0 %v404
    %2588 = vmatprep.subr.mxu0 0.0
    %2589 = vmatpush1.msra.mxu0 %v405
    %2590 = vmatprep.subr.mxu0 0.0
    %2591 = vmatpush1.msra.mxu0 %v406
    %2592 = vmatprep.subr.mxu0 0.0
    %2593 = vmatpush1.msra.mxu0 %v407
    %2594 = vmatprep.subr.mxu0 0.0
    %2595 = vmatpush1.msra.mxu0 %v408
    %2596 = vmatprep.subr.mxu0 0.0
    %2597 = vmatpush1.msra.mxu0 %v409
    %2598 = vmatprep.subr.mxu0 0.0
    %2599 = vmatpush1.msra.mxu0 0.0
    %2600 = vmatprep.subr.mxu0 0.0
    %2601 = vmatpush1.msra.mxu0 0.0
    %2602 = vmatprep.subr.mxu0 0.0
    %2603 = vmatpush1.msra.mxu0 0.0
    %2604 = vmatprep.subr.mxu0 0.0
    %2605 = vmatpush1.msra.mxu0 0.0
    %2606 = vmatprep.subr.mxu0 0.0
    %2607 = vmatpush1.msra.mxu0 0.0
    %2608 = vmatprep.subr.mxu0 0.0
    %2609 = vmatpush1.msra.mxu0 0.0
    %2610 = vmatprep.subr.mxu0 0.0
    %2611 = vmatpush1.msra.mxu0 0.0
    %2612 = vmatprep.subr.mxu0 0.0
    %2613 = vmatpush1.msra.mxu0 0.0
    %2614 = vmatprep.subr.mxu0 0.0
    %2615 = vmatpush1.msra.mxu0 0.0
    %2616 = vmatprep.subr.mxu0 0.0
    %2617 = vmatpush1.msra.mxu0 0.0
    %2618 = vmatprep.subr.mxu0 0.0
    %2619 = vmatpush1.msra.mxu0 0.0
    %2620 = vmatprep.subr.mxu0 0.0
    %2621 = vmatpush1.msra.mxu0 0.0
    %2622 = vmatprep.subr.mxu0 0.0
    %2623 = vmatpush1.msra.mxu0 0.0
    %2624 = vmatprep.subr.mxu0 0.0
    %2625 = vmatpush1.msra.mxu0 0.0
    %2626 = vmatprep.subr.mxu0 0.0
    %2627 = vmatpush1.msra.mxu0 0.0
    %2628 = vmatprep.subr.mxu0 0.0
    %2629 = vmatpush1.msra.mxu0 0.0
    %2630 = vmatprep.subr.mxu0 0.0
    %2631 = vmatpush1.msra.mxu0 0.0
    %2632 = vmatprep.subr.mxu0 0.0
    %2633 = vmatpush1.msra.mxu0 0.0
    %2634 = vmatprep.subr.mxu0 0.0
    %2635 = vmatpush1.msra.mxu0 0.0
    %2636 = vmatprep.subr.mxu0 0.0
    %2637 = vmatpush1.msra.mxu0 0.0
    %2638 = vmatprep.subr.mxu0 0.0
    %2639 = vmatpush1.msra.mxu0 0.0
    %2640 = vmatprep.subr.mxu0 0.0
    %2641 = vmatpush1.msra.mxu0 0.0
    %2642 = vmatprep.subr.mxu0 0.0
    %2643 = vmatpush1.msra.mxu0 0.0
    %2644 = vmatprep.subr.mxu0 0.0
    %2645 = vmatpush1.msra.mxu0 0.0
    %2646 = vmatprep.mubr.f32.mxu0 0.0
    %2647 = vmatmul.mubr.f32.gmra.mrb[0].mxu0 %v2430
    %v2648 = vpop.f32.mrb[0].mxu0
    %v2649 = vadd.f32 0.0, %v2648
    %v2650 = vpop.f32.mrb[0].mxu0
    %2651 = vdwg.mxu0
    %v2653 = vrot.slane %v2649, 2
    %v2655 = vadd.f32 %v382, %v2653
    %2656 = vmatprep.subr.mxu0 0.0
    %2657 = vmatpush1.msra.mxu0 %v411
    %2658 = vmatprep.subr.mxu0 0.0
    %2659 = vmatpush1.msra.mxu0 %v412
    %2660 = vmatprep.subr.mxu0 0.0
    %2661 = vmatpush1.msra.mxu0 %v413
    %2662 = vmatprep.subr.mxu0 0.0
    %2663 = vmatpush1.msra.mxu0 %v414
    %2664 = vmatprep.subr.mxu0 0.0
    %2665 = vmatpush1.msra.mxu0 %v415
    %2666 = vmatprep.subr.mxu0 0.0
    %2667 = vmatpush1.msra.mxu0 %v416
    %2668 = vmatprep.subr.mxu0 0.0
    %2669 = vmatpush1.msra.mxu0 %v417
    %2670 = vmatprep.subr.mxu0 0.0
    %2671 = vmatpush1.msra.mxu0 %v418
    %2672 = vmatprep.subr.mxu0 0.0
    %2673 = vmatpush1.msra.mxu0 0.0
    %2674 = vmatprep.subr.mxu0 0.0
    %2675 = vmatpush1.msra.mxu0 0.0
    %2676 = vmatprep.subr.mxu0 0.0
    %2677 = vmatpush1.msra.mxu0 0.0
    %2678 = vmatprep.subr.mxu0 0.0
    %2679 = vmatpush1.msra.mxu0 0.0
    %2680 = vmatprep.subr.mxu0 0.0
    %2681 = vmatpush1.msra.mxu0 0.0
    %2682 = vmatprep.subr.mxu0 0.0
    %2683 = vmatpush1.msra.mxu0 0.0
    %2684 = vmatprep.subr.mxu0 0.0
    %2685 = vmatpush1.msra.mxu0 0.0
    %2686 = vmatprep.subr.mxu0 0.0
    %2687 = vmatpush1.msra.mxu0 0.0
    %2688 = vmatprep.subr.mxu0 0.0
    %2689 = vmatpush1.msra.mxu0 0.0
    %2690 = vmatprep.subr.mxu0 0.0
    %2691 = vmatpush1.msra.mxu0 0.0
    %2692 = vmatprep.subr.mxu0 0.0
    %2693 = vmatpush1.msra.mxu0 0.0
    %2694 = vmatprep.subr.mxu0 0.0
    %2695 = vmatpush1.msra.mxu0 0.0
    %2696 = vmatprep.subr.mxu0 0.0
    %2697 = vmatpush1.msra.mxu0 0.0
    %2698 = vmatprep.subr.mxu0 0.0
    %2699 = vmatpush1.msra.mxu0 0.0
    %2700 = vmatprep.subr.mxu0 0.0
    %2701 = vmatpush1.msra.mxu0 0.0
    %2702 = vmatprep.subr.mxu0 0.0
    %2703 = vmatpush1.msra.mxu0 0.0
    %2704 = vmatprep.subr.mxu0 0.0
    %2705 = vmatpush1.msra.mxu0 0.0
    %2706 = vmatprep.subr.mxu0 0.0
    %2707 = vmatpush1.msra.mxu0 0.0
    %2708 = vmatprep.subr.mxu0 0.0
    %2709 = vmatpush1.msra.mxu0 0.0
    %2710 = vmatprep.subr.mxu0 0.0
    %2711 = vmatpush1.msra.mxu0 0.0
    %2712 = vmatprep.subr.mxu0 0.0
    %2713 = vmatpush1.msra.mxu0 0.0
    %2714 = vmatprep.subr.mxu0 0.0
    %2715 = vmatpush1.msra.mxu0 0.0
    %2716 = vmatprep.subr.mxu0 0.0
    %2717 = vmatpush1.msra.mxu0 0.0
    %2718 = vmatprep.subr.mxu0 0.0
    %2719 = vmatpush1.msra.mxu0 0.0
    %2720 = vmatprep.mubr.f32.mxu0 0.0
    %2721 = vmatmul.mubr.f32.gmra.mrb[0].mxu0 %v2430
    %v2722 = vpop.f32.mrb[0].mxu0
    %v2723 = vadd.f32 0.0, %v2722
    %v2724 = vpop.f32.mrb[0].mxu0
    %2725 = vdwg.mxu0
    %v2727 = vrot.slane %v2723, 2
    %2728 = vrot.lane.b32.xlu0 %v2727, 64
    %v2729 = vpop.permute.xlu0 %2728
    %v2731 = vadd.f32 %v382, %v2729
    %v2732 = vxor.u32 %v2581, 2147483648
    %v2733 = vmul.f32 %v2732, 1.442695
    %v2734 = vpow.pop %v2733
    %v2735 = vadd.f32 %v2734, 1.0
    %v2736 = vrcp.pop %v2735
    %v2737 = vmul.f32 1.0, %v2736
    %v2739 = vrot.slane %v2417, 7
    %v2741 = vmul.f32 %v2737, %v2739
    %v2742 = vxor.u32 %v2505, 2147483648
    %v2743 = vmul.f32 %v2742, 1.442695
    %v2744 = vpow.pop %v2743
    %v2745 = vadd.f32 %v2744, 1.0
    %v2746 = vrcp.pop %v2745
    %v2747 = vmul.f32 1.0, %v2746
    %v2748 = vtanh.pop %v2655
    %v2749 = vmul.f32 %v2747, %v2748
    %2751 = vrot.lane.b32.xlu0 %v2749, 64
    %v2752 = vpop.permute.xlu0 %2751
    %v2754 = vadd.f32 %v2741, %v2752
    %v2755 = vxor.u32 %v2731, 2147483648
    %v2756 = vmul.f32 %v2755, 1.442695
    %v2757 = vpow.pop %v2756
    %v2758 = vadd.f32 %v2757, 1.0
    %v2759 = vrcp.pop %v2758
    %v2760 = vmul.f32 1.0, %v2759
    %v2761 = vtanh.pop %v2754
    %v2762 = vmul.f32 %v2760, %v2761
    %v2764 = vrot.slane %v2762, 6
    %2765 = vrot.lane.b32.xlu0 %v2764, 64
    %v2766 = vpop.permute.xlu0 %2765
    %v2767 = vsel %vm309, %v2766, 0
    %2769 = vmatprep.subr.mxu0 0.0
    %2770 = vmatpush1.msra.mxu0 %v384
    %2771 = vmatprep.subr.mxu0 0.0
    %2772 = vmatpush1.msra.mxu0 %v385
    %2773 = vmatprep.subr.mxu0 0.0
    %2774 = vmatpush1.msra.mxu0 %v386
    %2775 = vmatprep.subr.mxu0 0.0
    %2776 = vmatpush1.msra.mxu0 %v387
    %2777 = vmatprep.subr.mxu0 0.0
    %2778 = vmatpush1.msra.mxu0 %v388
    %2779 = vmatprep.subr.mxu0 0.0
    %2780 = vmatpush1.msra.mxu0 %v389
    %2781 = vmatprep.subr.mxu0 0.0
    %2782 = vmatpush1.msra.mxu0 %v390
    %2783 = vmatprep.subr.mxu0 0.0
    %2784 = vmatpush1.msra.mxu0 %v391
    %2785 = vmatprep.subr.mxu0 0.0
    %2786 = vmatpush1.msra.mxu0 0.0
    %2787 = vmatprep.subr.mxu0 0.0
    %2788 = vmatpush1.msra.mxu0 0.0
    %2789 = vmatprep.subr.mxu0 0.0
    %2790 = vmatpush1.msra.mxu0 0.0
    %2791 = vmatprep.subr.mxu0 0.0
    %2792 = vmatpush1.msra.mxu0 0.0
    %2793 = vmatprep.subr.mxu0 0.0
    %2794 = vmatpush1.msra.mxu0 0.0
    %2795 = vmatprep.subr.mxu0 0.0
    %2796 = vmatpush1.msra.mxu0 0.0
    %2797 = vmatprep.subr.mxu0 0.0
    %2798 = vmatpush1.msra.mxu0 0.0
    %2799 = vmatprep.subr.mxu0 0.0
    %2800 = vmatpush1.msra.mxu0 0.0
    %2801 = vmatprep.subr.mxu0 0.0
    %2802 = vmatpush1.msra.mxu0 0.0
    %2803 = vmatprep.subr.mxu0 0.0
    %2804 = vmatpush1.msra.mxu0 0.0
    %2805 = vmatprep.subr.mxu0 0.0
    %2806 = vmatpush1.msra.mxu0 0.0
    %2807 = vmatprep.subr.mxu0 0.0
    %2808 = vmatpush1.msra.mxu0 0.0
    %2809 = vmatprep.subr.mxu0 0.0
    %2810 = vmatpush1.msra.mxu0 0.0
    %2811 = vmatprep.subr.mxu0 0.0
    %2812 = vmatpush1.msra.mxu0 0.0
    %2813 = vmatprep.subr.mxu0 0.0
    %2814 = vmatpush1.msra.mxu0 0.0
    %2815 = vmatprep.subr.mxu0 0.0
    %2816 = vmatpush1.msra.mxu0 0.0
    %2817 = vmatprep.subr.mxu0 0.0
    %2818 = vmatpush1.msra.mxu0 0.0
    %2819 = vmatprep.subr.mxu0 0.0
    %2820 = vmatpush1.msra.mxu0 0.0
    %2821 = vmatprep.subr.mxu0 0.0
    %2822 = vmatpush1.msra.mxu0 0.0
    %2823 = vmatprep.subr.mxu0 0.0
    %2824 = vmatpush1.msra.mxu0 0.0
    %2825 = vmatprep.subr.mxu0 0.0
    %2826 = vmatpush1.msra.mxu0 0.0
    %2827 = vmatprep.subr.mxu0 0.0
    %2828 = vmatpush1.msra.mxu0 0.0
    %2829 = vmatprep.subr.mxu0 0.0
    %2830 = vmatpush1.msra.mxu0 0.0
    %2831 = vmatprep.subr.mxu0 0.0
    %2832 = vmatpush1.msra.mxu0 0.0
    %2833 = vmatprep.mubr.f32.mxu0 0.0
    %2834 = vmatmul.mubr.f32.gmra.mrb[0].mxu0 %v2767
    %v2835 = vpop.f32.mrb[0].mxu0
    %v2836 = vadd.f32 0.0, %v2835
    %v2837 = vpop.f32.mrb[0].mxu0
    %2838 = vdwg.mxu0
    %v2840 = vrot.slane %v2836, 1
    %v2842 = vadd.f32 %v380, %v2840
    %2843 = vmatprep.subr.mxu0 0.0
    %2844 = vmatpush1.msra.mxu0 %v393
    %2845 = vmatprep.subr.mxu0 0.0
    %2846 = vmatpush1.msra.mxu0 %v394
    %2847 = vmatprep.subr.mxu0 0.0
    %2848 = vmatpush1.msra.mxu0 %v395
    %2849 = vmatprep.subr.mxu0 0.0
    %2850 = vmatpush1.msra.mxu0 %v396
    %2851 = vmatprep.subr.mxu0 0.0
    %2852 = vmatpush1.msra.mxu0 %v397
    %2853 = vmatprep.subr.mxu0 0.0
    %2854 = vmatpush1.msra.mxu0 %v398
    %2855 = vmatprep.subr.mxu0 0.0
    %2856 = vmatpush1.msra.mxu0 %v399
    %2857 = vmatprep.subr.mxu0 0.0
    %2858 = vmatpush1.msra.mxu0 %v400
    %2859 = vmatprep.subr.mxu0 0.0
    %2860 = vmatpush1.msra.mxu0 0.0
    %2861 = vmatprep.subr.mxu0 0.0
    %2862 = vmatpush1.msra.mxu0 0.0
    %2863 = vmatprep.subr.mxu0 0.0
    %2864 = vmatpush1.msra.mxu0 0.0
    %2865 = vmatprep.subr.mxu0 0.0
    %2866 = vmatpush1.msra.mxu0 0.0
    %2867 = vmatprep.subr.mxu0 0.0
    %2868 = vmatpush1.msra.mxu0 0.0
    %2869 = vmatprep.subr.mxu0 0.0
    %2870 = vmatpush1.msra.mxu0 0.0
    %2871 = vmatprep.subr.mxu0 0.0
    %2872 = vmatpush1.msra.mxu0 0.0
    %2873 = vmatprep.subr.mxu0 0.0
    %2874 = vmatpush1.msra.mxu0 0.0
    %2875 = vmatprep.subr.mxu0 0.0
    %2876 = vmatpush1.msra.mxu0 0.0
    %2877 = vmatprep.subr.mxu0 0.0
    %2878 = vmatpush1.msra.mxu0 0.0
    %2879 = vmatprep.subr.mxu0 0.0
    %2880 = vmatpush1.msra.mxu0 0.0
    %2881 = vmatprep.subr.mxu0 0.0
    %2882 = vmatpush1.msra.mxu0 0.0
    %2883 = vmatprep.subr.mxu0 0.0
    %2884 = vmatpush1.msra.mxu0 0.0
    %2885 = vmatprep.subr.mxu0 0.0
    %2886 = vmatpush1.msra.mxu0 0.0
    %2887 = vmatprep.subr.mxu0 0.0
    %2888 = vmatpush1.msra.mxu0 0.0
    %2889 = vmatprep.subr.mxu0 0.0
    %2890 = vmatpush1.msra.mxu0 0.0
    %2891 = vmatprep.subr.mxu0 0.0
    %2892 = vmatpush1.msra.mxu0 0.0
    %2893 = vmatprep.subr.mxu0 0.0
    %2894 = vmatpush1.msra.mxu0 0.0
    %2895 = vmatprep.subr.mxu0 0.0
    %2896 = vmatpush1.msra.mxu0 0.0
    %2897 = vmatprep.subr.mxu0 0.0
    %2898 = vmatpush1.msra.mxu0 0.0
    %2899 = vmatprep.subr.mxu0 0.0
    %2900 = vmatpush1.msra.mxu0 0.0
    %2901 = vmatprep.subr.mxu0 0.0
    %2902 = vmatpush1.msra.mxu0 0.0
    %2903 = vmatprep.subr.mxu0 0.0
    %2904 = vmatpush1.msra.mxu0 0.0
    %2905 = vmatprep.subr.mxu0 0.0
    %2906 = vmatpush1.msra.mxu0 0.0
    %2907 = vmatprep.mubr.f32.mxu0 0.0
    %2908 = vmatmul.mubr.f32.gmra.mrb[0].mxu0 %v2767
    %v2909 = vpop.f32.mrb[0].mxu0
    %v2910 = vadd.f32 0.0, %v2909
    %v2911 = vpop.f32.mrb[0].mxu0
    %2912 = vdwg.mxu0
    %v2914 = vrot.slane %v2910, 1
    %2915 = vrot.lane.b32.xlu0 %v2914, 64
    %v2916 = vpop.permute.xlu0 %2915
    %v2918 = vadd.f32 %v380, %v2916
    %2919 = vmatprep.subr.mxu0 0.0
    %2920 = vmatpush1.msra.mxu0 %v402
    %2921 = vmatprep.subr.mxu0 0.0
    %2922 = vmatpush1.msra.mxu0 %v403
    %2923 = vmatprep.subr.mxu0 0.0
    %2924 = vmatpush1.msra.mxu0 %v404
    %2925 = vmatprep.subr.mxu0 0.0
    %2926 = vmatpush1.msra.mxu0 %v405
    %2927 = vmatprep.subr.mxu0 0.0
    %2928 = vmatpush1.msra.mxu0 %v406
    %2929 = vmatprep.subr.mxu0 0.0
    %2930 = vmatpush1.msra.mxu0 %v407
    %2931 = vmatprep.subr.mxu0 0.0
    %2932 = vmatpush1.msra.mxu0 %v408
    %2933 = vmatprep.subr.mxu0 0.0
    %2934 = vmatpush1.msra.mxu0 %v409
    %2935 = vmatprep.subr.mxu0 0.0
    %2936 = vmatpush1.msra.mxu0 0.0
    %2937 = vmatprep.subr.mxu0 0.0
    %2938 = vmatpush1.msra.mxu0 0.0
    %2939 = vmatprep.subr.mxu0 0.0
    %2940 = vmatpush1.msra.mxu0 0.0
    %2941 = vmatprep.subr.mxu0 0.0
    %2942 = vmatpush1.msra.mxu0 0.0
    %2943 = vmatprep.subr.mxu0 0.0
    %2944 = vmatpush1.msra.mxu0 0.0
    %2945 = vmatprep.subr.mxu0 0.0
    %2946 = vmatpush1.msra.mxu0 0.0
    %2947 = vmatprep.subr.mxu0 0.0
    %2948 = vmatpush1.msra.mxu0 0.0
    %2949 = vmatprep.subr.mxu0 0.0
    %2950 = vmatpush1.msra.mxu0 0.0
    %2951 = vmatprep.subr.mxu0 0.0
    %2952 = vmatpush1.msra.mxu0 0.0
    %2953 = vmatprep.subr.mxu0 0.0
    %2954 = vmatpush1.msra.mxu0 0.0
    %2955 = vmatprep.subr.mxu0 0.0
    %2956 = vmatpush1.msra.mxu0 0.0
    %2957 = vmatprep.subr.mxu0 0.0
    %2958 = vmatpush1.msra.mxu0 0.0
    %2959 = vmatprep.subr.mxu0 0.0
    %2960 = vmatpush1.msra.mxu0 0.0
    %2961 = vmatprep.subr.mxu0 0.0
    %2962 = vmatpush1.msra.mxu0 0.0
    %2963 = vmatprep.subr.mxu0 0.0
    %2964 = vmatpush1.msra.mxu0 0.0
    %2965 = vmatprep.subr.mxu0 0.0
    %2966 = vmatpush1.msra.mxu0 0.0
    %2967 = vmatprep.subr.mxu0 0.0
    %2968 = vmatpush1.msra.mxu0 0.0
    %2969 = vmatprep.subr.mxu0 0.0
    %2970 = vmatpush1.msra.mxu0 0.0
    %2971 = vmatprep.subr.mxu0 0.0
    %2972 = vmatpush1.msra.mxu0 0.0
    %2973 = vmatprep.subr.mxu0 0.0
    %2974 = vmatpush1.msra.mxu0 0.0
    %2975 = vmatprep.subr.mxu0 0.0
    %2976 = vmatpush1.msra.mxu0 0.0
    %2977 = vmatprep.subr.mxu0 0.0
    %2978 = vmatpush1.msra.mxu0 0.0
    %2979 = vmatprep.subr.mxu0 0.0
    %2980 = vmatpush1.msra.mxu0 0.0
    %2981 = vmatprep.subr.mxu0 0.0
    %2982 = vmatpush1.msra.mxu0 0.0
    %2983 = vmatprep.mubr.f32.mxu0 0.0
    %2984 = vmatmul.mubr.f32.gmra.mrb[0].mxu0 %v2767
    %v2985 = vpop.f32.mrb[0].mxu0
    %v2986 = vadd.f32 0.0, %v2985
    %v2987 = vpop.f32.mrb[0].mxu0
    %2988 = vdwg.mxu0
    %v2990 = vrot.slane %v2986, 1
    %v2992 = vadd.f32 %v382, %v2990
    %2993 = vmatprep.subr.mxu0 0.0
    %2994 = vmatpush1.msra.mxu0 %v411
    %2995 = vmatprep.subr.mxu0 0.0
    %2996 = vmatpush1.msra.mxu0 %v412
    %2997 = vmatprep.subr.mxu0 0.0
    %2998 = vmatpush1.msra.mxu0 %v413
    %2999 = vmatprep.subr.mxu0 0.0
    %3000 = vmatpush1.msra.mxu0 %v414
    %3001 = vmatprep.subr.mxu0 0.0
    %3002 = vmatpush1.msra.mxu0 %v415
    %3003 = vmatprep.subr.mxu0 0.0
    %3004 = vmatpush1.msra.mxu0 %v416
    %3005 = vmatprep.subr.mxu0 0.0
    %3006 = vmatpush1.msra.mxu0 %v417
    %3007 = vmatprep.subr.mxu0 0.0
    %3008 = vmatpush1.msra.mxu0 %v418
    %3009 = vmatprep.subr.mxu0 0.0
    %3010 = vmatpush1.msra.mxu0 0.0
    %3011 = vmatprep.subr.mxu0 0.0
    %3012 = vmatpush1.msra.mxu0 0.0
    %3013 = vmatprep.subr.mxu0 0.0
    %3014 = vmatpush1.msra.mxu0 0.0
    %3015 = vmatprep.subr.mxu0 0.0
    %3016 = vmatpush1.msra.mxu0 0.0
    %3017 = vmatprep.subr.mxu0 0.0
    %3018 = vmatpush1.msra.mxu0 0.0
    %3019 = vmatprep.subr.mxu0 0.0
    %3020 = vmatpush1.msra.mxu0 0.0
    %3021 = vmatprep.subr.mxu0 0.0
    %3022 = vmatpush1.msra.mxu0 0.0
    %3023 = vmatprep.subr.mxu0 0.0
    %3024 = vmatpush1.msra.mxu0 0.0
    %3025 = vmatprep.subr.mxu0 0.0
    %3026 = vmatpush1.msra.mxu0 0.0
    %3027 = vmatprep.subr.mxu0 0.0
    %3028 = vmatpush1.msra.mxu0 0.0
    %3029 = vmatprep.subr.mxu0 0.0
    %3030 = vmatpush1.msra.mxu0 0.0
    %3031 = vmatprep.subr.mxu0 0.0
    %3032 = vmatpush1.msra.mxu0 0.0
    %3033 = vmatprep.subr.mxu0 0.0
    %3034 = vmatpush1.msra.mxu0 0.0
    %3035 = vmatprep.subr.mxu0 0.0
    %3036 = vmatpush1.msra.mxu0 0.0
    %3037 = vmatprep.subr.mxu0 0.0
    %3038 = vmatpush1.msra.mxu0 0.0
    %3039 = vmatprep.subr.mxu0 0.0
    %3040 = vmatpush1.msra.mxu0 0.0
    %3041 = vmatprep.subr.mxu0 0.0
    %3042 = vmatpush1.msra.mxu0 0.0
    %3043 = vmatprep.subr.mxu0 0.0
    %3044 = vmatpush1.msra.mxu0 0.0
    %3045 = vmatprep.subr.mxu0 0.0
    %3046 = vmatpush1.msra.mxu0 0.0
    %3047 = vmatprep.subr.mxu0 0.0
    %3048 = vmatpush1.msra.mxu0 0.0
    %3049 = vmatprep.subr.mxu0 0.0
    %3050 = vmatpush1.msra.mxu0 0.0
    %3051 = vmatprep.subr.mxu0 0.0
    %3052 = vmatpush1.msra.mxu0 0.0
    %3053 = vmatprep.subr.mxu0 0.0
    %3054 = vmatpush1.msra.mxu0 0.0
    %3055 = vmatprep.subr.mxu0 0.0
    %3056 = vmatpush1.msra.mxu0 0.0
    %3057 = vmatprep.mubr.f32.mxu0 0.0
    %3058 = vmatmul.mubr.f32.gmra.mrb[0].mxu0 %v2767
    %v3059 = vpop.f32.mrb[0].mxu0
    %v3060 = vadd.f32 0.0, %v3059
    %v3061 = vpop.f32.mrb[0].mxu0
    %3062 = vdwg.mxu0
    %v3064 = vrot.slane %v3060, 1
    %3065 = vrot.lane.b32.xlu0 %v3064, 64
    %v3066 = vpop.permute.xlu0 %3065
    %v3068 = vadd.f32 %v382, %v3066
    %v3069 = vxor.u32 %v2918, 2147483648
    %v3070 = vmul.f32 %v3069, 1.442695
    %v3071 = vpow.pop %v3070
    %v3072 = vadd.f32 %v3071, 1.0
    %v3073 = vrcp.pop %v3072
    %v3074 = vmul.f32 1.0, %v3073
    %v3076 = vrot.slane %v2754, 7
    %v3078 = vmul.f32 %v3074, %v3076
    %v3079 = vxor.u32 %v2842, 2147483648
    %v3080 = vmul.f32 %v3079, 1.442695
    %v3081 = vpow.pop %v3080
    %v3082 = vadd.f32 %v3081, 1.0
    %v3083 = vrcp.pop %v3082
    %v3084 = vmul.f32 1.0, %v3083
    %v3085 = vtanh.pop %v2992
    %v3086 = vmul.f32 %v3084, %v3085
    %3088 = vrot.lane.b32.xlu0 %v3086, 64
    %v3089 = vpop.permute.xlu0 %3088
    %v3091 = vadd.f32 %v3078, %v3089
    %v3092 = vxor.u32 %v3068, 2147483648
    %v3093 = vmul.f32 %v3092, 1.442695
    %v3094 = vpow.pop %v3093
    %v3095 = vadd.f32 %v3094, 1.0
    %v3096 = vrcp.pop %v3095
    %v3097 = vmul.f32 1.0, %v3096
    %v3098 = vtanh.pop %v3091
    %v3099 = vmul.f32 %v3097, %v3098
    %v3100 = vld [vmem:[#allocation12] sm:$0xff]
    %v3101 = vld [vmem:[#allocation12 + $0x8] sm:$0xff]
    %v3102 = vld [vmem:[#allocation12 + $0x10] sm:$0xff]
    %v3103 = vld [vmem:[#allocation12 + $0x18] sm:$0xff]
    %v3104 = vld [vmem:[#allocation12 + $0x20] sm:$0xff]
    %v3105 = vld [vmem:[#allocation12 + $0x28] sm:$0xff]
    %v3106 = vld [vmem:[#allocation12 + $0x30] sm:$0xff]
    %v3107 = vld [vmem:[#allocation12 + $0x38] sm:$0xff]
    %v3108 = vld [vmem:[#allocation13] sm:$0x1]
    %v3110 = vrot.slane %v3099, 7
    %3111 = vrot.lane.b32.xlu0 %v3110, 64
    %v3112 = vpop.permute.xlu0 %3111
    %v3113 = vsel %vm309, %v3112, 0
    %3115 = vmatprep.subr.mxu0 0.0
    %3116 = vmatpush1.msra.mxu0 %v3100
    %3117 = vmatprep.subr.mxu0 0.0
    %3118 = vmatpush1.msra.mxu0 %v3101
    %3119 = vmatprep.subr.mxu0 0.0
    %3120 = vmatpush1.msra.mxu0 %v3102
    %3121 = vmatprep.subr.mxu0 0.0
    %3122 = vmatpush1.msra.mxu0 %v3103
    %3123 = vmatprep.subr.mxu0 0.0
    %3124 = vmatpush1.msra.mxu0 %v3104
    %3125 = vmatprep.subr.mxu0 0.0
    %3126 = vmatpush1.msra.mxu0 %v3105
    %3127 = vmatprep.subr.mxu0 0.0
    %3128 = vmatpush1.msra.mxu0 %v3106
    %3129 = vmatprep.subr.mxu0 0.0
    %3130 = vmatpush1.msra.mxu0 %v3107
    %3131 = vmatprep.subr.mxu0 0.0
    %3132 = vmatpush1.msra.mxu0 0.0
    %3133 = vmatprep.subr.mxu0 0.0
    %3134 = vmatpush1.msra.mxu0 0.0
    %3135 = vmatprep.subr.mxu0 0.0
    %3136 = vmatpush1.msra.mxu0 0.0
    %3137 = vmatprep.subr.mxu0 0.0
    %3138 = vmatpush1.msra.mxu0 0.0
    %3139 = vmatprep.subr.mxu0 0.0
    %3140 = vmatpush1.msra.mxu0 0.0
    %3141 = vmatprep.subr.mxu0 0.0
    %3142 = vmatpush1.msra.mxu0 0.0
    %3143 = vmatprep.subr.mxu0 0.0
    %3144 = vmatpush1.msra.mxu0 0.0
    %3145 = vmatprep.subr.mxu0 0.0
    %3146 = vmatpush1.msra.mxu0 0.0
    %3147 = vmatprep.subr.mxu0 0.0
    %3148 = vmatpush1.msra.mxu0 0.0
    %3149 = vmatprep.subr.mxu0 0.0
    %3150 = vmatpush1.msra.mxu0 0.0
    %3151 = vmatprep.subr.mxu0 0.0
    %3152 = vmatpush1.msra.mxu0 0.0
    %3153 = vmatprep.subr.mxu0 0.0
    %3154 = vmatpush1.msra.mxu0 0.0
    %3155 = vmatprep.subr.mxu0 0.0
    %3156 = vmatpush1.msra.mxu0 0.0
    %3157 = vmatprep.subr.mxu0 0.0
    %3158 = vmatpush1.msra.mxu0 0.0
    %3159 = vmatprep.subr.mxu0 0.0
    %3160 = vmatpush1.msra.mxu0 0.0
    %3161 = vmatprep.subr.mxu0 0.0
    %3162 = vmatpush1.msra.mxu0 0.0
    %3163 = vmatprep.subr.mxu0 0.0
    %3164 = vmatpush1.msra.mxu0 0.0
    %3165 = vmatprep.subr.mxu0 0.0
    %3166 = vmatpush1.msra.mxu0 0.0
    %3167 = vmatprep.subr.mxu0 0.0
    %3168 = vmatpush1.msra.mxu0 0.0
    %3169 = vmatprep.subr.mxu0 0.0
    %3170 = vmatpush1.msra.mxu0 0.0
    %3171 = vmatprep.subr.mxu0 0.0
    %3172 = vmatpush1.msra.mxu0 0.0
    %3173 = vmatprep.subr.mxu0 0.0
    %3174 = vmatpush1.msra.mxu0 0.0
    %3175 = vmatprep.subr.mxu0 0.0
    %3176 = vmatpush1.msra.mxu0 0.0
    %3177 = vmatprep.subr.mxu0 0.0
    %3178 = vmatpush1.msra.mxu0 0.0
    %3179 = vmatprep.mubr.f32.mxu0 0.0
    %3180 = vmatmul.mubr.f32.gmra.mrb[0].mxu0 %v3113
    %v3181 = vpop.f32.mrb[0].mxu0
    %v3182 = vadd.f32 %v3108, %v3181
    %v3183 = vpop.f32.mrb[0].mxu0
    %3184 = vdwg.mxu0
    %v3185 = vmax.f32 %v3182, 0.0
    %v3186 = vld [vmem:[#allocation15] sm:$0xff]
    %v3187 = vld [vmem:[#allocation15 + $0x8] sm:$0xff]
    %v3188 = vld [vmem:[#allocation15 + $0x10] sm:$0xff]
    %v3189 = vld [vmem:[#allocation15 + $0x18] sm:$0xff]
    %v3190 = vld [vmem:[#allocation15 + $0x20] sm:$0xff]
    %v3191 = vld [vmem:[#allocation15 + $0x28] sm:$0xff]
    %v3192 = vld [vmem:[#allocation15 + $0x30] sm:$0xff]
    %v3193 = vld [vmem:[#allocation15 + $0x38] sm:$0xff]
    %v3194 = vld [vmem:[#allocation15 + $0x40] sm:$0xff]
    %v3195 = vld [vmem:[#allocation15 + $0x48] sm:$0xff]
    %v3196 = vld [vmem:[#allocation15 + $0x50] sm:$0xff]
    %v3197 = vld [vmem:[#allocation15 + $0x58] sm:$0xff]
    %v3198 = vld [vmem:[#allocation15 + $0x60] sm:$0xff]
    %v3199 = vld [vmem:[#allocation15 + $0x68] sm:$0xff]
    %v3200 = vld [vmem:[#allocation15 + $0x70] sm:$0xff]
    %v3201 = vld [vmem:[#allocation15 + $0x78] sm:$0xff]
    %v3202 = vld [vmem:[#allocation16] sm:$0x1]
    %3203 = vmatprep.subr.mxu0 0.0
    %3204 = vmatpush1.msra.mxu0 %v3186
    %3205 = vmatprep.subr.mxu0 0.0
    %3206 = vmatpush1.msra.mxu0 %v3187
    %3207 = vmatprep.subr.mxu0 0.0
    %3208 = vmatpush1.msra.mxu0 %v3188
    %3209 = vmatprep.subr.mxu0 0.0
    %3210 = vmatpush1.msra.mxu0 %v3189
    %3211 = vmatprep.subr.mxu0 0.0
    %3212 = vmatpush1.msra.mxu0 %v3190
    %3213 = vmatprep.subr.mxu0 0.0
    %3214 = vmatpush1.msra.mxu0 %v3191
    %3215 = vmatprep.subr.mxu0 0.0
    %3216 = vmatpush1.msra.mxu0 %v3192
    %3217 = vmatprep.subr.mxu0 0.0
    %3218 = vmatpush1.msra.mxu0 %v3193
    %3219 = vmatprep.subr.mxu0 0.0
    %3220 = vmatpush1.msra.mxu0 %v3194
    %3221 = vmatprep.subr.mxu0 0.0
    %3222 = vmatpush1.msra.mxu0 %v3195
    %3223 = vmatprep.subr.mxu0 0.0
    %3224 = vmatpush1.msra.mxu0 %v3196
    %3225 = vmatprep.subr.mxu0 0.0
    %3226 = vmatpush1.msra.mxu0 %v3197
    %3227 = vmatprep.subr.mxu0 0.0
    %3228 = vmatpush1.msra.mxu0 %v3198
    %3229 = vmatprep.subr.mxu0 0.0
    %3230 = vmatpush1.msra.mxu0 %v3199
    %3231 = vmatprep.subr.mxu0 0.0
    %3232 = vmatpush1.msra.mxu0 %v3200
    %3233 = vmatprep.subr.mxu0 0.0
    %3234 = vmatpush1.msra.mxu0 %v3201
    %3235 = vmatprep.subr.mxu0 0.0
    %3236 = vmatpush1.msra.mxu0 0.0
    %3237 = vmatprep.subr.mxu0 0.0
    %3238 = vmatpush1.msra.mxu0 0.0
    %3239 = vmatprep.subr.mxu0 0.0
    %3240 = vmatpush1.msra.mxu0 0.0
    %3241 = vmatprep.subr.mxu0 0.0
    %3242 = vmatpush1.msra.mxu0 0.0
    %3243 = vmatprep.subr.mxu0 0.0
    %3244 = vmatpush1.msra.mxu0 0.0
    %3245 = vmatprep.subr.mxu0 0.0
    %3246 = vmatpush1.msra.mxu0 0.0
    %3247 = vmatprep.subr.mxu0 0.0
    %3248 = vmatpush1.msra.mxu0 0.0
    %3249 = vmatprep.subr.mxu0 0.0
    %3250 = vmatpush1.msra.mxu0 0.0
    %3251 = vmatprep.subr.mxu0 0.0
    %3252 = vmatpush1.msra.mxu0 0.0
    %3253 = vmatprep.subr.mxu0 0.0
    %3254 = vmatpush1.msra.mxu0 0.0
    %3255 = vmatprep.subr.mxu0 0.0
    %3256 = vmatpush1.msra.mxu0 0.0
    %3257 = vmatprep.subr.mxu0 0.0
    %3258 = vmatpush1.msra.mxu0 0.0
    %3259 = vmatprep.subr.mxu0 0.0
    %3260 = vmatpush1.msra.mxu0 0.0
    %3261 = vmatprep.subr.mxu0 0.0
    %3262 = vmatpush1.msra.mxu0 0.0
    %3263 = vmatprep.subr.mxu0 0.0
    %3264 = vmatpush1.msra.mxu0 0.0
    %3265 = vmatprep.subr.mxu0 0.0
    %3266 = vmatpush1.msra.mxu0 0.0
    %3267 = vmatprep.mubr.f32.mxu0 0.0
    %3268 = vmatmul.mubr.f32.gmra.mrb[0].mxu0 %v3185
    %v3269 = vpop.f32.mrb[0].mxu0
    %v3270 = vadd.f32 %v3202, %v3269
    %v3271 = vpop.f32.mrb[0].mxu0
    %3272 = vdwg.mxu0
    %v3273 = vmax.f32 %v3270, 0.0
    %v3274 = vld [vmem:[#allocation18] sm:$0xff]
    %v3275 = vld [vmem:[#allocation19] sm:$0x1]
    %vm3276 = vcmask 64512
    %v3278 = vsel %vm3276, %v3273, 0
    %3280 = vmatprep.subr.mxu0 0.0
    %3281 = vmatpush1.msra.mxu0 %v3274
    %3282 = vmatprep.subr.mxu0 0.0
    %3283 = vmatpush1.msra.mxu0 0.0
    %3284 = vmatprep.subr.mxu0 0.0
    %3285 = vmatpush1.msra.mxu0 0.0
    %3286 = vmatprep.subr.mxu0 0.0
    %3287 = vmatpush1.msra.mxu0 0.0
    %3288 = vmatprep.subr.mxu0 0.0
    %3289 = vmatpush1.msra.mxu0 0.0
    %3290 = vmatprep.subr.mxu0 0.0
    %3291 = vmatpush1.msra.mxu0 0.0
    %3292 = vmatprep.subr.mxu0 0.0
    %3293 = vmatpush1.msra.mxu0 0.0
    %3294 = vmatprep.subr.mxu0 0.0
    %3295 = vmatpush1.msra.mxu0 0.0
    %3296 = vmatprep.subr.mxu0 0.0
    %3297 = vmatpush1.msra.mxu0 0.0
    %3298 = vmatprep.subr.mxu0 0.0
    %3299 = vmatpush1.msra.mxu0 0.0
    %3300 = vmatprep.subr.mxu0 0.0
    %3301 = vmatpush1.msra.mxu0 0.0
    %3302 = vmatprep.subr.mxu0 0.0
    %3303 = vmatpush1.msra.mxu0 0.0
    %3304 = vmatprep.subr.mxu0 0.0
    %3305 = vmatpush1.msra.mxu0 0.0
    %3306 = vmatprep.subr.mxu0 0.0
    %3307 = vmatpush1.msra.mxu0 0.0
    %3308 = vmatprep.subr.mxu0 0.0
    %3309 = vmatpush1.msra.mxu0 0.0
    %3310 = vmatprep.subr.mxu0 0.0
    %3311 = vmatpush1.msra.mxu0 0.0
    %3312 = vmatprep.subr.mxu0 0.0
    %3313 = vmatpush1.msra.mxu0 0.0
    %3314 = vmatprep.subr.mxu0 0.0
    %3315 = vmatpush1.msra.mxu0 0.0
    %3316 = vmatprep.subr.mxu0 0.0
    %3317 = vmatpush1.msra.mxu0 0.0
    %3318 = vmatprep.subr.mxu0 0.0
    %3319 = vmatpush1.msra.mxu0 0.0
    %3320 = vmatprep.subr.mxu0 0.0
    %3321 = vmatpush1.msra.mxu0 0.0
    %3322 = vmatprep.subr.mxu0 0.0
    %3323 = vmatpush1.msra.mxu0 0.0
    %3324 = vmatprep.subr.mxu0 0.0
    %3325 = vmatpush1.msra.mxu0 0.0
    %3326 = vmatprep.subr.mxu0 0.0
    %3327 = vmatpush1.msra.mxu0 0.0
    %3328 = vmatprep.subr.mxu0 0.0
    %3329 = vmatpush1.msra.mxu0 0.0
    %3330 = vmatprep.subr.mxu0 0.0
    %3331 = vmatpush1.msra.mxu0 0.0
    %3332 = vmatprep.subr.mxu0 0.0
    %3333 = vmatpush1.msra.mxu0 0.0
    %3334 = vmatprep.subr.mxu0 0.0
    %3335 = vmatpush1.msra.mxu0 0.0
    %3336 = vmatprep.subr.mxu0 0.0
    %3337 = vmatpush1.msra.mxu0 0.0
    %3338 = vmatprep.subr.mxu0 0.0
    %3339 = vmatpush1.msra.mxu0 0.0
    %3340 = vmatprep.subr.mxu0 0.0
    %3341 = vmatpush1.msra.mxu0 0.0
    %3342 = vmatprep.subr.mxu0 0.0
    %3343 = vmatpush1.msra.mxu0 0.0
    %3344 = vmatprep.mubr.f32.mxu0 0.0
    %3345 = vmatmul.mubr.f32.gmra.mrb[0].mxu0 %v3278
    %v3346 = vpop.f32.mrb[0].mxu0
    %v3347 = vadd.f32 %v3275, %v3346
    %v3348 = vpop.f32.mrb[0].mxu0
    %3349 = vdwg.mxu0
    %vm3350 = vcmask 16384
    %3351 = vst.msk [vmem:[%s12] sm:$0x1] %vm3350, %v3347
    // Predicated region
    $region98: #{_lambda_.7} parent=1 // pred_check
      _
    $region99: #{_lambda_.7} parent=1 // pred_check_branch
      %3353 = sbr.rel (0) target = $region101
    $region100: #{_lambda_.7} parent=1 // pred_region
      _
    $region101: #{_lambda_.7} parent=1 // pred_fallthru
      _
    // Predicated region
    $region102: #{_lambda_.7} parent=1 // pred_check
      _
    $region103: #{_lambda_.7} parent=1 // pred_check_branch
      %3355 = sbr.rel (0) target = $region105
    $region104: #{_lambda_.7} parent=1 // pred_region
      _
    $region105: #{_lambda_.7} parent=1 // pred_fallthru
      _
    %3356 = vsyncpa [#allocation3], 1
    %3357 = vsyncpa [#allocation5], 1
    %3358 = vsyncpa [#allocation8], 1
    %3359 = vsyncpa [#allocation11], 1
    %3360 = vsyncpa [#allocation14], 1
    %3361 = vsyncpa [#allocation17], 1
    %3362 = vsyncpa [#allocation20], 1

// kernel: _lambda_.4
$region0: #{_lambda_.4}
  #allocation0 [shape = 'u32[]', space=smem, size = 0x4, offset = 0x4, fixed_abs, tag = 'smem constant byte address 0x4 - core index']
  #allocation1 [shape = 'u32[144,128]{1,0:T(1,128)}', space=vmem, size = 0x12000, scoped, tag = 'internal scratch']
  %s0 = inlined_call_operand.vmem [shape: f32[9,81,216], index: 0, kind: input, shape index: {}]
  %s1 = inlined_call_operand.vmem [shape: f32[16,81], index: 1, kind: input, shape index: {}]
  %s2 = inlined_call_operand.vmem [shape: f32[16,1], index: 2, kind: input, shape index: {}]
  %s3 = inlined_call_operand.vmem [shape: f32[16,216], index: 3, kind: output, shape index: {}]
  %s4 = sld [smem:[#allocation0]]
  $region22: #{_lambda_.4} parent=0
    _
  %s6 = ssub.s32 1, %s4
  %s7 = scalar_select 0, %s6, %s4
  // Predicated region
  $region2: #{_lambda_.4} parent=0 // pred_check
    _
  $region3: #{_lambda_.4} parent=0 // pred_check_branch
    %9 = sbr.rel (0) target = $region5
  $region4: #{_lambda_.4} parent=0 // pred_region
    _
  $region5: #{_lambda_.4} parent=0 // pred_fallthru
    _
  // Predicated region
  $region6: #{_lambda_.4} parent=0 // pred_check
    _
  $region7: #{_lambda_.4} parent=0 // pred_check_branch
    %11 = sbr.rel (0) target = $region9
  $region8: #{_lambda_.4} parent=0 // pred_region
    _
  $region9: #{_lambda_.4} parent=0 // pred_fallthru
    _
  // Predicated region
  $region10: #{_lambda_.4} parent=0 // pred_check
    _
  $region11: #{_lambda_.4} parent=0 // pred_check_branch
    %13 = sbr.rel (0) target = $region13
  $region12: #{_lambda_.4} parent=0 // pred_region
    _
  $region13: #{_lambda_.4} parent=0 // pred_fallthru
    _
  %v14 = vld [vmem:[%s1] sm:$0xff]
  %v15 = vld [vmem:[%s1 + $0x8] sm:$0xff]
  %v16 = vld [vmem:[%s0] sm:$0xff]
  %v17 = vld [vmem:[%s0 + $0x8] sm:$0xff]
  %v18 = vld [vmem:[%s0 + $0x10] sm:$0xff]
  %v19 = vld [vmem:[%s0 + $0x18] sm:$0xff]
  %v20 = vld [vmem:[%s0 + $0x20] sm:$0xff]
  %v21 = vld [vmem:[%s0 + $0x28] sm:$0xff]
  %v22 = vld [vmem:[%s0 + $0x30] sm:$0xff]
  %v23 = vld [vmem:[%s0 + $0x38] sm:$0xff]
  %v24 = vld [vmem:[%s0 + $0x40] sm:$0xff]
  %v25 = vld [vmem:[%s0 + $0x48] sm:$0xff]
  %v26 = vld [vmem:[%s0 + $0x50] sm:$0xff]
  %v27 = vld [vmem:[%s0 + $0x58] sm:$0xff]
  %v28 = vld [vmem:[%s0 + $0x60] sm:$0xff]
  %v29 = vld [vmem:[%s0 + $0x68] sm:$0xff]
  %v30 = vld [vmem:[%s0 + $0x70] sm:$0xff]
  %v31 = vld [vmem:[%s0 + $0x78] sm:$0xff]
  %v32 = vld [vmem:[%s0 + $0x80] sm:$0xff]
  %v33 = vld [vmem:[%s0 + $0x88] sm:$0xff]
  %v34 = vld [vmem:[%s0 + $0x90] sm:$0xff]
  %v35 = vld [vmem:[%s0 + $0x98] sm:$0xff]
  %v36 = vld [vmem:[%s0 + $0xa0] sm:$0x1]
  %v37 = vld [vmem:[%s0 + $0xa8] sm:$0x1]
  %vm38 = vcmask 662528
  %v40 = vsel %vm38, %v14, 0
  %v43 = vsel %vm38, %v15, 0
  %vm45 = vcmask 1040384
  %v47 = vsel %vm45, %v36, 0
  %v50 = vsel %vm45, %v37, 0
  %52 = vmatprep.subr.mxu0 %v17
  %53 = vmatpush1.msra.mxu0 %v16
  %54 = vmatprep.subr.mxu0 %v19
  %55 = vmatpush1.msra.mxu0 %v18
  %56 = vmatprep.subr.mxu0 %v21
  %57 = vmatpush1.msra.mxu0 %v20
  %58 = vmatprep.subr.mxu0 %v23
  %59 = vmatpush1.msra.mxu0 %v22
  %60 = vmatprep.subr.mxu0 %v25
  %61 = vmatpush1.msra.mxu0 %v24
  %62 = vmatprep.subr.mxu0 %v27
  %63 = vmatpush1.msra.mxu0 %v26
  %64 = vmatprep.subr.mxu0 %v29
  %65 = vmatpush1.msra.mxu0 %v28
  %66 = vmatprep.subr.mxu0 %v31
  %67 = vmatpush1.msra.mxu0 %v30
  %68 = vmatprep.subr.mxu0 %v33
  %69 = vmatpush1.msra.mxu0 %v32
  %70 = vmatprep.subr.mxu0 %v35
  %71 = vmatpush1.msra.mxu0 %v34
  %72 = vmatprep.subr.mxu0 %v50
  %73 = vmatpush1.msra.mxu0 %v47
  %74 = vmatprep.subr.mxu0 0.0
  %75 = vmatpush1.msra.mxu0 0.0
  %76 = vmatprep.subr.mxu0 0.0
  %77 = vmatpush1.msra.mxu0 0.0
  %78 = vmatprep.subr.mxu0 0.0
  %79 = vmatpush1.msra.mxu0 0.0
  %80 = vmatprep.subr.mxu0 0.0
  %81 = vmatpush1.msra.mxu0 0.0
  %82 = vmatprep.subr.mxu0 0.0
  %83 = vmatpush1.msra.mxu0 0.0
  %84 = vmatprep.subr.mxu0 0.0
  %85 = vmatpush1.msra.mxu0 0.0
  %86 = vmatprep.subr.mxu0 0.0
  %87 = vmatpush1.msra.mxu0 0.0
  %88 = vmatprep.subr.mxu0 0.0
  %89 = vmatpush1.msra.mxu0 0.0
  %90 = vmatprep.subr.mxu0 0.0
  %91 = vmatpush1.msra.mxu0 0.0
  %92 = vmatprep.subr.mxu0 0.0
  %93 = vmatpush1.msra.mxu0 0.0
  %94 = vmatprep.subr.mxu0 0.0
  %95 = vmatpush1.msra.mxu0 0.0
  %96 = vmatprep.subr.mxu0 0.0
  %97 = vmatpush1.msra.mxu0 0.0
  %98 = vmatprep.subr.mxu0 0.0
  %99 = vmatpush1.msra.mxu0 0.0
  %100 = vmatprep.subr.mxu0 0.0
  %101 = vmatpush1.msra.mxu0 0.0
  %102 = vmatprep.subr.mxu0 0.0
  %103 = vmatpush1.msra.mxu0 0.0
  %104 = vmatprep.subr.mxu0 0.0
  %105 = vmatpush1.msra.mxu0 0.0
  %106 = vmatprep.subr.mxu0 0.0
  %107 = vmatpush1.msra.mxu0 0.0
  %108 = vmatprep.subr.mxu0 0.0
  %109 = vmatpush1.msra.mxu0 0.0
  %110 = vmatprep.subr.mxu0 0.0
  %111 = vmatpush1.msra.mxu0 0.0
  %112 = vmatprep.subr.mxu0 0.0
  %113 = vmatpush1.msra.mxu0 0.0
  %114 = vmatprep.subr.mxu0 0.0
  %115 = vmatpush1.msra.mxu0 0.0
  %116 = vmatprep.mubr.f32.mxu0 0.0
  %117 = vmatmul.mubr.f32.gmra.mrb[0].mxu0 %v40
  %v118 = vpop.f32.mrb[0].mxu0
  %v119 = vadd.f32 0.0, %v118
  %v120 = vpop.f32.mrb[0].mxu0
  %v121 = vadd.f32 0.0, %v120
  %122 = vmatprep.mubr.f32.mxu0 0.0
  %123 = vmatmul.mubr.f32.gmra.mrb[0].mxu0 %v43
  %v124 = vpop.f32.mrb[0].mxu0
  %v125 = vadd.f32 0.0, %v124
  %v126 = vpop.f32.mrb[0].mxu0
  %v127 = vadd.f32 0.0, %v126
  %128 = vdwg.mxu0
  %s129 = scalar_lea.vmem %s0, 176
  %v130 = vld [vmem:[%s129] sm:$0xff]
  %v131 = vld [vmem:[%s129 + $0x8] sm:$0xff]
  %v132 = vld [vmem:[%s129 + $0x10] sm:$0xff]
  %v133 = vld [vmem:[%s129 + $0x18] sm:$0xff]
  %v134 = vld [vmem:[%s129 + $0x20] sm:$0xff]
  %v135 = vld [vmem:[%s129 + $0x28] sm:$0xff]
  %v136 = vld [vmem:[%s129 + $0x30] sm:$0xff]
  %v137 = vld [vmem:[%s129 + $0x38] sm:$0xff]
  %v138 = vld [vmem:[%s129 + $0x40] sm:$0xff]
  %v139 = vld [vmem:[%s129 + $0x48] sm:$0xff]
  %v140 = vld [vmem:[%s129 + $0x50] sm:$0xff]
  %v141 = vld [vmem:[%s129 + $0x58] sm:$0xff]
  %v142 = vld [vmem:[%s129 + $0x60] sm:$0xff]
  %v143 = vld [vmem:[%s129 + $0x68] sm:$0xff]
  %v144 = vld [vmem:[%s129 + $0x70] sm:$0xff]
  %v145 = vld [vmem:[%s129 + $0x78] sm:$0xff]
  %v146 = vld [vmem:[%s129 + $0x80] sm:$0xff]
  %v147 = vld [vmem:[%s129 + $0x88] sm:$0xff]
  %v148 = vld [vmem:[%s129 + $0x90] sm:$0xff]
  %v149 = vld [vmem:[%s129 + $0x98] sm:$0xff]
  %v150 = vld [vmem:[%s129 + $0xa0] sm:$0x1]
  %v151 = vld [vmem:[%s129 + $0xa8] sm:$0x1]
  %v153 = vsel %vm45, %v150, 0
  %v156 = vsel %vm45, %v151, 0
  %158 = vmatprep.subr.mxu0 %v131
  %159 = vmatpush1.msra.mxu0 %v130
  %160 = vmatprep.subr.mxu0 %v133
  %161 = vmatpush1.msra.mxu0 %v132
  %162 = vmatprep.subr.mxu0 %v135
  %163 = vmatpush1.msra.mxu0 %v134
  %164 = vmatprep.subr.mxu0 %v137
  %165 = vmatpush1.msra.mxu0 %v136
  %166 = vmatprep.subr.mxu0 %v139
  %167 = vmatpush1.msra.mxu0 %v138
  %168 = vmatprep.subr.mxu0 %v141
  %169 = vmatpush1.msra.mxu0 %v140
  %170 = vmatprep.subr.mxu0 %v143
  %171 = vmatpush1.msra.mxu0 %v142
  %172 = vmatprep.subr.mxu0 %v145
  %173 = vmatpush1.msra.mxu0 %v144
  %174 = vmatprep.subr.mxu0 %v147
  %175 = vmatpush1.msra.mxu0 %v146
  %176 = vmatprep.subr.mxu0 %v149
  %177 = vmatpush1.msra.mxu0 %v148
  %178 = vmatprep.subr.mxu0 %v156
  %179 = vmatpush1.msra.mxu0 %v153
  %180 = vmatprep.subr.mxu0 0.0
  %181 = vmatpush1.msra.mxu0 0.0
  %182 = vmatprep.subr.mxu0 0.0
  %183 = vmatpush1.msra.mxu0 0.0
  %184 = vmatprep.subr.mxu0 0.0
  %185 = vmatpush1.msra.mxu0 0.0
  %186 = vmatprep.subr.mxu0 0.0
  %187 = vmatpush1.msra.mxu0 0.0
  %188 = vmatprep.subr.mxu0 0.0
  %189 = vmatpush1.msra.mxu0 0.0
  %190 = vmatprep.subr.mxu0 0.0
  %191 = vmatpush1.msra.mxu0 0.0
  %192 = vmatprep.subr.mxu0 0.0
  %193 = vmatpush1.msra.mxu0 0.0
  %194 = vmatprep.subr.mxu0 0.0
  %195 = vmatpush1.msra.mxu0 0.0
  %196 = vmatprep.subr.mxu0 0.0
  %197 = vmatpush1.msra.mxu0 0.0
  %198 = vmatprep.subr.mxu0 0.0
  %199 = vmatpush1.msra.mxu0 0.0
  %200 = vmatprep.subr.mxu0 0.0
  %201 = vmatpush1.msra.mxu0 0.0
  %202 = vmatprep.subr.mxu0 0.0
  %203 = vmatpush1.msra.mxu0 0.0
  %204 = vmatprep.subr.mxu0 0.0
  %205 = vmatpush1.msra.mxu0 0.0
  %206 = vmatprep.subr.mxu0 0.0
  %207 = vmatpush1.msra.mxu0 0.0
  %208 = vmatprep.subr.mxu0 0.0
  %209 = vmatpush1.msra.mxu0 0.0
  %210 = vmatprep.subr.mxu0 0.0
  %211 = vmatpush1.msra.mxu0 0.0
  %212 = vmatprep.subr.mxu0 0.0
  %213 = vmatpush1.msra.mxu0 0.0
  %214 = vmatprep.subr.mxu0 0.0
  %215 = vmatpush1.msra.mxu0 0.0
  %216 = vmatprep.subr.mxu0 0.0
  %217 = vmatpush1.msra.mxu0 0.0
  %218 = vmatprep.subr.mxu0 0.0
  %219 = vmatpush1.msra.mxu0 0.0
  %220 = vmatprep.subr.mxu0 0.0
  %221 = vmatpush1.msra.mxu0 0.0
  %222 = vmatprep.mubr.f32.mxu0 0.0
  %223 = vmatmul.mubr.f32.gmra.mrb[0].mxu0 %v40
  %v224 = vpop.f32.mrb[0].mxu0
  %v225 = vadd.f32 0.0, %v224
  %v226 = vpop.f32.mrb[0].mxu0
  %v227 = vadd.f32 0.0, %v226
  %228 = vmatprep.mubr.f32.mxu0 0.0
  %229 = vmatmul.mubr.f32.gmra.mrb[0].mxu0 %v43
  %v230 = vpop.f32.mrb[0].mxu0
  %v231 = vadd.f32 0.0, %v230
  %v232 = vpop.f32.mrb[0].mxu0
  %v233 = vadd.f32 0.0, %v232
  %234 = vdwg.mxu0
  %v235 = vmax.f32 %v119, %v225
  %v236 = vmax.f32 %v121, %v227
  %v237 = vmax.f32 %v125, %v231
  %v238 = vmax.f32 %v127, %v233
  %s239 = scalar_lea.vmem %s0, 352
  %v240 = vld [vmem:[%s239] sm:$0xff]
  %v241 = vld [vmem:[%s239 + $0x8] sm:$0xff]
  %v242 = vld [vmem:[%s239 + $0x10] sm:$0xff]
  %v243 = vld [vmem:[%s239 + $0x18] sm:$0xff]
  %v244 = vld [vmem:[%s239 + $0x20] sm:$0xff]
  %v245 = vld [vmem:[%s239 + $0x28] sm:$0xff]
  %v246 = vld [vmem:[%s239 + $0x30] sm:$0xff]
  %v247 = vld [vmem:[%s239 + $0x38] sm:$0xff]
  %v248 = vld [vmem:[%s239 + $0x40] sm:$0xff]
  %v249 = vld [vmem:[%s239 + $0x48] sm:$0xff]
  %v250 = vld [vmem:[%s239 + $0x50] sm:$0xff]
  %v251 = vld [vmem:[%s239 + $0x58] sm:$0xff]
  %v252 = vld [vmem:[%s239 + $0x60] sm:$0xff]
  %v253 = vld [vmem:[%s239 + $0x68] sm:$0xff]
  %v254 = vld [vmem:[%s239 + $0x70] sm:$0xff]
  %v255 = vld [vmem:[%s239 + $0x78] sm:$0xff]
  %v256 = vld [vmem:[%s239 + $0x80] sm:$0xff]
  %v257 = vld [vmem:[%s239 + $0x88] sm:$0xff]
  %v258 = vld [vmem:[%s239 + $0x90] sm:$0xff]
  %v259 = vld [vmem:[%s239 + $0x98] sm:$0xff]
  %v260 = vld [vmem:[%s239 + $0xa0] sm:$0x1]
  %v261 = vld [vmem:[%s239 + $0xa8] sm:$0x1]
  %v263 = vsel %vm45, %v260, 0
  %v266 = vsel %vm45, %v261, 0
  %268 = vmatprep.subr.mxu0 %v241
  %269 = vmatpush1.msra.mxu0 %v240
  %270 = vmatprep.subr.mxu0 %v243
  %271 = vmatpush1.msra.mxu0 %v242
  %272 = vmatprep.subr.mxu0 %v245
  %273 = vmatpush1.msra.mxu0 %v244
  %274 = vmatprep.subr.mxu0 %v247
  %275 = vmatpush1.msra.mxu0 %v246
  %276 = vmatprep.subr.mxu0 %v249
  %277 = vmatpush1.msra.mxu0 %v248
  %278 = vmatprep.subr.mxu0 %v251
  %279 = vmatpush1.msra.mxu0 %v250
  %280 = vmatprep.subr.mxu0 %v253
  %281 = vmatpush1.msra.mxu0 %v252
  %282 = vmatprep.subr.mxu0 %v255
  %283 = vmatpush1.msra.mxu0 %v254
  %284 = vmatprep.subr.mxu0 %v257
  %285 = vmatpush1.msra.mxu0 %v256
  %286 = vmatprep.subr.mxu0 %v259
  %287 = vmatpush1.msra.mxu0 %v258
  %288 = vmatprep.subr.mxu0 %v266
  %289 = vmatpush1.msra.mxu0 %v263
  %290 = vmatprep.subr.mxu0 0.0
  %291 = vmatpush1.msra.mxu0 0.0
  %292 = vmatprep.subr.mxu0 0.0
  %293 = vmatpush1.msra.mxu0 0.0
  %294 = vmatprep.subr.mxu0 0.0
  %295 = vmatpush1.msra.mxu0 0.0
  %296 = vmatprep.subr.mxu0 0.0
  %297 = vmatpush1.msra.mxu0 0.0
  %298 = vmatprep.subr.mxu0 0.0
  %299 = vmatpush1.msra.mxu0 0.0
  %300 = vmatprep.subr.mxu0 0.0
  %301 = vmatpush1.msra.mxu0 0.0
  %302 = vmatprep.subr.mxu0 0.0
  %303 = vmatpush1.msra.mxu0 0.0
  %304 = vmatprep.subr.mxu0 0.0
  %305 = vmatpush1.msra.mxu0 0.0
  %306 = vmatprep.subr.mxu0 0.0
  %307 = vmatpush1.msra.mxu0 0.0
  %308 = vmatprep.subr.mxu0 0.0
  %309 = vmatpush1.msra.mxu0 0.0
  %310 = vmatprep.subr.mxu0 0.0
  %311 = vmatpush1.msra.mxu0 0.0
  %312 = vmatprep.subr.mxu0 0.0
  %313 = vmatpush1.msra.mxu0 0.0
  %314 = vmatprep.subr.mxu0 0.0
  %315 = vmatpush1.msra.mxu0 0.0
  %316 = vmatprep.subr.mxu0 0.0
  %317 = vmatpush1.msra.mxu0 0.0
  %318 = vmatprep.subr.mxu0 0.0
  %319 = vmatpush1.msra.mxu0 0.0
  %320 = vmatprep.subr.mxu0 0.0
  %321 = vmatpush1.msra.mxu0 0.0
  %322 = vmatprep.subr.mxu0 0.0
  %323 = vmatpush1.msra.mxu0 0.0
  %324 = vmatprep.subr.mxu0 0.0
  %325 = vmatpush1.msra.mxu0 0.0
  %326 = vmatprep.subr.mxu0 0.0
  %327 = vmatpush1.msra.mxu0 0.0
  %328 = vmatprep.subr.mxu0 0.0
  %329 = vmatpush1.msra.mxu0 0.0
  %330 = vmatprep.subr.mxu0 0.0
  %331 = vmatpush1.msra.mxu0 0.0
  %332 = vmatprep.mubr.f32.mxu0 0.0
  %333 = vmatmul.mubr.f32.gmra.mrb[0].mxu0 %v40
  %v334 = vpop.f32.mrb[0].mxu0
  %v335 = vadd.f32 0.0, %v334
  %v336 = vpop.f32.mrb[0].mxu0
  %v337 = vadd.f32 0.0, %v336
  %338 = vmatprep.mubr.f32.mxu0 0.0
  %339 = vmatmul.mubr.f32.gmra.mrb[0].mxu0 %v43
  %v340 = vpop.f32.mrb[0].mxu0
  %v341 = vadd.f32 0.0, %v340
  %v342 = vpop.f32.mrb[0].mxu0
  %v343 = vadd.f32 0.0, %v342
  %344 = vdwg.mxu0
  %v345 = vmax.f32 %v235, %v335
  %v346 = vmax.f32 %v236, %v337
  %v347 = vmax.f32 %v237, %v341
  %v348 = vmax.f32 %v238, %v343
  %s349 = scalar_lea.vmem %s0, 528
  %v350 = vld [vmem:[%s349] sm:$0xff]
  %v351 = vld [vmem:[%s349 + $0x8] sm:$0xff]
  %v352 = vld [vmem:[%s349 + $0x10] sm:$0xff]
  %v353 = vld [vmem:[%s349 + $0x18] sm:$0xff]
  %v354 = vld [vmem:[%s349 + $0x20] sm:$0xff]
  %v355 = vld [vmem:[%s349 + $0x28] sm:$0xff]
  %v356 = vld [vmem:[%s349 + $0x30] sm:$0xff]
  %v357 = vld [vmem:[%s349 + $0x38] sm:$0xff]
  %v358 = vld [vmem:[%s349 + $0x40] sm:$0xff]
  %v359 = vld [vmem:[%s349 + $0x48] sm:$0xff]
  %v360 = vld [vmem:[%s349 + $0x50] sm:$0xff]
  %v361 = vld [vmem:[%s349 + $0x58] sm:$0xff]
  %v362 = vld [vmem:[%s349 + $0x60] sm:$0xff]
  %v363 = vld [vmem:[%s349 + $0x68] sm:$0xff]
  %v364 = vld [vmem:[%s349 + $0x70] sm:$0xff]
  %v365 = vld [vmem:[%s349 + $0x78] sm:$0xff]
  %v366 = vld [vmem:[%s349 + $0x80] sm:$0xff]
  %v367 = vld [vmem:[%s349 + $0x88] sm:$0xff]
  %v368 = vld [vmem:[%s349 + $0x90] sm:$0xff]
  %v369 = vld [vmem:[%s349 + $0x98] sm:$0xff]
  %v370 = vld [vmem:[%s349 + $0xa0] sm:$0x1]
  %v371 = vld [vmem:[%s349 + $0xa8] sm:$0x1]
  %v373 = vsel %vm45, %v370, 0
  %v376 = vsel %vm45, %v371, 0
  %378 = vmatprep.subr.mxu0 %v351
  %379 = vmatpush1.msra.mxu0 %v350
  %380 = vmatprep.subr.mxu0 %v353
  %381 = vmatpush1.msra.mxu0 %v352
  %382 = vmatprep.subr.mxu0 %v355
  %383 = vmatpush1.msra.mxu0 %v354
  %384 = vmatprep.subr.mxu0 %v357
  %385 = vmatpush1.msra.mxu0 %v356
  %386 = vmatprep.subr.mxu0 %v359
  %387 = vmatpush1.msra.mxu0 %v358
  %388 = vmatprep.subr.mxu0 %v361
  %389 = vmatpush1.msra.mxu0 %v360
  %390 = vmatprep.subr.mxu0 %v363
  %391 = vmatpush1.msra.mxu0 %v362
  %392 = vmatprep.subr.mxu0 %v365
  %393 = vmatpush1.msra.mxu0 %v364
  %394 = vmatprep.subr.mxu0 %v367
  %395 = vmatpush1.msra.mxu0 %v366
  %396 = vmatprep.subr.mxu0 %v369
  %397 = vmatpush1.msra.mxu0 %v368
  %398 = vmatprep.subr.mxu0 %v376
  %399 = vmatpush1.msra.mxu0 %v373
  %400 = vmatprep.subr.mxu0 0.0
  %401 = vmatpush1.msra.mxu0 0.0
  %402 = vmatprep.subr.mxu0 0.0
  %403 = vmatpush1.msra.mxu0 0.0
  %404 = vmatprep.subr.mxu0 0.0
  %405 = vmatpush1.msra.mxu0 0.0
  %406 = vmatprep.subr.mxu0 0.0
  %407 = vmatpush1.msra.mxu0 0.0
  %408 = vmatprep.subr.mxu0 0.0
  %409 = vmatpush1.msra.mxu0 0.0
  %410 = vmatprep.subr.mxu0 0.0
  %411 = vmatpush1.msra.mxu0 0.0
  %412 = vmatprep.subr.mxu0 0.0
  %413 = vmatpush1.msra.mxu0 0.0
  %414 = vmatprep.subr.mxu0 0.0
  %415 = vmatpush1.msra.mxu0 0.0
  %416 = vmatprep.subr.mxu0 0.0
  %417 = vmatpush1.msra.mxu0 0.0
  %418 = vmatprep.subr.mxu0 0.0
  %419 = vmatpush1.msra.mxu0 0.0
  %420 = vmatprep.subr.mxu0 0.0
  %421 = vmatpush1.msra.mxu0 0.0
  %422 = vmatprep.subr.mxu0 0.0
  %423 = vmatpush1.msra.mxu0 0.0
  %424 = vmatprep.subr.mxu0 0.0
  %425 = vmatpush1.msra.mxu0 0.0
  %426 = vmatprep.subr.mxu0 0.0
  %427 = vmatpush1.msra.mxu0 0.0
  %428 = vmatprep.subr.mxu0 0.0
  %429 = vmatpush1.msra.mxu0 0.0
  %430 = vmatprep.subr.mxu0 0.0
  %431 = vmatpush1.msra.mxu0 0.0
  %432 = vmatprep.subr.mxu0 0.0
  %433 = vmatpush1.msra.mxu0 0.0
  %434 = vmatprep.subr.mxu0 0.0
  %435 = vmatpush1.msra.mxu0 0.0
  %436 = vmatprep.subr.mxu0 0.0
  %437 = vmatpush1.msra.mxu0 0.0
  %438 = vmatprep.subr.mxu0 0.0
  %439 = vmatpush1.msra.mxu0 0.0
  %440 = vmatprep.subr.mxu0 0.0
  %441 = vmatpush1.msra.mxu0 0.0
  %442 = vmatprep.mubr.f32.mxu0 0.0
  %443 = vmatmul.mubr.f32.gmra.mrb[0].mxu0 %v40
  %v444 = vpop.f32.mrb[0].mxu0
  %v445 = vadd.f32 0.0, %v444
  %v446 = vpop.f32.mrb[0].mxu0
  %v447 = vadd.f32 0.0, %v446
  %448 = vmatprep.mubr.f32.mxu0 0.0
  %449 = vmatmul.mubr.f32.gmra.mrb[0].mxu0 %v43
  %v450 = vpop.f32.mrb[0].mxu0
  %v451 = vadd.f32 0.0, %v450
  %v452 = vpop.f32.mrb[0].mxu0
  %v453 = vadd.f32 0.0, %v452
  %454 = vdwg.mxu0
  %v455 = vmax.f32 %v345, %v445
  %v456 = vmax.f32 %v346, %v447
  %v457 = vmax.f32 %v347, %v451
  %v458 = vmax.f32 %v348, %v453
  %s459 = scalar_lea.vmem %s0, 704
  %v460 = vld [vmem:[%s459] sm:$0xff]
  %v461 = vld [vmem:[%s459 + $0x8] sm:$0xff]
  %v462 = vld [vmem:[%s459 + $0x10] sm:$0xff]
  %v463 = vld [vmem:[%s459 + $0x18] sm:$0xff]
  %v464 = vld [vmem:[%s459 + $0x20] sm:$0xff]
  %v465 = vld [vmem:[%s459 + $0x28] sm:$0xff]
  %v466 = vld [vmem:[%s459 + $0x30] sm:$0xff]
  %v467 = vld [vmem:[%s459 + $0x38] sm:$0xff]
  %v468 = vld [vmem:[%s459 + $0x40] sm:$0xff]
  %v469 = vld [vmem:[%s459 + $0x48] sm:$0xff]
  %v470 = vld [vmem:[%s459 + $0x50] sm:$0xff]
  %v471 = vld [vmem:[%s459 + $0x58] sm:$0xff]
  %v472 = vld [vmem:[%s459 + $0x60] sm:$0xff]
  %v473 = vld [vmem:[%s459 + $0x68] sm:$0xff]
  %v474 = vld [vmem:[%s459 + $0x70] sm:$0xff]
  %v475 = vld [vmem:[%s459 + $0x78] sm:$0xff]
  %v476 = vld [vmem:[%s459 + $0x80] sm:$0xff]
  %v477 = vld [vmem:[%s459 + $0x88] sm:$0xff]
  %v478 = vld [vmem:[%s459 + $0x90] sm:$0xff]
  %v479 = vld [vmem:[%s459 + $0x98] sm:$0xff]
  %v480 = vld [vmem:[%s459 + $0xa0] sm:$0x1]
  %v481 = vld [vmem:[%s459 + $0xa8] sm:$0x1]
  %v483 = vsel %vm45, %v480, 0
  %v486 = vsel %vm45, %v481, 0
  %488 = vmatprep.subr.mxu0 %v461
  %489 = vmatpush1.msra.mxu0 %v460
  %490 = vmatprep.subr.mxu0 %v463
  %491 = vmatpush1.msra.mxu0 %v462
  %492 = vmatprep.subr.mxu0 %v465
  %493 = vmatpush1.msra.mxu0 %v464
  %494 = vmatprep.subr.mxu0 %v467
  %495 = vmatpush1.msra.mxu0 %v466
  %496 = vmatprep.subr.mxu0 %v469
  %497 = vmatpush1.msra.mxu0 %v468
  %498 = vmatprep.subr.mxu0 %v471
  %499 = vmatpush1.msra.mxu0 %v470
  %500 = vmatprep.subr.mxu0 %v473
  %501 = vmatpush1.msra.mxu0 %v472
  %502 = vmatprep.subr.mxu0 %v475
  %503 = vmatpush1.msra.mxu0 %v474
  %504 = vmatprep.subr.mxu0 %v477
  %505 = vmatpush1.msra.mxu0 %v476
  %506 = vmatprep.subr.mxu0 %v479
  %507 = vmatpush1.msra.mxu0 %v478
  %508 = vmatprep.subr.mxu0 %v486
  %509 = vmatpush1.msra.mxu0 %v483
  %510 = vmatprep.subr.mxu0 0.0
  %511 = vmatpush1.msra.mxu0 0.0
  %512 = vmatprep.subr.mxu0 0.0
  %513 = vmatpush1.msra.mxu0 0.0
  %514 = vmatprep.subr.mxu0 0.0
  %515 = vmatpush1.msra.mxu0 0.0
  %516 = vmatprep.subr.mxu0 0.0
  %517 = vmatpush1.msra.mxu0 0.0
  %518 = vmatprep.subr.mxu0 0.0
  %519 = vmatpush1.msra.mxu0 0.0
  %520 = vmatprep.subr.mxu0 0.0
  %521 = vmatpush1.msra.mxu0 0.0
  %522 = vmatprep.subr.mxu0 0.0
  %523 = vmatpush1.msra.mxu0 0.0
  %524 = vmatprep.subr.mxu0 0.0
  %525 = vmatpush1.msra.mxu0 0.0
  %526 = vmatprep.subr.mxu0 0.0
  %527 = vmatpush1.msra.mxu0 0.0
  %528 = vmatprep.subr.mxu0 0.0
  %529 = vmatpush1.msra.mxu0 0.0
  %530 = vmatprep.subr.mxu0 0.0
  %531 = vmatpush1.msra.mxu0 0.0
  %532 = vmatprep.subr.mxu0 0.0
  %533 = vmatpush1.msra.mxu0 0.0
  %534 = vmatprep.subr.mxu0 0.0
  %535 = vmatpush1.msra.mxu0 0.0
  %536 = vmatprep.subr.mxu0 0.0
  %537 = vmatpush1.msra.mxu0 0.0
  %538 = vmatprep.subr.mxu0 0.0
  %539 = vmatpush1.msra.mxu0 0.0
  %540 = vmatprep.subr.mxu0 0.0
  %541 = vmatpush1.msra.mxu0 0.0
  %542 = vmatprep.subr.mxu0 0.0
  %543 = vmatpush1.msra.mxu0 0.0
  %544 = vmatprep.subr.mxu0 0.0
  %545 = vmatpush1.msra.mxu0 0.0
  %546 = vmatprep.subr.mxu0 0.0
  %547 = vmatpush1.msra.mxu0 0.0
  %548 = vmatprep.subr.mxu0 0.0
  %549 = vmatpush1.msra.mxu0 0.0
  %550 = vmatprep.subr.mxu0 0.0
  %551 = vmatpush1.msra.mxu0 0.0
  %552 = vmatprep.mubr.f32.mxu0 0.0
  %553 = vmatmul.mubr.f32.gmra.mrb[0].mxu0 %v40
  %v554 = vpop.f32.mrb[0].mxu0
  %v555 = vadd.f32 0.0, %v554
  %v556 = vpop.f32.mrb[0].mxu0
  %v557 = vadd.f32 0.0, %v556
  %558 = vmatprep.mubr.f32.mxu0 0.0
  %559 = vmatmul.mubr.f32.gmra.mrb[0].mxu0 %v43
  %v560 = vpop.f32.mrb[0].mxu0
  %v561 = vadd.f32 0.0, %v560
  %v562 = vpop.f32.mrb[0].mxu0
  %v563 = vadd.f32 0.0, %v562
  %564 = vdwg.mxu0
  %v565 = vmax.f32 %v455, %v555
  %v566 = vmax.f32 %v456, %v557
  %v567 = vmax.f32 %v457, %v561
  %v568 = vmax.f32 %v458, %v563
  %s569 = scalar_lea.vmem %s0, 880
  %v570 = vld [vmem:[%s569] sm:$0xff]
  %v571 = vld [vmem:[%s569 + $0x8] sm:$0xff]
  %v572 = vld [vmem:[%s569 + $0x10] sm:$0xff]
  %v573 = vld [vmem:[%s569 + $0x18] sm:$0xff]
  %v574 = vld [vmem:[%s569 + $0x20] sm:$0xff]
  %v575 = vld [vmem:[%s569 + $0x28] sm:$0xff]
  %v576 = vld [vmem:[%s569 + $0x30] sm:$0xff]
  %v577 = vld [vmem:[%s569 + $0x38] sm:$0xff]
  %v578 = vld [vmem:[%s569 + $0x40] sm:$0xff]
  %v579 = vld [vmem:[%s569 + $0x48] sm:$0xff]
  %v580 = vld [vmem:[%s569 + $0x50] sm:$0xff]
  %v581 = vld [vmem:[%s569 + $0x58] sm:$0xff]
  %v582 = vld [vmem:[%s569 + $0x60] sm:$0xff]
  %v583 = vld [vmem:[%s569 + $0x68] sm:$0xff]
  %v584 = vld [vmem:[%s569 + $0x70] sm:$0xff]
  %v585 = vld [vmem:[%s569 + $0x78] sm:$0xff]
  %v586 = vld [vmem:[%s569 + $0x80] sm:$0xff]
  %v587 = vld [vmem:[%s569 + $0x88] sm:$0xff]
  %v588 = vld [vmem:[%s569 + $0x90] sm:$0xff]
  %v589 = vld [vmem:[%s569 + $0x98] sm:$0xff]
  %v590 = vld [vmem:[%s569 + $0xa0] sm:$0x1]
  %v591 = vld [vmem:[%s569 + $0xa8] sm:$0x1]
  %v593 = vsel %vm45, %v590, 0
  %v596 = vsel %vm45, %v591, 0
  %598 = vmatprep.subr.mxu0 %v571
  %599 = vmatpush1.msra.mxu0 %v570
  %600 = vmatprep.subr.mxu0 %v573
  %601 = vmatpush1.msra.mxu0 %v572
  %602 = vmatprep.subr.mxu0 %v575
  %603 = vmatpush1.msra.mxu0 %v574
  %604 = vmatprep.subr.mxu0 %v577
  %605 = vmatpush1.msra.mxu0 %v576
  %606 = vmatprep.subr.mxu0 %v579
  %607 = vmatpush1.msra.mxu0 %v578
  %608 = vmatprep.subr.mxu0 %v581
  %609 = vmatpush1.msra.mxu0 %v580
  %610 = vmatprep.subr.mxu0 %v583
  %611 = vmatpush1.msra.mxu0 %v582
  %612 = vmatprep.subr.mxu0 %v585
  %613 = vmatpush1.msra.mxu0 %v584
  %614 = vmatprep.subr.mxu0 %v587
  %615 = vmatpush1.msra.mxu0 %v586
  %616 = vmatprep.subr.mxu0 %v589
  %617 = vmatpush1.msra.mxu0 %v588
  %618 = vmatprep.subr.mxu0 %v596
  %619 = vmatpush1.msra.mxu0 %v593
  %620 = vmatprep.subr.mxu0 0.0
  %621 = vmatpush1.msra.mxu0 0.0
  %622 = vmatprep.subr.mxu0 0.0
  %623 = vmatpush1.msra.mxu0 0.0
  %624 = vmatprep.subr.mxu0 0.0
  %625 = vmatpush1.msra.mxu0 0.0
  %626 = vmatprep.subr.mxu0 0.0
  %627 = vmatpush1.msra.mxu0 0.0
  %628 = vmatprep.subr.mxu0 0.0
  %629 = vmatpush1.msra.mxu0 0.0
  %630 = vmatprep.subr.mxu0 0.0
  %631 = vmatpush1.msra.mxu0 0.0
  %632 = vmatprep.subr.mxu0 0.0
  %633 = vmatpush1.msra.mxu0 0.0
  %634 = vmatprep.subr.mxu0 0.0
  %635 = vmatpush1.msra.mxu0 0.0
  %636 = vmatprep.subr.mxu0 0.0
  %637 = vmatpush1.msra.mxu0 0.0
  %638 = vmatprep.subr.mxu0 0.0
  %639 = vmatpush1.msra.mxu0 0.0
  %640 = vmatprep.subr.mxu0 0.0
  %641 = vmatpush1.msra.mxu0 0.0
  %642 = vmatprep.subr.mxu0 0.0
  %643 = vmatpush1.msra.mxu0 0.0
  %644 = vmatprep.subr.mxu0 0.0
  %645 = vmatpush1.msra.mxu0 0.0
  %646 = vmatprep.subr.mxu0 0.0
  %647 = vmatpush1.msra.mxu0 0.0
  %648 = vmatprep.subr.mxu0 0.0
  %649 = vmatpush1.msra.mxu0 0.0
  %650 = vmatprep.subr.mxu0 0.0
  %651 = vmatpush1.msra.mxu0 0.0
  %652 = vmatprep.subr.mxu0 0.0
  %653 = vmatpush1.msra.mxu0 0.0
  %654 = vmatprep.subr.mxu0 0.0
  %655 = vmatpush1.msra.mxu0 0.0
  %656 = vmatprep.subr.mxu0 0.0
  %657 = vmatpush1.msra.mxu0 0.0
  %658 = vmatprep.subr.mxu0 0.0
  %659 = vmatpush1.msra.mxu0 0.0
  %660 = vmatprep.subr.mxu0 0.0
  %661 = vmatpush1.msra.mxu0 0.0
  %662 = vmatprep.mubr.f32.mxu0 0.0
  %663 = vmatmul.mubr.f32.gmra.mrb[0].mxu0 %v40
  %v664 = vpop.f32.mrb[0].mxu0
  %v665 = vadd.f32 0.0, %v664
  %v666 = vpop.f32.mrb[0].mxu0
  %v667 = vadd.f32 0.0, %v666
  %668 = vmatprep.mubr.f32.mxu0 0.0
  %669 = vmatmul.mubr.f32.gmra.mrb[0].mxu0 %v43
  %v670 = vpop.f32.mrb[0].mxu0
  %v671 = vadd.f32 0.0, %v670
  %v672 = vpop.f32.mrb[0].mxu0
  %v673 = vadd.f32 0.0, %v672
  %674 = vdwg.mxu0
  %v675 = vmax.f32 %v565, %v665
  %v676 = vmax.f32 %v566, %v667
  %v677 = vmax.f32 %v567, %v671
  %v678 = vmax.f32 %v568, %v673
  %s679 = scalar_lea.vmem %s0, 1056
  %v680 = vld [vmem:[%s679] sm:$0xff]
  %v681 = vld [vmem:[%s679 + $0x8] sm:$0xff]
  %v682 = vld [vmem:[%s679 + $0x10] sm:$0xff]
  %v683 = vld [vmem:[%s679 + $0x18] sm:$0xff]
  %v684 = vld [vmem:[%s679 + $0x20] sm:$0xff]
  %v685 = vld [vmem:[%s679 + $0x28] sm:$0xff]
  %v686 = vld [vmem:[%s679 + $0x30] sm:$0xff]
  %v687 = vld [vmem:[%s679 + $0x38] sm:$0xff]
  %v688 = vld [vmem:[%s679 + $0x40] sm:$0xff]
  %v689 = vld [vmem:[%s679 + $0x48] sm:$0xff]
  %v690 = vld [vmem:[%s679 + $0x50] sm:$0xff]
  %v691 = vld [vmem:[%s679 + $0x58] sm:$0xff]
  %v692 = vld [vmem:[%s679 + $0x60] sm:$0xff]
  %v693 = vld [vmem:[%s679 + $0x68] sm:$0xff]
  %v694 = vld [vmem:[%s679 + $0x70] sm:$0xff]
  %v695 = vld [vmem:[%s679 + $0x78] sm:$0xff]
  %v696 = vld [vmem:[%s679 + $0x80] sm:$0xff]
  %v697 = vld [vmem:[%s679 + $0x88] sm:$0xff]
  %v698 = vld [vmem:[%s679 + $0x90] sm:$0xff]
  %v699 = vld [vmem:[%s679 + $0x98] sm:$0xff]
  %v700 = vld [vmem:[%s679 + $0xa0] sm:$0x1]
  %v701 = vld [vmem:[%s679 + $0xa8] sm:$0x1]
  %v703 = vsel %vm45, %v700, 0
  %v706 = vsel %vm45, %v701, 0
  %708 = vmatprep.subr.mxu0 %v681
  %709 = vmatpush1.msra.mxu0 %v680
  %710 = vmatprep.subr.mxu0 %v683
  %711 = vmatpush1.msra.mxu0 %v682
  %712 = vmatprep.subr.mxu0 %v685
  %713 = vmatpush1.msra.mxu0 %v684
  %714 = vmatprep.subr.mxu0 %v687
  %715 = vmatpush1.msra.mxu0 %v686
  %716 = vmatprep.subr.mxu0 %v689
  %717 = vmatpush1.msra.mxu0 %v688
  %718 = vmatprep.subr.mxu0 %v691
  %719 = vmatpush1.msra.mxu0 %v690
  %720 = vmatprep.subr.mxu0 %v693
  %721 = vmatpush1.msra.mxu0 %v692
  %722 = vmatprep.subr.mxu0 %v695
  %723 = vmatpush1.msra.mxu0 %v694
  %724 = vmatprep.subr.mxu0 %v697
  %725 = vmatpush1.msra.mxu0 %v696
  %726 = vmatprep.subr.mxu0 %v699
  %727 = vmatpush1.msra.mxu0 %v698
  %728 = vmatprep.subr.mxu0 %v706
  %729 = vmatpush1.msra.mxu0 %v703
  %730 = vmatprep.subr.mxu0 0.0
  %731 = vmatpush1.msra.mxu0 0.0
  %732 = vmatprep.subr.mxu0 0.0
  %733 = vmatpush1.msra.mxu0 0.0
  %734 = vmatprep.subr.mxu0 0.0
  %735 = vmatpush1.msra.mxu0 0.0
  %736 = vmatprep.subr.mxu0 0.0
  %737 = vmatpush1.msra.mxu0 0.0
  %738 = vmatprep.subr.mxu0 0.0
  %739 = vmatpush1.msra.mxu0 0.0
  %740 = vmatprep.subr.mxu0 0.0
  %741 = vmatpush1.msra.mxu0 0.0
  %742 = vmatprep.subr.mxu0 0.0
  %743 = vmatpush1.msra.mxu0 0.0
  %744 = vmatprep.subr.mxu0 0.0
  %745 = vmatpush1.msra.mxu0 0.0
  %746 = vmatprep.subr.mxu0 0.0
  %747 = vmatpush1.msra.mxu0 0.0
  %748 = vmatprep.subr.mxu0 0.0
  %749 = vmatpush1.msra.mxu0 0.0
  %750 = vmatprep.subr.mxu0 0.0
  %751 = vmatpush1.msra.mxu0 0.0
  %752 = vmatprep.subr.mxu0 0.0
  %753 = vmatpush1.msra.mxu0 0.0
  %754 = vmatprep.subr.mxu0 0.0
  %755 = vmatpush1.msra.mxu0 0.0
  %756 = vmatprep.subr.mxu0 0.0
  %757 = vmatpush1.msra.mxu0 0.0
  %758 = vmatprep.subr.mxu0 0.0
  %759 = vmatpush1.msra.mxu0 0.0
  %760 = vmatprep.subr.mxu0 0.0
  %761 = vmatpush1.msra.mxu0 0.0
  %762 = vmatprep.subr.mxu0 0.0
  %763 = vmatpush1.msra.mxu0 0.0
  %764 = vmatprep.subr.mxu0 0.0
  %765 = vmatpush1.msra.mxu0 0.0
  %766 = vmatprep.subr.mxu0 0.0
  %767 = vmatpush1.msra.mxu0 0.0
  %768 = vmatprep.subr.mxu0 0.0
  %769 = vmatpush1.msra.mxu0 0.0
  %770 = vmatprep.subr.mxu0 0.0
  %771 = vmatpush1.msra.mxu0 0.0
  %772 = vmatprep.mubr.f32.mxu0 0.0
  %773 = vmatmul.mubr.f32.gmra.mrb[0].mxu0 %v40
  %v774 = vpop.f32.mrb[0].mxu0
  %v775 = vadd.f32 0.0, %v774
  %v776 = vpop.f32.mrb[0].mxu0
  %v777 = vadd.f32 0.0, %v776
  %778 = vmatprep.mubr.f32.mxu0 0.0
  %779 = vmatmul.mubr.f32.gmra.mrb[0].mxu0 %v43
  %v780 = vpop.f32.mrb[0].mxu0
  %v781 = vadd.f32 0.0, %v780
  %v782 = vpop.f32.mrb[0].mxu0
  %v783 = vadd.f32 0.0, %v782
  %784 = vdwg.mxu0
  %v785 = vmax.f32 %v675, %v775
  %v786 = vmax.f32 %v676, %v777
  %v787 = vmax.f32 %v677, %v781
  %v788 = vmax.f32 %v678, %v783
  %s789 = scalar_lea.vmem %s0, 1232
  %v790 = vld [vmem:[%s789] sm:$0xff]
  %v791 = vld [vmem:[%s789 + $0x8] sm:$0xff]
  %v792 = vld [vmem:[%s789 + $0x10] sm:$0xff]
  %v793 = vld [vmem:[%s789 + $0x18] sm:$0xff]
  %v794 = vld [vmem:[%s789 + $0x20] sm:$0xff]
  %v795 = vld [vmem:[%s789 + $0x28] sm:$0xff]
  %v796 = vld [vmem:[%s789 + $0x30] sm:$0xff]
  %v797 = vld [vmem:[%s789 + $0x38] sm:$0xff]
  %v798 = vld [vmem:[%s789 + $0x40] sm:$0xff]
  %v799 = vld [vmem:[%s789 + $0x48] sm:$0xff]
  %v800 = vld [vmem:[%s789 + $0x50] sm:$0xff]
  %v801 = vld [vmem:[%s789 + $0x58] sm:$0xff]
  %v802 = vld [vmem:[%s789 + $0x60] sm:$0xff]
  %v803 = vld [vmem:[%s789 + $0x68] sm:$0xff]
  %v804 = vld [vmem:[%s789 + $0x70] sm:$0xff]
  %v805 = vld [vmem:[%s789 + $0x78] sm:$0xff]
  %v806 = vld [vmem:[%s789 + $0x80] sm:$0xff]
  %v807 = vld [vmem:[%s789 + $0x88] sm:$0xff]
  %v808 = vld [vmem:[%s789 + $0x90] sm:$0xff]
  %v809 = vld [vmem:[%s789 + $0x98] sm:$0xff]
  %v810 = vld [vmem:[%s789 + $0xa0] sm:$0x1]
  %v811 = vld [vmem:[%s789 + $0xa8] sm:$0x1]
  %v813 = vsel %vm45, %v810, 0
  %v816 = vsel %vm45, %v811, 0
  %818 = vmatprep.subr.mxu0 %v791
  %819 = vmatpush1.msra.mxu0 %v790
  %820 = vmatprep.subr.mxu0 %v793
  %821 = vmatpush1.msra.mxu0 %v792
  %822 = vmatprep.subr.mxu0 %v795
  %823 = vmatpush1.msra.mxu0 %v794
  %824 = vmatprep.subr.mxu0 %v797
  %825 = vmatpush1.msra.mxu0 %v796
  %826 = vmatprep.subr.mxu0 %v799
  %827 = vmatpush1.msra.mxu0 %v798
  %828 = vmatprep.subr.mxu0 %v801
  %829 = vmatpush1.msra.mxu0 %v800
  %830 = vmatprep.subr.mxu0 %v803
  %831 = vmatpush1.msra.mxu0 %v802
  %832 = vmatprep.subr.mxu0 %v805
  %833 = vmatpush1.msra.mxu0 %v804
  %834 = vmatprep.subr.mxu0 %v807
  %835 = vmatpush1.msra.mxu0 %v806
  %836 = vmatprep.subr.mxu0 %v809
  %837 = vmatpush1.msra.mxu0 %v808
  %838 = vmatprep.subr.mxu0 %v816
  %839 = vmatpush1.msra.mxu0 %v813
  %840 = vmatprep.subr.mxu0 0.0
  %841 = vmatpush1.msra.mxu0 0.0
  %842 = vmatprep.subr.mxu0 0.0
  %843 = vmatpush1.msra.mxu0 0.0
  %844 = vmatprep.subr.mxu0 0.0
  %845 = vmatpush1.msra.mxu0 0.0
  %846 = vmatprep.subr.mxu0 0.0
  %847 = vmatpush1.msra.mxu0 0.0
  %848 = vmatprep.subr.mxu0 0.0
  %849 = vmatpush1.msra.mxu0 0.0
  %850 = vmatprep.subr.mxu0 0.0
  %851 = vmatpush1.msra.mxu0 0.0
  %852 = vmatprep.subr.mxu0 0.0
  %853 = vmatpush1.msra.mxu0 0.0
  %854 = vmatprep.subr.mxu0 0.0
  %855 = vmatpush1.msra.mxu0 0.0
  %856 = vmatprep.subr.mxu0 0.0
  %857 = vmatpush1.msra.mxu0 0.0
  %858 = vmatprep.subr.mxu0 0.0
  %859 = vmatpush1.msra.mxu0 0.0
  %860 = vmatprep.subr.mxu0 0.0
  %861 = vmatpush1.msra.mxu0 0.0
  %862 = vmatprep.subr.mxu0 0.0
  %863 = vmatpush1.msra.mxu0 0.0
  %864 = vmatprep.subr.mxu0 0.0
  %865 = vmatpush1.msra.mxu0 0.0
  %866 = vmatprep.subr.mxu0 0.0
  %867 = vmatpush1.msra.mxu0 0.0
  %868 = vmatprep.subr.mxu0 0.0
  %869 = vmatpush1.msra.mxu0 0.0
  %870 = vmatprep.subr.mxu0 0.0
  %871 = vmatpush1.msra.mxu0 0.0
  %872 = vmatprep.subr.mxu0 0.0
  %873 = vmatpush1.msra.mxu0 0.0
  %874 = vmatprep.subr.mxu0 0.0
  %875 = vmatpush1.msra.mxu0 0.0
  %876 = vmatprep.subr.mxu0 0.0
  %877 = vmatpush1.msra.mxu0 0.0
  %878 = vmatprep.subr.mxu0 0.0
  %879 = vmatpush1.msra.mxu0 0.0
  %880 = vmatprep.subr.mxu0 0.0
  %881 = vmatpush1.msra.mxu0 0.0
  %882 = vmatprep.mubr.f32.mxu0 0.0
  %883 = vmatmul.mubr.f32.gmra.mrb[0].mxu0 %v40
  %v884 = vpop.f32.mrb[0].mxu0
  %v885 = vadd.f32 0.0, %v884
  %v886 = vpop.f32.mrb[0].mxu0
  %v887 = vadd.f32 0.0, %v886
  %888 = vmatprep.mubr.f32.mxu0 0.0
  %889 = vmatmul.mubr.f32.gmra.mrb[0].mxu0 %v43
  %v890 = vpop.f32.mrb[0].mxu0
  %v891 = vadd.f32 0.0, %v890
  %v892 = vpop.f32.mrb[0].mxu0
  %v893 = vadd.f32 0.0, %v892
  %894 = vdwg.mxu0
  %v895 = vmax.f32 %v785, %v885
  %v896 = vmax.f32 %v786, %v887
  %v897 = vmax.f32 %v787, %v891
  %v898 = vmax.f32 %v788, %v893
  %s899 = scalar_lea.vmem %s0, 1408
  %v900 = vld [vmem:[%s899] sm:$0xff]
  %v901 = vld [vmem:[%s899 + $0x8] sm:$0xff]
  %v902 = vld [vmem:[%s899 + $0x10] sm:$0xff]
  %v903 = vld [vmem:[%s899 + $0x18] sm:$0xff]
  %v904 = vld [vmem:[%s899 + $0x20] sm:$0xff]
  %v905 = vld [vmem:[%s899 + $0x28] sm:$0xff]
  %v906 = vld [vmem:[%s899 + $0x30] sm:$0xff]
  %v907 = vld [vmem:[%s899 + $0x38] sm:$0xff]
  %v908 = vld [vmem:[%s899 + $0x40] sm:$0xff]
  %v909 = vld [vmem:[%s899 + $0x48] sm:$0xff]
  %v910 = vld [vmem:[%s899 + $0x50] sm:$0xff]
  %v911 = vld [vmem:[%s899 + $0x58] sm:$0xff]
  %v912 = vld [vmem:[%s899 + $0x60] sm:$0xff]
  %v913 = vld [vmem:[%s899 + $0x68] sm:$0xff]
  %v914 = vld [vmem:[%s899 + $0x70] sm:$0xff]
  %v915 = vld [vmem:[%s899 + $0x78] sm:$0xff]
  %v916 = vld [vmem:[%s899 + $0x80] sm:$0xff]
  %v917 = vld [vmem:[%s899 + $0x88] sm:$0xff]
  %v918 = vld [vmem:[%s899 + $0x90] sm:$0xff]
  %v919 = vld [vmem:[%s899 + $0x98] sm:$0xff]
  %v920 = vld [vmem:[%s899 + $0xa0] sm:$0x1]
  %v921 = vld [vmem:[%s899 + $0xa8] sm:$0x1]
  %v923 = vsel %vm45, %v920, 0
  %v926 = vsel %vm45, %v921, 0
  %928 = vmatprep.subr.mxu0 %v901
  %929 = vmatpush1.msra.mxu0 %v900
  %930 = vmatprep.subr.mxu0 %v903
  %931 = vmatpush1.msra.mxu0 %v902
  %932 = vmatprep.subr.mxu0 %v905
  %933 = vmatpush1.msra.mxu0 %v904
  %934 = vmatprep.subr.mxu0 %v907
  %935 = vmatpush1.msra.mxu0 %v906
  %936 = vmatprep.subr.mxu0 %v909
  %937 = vmatpush1.msra.mxu0 %v908
  %938 = vmatprep.subr.mxu0 %v911
  %939 = vmatpush1.msra.mxu0 %v910
  %940 = vmatprep.subr.mxu0 %v913
  %941 = vmatpush1.msra.mxu0 %v912
  %942 = vmatprep.subr.mxu0 %v915
  %943 = vmatpush1.msra.mxu0 %v914
  %944 = vmatprep.subr.mxu0 %v917
  %945 = vmatpush1.msra.mxu0 %v916
  %946 = vmatprep.subr.mxu0 %v919
  %947 = vmatpush1.msra.mxu0 %v918
  %948 = vmatprep.subr.mxu0 %v926
  %949 = vmatpush1.msra.mxu0 %v923
  %950 = vmatprep.subr.mxu0 0.0
  %951 = vmatpush1.msra.mxu0 0.0
  %952 = vmatprep.subr.mxu0 0.0
  %953 = vmatpush1.msra.mxu0 0.0
  %954 = vmatprep.subr.mxu0 0.0
  %955 = vmatpush1.msra.mxu0 0.0
  %956 = vmatprep.subr.mxu0 0.0
  %957 = vmatpush1.msra.mxu0 0.0
  %958 = vmatprep.subr.mxu0 0.0
  %959 = vmatpush1.msra.mxu0 0.0
  %960 = vmatprep.subr.mxu0 0.0
  %961 = vmatpush1.msra.mxu0 0.0
  %962 = vmatprep.subr.mxu0 0.0
  %963 = vmatpush1.msra.mxu0 0.0
  %964 = vmatprep.subr.mxu0 0.0
  %965 = vmatpush1.msra.mxu0 0.0
  %966 = vmatprep.subr.mxu0 0.0
  %967 = vmatpush1.msra.mxu0 0.0
  %968 = vmatprep.subr.mxu0 0.0
  %969 = vmatpush1.msra.mxu0 0.0
  %970 = vmatprep.subr.mxu0 0.0
  %971 = vmatpush1.msra.mxu0 0.0
  %972 = vmatprep.subr.mxu0 0.0
  %973 = vmatpush1.msra.mxu0 0.0
  %974 = vmatprep.subr.mxu0 0.0
  %975 = vmatpush1.msra.mxu0 0.0
  %976 = vmatprep.subr.mxu0 0.0
  %977 = vmatpush1.msra.mxu0 0.0
  %978 = vmatprep.subr.mxu0 0.0
  %979 = vmatpush1.msra.mxu0 0.0
  %980 = vmatprep.subr.mxu0 0.0
  %981 = vmatpush1.msra.mxu0 0.0
  %982 = vmatprep.subr.mxu0 0.0
  %983 = vmatpush1.msra.mxu0 0.0
  %984 = vmatprep.subr.mxu0 0.0
  %985 = vmatpush1.msra.mxu0 0.0
  %986 = vmatprep.subr.mxu0 0.0
  %987 = vmatpush1.msra.mxu0 0.0
  %988 = vmatprep.subr.mxu0 0.0
  %989 = vmatpush1.msra.mxu0 0.0
  %990 = vmatprep.subr.mxu0 0.0
  %991 = vmatpush1.msra.mxu0 0.0
  %992 = vmatprep.mubr.f32.mxu0 0.0
  %993 = vmatmul.mubr.f32.gmra.mrb[0].mxu0 %v40
  %v994 = vpop.f32.mrb[0].mxu0
  %v995 = vadd.f32 0.0, %v994
  %v996 = vpop.f32.mrb[0].mxu0
  %v997 = vadd.f32 0.0, %v996
  %998 = vmatprep.mubr.f32.mxu0 0.0
  %999 = vmatmul.mubr.f32.gmra.mrb[0].mxu0 %v43
  %v1000 = vpop.f32.mrb[0].mxu0
  %v1001 = vadd.f32 0.0, %v1000
  %v1002 = vpop.f32.mrb[0].mxu0
  %v1003 = vadd.f32 0.0, %v1002
  %1004 = vdwg.mxu0
  %v1005 = vmax.f32 %v895, %v995
  %v1006 = vmax.f32 %v896, %v997
  %v1007 = vmax.f32 %v897, %v1001
  %v1008 = vmax.f32 %v898, %v1003
  %v1009 = vld [vmem:[%s2] sm:$0xff]
  %v1010 = vld [vmem:[%s2 + $0x8] sm:$0xff]
  %1012 = vset.pattern.permute.xlu0 0
  %1013 = vperm.xlu0 %1012, %v1009
  %v1014 = vpop.permute.xlu0 %1013
  %1017 = vset.pattern.permute.xlu0 0
  %1018 = vperm.xlu0 %1017, %v1010
  %v1019 = vpop.permute.xlu0 %1018
  %v1021 = vadd.f32 %v1005, %v1014
  %v1022 = vadd.f32 %v1006, %v1014
  %v1023 = vadd.f32 %v1007, %v1019
  %v1024 = vadd.f32 %v1008, %v1019
  %v1025 = vmax.f32 %v1021, 0.0
  %v1026 = vmax.f32 %v1022, 0.0
  %v1027 = vmax.f32 %v1023, 0.0
  %v1028 = vmax.f32 %v1024, 0.0
  %1029 = vst [vmem:[%s3] sm:$0xff] %v1025
  %vm1030 = vcmask 719872
  %1031 = vst.msk [vmem:[%s3 + $0x8] sm:$0xff] %vm1030, %v1026
  %1032 = vst [vmem:[%s3 + $0x10] sm:$0xff] %v1027
  %1033 = vst.msk [vmem:[%s3 + $0x18] sm:$0xff] %vm1030, %v1028
  // Predicated region
  $region14: #{_lambda_.4} parent=0 // pred_check
    _
  $region15: #{_lambda_.4} parent=0 // pred_check_branch
    %1035 = sbr.rel (0) target = $region17
  $region16: #{_lambda_.4} parent=0 // pred_region
    _
  $region17: #{_lambda_.4} parent=0 // pred_fallthru
    _
  // Predicated region
  $region18: #{_lambda_.4} parent=0 // pred_check
    _
  $region19: #{_lambda_.4} parent=0 // pred_check_branch
    %1037 = sbr.rel (0) target = $region21
  $region20: #{_lambda_.4} parent=0 // pred_region
    _
  $region21: #{_lambda_.4} parent=0 // pred_fallthru
    _

// kernel: _lambda_.6
$region0: #{_lambda_.6}
  #allocation0 [shape = 'u32[]', space=smem, size = 0x4, offset = 0x4, fixed_abs, tag = 'smem constant byte address 0x4 - core index']
  #allocation1 [shape = 'u32[144,128]{1,0:T(1,128)}', space=vmem, size = 0x12000, scoped, tag = 'internal scratch']
  #allocation2 [shape = 'f32[1,1]{1,0:T(1,128)S(1)}', space=vmem, size = 0x200, scoped, tag = 'scoped memory for _lambda_.6']
  %s0 = inlined_call_operand.vmem [shape: f32[1,32], index: 0, kind: input, shape index: {}]
  %s1 = inlined_call_operand.vmem [shape: f32[32,128], index: 1, kind: input, shape index: {}]
  %s2 = inlined_call_operand.vmem [shape: f32[1,128], index: 2, kind: input, shape index: {}]
  %s3 = inlined_call_operand.vmem [shape: f32[128,64], index: 3, kind: input, shape index: {}]
  %s4 = inlined_call_operand.vmem [shape: f32[1,64], index: 4, kind: input, shape index: {}]
  %s5 = inlined_call_operand.vmem [shape: f32[64,16], index: 5, kind: input, shape index: {}]
  %s6 = inlined_call_operand.vmem [shape: f32[1,16], index: 6, kind: input, shape index: {}]
  %s7 = inlined_call_operand.vmem [shape: f32[16,1], index: 7, kind: input, shape index: {}]
  %s8 = inlined_call_operand.<no memory space> [shape: f32[1,1], index: 8, kind: input, shape index: {}]
  %s9 = inlined_call_operand.hbm [shape: f32[1,1], index: 9, kind: output, shape index: {}]
  %s10 = sld [smem:[#allocation0]]
  $region46: #{_lambda_.6} parent=0
    _
  %s12 = ssub.s32 1, %s10
  %s13 = scalar_select 0, %s12, %s10
  %v14 = vstv %s8
  %15 = vst [vmem:[#allocation2] sm:$0x1] %v14
  $region1: #{_lambda_.6} parent=0
    #allocation3 [shape = 'u8[512]{0}', space=vmem, size = 0x400, scoped, tag = 'output window, operand 0, single buffered']
    #allocation4 [shape = 's32[1]{0}', space=sflag, size = 0x4, scoped, tag = 'scoped memory for _lambda_.6']
    %16 = vsyncpa [#allocation4], 0
    // Predicated region
    $region2: #{_lambda_.6} parent=1 // pred_check
      _
    $region3: #{_lambda_.6} parent=1 // pred_check_branch
      %18 = sbr.rel (0) target = $region5
    $region4: #{_lambda_.6} parent=1 // pred_region
      _
    $region5: #{_lambda_.6} parent=1 // pred_fallthru
      _
    // Predicated region
    $region6: #{_lambda_.6} parent=1 // pred_check
      _
    $region7: #{_lambda_.6} parent=1 // pred_check_branch
      %20 = sbr.rel (0) target = $region9
    $region8: #{_lambda_.6} parent=1 // pred_region
      _
    $region9: #{_lambda_.6} parent=1 // pred_fallthru
      _
    // Predicated region
    $region10: #{_lambda_.6} parent=1 // pred_check
      _
    $region11: #{_lambda_.6} parent=1 // pred_check_branch
      %22 = sbr.rel (0) target = $region13
    $region12: #{_lambda_.6} parent=1 // pred_region
      _
    $region13: #{_lambda_.6} parent=1 // pred_fallthru
      _
    // Predicated region
    $region14: #{_lambda_.6} parent=1 // pred_check
      _
    $region15: #{_lambda_.6} parent=1 // pred_check_branch
      %24 = sbr.rel (0) target = $region17
    $region16: #{_lambda_.6} parent=1 // pred_region
      _
    $region17: #{_lambda_.6} parent=1 // pred_fallthru
      _
    // Predicated region
    $region18: #{_lambda_.6} parent=1 // pred_check
      _
    $region19: #{_lambda_.6} parent=1 // pred_check_branch
      %26 = sbr.rel (0) target = $region21
    $region20: #{_lambda_.6} parent=1 // pred_region
      _
    $region21: #{_lambda_.6} parent=1 // pred_fallthru
      _
    // Predicated region
    $region22: #{_lambda_.6} parent=1 // pred_check
      _
    $region23: #{_lambda_.6} parent=1 // pred_check_branch
      %28 = sbr.rel (0) target = $region25
    $region24: #{_lambda_.6} parent=1 // pred_region
      _
    $region25: #{_lambda_.6} parent=1 // pred_fallthru
      _
    // Predicated region
    $region26: #{_lambda_.6} parent=1 // pred_check
      _
    $region27: #{_lambda_.6} parent=1 // pred_check_branch
      %30 = sbr.rel (0) target = $region29
    $region28: #{_lambda_.6} parent=1 // pred_region
      _
    $region29: #{_lambda_.6} parent=1 // pred_fallthru
      _
    // Predicated region
    $region30: #{_lambda_.6} parent=1 // pred_check
      _
    $region31: #{_lambda_.6} parent=1 // pred_check_branch
      %32 = sbr.rel (0) target = $region33
    $region32: #{_lambda_.6} parent=1 // pred_region
      _
    $region33: #{_lambda_.6} parent=1 // pred_fallthru
      _
    // Predicated region
    $region34: #{_lambda_.6} parent=1 // pred_check
      _
    $region35: #{_lambda_.6} parent=1 // pred_check_branch
      %34 = sbr.rel (0) target = $region37
    $region36: #{_lambda_.6} parent=1 // pred_region
      _
    $region37: #{_lambda_.6} parent=1 // pred_fallthru
      _
    %v35 = vld [vmem:[%s0] sm:$0x1]
    %v36 = vld [vmem:[%s1] sm:$0xff]
    %v37 = vld [vmem:[%s1 + $0x8] sm:$0xff]
    %v38 = vld [vmem:[%s1 + $0x10] sm:$0xff]
    %v39 = vld [vmem:[%s1 + $0x18] sm:$0xff]
    %v40 = vld [vmem:[%s2] sm:$0x1]
    %vm41 = vcmask 261120
    %v43 = vsel %vm41, %v35, 0
    %45 = vmatprep.subr.mxu0 0.0
    %46 = vmatpush1.msra.mxu0 %v36
    %47 = vmatprep.subr.mxu0 0.0
    %48 = vmatpush1.msra.mxu0 %v37
    %49 = vmatprep.subr.mxu0 0.0
    %50 = vmatpush1.msra.mxu0 %v38
    %51 = vmatprep.subr.mxu0 0.0
    %52 = vmatpush1.msra.mxu0 %v39
    %53 = vmatprep.subr.mxu0 0.0
    %54 = vmatpush1.msra.mxu0 0.0
    %55 = vmatprep.subr.mxu0 0.0
    %56 = vmatpush1.msra.mxu0 0.0
    %57 = vmatprep.subr.mxu0 0.0
    %58 = vmatpush1.msra.mxu0 0.0
    %59 = vmatprep.subr.mxu0 0.0
    %60 = vmatpush1.msra.mxu0 0.0
    %61 = vmatprep.subr.mxu0 0.0
    %62 = vmatpush1.msra.mxu0 0.0
    %63 = vmatprep.subr.mxu0 0.0
    %64 = vmatpush1.msra.mxu0 0.0
    %65 = vmatprep.subr.mxu0 0.0
    %66 = vmatpush1.msra.mxu0 0.0
    %67 = vmatprep.subr.mxu0 0.0
    %68 = vmatpush1.msra.mxu0 0.0
    %69 = vmatprep.subr.mxu0 0.0
    %70 = vmatpush1.msra.mxu0 0.0
    %71 = vmatprep.subr.mxu0 0.0
    %72 = vmatpush1.msra.mxu0 0.0
    %73 = vmatprep.subr.mxu0 0.0
    %74 = vmatpush1.msra.mxu0 0.0
    %75 = vmatprep.subr.mxu0 0.0
    %76 = vmatpush1.msra.mxu0 0.0
    %77 = vmatprep.subr.mxu0 0.0
    %78 = vmatpush1.msra.mxu0 0.0
    %79 = vmatprep.subr.mxu0 0.0
    %80 = vmatpush1.msra.mxu0 0.0
    %81 = vmatprep.subr.mxu0 0.0
    %82 = vmatpush1.msra.mxu0 0.0
    %83 = vmatprep.subr.mxu0 0.0
    %84 = vmatpush1.msra.mxu0 0.0
    %85 = vmatprep.subr.mxu0 0.0
    %86 = vmatpush1.msra.mxu0 0.0
    %87 = vmatprep.subr.mxu0 0.0
    %88 = vmatpush1.msra.mxu0 0.0
    %89 = vmatprep.subr.mxu0 0.0
    %90 = vmatpush1.msra.mxu0 0.0
    %91 = vmatprep.subr.mxu0 0.0
    %92 = vmatpush1.msra.mxu0 0.0
    %93 = vmatprep.subr.mxu0 0.0
    %94 = vmatpush1.msra.mxu0 0.0
    %95 = vmatprep.subr.mxu0 0.0
    %96 = vmatpush1.msra.mxu0 0.0
    %97 = vmatprep.subr.mxu0 0.0
    %98 = vmatpush1.msra.mxu0 0.0
    %99 = vmatprep.subr.mxu0 0.0
    %100 = vmatpush1.msra.mxu0 0.0
    %101 = vmatprep.subr.mxu0 0.0
    %102 = vmatpush1.msra.mxu0 0.0
    %103 = vmatprep.subr.mxu0 0.0
    %104 = vmatpush1.msra.mxu0 0.0
    %105 = vmatprep.subr.mxu0 0.0
    %106 = vmatpush1.msra.mxu0 0.0
    %107 = vmatprep.subr.mxu0 0.0
    %108 = vmatpush1.msra.mxu0 0.0
    %109 = vmatprep.mubr.f32.mxu0 0.0
    %110 = vmatmul.mubr.f32.gmra.mrb[0].mxu0 %v43
    %v111 = vpop.f32.mrb[0].mxu0
    %v112 = vadd.f32 %v40, %v111
    %v113 = vpop.f32.mrb[0].mxu0
    %114 = vdwg.mxu0
    %v115 = vmax.f32 %v112, 0.0
    %v116 = vld [vmem:[%s3] sm:$0xff]
    %v117 = vld [vmem:[%s3 + $0x8] sm:$0xff]
    %v118 = vld [vmem:[%s3 + $0x10] sm:$0xff]
    %v119 = vld [vmem:[%s3 + $0x18] sm:$0xff]
    %v120 = vld [vmem:[%s3 + $0x20] sm:$0xff]
    %v121 = vld [vmem:[%s3 + $0x28] sm:$0xff]
    %v122 = vld [vmem:[%s3 + $0x30] sm:$0xff]
    %v123 = vld [vmem:[%s3 + $0x38] sm:$0xff]
    %v124 = vld [vmem:[%s3 + $0x40] sm:$0xff]
    %v125 = vld [vmem:[%s3 + $0x48] sm:$0xff]
    %v126 = vld [vmem:[%s3 + $0x50] sm:$0xff]
    %v127 = vld [vmem:[%s3 + $0x58] sm:$0xff]
    %v128 = vld [vmem:[%s3 + $0x60] sm:$0xff]
    %v129 = vld [vmem:[%s3 + $0x68] sm:$0xff]
    %v130 = vld [vmem:[%s3 + $0x70] sm:$0xff]
    %v131 = vld [vmem:[%s3 + $0x78] sm:$0xff]
    %v132 = vld [vmem:[%s4] sm:$0x1]
    %133 = vmatprep.subr.mxu0 0.0
    %134 = vmatpush1.msra.mxu0 %v116
    %135 = vmatprep.subr.mxu0 0.0
    %136 = vmatpush1.msra.mxu0 %v117
    %137 = vmatprep.subr.mxu0 0.0
    %138 = vmatpush1.msra.mxu0 %v118
    %139 = vmatprep.subr.mxu0 0.0
    %140 = vmatpush1.msra.mxu0 %v119
    %141 = vmatprep.subr.mxu0 0.0
    %142 = vmatpush1.msra.mxu0 %v120
    %143 = vmatprep.subr.mxu0 0.0
    %144 = vmatpush1.msra.mxu0 %v121
    %145 = vmatprep.subr.mxu0 0.0
    %146 = vmatpush1.msra.mxu0 %v122
    %147 = vmatprep.subr.mxu0 0.0
    %148 = vmatpush1.msra.mxu0 %v123
    %149 = vmatprep.subr.mxu0 0.0
    %150 = vmatpush1.msra.mxu0 %v124
    %151 = vmatprep.subr.mxu0 0.0
    %152 = vmatpush1.msra.mxu0 %v125
    %153 = vmatprep.subr.mxu0 0.0
    %154 = vmatpush1.msra.mxu0 %v126
    %155 = vmatprep.subr.mxu0 0.0
    %156 = vmatpush1.msra.mxu0 %v127
    %157 = vmatprep.subr.mxu0 0.0
    %158 = vmatpush1.msra.mxu0 %v128
    %159 = vmatprep.subr.mxu0 0.0
    %160 = vmatpush1.msra.mxu0 %v129
    %161 = vmatprep.subr.mxu0 0.0
    %162 = vmatpush1.msra.mxu0 %v130
    %163 = vmatprep.subr.mxu0 0.0
    %164 = vmatpush1.msra.mxu0 %v131
    %165 = vmatprep.subr.mxu0 0.0
    %166 = vmatpush1.msra.mxu0 0.0
    %167 = vmatprep.subr.mxu0 0.0
    %168 = vmatpush1.msra.mxu0 0.0
    %169 = vmatprep.subr.mxu0 0.0
    %170 = vmatpush1.msra.mxu0 0.0
    %171 = vmatprep.subr.mxu0 0.0
    %172 = vmatpush1.msra.mxu0 0.0
    %173 = vmatprep.subr.mxu0 0.0
    %174 = vmatpush1.msra.mxu0 0.0
    %175 = vmatprep.subr.mxu0 0.0
    %176 = vmatpush1.msra.mxu0 0.0
    %177 = vmatprep.subr.mxu0 0.0
    %178 = vmatpush1.msra.mxu0 0.0
    %179 = vmatprep.subr.mxu0 0.0
    %180 = vmatpush1.msra.mxu0 0.0
    %181 = vmatprep.subr.mxu0 0.0
    %182 = vmatpush1.msra.mxu0 0.0
    %183 = vmatprep.subr.mxu0 0.0
    %184 = vmatpush1.msra.mxu0 0.0
    %185 = vmatprep.subr.mxu0 0.0
    %186 = vmatpush1.msra.mxu0 0.0
    %187 = vmatprep.subr.mxu0 0.0
    %188 = vmatpush1.msra.mxu0 0.0
    %189 = vmatprep.subr.mxu0 0.0
    %190 = vmatpush1.msra.mxu0 0.0
    %191 = vmatprep.subr.mxu0 0.0
    %192 = vmatpush1.msra.mxu0 0.0
    %193 = vmatprep.subr.mxu0 0.0
    %194 = vmatpush1.msra.mxu0 0.0
    %195 = vmatprep.subr.mxu0 0.0
    %196 = vmatpush1.msra.mxu0 0.0
    %197 = vmatprep.mubr.f32.mxu0 0.0
    %198 = vmatmul.mubr.f32.gmra.mrb[0].mxu0 %v115
    %v199 = vpop.f32.mrb[0].mxu0
    %v200 = vadd.f32 %v132, %v199
    %v201 = vpop.f32.mrb[0].mxu0
    %202 = vdwg.mxu0
    %v203 = vmax.f32 %v200, 0.0
    %v204 = vld [vmem:[%s5] sm:$0xff]
    %v205 = vld [vmem:[%s5 + $0x8] sm:$0xff]
    %v206 = vld [vmem:[%s5 + $0x10] sm:$0xff]
    %v207 = vld [vmem:[%s5 + $0x18] sm:$0xff]
    %v208 = vld [vmem:[%s5 + $0x20] sm:$0xff]
    %v209 = vld [vmem:[%s5 + $0x28] sm:$0xff]
    %v210 = vld [vmem:[%s5 + $0x30] sm:$0xff]
    %v211 = vld [vmem:[%s5 + $0x38] sm:$0xff]
    %v212 = vld [vmem:[%s6] sm:$0x1]
    %vm213 = vcmask 523264
    %v215 = vsel %vm213, %v203, 0
    %217 = vmatprep.subr.mxu0 0.0
    %218 = vmatpush1.msra.mxu0 %v204
    %219 = vmatprep.subr.mxu0 0.0
    %220 = vmatpush1.msra.mxu0 %v205
    %221 = vmatprep.subr.mxu0 0.0
    %222 = vmatpush1.msra.mxu0 %v206
    %223 = vmatprep.subr.mxu0 0.0
    %224 = vmatpush1.msra.mxu0 %v207
    %225 = vmatprep.subr.mxu0 0.0
    %226 = vmatpush1.msra.mxu0 %v208
    %227 = vmatprep.subr.mxu0 0.0
    %228 = vmatpush1.msra.mxu0 %v209
    %229 = vmatprep.subr.mxu0 0.0
    %230 = vmatpush1.msra.mxu0 %v210
    %231 = vmatprep.subr.mxu0 0.0
    %232 = vmatpush1.msra.mxu0 %v211
    %233 = vmatprep.subr.mxu0 0.0
    %234 = vmatpush1.msra.mxu0 0.0
    %235 = vmatprep.subr.mxu0 0.0
    %236 = vmatpush1.msra.mxu0 0.0
    %237 = vmatprep.subr.mxu0 0.0
    %238 = vmatpush1.msra.mxu0 0.0
    %239 = vmatprep.subr.mxu0 0.0
    %240 = vmatpush1.msra.mxu0 0.0
    %241 = vmatprep.subr.mxu0 0.0
    %242 = vmatpush1.msra.mxu0 0.0
    %243 = vmatprep.subr.mxu0 0.0
    %244 = vmatpush1.msra.mxu0 0.0
    %245 = vmatprep.subr.mxu0 0.0
    %246 = vmatpush1.msra.mxu0 0.0
    %247 = vmatprep.subr.mxu0 0.0
    %248 = vmatpush1.msra.mxu0 0.0
    %249 = vmatprep.subr.mxu0 0.0
    %250 = vmatpush1.msra.mxu0 0.0
    %251 = vmatprep.subr.mxu0 0.0
    %252 = vmatpush1.msra.mxu0 0.0
    %253 = vmatprep.subr.mxu0 0.0
    %254 = vmatpush1.msra.mxu0 0.0
    %255 = vmatprep.subr.mxu0 0.0
    %256 = vmatpush1.msra.mxu0 0.0
    %257 = vmatprep.subr.mxu0 0.0
    %258 = vmatpush1.msra.mxu0 0.0
    %259 = vmatprep.subr.mxu0 0.0
    %260 = vmatpush1.msra.mxu0 0.0
    %261 = vmatprep.subr.mxu0 0.0
    %262 = vmatpush1.msra.mxu0 0.0
    %263 = vmatprep.subr.mxu0 0.0
    %264 = vmatpush1.msra.mxu0 0.0
    %265 = vmatprep.subr.mxu0 0.0
    %266 = vmatpush1.msra.mxu0 0.0
    %267 = vmatprep.subr.mxu0 0.0
    %268 = vmatpush1.msra.mxu0 0.0
    %269 = vmatprep.subr.mxu0 0.0
    %270 = vmatpush1.msra.mxu0 0.0
    %271 = vmatprep.subr.mxu0 0.0
    %272 = vmatpush1.msra.mxu0 0.0
    %273 = vmatprep.subr.mxu0 0.0
    %274 = vmatpush1.msra.mxu0 0.0
    %275 = vmatprep.subr.mxu0 0.0
    %276 = vmatpush1.msra.mxu0 0.0
    %277 = vmatprep.subr.mxu0 0.0
    %278 = vmatpush1.msra.mxu0 0.0
    %279 = vmatprep.subr.mxu0 0.0
    %280 = vmatpush1.msra.mxu0 0.0
    %281 = vmatprep.mubr.f32.mxu0 0.0
    %282 = vmatmul.mubr.f32.gmra.mrb[0].mxu0 %v215
    %v283 = vpop.f32.mrb[0].mxu0
    %v284 = vadd.f32 %v212, %v283
    %v285 = vpop.f32.mrb[0].mxu0
    %286 = vdwg.mxu0
    %v287 = vmax.f32 %v284, 0.0
    %v288 = vld [vmem:[%s7] sm:$0xff]
    %v289 = vld [vmem:[%s7 + $0x8] sm:$0xff]
    %v290 = vld [vmem:[#allocation2] sm:$0x1]
    %vm291 = vcmask 130048
    %v293 = vsel %vm291, %v287, 0
    %295 = vmatprep.subr.mxu0 0.0
    %296 = vmatpush1.msra.mxu0 %v288
    %297 = vmatprep.subr.mxu0 0.0
    %298 = vmatpush1.msra.mxu0 %v289
    %299 = vmatprep.subr.mxu0 0.0
    %300 = vmatpush1.msra.mxu0 0.0
    %301 = vmatprep.subr.mxu0 0.0
    %302 = vmatpush1.msra.mxu0 0.0
    %303 = vmatprep.subr.mxu0 0.0
    %304 = vmatpush1.msra.mxu0 0.0
    %305 = vmatprep.subr.mxu0 0.0
    %306 = vmatpush1.msra.mxu0 0.0
    %307 = vmatprep.subr.mxu0 0.0
    %308 = vmatpush1.msra.mxu0 0.0
    %309 = vmatprep.subr.mxu0 0.0
    %310 = vmatpush1.msra.mxu0 0.0
    %311 = vmatprep.subr.mxu0 0.0
    %312 = vmatpush1.msra.mxu0 0.0
    %313 = vmatprep.subr.mxu0 0.0
    %314 = vmatpush1.msra.mxu0 0.0
    %315 = vmatprep.subr.mxu0 0.0
    %316 = vmatpush1.msra.mxu0 0.0
    %317 = vmatprep.subr.mxu0 0.0
    %318 = vmatpush1.msra.mxu0 0.0
    %319 = vmatprep.subr.mxu0 0.0
    %320 = vmatpush1.msra.mxu0 0.0
    %321 = vmatprep.subr.mxu0 0.0
    %322 = vmatpush1.msra.mxu0 0.0
    %323 = vmatprep.subr.mxu0 0.0
    %324 = vmatpush1.msra.mxu0 0.0
    %325 = vmatprep.subr.mxu0 0.0
    %326 = vmatpush1.msra.mxu0 0.0
    %327 = vmatprep.subr.mxu0 0.0
    %328 = vmatpush1.msra.mxu0 0.0
    %329 = vmatprep.subr.mxu0 0.0
    %330 = vmatpush1.msra.mxu0 0.0
    %331 = vmatprep.subr.mxu0 0.0
    %332 = vmatpush1.msra.mxu0 0.0
    %333 = vmatprep.subr.mxu0 0.0
    %334 = vmatpush1.msra.mxu0 0.0
    %335 = vmatprep.subr.mxu0 0.0
    %336 = vmatpush1.msra.mxu0 0.0
    %337 = vmatprep.subr.mxu0 0.0
    %338 = vmatpush1.msra.mxu0 0.0
    %339 = vmatprep.subr.mxu0 0.0
    %340 = vmatpush1.msra.mxu0 0.0
    %341 = vmatprep.subr.mxu0 0.0
    %342 = vmatpush1.msra.mxu0 0.0
    %343 = vmatprep.subr.mxu0 0.0
    %344 = vmatpush1.msra.mxu0 0.0
    %345 = vmatprep.subr.mxu0 0.0
    %346 = vmatpush1.msra.mxu0 0.0
    %347 = vmatprep.subr.mxu0 0.0
    %348 = vmatpush1.msra.mxu0 0.0
    %349 = vmatprep.subr.mxu0 0.0
    %350 = vmatpush1.msra.mxu0 0.0
    %351 = vmatprep.subr.mxu0 0.0
    %352 = vmatpush1.msra.mxu0 0.0
    %353 = vmatprep.subr.mxu0 0.0
    %354 = vmatpush1.msra.mxu0 0.0
    %355 = vmatprep.subr.mxu0 0.0
    %356 = vmatpush1.msra.mxu0 0.0
    %357 = vmatprep.subr.mxu0 0.0
    %358 = vmatpush1.msra.mxu0 0.0
    %359 = vmatprep.mubr.f32.mxu0 0.0
    %360 = vmatmul.mubr.f32.gmra.mrb[0].mxu0 %v293
    %v361 = vpop.f32.mrb[0].mxu0
    %v362 = vadd.f32 %v290, %v361
    %v363 = vpop.f32.mrb[0].mxu0
    %364 = vdwg.mxu0
    %vm365 = vcmask 0
    %366 = vst.msk [vmem:[#allocation3] sm:$0x1] %vm365, %v362
    // Predicated region
    $region38: #{_lambda_.6} parent=1 // pred_check
      _
    $region39: #{_lambda_.6} parent=1 // pred_check_branch
      %368 = sbr.rel (0) target = $region41
    $region40: #{_lambda_.6} parent=1 // pred_region
      %s370 = ssub.s32 16, 16
      %371 = vsyncadd [#allocation4], %s370
      %s373 = sshll.u32 [#allocation3], 4
      %s374 = int_to_ptr.vmem [resolvable:$true] %s373
      %376 = dma.vmem_to_hbm [thread:$0]  %s374, 16, %s9, [#allocation4]
    $region41: #{_lambda_.6} parent=1 // pred_fallthru
      _
    // Predicated region
    $region42: #{_lambda_.6} parent=1 // pred_check
      _
    $region43: #{_lambda_.6} parent=1 // pred_check_branch
      %378 = sbr.rel (0) target = $region45
    $region44: #{_lambda_.6} parent=1 // pred_region
      %379 = dma.done [#allocation4], 16
    $region45: #{_lambda_.6} parent=1 // pred_fallthru
      _
    %380 = vsyncpa [#allocation4], 1

// kernel: _lambda_.5
$region0: #{_lambda_.5}
  #allocation0 [shape = 'u32[]', space=smem, size = 0x4, offset = 0x4, fixed_abs, tag = 'smem constant byte address 0x4 - core index']
  #allocation1 [shape = 'u32[144,128]{1,0:T(1,128)}', space=vmem, size = 0x12000, scoped, tag = 'internal scratch']
  %s0 = inlined_call_operand.vmem [shape: f32[9,432,4], index: 0, kind: input, shape index: {}]
  %s1 = inlined_call_operand.vmem [shape: f32[8,432], index: 1, kind: input, shape index: {}]
  %s2 = inlined_call_operand.vmem [shape: f32[8,1], index: 2, kind: input, shape index: {}]
  %s3 = inlined_call_operand.vmem [shape: f32[8,4], index: 3, kind: output, shape index: {}]
  %s4 = sld [smem:[#allocation0]]
  $region22: #{_lambda_.5} parent=0
    _
  %s6 = ssub.s32 1, %s4
  %s7 = scalar_select 0, %s6, %s4
  // Predicated region
  $region2: #{_lambda_.5} parent=0 // pred_check
    _
  $region3: #{_lambda_.5} parent=0 // pred_check_branch
    %9 = sbr.rel (0) target = $region5
  $region4: #{_lambda_.5} parent=0 // pred_region
    _
  $region5: #{_lambda_.5} parent=0 // pred_fallthru
    _
  // Predicated region
  $region6: #{_lambda_.5} parent=0 // pred_check
    _
  $region7: #{_lambda_.5} parent=0 // pred_check_branch
    %11 = sbr.rel (0) target = $region9
  $region8: #{_lambda_.5} parent=0 // pred_region
    _
  $region9: #{_lambda_.5} parent=0 // pred_fallthru
    _
  // Predicated region
  $region10: #{_lambda_.5} parent=0 // pred_check
    _
  $region11: #{_lambda_.5} parent=0 // pred_check_branch
    %13 = sbr.rel (0) target = $region13
  $region12: #{_lambda_.5} parent=0 // pred_region
    _
  $region13: #{_lambda_.5} parent=0 // pred_fallthru
    _
  %v14 = vld [vmem:[%s1] sm:$0xff]
  %v15 = vld [vmem:[%s1 + $0x8] sm:$0xff]
  %v16 = vld [vmem:[%s1 + $0x10] sm:$0xff]
  %v17 = vld [vmem:[%s1 + $0x18] sm:$0xff]
  %v18 = vld [vmem:[%s0] sm:$0xff]
  %v19 = vld [vmem:[%s0 + $0x8] sm:$0xff]
  %v20 = vld [vmem:[%s0 + $0x10] sm:$0xff]
  %v21 = vld [vmem:[%s0 + $0x18] sm:$0xff]
  %v22 = vld [vmem:[%s0 + $0x20] sm:$0xff]
  %v23 = vld [vmem:[%s0 + $0x28] sm:$0xff]
  %v24 = vld [vmem:[%s0 + $0x30] sm:$0xff]
  %v25 = vld [vmem:[%s0 + $0x38] sm:$0xff]
  %v26 = vld [vmem:[%s0 + $0x40] sm:$0xff]
  %v27 = vld [vmem:[%s0 + $0x48] sm:$0xff]
  %v28 = vld [vmem:[%s0 + $0x50] sm:$0xff]
  %v29 = vld [vmem:[%s0 + $0x58] sm:$0xff]
  %v30 = vld [vmem:[%s0 + $0x60] sm:$0xff]
  %v31 = vld [vmem:[%s0 + $0x68] sm:$0xff]
  %v32 = vld [vmem:[%s0 + $0x70] sm:$0xff]
  %v33 = vld [vmem:[%s0 + $0x78] sm:$0xff]
  %v34 = vld [vmem:[%s0 + $0x80] sm:$0xff]
  %v35 = vld [vmem:[%s0 + $0x88] sm:$0xff]
  %v36 = vld [vmem:[%s0 + $0x90] sm:$0xff]
  %v37 = vld [vmem:[%s0 + $0x98] sm:$0xff]
  %v38 = vld [vmem:[%s0 + $0xa0] sm:$0xff]
  %v39 = vld [vmem:[%s0 + $0xa8] sm:$0xff]
  %v40 = vld [vmem:[%s0 + $0xb0] sm:$0xff]
  %v41 = vld [vmem:[%s0 + $0xb8] sm:$0xff]
  %v42 = vld [vmem:[%s0 + $0xc0] sm:$0xff]
  %v43 = vld [vmem:[%s0 + $0xc8] sm:$0xff]
  %v44 = vld [vmem:[%s0 + $0xd0] sm:$0xff]
  %v45 = vld [vmem:[%s0 + $0xd8] sm:$0xff]
  %v46 = vld [vmem:[%s0 + $0xe0] sm:$0xff]
  %v47 = vld [vmem:[%s0 + $0xe8] sm:$0xff]
  %v48 = vld [vmem:[%s0 + $0xf0] sm:$0xff]
  %v49 = vld [vmem:[%s0 + $0xf8] sm:$0xff]
  %v50 = vld [vmem:[%s0 + $0x100] sm:$0xff]
  %v51 = vld [vmem:[%s0 + $0x108] sm:$0xff]
  %v52 = vld [vmem:[%s0 + $0x110] sm:$0xff]
  %v53 = vld [vmem:[%s0 + $0x118] sm:$0xff]
  %v54 = vld [vmem:[%s0 + $0x120] sm:$0xff]
  %v55 = vld [vmem:[%s0 + $0x128] sm:$0xff]
  %v56 = vld [vmem:[%s0 + $0x130] sm:$0xff]
  %v57 = vld [vmem:[%s0 + $0x138] sm:$0xff]
  %v58 = vld [vmem:[%s0 + $0x140] sm:$0xff]
  %v59 = vld [vmem:[%s0 + $0x148] sm:$0xff]
  %v60 = vld [vmem:[%s0 + $0x150] sm:$0xff]
  %v61 = vld [vmem:[%s0 + $0x158] sm:$0xff]
  %v62 = vld [vmem:[%s0 + $0x160] sm:$0xff]
  %v63 = vld [vmem:[%s0 + $0x168] sm:$0xff]
  %v64 = vld [vmem:[%s0 + $0x170] sm:$0xff]
  %v65 = vld [vmem:[%s0 + $0x178] sm:$0xff]
  %v66 = vld [vmem:[%s0 + $0x180] sm:$0xff]
  %v67 = vld [vmem:[%s0 + $0x188] sm:$0xff]
  %v68 = vld [vmem:[%s0 + $0x190] sm:$0xff]
  %v69 = vld [vmem:[%s0 + $0x198] sm:$0xff]
  %v70 = vld [vmem:[%s0 + $0x1a0] sm:$0xff]
  %v71 = vld [vmem:[%s0 + $0x1a8] sm:$0xff]
  %vm72 = vcmask 392192
  %v74 = vsel %vm72, %v17, 0
  %76 = vmatprep.subr.mxu0 0.0
  %77 = vmatpush1.msra.mxu0 %v18
  %78 = vmatprep.subr.mxu0 0.0
  %79 = vmatpush1.msra.mxu0 %v19
  %80 = vmatprep.subr.mxu0 0.0
  %81 = vmatpush1.msra.mxu0 %v20
  %82 = vmatprep.subr.mxu0 0.0
  %83 = vmatpush1.msra.mxu0 %v21
  %84 = vmatprep.subr.mxu0 0.0
  %85 = vmatpush1.msra.mxu0 %v22
  %86 = vmatprep.subr.mxu0 0.0
  %87 = vmatpush1.msra.mxu0 %v23
  %88 = vmatprep.subr.mxu0 0.0
  %89 = vmatpush1.msra.mxu0 %v24
  %90 = vmatprep.subr.mxu0 0.0
  %91 = vmatpush1.msra.mxu0 %v25
  %92 = vmatprep.subr.mxu0 0.0
  %93 = vmatpush1.msra.mxu0 %v26
  %94 = vmatprep.subr.mxu0 0.0
  %95 = vmatpush1.msra.mxu0 %v27
  %96 = vmatprep.subr.mxu0 0.0
  %97 = vmatpush1.msra.mxu0 %v28
  %98 = vmatprep.subr.mxu0 0.0
  %99 = vmatpush1.msra.mxu0 %v29
  %100 = vmatprep.subr.mxu0 0.0
  %101 = vmatpush1.msra.mxu0 %v30
  %102 = vmatprep.subr.mxu0 0.0
  %103 = vmatpush1.msra.mxu0 %v31
  %104 = vmatprep.subr.mxu0 0.0
  %105 = vmatpush1.msra.mxu0 %v32
  %106 = vmatprep.subr.mxu0 0.0
  %107 = vmatpush1.msra.mxu0 %v33
  %108 = vmatprep.subr.mxu0 0.0
  %109 = vmatpush1.msra.mxu0 %v34
  %110 = vmatprep.subr.mxu0 0.0
  %111 = vmatpush1.msra.mxu0 %v35
  %112 = vmatprep.subr.mxu0 0.0
  %113 = vmatpush1.msra.mxu0 %v36
  %114 = vmatprep.subr.mxu0 0.0
  %115 = vmatpush1.msra.mxu0 %v37
  %116 = vmatprep.subr.mxu0 0.0
  %117 = vmatpush1.msra.mxu0 %v38
  %118 = vmatprep.subr.mxu0 0.0
  %119 = vmatpush1.msra.mxu0 %v39
  %120 = vmatprep.subr.mxu0 0.0
  %121 = vmatpush1.msra.mxu0 %v40
  %122 = vmatprep.subr.mxu0 0.0
  %123 = vmatpush1.msra.mxu0 %v41
  %124 = vmatprep.subr.mxu0 0.0
  %125 = vmatpush1.msra.mxu0 %v42
  %126 = vmatprep.subr.mxu0 0.0
  %127 = vmatpush1.msra.mxu0 %v43
  %128 = vmatprep.subr.mxu0 0.0
  %129 = vmatpush1.msra.mxu0 %v44
  %130 = vmatprep.subr.mxu0 0.0
  %131 = vmatpush1.msra.mxu0 %v45
  %132 = vmatprep.subr.mxu0 0.0
  %133 = vmatpush1.msra.mxu0 %v46
  %134 = vmatprep.subr.mxu0 0.0
  %135 = vmatpush1.msra.mxu0 %v47
  %136 = vmatprep.subr.mxu0 0.0
  %137 = vmatpush1.msra.mxu0 %v48
  %138 = vmatprep.subr.mxu0 0.0
  %139 = vmatpush1.msra.mxu0 %v49
  %140 = vmatprep.mubr.f32.mxu0 %v15
  %141 = vmatmul.mubr.f32.gmra.mrb[0].mxu0 %v14
  %v142 = vpop.f32.mrb[0].mxu0
  %v143 = vadd.f32 0.0, %v142
  %v144 = vpop.f32.mrb[0].mxu0
  %145 = vdwg.mxu0
  %146 = vmatprep.subr.mxu0 0.0
  %147 = vmatpush1.msra.mxu0 %v50
  %148 = vmatprep.subr.mxu0 0.0
  %149 = vmatpush1.msra.mxu0 %v51
  %150 = vmatprep.subr.mxu0 0.0
  %151 = vmatpush1.msra.mxu0 %v52
  %152 = vmatprep.subr.mxu0 0.0
  %153 = vmatpush1.msra.mxu0 %v53
  %154 = vmatprep.subr.mxu0 0.0
  %155 = vmatpush1.msra.mxu0 %v54
  %156 = vmatprep.subr.mxu0 0.0
  %157 = vmatpush1.msra.mxu0 %v55
  %158 = vmatprep.subr.mxu0 0.0
  %159 = vmatpush1.msra.mxu0 %v56
  %160 = vmatprep.subr.mxu0 0.0
  %161 = vmatpush1.msra.mxu0 %v57
  %162 = vmatprep.subr.mxu0 0.0
  %163 = vmatpush1.msra.mxu0 %v58
  %164 = vmatprep.subr.mxu0 0.0
  %165 = vmatpush1.msra.mxu0 %v59
  %166 = vmatprep.subr.mxu0 0.0
  %167 = vmatpush1.msra.mxu0 %v60
  %168 = vmatprep.subr.mxu0 0.0
  %169 = vmatpush1.msra.mxu0 %v61
  %170 = vmatprep.subr.mxu0 0.0
  %171 = vmatpush1.msra.mxu0 %v62
  %172 = vmatprep.subr.mxu0 0.0
  %173 = vmatpush1.msra.mxu0 %v63
  %174 = vmatprep.subr.mxu0 0.0
  %175 = vmatpush1.msra.mxu0 %v64
  %176 = vmatprep.subr.mxu0 0.0
  %177 = vmatpush1.msra.mxu0 %v65
  %178 = vmatprep.subr.mxu0 0.0
  %179 = vmatpush1.msra.mxu0 %v66
  %180 = vmatprep.subr.mxu0 0.0
  %181 = vmatpush1.msra.mxu0 %v67
  %182 = vmatprep.subr.mxu0 0.0
  %183 = vmatpush1.msra.mxu0 %v68
  %184 = vmatprep.subr.mxu0 0.0
  %185 = vmatpush1.msra.mxu0 %v69
  %186 = vmatprep.subr.mxu0 0.0
  %187 = vmatpush1.msra.mxu0 %v70
  %188 = vmatprep.subr.mxu0 0.0
  %189 = vmatpush1.msra.mxu0 %v71
  %190 = vmatprep.subr.mxu0 0.0
  %191 = vmatpush1.msra.mxu0 0.0
  %192 = vmatprep.subr.mxu0 0.0
  %193 = vmatpush1.msra.mxu0 0.0
  %194 = vmatprep.subr.mxu0 0.0
  %195 = vmatpush1.msra.mxu0 0.0
  %196 = vmatprep.subr.mxu0 0.0
  %197 = vmatpush1.msra.mxu0 0.0
  %198 = vmatprep.subr.mxu0 0.0
  %199 = vmatpush1.msra.mxu0 0.0
  %200 = vmatprep.subr.mxu0 0.0
  %201 = vmatpush1.msra.mxu0 0.0
  %202 = vmatprep.subr.mxu0 0.0
  %203 = vmatpush1.msra.mxu0 0.0
  %204 = vmatprep.subr.mxu0 0.0
  %205 = vmatpush1.msra.mxu0 0.0
  %206 = vmatprep.subr.mxu0 0.0
  %207 = vmatpush1.msra.mxu0 0.0
  %208 = vmatprep.subr.mxu0 0.0
  %209 = vmatpush1.msra.mxu0 0.0
  %210 = vmatprep.mubr.f32.mxu0 %v74
  %211 = vmatmul.mubr.f32.gmra.mrb[0].mxu0 %v16
  %v212 = vpop.f32.mrb[0].mxu0
  %v213 = vadd.f32 %v143, %v212
  %v214 = vpop.f32.mrb[0].mxu0
  %215 = vdwg.mxu0
  %s216 = scalar_lea.vmem %s0, 432
  %v217 = vld [vmem:[%s216] sm:$0xff]
  %v218 = vld [vmem:[%s216 + $0x8] sm:$0xff]
  %v219 = vld [vmem:[%s216 + $0x10] sm:$0xff]
  %v220 = vld [vmem:[%s216 + $0x18] sm:$0xff]
  %v221 = vld [vmem:[%s216 + $0x20] sm:$0xff]
  %v222 = vld [vmem:[%s216 + $0x28] sm:$0xff]
  %v223 = vld [vmem:[%s216 + $0x30] sm:$0xff]
  %v224 = vld [vmem:[%s216 + $0x38] sm:$0xff]
  %v225 = vld [vmem:[%s216 + $0x40] sm:$0xff]
  %v226 = vld [vmem:[%s216 + $0x48] sm:$0xff]
  %v227 = vld [vmem:[%s216 + $0x50] sm:$0xff]
  %v228 = vld [vmem:[%s216 + $0x58] sm:$0xff]
  %v229 = vld [vmem:[%s216 + $0x60] sm:$0xff]
  %v230 = vld [vmem:[%s216 + $0x68] sm:$0xff]
  %v231 = vld [vmem:[%s216 + $0x70] sm:$0xff]
  %v232 = vld [vmem:[%s216 + $0x78] sm:$0xff]
  %v233 = vld [vmem:[%s216 + $0x80] sm:$0xff]
  %v234 = vld [vmem:[%s216 + $0x88] sm:$0xff]
  %v235 = vld [vmem:[%s216 + $0x90] sm:$0xff]
  %v236 = vld [vmem:[%s216 + $0x98] sm:$0xff]
  %v237 = vld [vmem:[%s216 + $0xa0] sm:$0xff]
  %v238 = vld [vmem:[%s216 + $0xa8] sm:$0xff]
  %v239 = vld [vmem:[%s216 + $0xb0] sm:$0xff]
  %v240 = vld [vmem:[%s216 + $0xb8] sm:$0xff]
  %v241 = vld [vmem:[%s216 + $0xc0] sm:$0xff]
  %v242 = vld [vmem:[%s216 + $0xc8] sm:$0xff]
  %v243 = vld [vmem:[%s216 + $0xd0] sm:$0xff]
  %v244 = vld [vmem:[%s216 + $0xd8] sm:$0xff]
  %v245 = vld [vmem:[%s216 + $0xe0] sm:$0xff]
  %v246 = vld [vmem:[%s216 + $0xe8] sm:$0xff]
  %v247 = vld [vmem:[%s216 + $0xf0] sm:$0xff]
  %v248 = vld [vmem:[%s216 + $0xf8] sm:$0xff]
  %v249 = vld [vmem:[%s216 + $0x100] sm:$0xff]
  %v250 = vld [vmem:[%s216 + $0x108] sm:$0xff]
  %v251 = vld [vmem:[%s216 + $0x110] sm:$0xff]
  %v252 = vld [vmem:[%s216 + $0x118] sm:$0xff]
  %v253 = vld [vmem:[%s216 + $0x120] sm:$0xff]
  %v254 = vld [vmem:[%s216 + $0x128] sm:$0xff]
  %v255 = vld [vmem:[%s216 + $0x130] sm:$0xff]
  %v256 = vld [vmem:[%s216 + $0x138] sm:$0xff]
  %v257 = vld [vmem:[%s216 + $0x140] sm:$0xff]
  %v258 = vld [vmem:[%s216 + $0x148] sm:$0xff]
  %v259 = vld [vmem:[%s216 + $0x150] sm:$0xff]
  %v260 = vld [vmem:[%s216 + $0x158] sm:$0xff]
  %v261 = vld [vmem:[%s216 + $0x160] sm:$0xff]
  %v262 = vld [vmem:[%s216 + $0x168] sm:$0xff]
  %v263 = vld [vmem:[%s216 + $0x170] sm:$0xff]
  %v264 = vld [vmem:[%s216 + $0x178] sm:$0xff]
  %v265 = vld [vmem:[%s216 + $0x180] sm:$0xff]
  %v266 = vld [vmem:[%s216 + $0x188] sm:$0xff]
  %v267 = vld [vmem:[%s216 + $0x190] sm:$0xff]
  %v268 = vld [vmem:[%s216 + $0x198] sm:$0xff]
  %v269 = vld [vmem:[%s216 + $0x1a0] sm:$0xff]
  %v270 = vld [vmem:[%s216 + $0x1a8] sm:$0xff]
  %271 = vmatprep.subr.mxu0 0.0
  %272 = vmatpush1.msra.mxu0 %v217
  %273 = vmatprep.subr.mxu0 0.0
  %274 = vmatpush1.msra.mxu0 %v218
  %275 = vmatprep.subr.mxu0 0.0
  %276 = vmatpush1.msra.mxu0 %v219
  %277 = vmatprep.subr.mxu0 0.0
  %278 = vmatpush1.msra.mxu0 %v220
  %279 = vmatprep.subr.mxu0 0.0
  %280 = vmatpush1.msra.mxu0 %v221
  %281 = vmatprep.subr.mxu0 0.0
  %282 = vmatpush1.msra.mxu0 %v222
  %283 = vmatprep.subr.mxu0 0.0
  %284 = vmatpush1.msra.mxu0 %v223
  %285 = vmatprep.subr.mxu0 0.0
  %286 = vmatpush1.msra.mxu0 %v224
  %287 = vmatprep.subr.mxu0 0.0
  %288 = vmatpush1.msra.mxu0 %v225
  %289 = vmatprep.subr.mxu0 0.0
  %290 = vmatpush1.msra.mxu0 %v226
  %291 = vmatprep.subr.mxu0 0.0
  %292 = vmatpush1.msra.mxu0 %v227
  %293 = vmatprep.subr.mxu0 0.0
  %294 = vmatpush1.msra.mxu0 %v228
  %295 = vmatprep.subr.mxu0 0.0
  %296 = vmatpush1.msra.mxu0 %v229
  %297 = vmatprep.subr.mxu0 0.0
  %298 = vmatpush1.msra.mxu0 %v230
  %299 = vmatprep.subr.mxu0 0.0
  %300 = vmatpush1.msra.mxu0 %v231
  %301 = vmatprep.subr.mxu0 0.0
  %302 = vmatpush1.msra.mxu0 %v232
  %303 = vmatprep.subr.mxu0 0.0
  %304 = vmatpush1.msra.mxu0 %v233
  %305 = vmatprep.subr.mxu0 0.0
  %306 = vmatpush1.msra.mxu0 %v234
  %307 = vmatprep.subr.mxu0 0.0
  %308 = vmatpush1.msra.mxu0 %v235
  %309 = vmatprep.subr.mxu0 0.0
  %310 = vmatpush1.msra.mxu0 %v236
  %311 = vmatprep.subr.mxu0 0.0
  %312 = vmatpush1.msra.mxu0 %v237
  %313 = vmatprep.subr.mxu0 0.0
  %314 = vmatpush1.msra.mxu0 %v238
  %315 = vmatprep.subr.mxu0 0.0
  %316 = vmatpush1.msra.mxu0 %v239
  %317 = vmatprep.subr.mxu0 0.0
  %318 = vmatpush1.msra.mxu0 %v240
  %319 = vmatprep.subr.mxu0 0.0
  %320 = vmatpush1.msra.mxu0 %v241
  %321 = vmatprep.subr.mxu0 0.0
  %322 = vmatpush1.msra.mxu0 %v242
  %323 = vmatprep.subr.mxu0 0.0
  %324 = vmatpush1.msra.mxu0 %v243
  %325 = vmatprep.subr.mxu0 0.0
  %326 = vmatpush1.msra.mxu0 %v244
  %327 = vmatprep.subr.mxu0 0.0
  %328 = vmatpush1.msra.mxu0 %v245
  %329 = vmatprep.subr.mxu0 0.0
  %330 = vmatpush1.msra.mxu0 %v246
  %331 = vmatprep.subr.mxu0 0.0
  %332 = vmatpush1.msra.mxu0 %v247
  %333 = vmatprep.subr.mxu0 0.0
  %334 = vmatpush1.msra.mxu0 %v248
  %335 = vmatprep.mubr.f32.mxu0 %v15
  %336 = vmatmul.mubr.f32.gmra.mrb[0].mxu0 %v14
  %v337 = vpop.f32.mrb[0].mxu0
  %v338 = vadd.f32 0.0, %v337
  %v339 = vpop.f32.mrb[0].mxu0
  %340 = vdwg.mxu0
  %341 = vmatprep.subr.mxu0 0.0
  %342 = vmatpush1.msra.mxu0 %v249
  %343 = vmatprep.subr.mxu0 0.0
  %344 = vmatpush1.msra.mxu0 %v250
  %345 = vmatprep.subr.mxu0 0.0
  %346 = vmatpush1.msra.mxu0 %v251
  %347 = vmatprep.subr.mxu0 0.0
  %348 = vmatpush1.msra.mxu0 %v252
  %349 = vmatprep.subr.mxu0 0.0
  %350 = vmatpush1.msra.mxu0 %v253
  %351 = vmatprep.subr.mxu0 0.0
  %352 = vmatpush1.msra.mxu0 %v254
  %353 = vmatprep.subr.mxu0 0.0
  %354 = vmatpush1.msra.mxu0 %v255
  %355 = vmatprep.subr.mxu0 0.0
  %356 = vmatpush1.msra.mxu0 %v256
  %357 = vmatprep.subr.mxu0 0.0
  %358 = vmatpush1.msra.mxu0 %v257
  %359 = vmatprep.subr.mxu0 0.0
  %360 = vmatpush1.msra.mxu0 %v258
  %361 = vmatprep.subr.mxu0 0.0
  %362 = vmatpush1.msra.mxu0 %v259
  %363 = vmatprep.subr.mxu0 0.0
  %364 = vmatpush1.msra.mxu0 %v260
  %365 = vmatprep.subr.mxu0 0.0
  %366 = vmatpush1.msra.mxu0 %v261
  %367 = vmatprep.subr.mxu0 0.0
  %368 = vmatpush1.msra.mxu0 %v262
  %369 = vmatprep.subr.mxu0 0.0
  %370 = vmatpush1.msra.mxu0 %v263
  %371 = vmatprep.subr.mxu0 0.0
  %372 = vmatpush1.msra.mxu0 %v264
  %373 = vmatprep.subr.mxu0 0.0
  %374 = vmatpush1.msra.mxu0 %v265
  %375 = vmatprep.subr.mxu0 0.0
  %376 = vmatpush1.msra.mxu0 %v266
  %377 = vmatprep.subr.mxu0 0.0
  %378 = vmatpush1.msra.mxu0 %v267
  %379 = vmatprep.subr.mxu0 0.0
  %380 = vmatpush1.msra.mxu0 %v268
  %381 = vmatprep.subr.mxu0 0.0
  %382 = vmatpush1.msra.mxu0 %v269
  %383 = vmatprep.subr.mxu0 0.0
  %384 = vmatpush1.msra.mxu0 %v270
  %385 = vmatprep.subr.mxu0 0.0
  %386 = vmatpush1.msra.mxu0 0.0
  %387 = vmatprep.subr.mxu0 0.0
  %388 = vmatpush1.msra.mxu0 0.0
  %389 = vmatprep.subr.mxu0 0.0
  %390 = vmatpush1.msra.mxu0 0.0
  %391 = vmatprep.subr.mxu0 0.0
  %392 = vmatpush1.msra.mxu0 0.0
  %393 = vmatprep.subr.mxu0 0.0
  %394 = vmatpush1.msra.mxu0 0.0
  %395 = vmatprep.subr.mxu0 0.0
  %396 = vmatpush1.msra.mxu0 0.0
  %397 = vmatprep.subr.mxu0 0.0
  %398 = vmatpush1.msra.mxu0 0.0
  %399 = vmatprep.subr.mxu0 0.0
  %400 = vmatpush1.msra.mxu0 0.0
  %401 = vmatprep.subr.mxu0 0.0
  %402 = vmatpush1.msra.mxu0 0.0
  %403 = vmatprep.subr.mxu0 0.0
  %404 = vmatpush1.msra.mxu0 0.0
  %405 = vmatprep.mubr.f32.mxu0 %v74
  %406 = vmatmul.mubr.f32.gmra.mrb[0].mxu0 %v16
  %v407 = vpop.f32.mrb[0].mxu0
  %v408 = vadd.f32 %v338, %v407
  %v409 = vpop.f32.mrb[0].mxu0
  %410 = vdwg.mxu0
  %v411 = vmax.f32 %v213, %v408
  %s412 = scalar_lea.vmem %s0, 864
  %v413 = vld [vmem:[%s412] sm:$0xff]
  %v414 = vld [vmem:[%s412 + $0x8] sm:$0xff]
  %v415 = vld [vmem:[%s412 + $0x10] sm:$0xff]
  %v416 = vld [vmem:[%s412 + $0x18] sm:$0xff]
  %v417 = vld [vmem:[%s412 + $0x20] sm:$0xff]
  %v418 = vld [vmem:[%s412 + $0x28] sm:$0xff]
  %v419 = vld [vmem:[%s412 + $0x30] sm:$0xff]
  %v420 = vld [vmem:[%s412 + $0x38] sm:$0xff]
  %v421 = vld [vmem:[%s412 + $0x40] sm:$0xff]
  %v422 = vld [vmem:[%s412 + $0x48] sm:$0xff]
  %v423 = vld [vmem:[%s412 + $0x50] sm:$0xff]
  %v424 = vld [vmem:[%s412 + $0x58] sm:$0xff]
  %v425 = vld [vmem:[%s412 + $0x60] sm:$0xff]
  %v426 = vld [vmem:[%s412 + $0x68] sm:$0xff]
  %v427 = vld [vmem:[%s412 + $0x70] sm:$0xff]
  %v428 = vld [vmem:[%s412 + $0x78] sm:$0xff]
  %v429 = vld [vmem:[%s412 + $0x80] sm:$0xff]
  %v430 = vld [vmem:[%s412 + $0x88] sm:$0xff]
  %v431 = vld [vmem:[%s412 + $0x90] sm:$0xff]
  %v432 = vld [vmem:[%s412 + $0x98] sm:$0xff]
  %v433 = vld [vmem:[%s412 + $0xa0] sm:$0xff]
  %v434 = vld [vmem:[%s412 + $0xa8] sm:$0xff]
  %v435 = vld [vmem:[%s412 + $0xb0] sm:$0xff]
  %v436 = vld [vmem:[%s412 + $0xb8] sm:$0xff]
  %v437 = vld [vmem:[%s412 + $0xc0] sm:$0xff]
  %v438 = vld [vmem:[%s412 + $0xc8] sm:$0xff]
  %v439 = vld [vmem:[%s412 + $0xd0] sm:$0xff]
  %v440 = vld [vmem:[%s412 + $0xd8] sm:$0xff]
  %v441 = vld [vmem:[%s412 + $0xe0] sm:$0xff]
  %v442 = vld [vmem:[%s412 + $0xe8] sm:$0xff]
  %v443 = vld [vmem:[%s412 + $0xf0] sm:$0xff]
  %v444 = vld [vmem:[%s412 + $0xf8] sm:$0xff]
  %v445 = vld [vmem:[%s412 + $0x100] sm:$0xff]
  %v446 = vld [vmem:[%s412 + $0x108] sm:$0xff]
  %v447 = vld [vmem:[%s412 + $0x110] sm:$0xff]
  %v448 = vld [vmem:[%s412 + $0x118] sm:$0xff]
  %v449 = vld [vmem:[%s412 + $0x120] sm:$0xff]
  %v450 = vld [vmem:[%s412 + $0x128] sm:$0xff]
  %v451 = vld [vmem:[%s412 + $0x130] sm:$0xff]
  %v452 = vld [vmem:[%s412 + $0x138] sm:$0xff]
  %v453 = vld [vmem:[%s412 + $0x140] sm:$0xff]
  %v454 = vld [vmem:[%s412 + $0x148] sm:$0xff]
  %v455 = vld [vmem:[%s412 + $0x150] sm:$0xff]
  %v456 = vld [vmem:[%s412 + $0x158] sm:$0xff]
  %v457 = vld [vmem:[%s412 + $0x160] sm:$0xff]
  %v458 = vld [vmem:[%s412 + $0x168] sm:$0xff]
  %v459 = vld [vmem:[%s412 + $0x170] sm:$0xff]
  %v460 = vld [vmem:[%s412 + $0x178] sm:$0xff]
  %v461 = vld [vmem:[%s412 + $0x180] sm:$0xff]
  %v462 = vld [vmem:[%s412 + $0x188] sm:$0xff]
  %v463 = vld [vmem:[%s412 + $0x190] sm:$0xff]
  %v464 = vld [vmem:[%s412 + $0x198] sm:$0xff]
  %v465 = vld [vmem:[%s412 + $0x1a0] sm:$0xff]
  %v466 = vld [vmem:[%s412 + $0x1a8] sm:$0xff]
  %467 = vmatprep.subr.mxu0 0.0
  %468 = vmatpush1.msra.mxu0 %v413
  %469 = vmatprep.subr.mxu0 0.0
  %470 = vmatpush1.msra.mxu0 %v414
  %471 = vmatprep.subr.mxu0 0.0
  %472 = vmatpush1.msra.mxu0 %v415
  %473 = vmatprep.subr.mxu0 0.0
  %474 = vmatpush1.msra.mxu0 %v416
  %475 = vmatprep.subr.mxu0 0.0
  %476 = vmatpush1.msra.mxu0 %v417
  %477 = vmatprep.subr.mxu0 0.0
  %478 = vmatpush1.msra.mxu0 %v418
  %479 = vmatprep.subr.mxu0 0.0
  %480 = vmatpush1.msra.mxu0 %v419
  %481 = vmatprep.subr.mxu0 0.0
  %482 = vmatpush1.msra.mxu0 %v420
  %483 = vmatprep.subr.mxu0 0.0
  %484 = vmatpush1.msra.mxu0 %v421
  %485 = vmatprep.subr.mxu0 0.0
  %486 = vmatpush1.msra.mxu0 %v422
  %487 = vmatprep.subr.mxu0 0.0
  %488 = vmatpush1.msra.mxu0 %v423
  %489 = vmatprep.subr.mxu0 0.0
  %490 = vmatpush1.msra.mxu0 %v424
  %491 = vmatprep.subr.mxu0 0.0
  %492 = vmatpush1.msra.mxu0 %v425
  %493 = vmatprep.subr.mxu0 0.0
  %494 = vmatpush1.msra.mxu0 %v426
  %495 = vmatprep.subr.mxu0 0.0
  %496 = vmatpush1.msra.mxu0 %v427
  %497 = vmatprep.subr.mxu0 0.0
  %498 = vmatpush1.msra.mxu0 %v428
  %499 = vmatprep.subr.mxu0 0.0
  %500 = vmatpush1.msra.mxu0 %v429
  %501 = vmatprep.subr.mxu0 0.0
  %502 = vmatpush1.msra.mxu0 %v430
  %503 = vmatprep.subr.mxu0 0.0
  %504 = vmatpush1.msra.mxu0 %v431
  %505 = vmatprep.subr.mxu0 0.0
  %506 = vmatpush1.msra.mxu0 %v432
  %507 = vmatprep.subr.mxu0 0.0
  %508 = vmatpush1.msra.mxu0 %v433
  %509 = vmatprep.subr.mxu0 0.0
  %510 = vmatpush1.msra.mxu0 %v434
  %511 = vmatprep.subr.mxu0 0.0
  %512 = vmatpush1.msra.mxu0 %v435
  %513 = vmatprep.subr.mxu0 0.0
  %514 = vmatpush1.msra.mxu0 %v436
  %515 = vmatprep.subr.mxu0 0.0
  %516 = vmatpush1.msra.mxu0 %v437
  %517 = vmatprep.subr.mxu0 0.0
  %518 = vmatpush1.msra.mxu0 %v438
  %519 = vmatprep.subr.mxu0 0.0
  %520 = vmatpush1.msra.mxu0 %v439
  %521 = vmatprep.subr.mxu0 0.0
  %522 = vmatpush1.msra.mxu0 %v440
  %523 = vmatprep.subr.mxu0 0.0
  %524 = vmatpush1.msra.mxu0 %v441
  %525 = vmatprep.subr.mxu0 0.0
  %526 = vmatpush1.msra.mxu0 %v442
  %527 = vmatprep.subr.mxu0 0.0
  %528 = vmatpush1.msra.mxu0 %v443
  %529 = vmatprep.subr.mxu0 0.0
  %530 = vmatpush1.msra.mxu0 %v444
  %531 = vmatprep.mubr.f32.mxu0 %v15
  %532 = vmatmul.mubr.f32.gmra.mrb[0].mxu0 %v14
  %v533 = vpop.f32.mrb[0].mxu0
  %v534 = vadd.f32 0.0, %v533
  %v535 = vpop.f32.mrb[0].mxu0
  %536 = vdwg.mxu0
  %537 = vmatprep.subr.mxu0 0.0
  %538 = vmatpush1.msra.mxu0 %v445
  %539 = vmatprep.subr.mxu0 0.0
  %540 = vmatpush1.msra.mxu0 %v446
  %541 = vmatprep.subr.mxu0 0.0
  %542 = vmatpush1.msra.mxu0 %v447
  %543 = vmatprep.subr.mxu0 0.0
  %544 = vmatpush1.msra.mxu0 %v448
  %545 = vmatprep.subr.mxu0 0.0
  %546 = vmatpush1.msra.mxu0 %v449
  %547 = vmatprep.subr.mxu0 0.0
  %548 = vmatpush1.msra.mxu0 %v450
  %549 = vmatprep.subr.mxu0 0.0
  %550 = vmatpush1.msra.mxu0 %v451
  %551 = vmatprep.subr.mxu0 0.0
  %552 = vmatpush1.msra.mxu0 %v452
  %553 = vmatprep.subr.mxu0 0.0
  %554 = vmatpush1.msra.mxu0 %v453
  %555 = vmatprep.subr.mxu0 0.0
  %556 = vmatpush1.msra.mxu0 %v454
  %557 = vmatprep.subr.mxu0 0.0
  %558 = vmatpush1.msra.mxu0 %v455
  %559 = vmatprep.subr.mxu0 0.0
  %560 = vmatpush1.msra.mxu0 %v456
  %561 = vmatprep.subr.mxu0 0.0
  %562 = vmatpush1.msra.mxu0 %v457
  %563 = vmatprep.subr.mxu0 0.0
  %564 = vmatpush1.msra.mxu0 %v458
  %565 = vmatprep.subr.mxu0 0.0
  %566 = vmatpush1.msra.mxu0 %v459
  %567 = vmatprep.subr.mxu0 0.0
  %568 = vmatpush1.msra.mxu0 %v460
  %569 = vmatprep.subr.mxu0 0.0
  %570 = vmatpush1.msra.mxu0 %v461
  %571 = vmatprep.subr.mxu0 0.0
  %572 = vmatpush1.msra.mxu0 %v462
  %573 = vmatprep.subr.mxu0 0.0
  %574 = vmatpush1.msra.mxu0 %v463
  %575 = vmatprep.subr.mxu0 0.0
  %576 = vmatpush1.msra.mxu0 %v464
  %577 = vmatprep.subr.mxu0 0.0
  %578 = vmatpush1.msra.mxu0 %v465
  %579 = vmatprep.subr.mxu0 0.0
  %580 = vmatpush1.msra.mxu0 %v466
  %581 = vmatprep.subr.mxu0 0.0
  %582 = vmatpush1.msra.mxu0 0.0
  %583 = vmatprep.subr.mxu0 0.0
  %584 = vmatpush1.msra.mxu0 0.0
  %585 = vmatprep.subr.mxu0 0.0
  %586 = vmatpush1.msra.mxu0 0.0
  %587 = vmatprep.subr.mxu0 0.0
  %588 = vmatpush1.msra.mxu0 0.0
  %589 = vmatprep.subr.mxu0 0.0
  %590 = vmatpush1.msra.mxu0 0.0
  %591 = vmatprep.subr.mxu0 0.0
  %592 = vmatpush1.msra.mxu0 0.0
  %593 = vmatprep.subr.mxu0 0.0
  %594 = vmatpush1.msra.mxu0 0.0
  %595 = vmatprep.subr.mxu0 0.0
  %596 = vmatpush1.msra.mxu0 0.0
  %597 = vmatprep.subr.mxu0 0.0
  %598 = vmatpush1.msra.mxu0 0.0
  %599 = vmatprep.subr.mxu0 0.0
  %600 = vmatpush1.msra.mxu0 0.0
  %601 = vmatprep.mubr.f32.mxu0 %v74
  %602 = vmatmul.mubr.f32.gmra.mrb[0].mxu0 %v16
  %v603 = vpop.f32.mrb[0].mxu0
  %v604 = vadd.f32 %v534, %v603
  %v605 = vpop.f32.mrb[0].mxu0
  %606 = vdwg.mxu0
  %v607 = vmax.f32 %v411, %v604
  %s608 = scalar_lea.vmem %s0, 1296
  %v609 = vld [vmem:[%s608] sm:$0xff]
  %v610 = vld [vmem:[%s608 + $0x8] sm:$0xff]
  %v611 = vld [vmem:[%s608 + $0x10] sm:$0xff]
  %v612 = vld [vmem:[%s608 + $0x18] sm:$0xff]
  %v613 = vld [vmem:[%s608 + $0x20] sm:$0xff]
  %v614 = vld [vmem:[%s608 + $0x28] sm:$0xff]
  %v615 = vld [vmem:[%s608 + $0x30] sm:$0xff]
  %v616 = vld [vmem:[%s608 + $0x38] sm:$0xff]
  %v617 = vld [vmem:[%s608 + $0x40] sm:$0xff]
  %v618 = vld [vmem:[%s608 + $0x48] sm:$0xff]
  %v619 = vld [vmem:[%s608 + $0x50] sm:$0xff]
  %v620 = vld [vmem:[%s608 + $0x58] sm:$0xff]
  %v621 = vld [vmem:[%s608 + $0x60] sm:$0xff]
  %v622 = vld [vmem:[%s608 + $0x68] sm:$0xff]
  %v623 = vld [vmem:[%s608 + $0x70] sm:$0xff]
  %v624 = vld [vmem:[%s608 + $0x78] sm:$0xff]
  %v625 = vld [vmem:[%s608 + $0x80] sm:$0xff]
  %v626 = vld [vmem:[%s608 + $0x88] sm:$0xff]
  %v627 = vld [vmem:[%s608 + $0x90] sm:$0xff]
  %v628 = vld [vmem:[%s608 + $0x98] sm:$0xff]
  %v629 = vld [vmem:[%s608 + $0xa0] sm:$0xff]
  %v630 = vld [vmem:[%s608 + $0xa8] sm:$0xff]
  %v631 = vld [vmem:[%s608 + $0xb0] sm:$0xff]
  %v632 = vld [vmem:[%s608 + $0xb8] sm:$0xff]
  %v633 = vld [vmem:[%s608 + $0xc0] sm:$0xff]
  %v634 = vld [vmem:[%s608 + $0xc8] sm:$0xff]
  %v635 = vld [vmem:[%s608 + $0xd0] sm:$0xff]
  %v636 = vld [vmem:[%s608 + $0xd8] sm:$0xff]
  %v637 = vld [vmem:[%s608 + $0xe0] sm:$0xff]
  %v638 = vld [vmem:[%s608 + $0xe8] sm:$0xff]
  %v639 = vld [vmem:[%s608 + $0xf0] sm:$0xff]
  %v640 = vld [vmem:[%s608 + $0xf8] sm:$0xff]
  %v641 = vld [vmem:[%s608 + $0x100] sm:$0xff]
  %v642 = vld [vmem:[%s608 + $0x108] sm:$0xff]
  %v643 = vld [vmem:[%s608 + $0x110] sm:$0xff]
  %v644 = vld [vmem:[%s608 + $0x118] sm:$0xff]
  %v645 = vld [vmem:[%s608 + $0x120] sm:$0xff]
  %v646 = vld [vmem:[%s608 + $0x128] sm:$0xff]
  %v647 = vld [vmem:[%s608 + $0x130] sm:$0xff]
  %v648 = vld [vmem:[%s608 + $0x138] sm:$0xff]
  %v649 = vld [vmem:[%s608 + $0x140] sm:$0xff]
  %v650 = vld [vmem:[%s608 + $0x148] sm:$0xff]
  %v651 = vld [vmem:[%s608 + $0x150] sm:$0xff]
  %v652 = vld [vmem:[%s608 + $0x158] sm:$0xff]
  %v653 = vld [vmem:[%s608 + $0x160] sm:$0xff]
  %v654 = vld [vmem:[%s608 + $0x168] sm:$0xff]
  %v655 = vld [vmem:[%s608 + $0x170] sm:$0xff]
  %v656 = vld [vmem:[%s608 + $0x178] sm:$0xff]
  %v657 = vld [vmem:[%s608 + $0x180] sm:$0xff]
  %v658 = vld [vmem:[%s608 + $0x188] sm:$0xff]
  %v659 = vld [vmem:[%s608 + $0x190] sm:$0xff]
  %v660 = vld [vmem:[%s608 + $0x198] sm:$0xff]
  %v661 = vld [vmem:[%s608 + $0x1a0] sm:$0xff]
  %v662 = vld [vmem:[%s608 + $0x1a8] sm:$0xff]
  %663 = vmatprep.subr.mxu0 0.0
  %664 = vmatpush1.msra.mxu0 %v609
  %665 = vmatprep.subr.mxu0 0.0
  %666 = vmatpush1.msra.mxu0 %v610
  %667 = vmatprep.subr.mxu0 0.0
  %668 = vmatpush1.msra.mxu0 %v611
  %669 = vmatprep.subr.mxu0 0.0
  %670 = vmatpush1.msra.mxu0 %v612
  %671 = vmatprep.subr.mxu0 0.0
  %672 = vmatpush1.msra.mxu0 %v613
  %673 = vmatprep.subr.mxu0 0.0
  %674 = vmatpush1.msra.mxu0 %v614
  %675 = vmatprep.subr.mxu0 0.0
  %676 = vmatpush1.msra.mxu0 %v615
  %677 = vmatprep.subr.mxu0 0.0
  %678 = vmatpush1.msra.mxu0 %v616
  %679 = vmatprep.subr.mxu0 0.0
  %680 = vmatpush1.msra.mxu0 %v617
  %681 = vmatprep.subr.mxu0 0.0
  %682 = vmatpush1.msra.mxu0 %v618
  %683 = vmatprep.subr.mxu0 0.0
  %684 = vmatpush1.msra.mxu0 %v619
  %685 = vmatprep.subr.mxu0 0.0
  %686 = vmatpush1.msra.mxu0 %v620
  %687 = vmatprep.subr.mxu0 0.0
  %688 = vmatpush1.msra.mxu0 %v621
  %689 = vmatprep.subr.mxu0 0.0
  %690 = vmatpush1.msra.mxu0 %v622
  %691 = vmatprep.subr.mxu0 0.0
  %692 = vmatpush1.msra.mxu0 %v623
  %693 = vmatprep.subr.mxu0 0.0
  %694 = vmatpush1.msra.mxu0 %v624
  %695 = vmatprep.subr.mxu0 0.0
  %696 = vmatpush1.msra.mxu0 %v625
  %697 = vmatprep.subr.mxu0 0.0
  %698 = vmatpush1.msra.mxu0 %v626
  %699 = vmatprep.subr.mxu0 0.0
  %700 = vmatpush1.msra.mxu0 %v627
  %701 = vmatprep.subr.mxu0 0.0
  %702 = vmatpush1.msra.mxu0 %v628
  %703 = vmatprep.subr.mxu0 0.0
  %704 = vmatpush1.msra.mxu0 %v629
  %705 = vmatprep.subr.mxu0 0.0
  %706 = vmatpush1.msra.mxu0 %v630
  %707 = vmatprep.subr.mxu0 0.0
  %708 = vmatpush1.msra.mxu0 %v631
  %709 = vmatprep.subr.mxu0 0.0
  %710 = vmatpush1.msra.mxu0 %v632
  %711 = vmatprep.subr.mxu0 0.0
  %712 = vmatpush1.msra.mxu0 %v633
  %713 = vmatprep.subr.mxu0 0.0
  %714 = vmatpush1.msra.mxu0 %v634
  %715 = vmatprep.subr.mxu0 0.0
  %716 = vmatpush1.msra.mxu0 %v635
  %717 = vmatprep.subr.mxu0 0.0
  %718 = vmatpush1.msra.mxu0 %v636
  %719 = vmatprep.subr.mxu0 0.0
  %720 = vmatpush1.msra.mxu0 %v637
  %721 = vmatprep.subr.mxu0 0.0
  %722 = vmatpush1.msra.mxu0 %v638
  %723 = vmatprep.subr.mxu0 0.0
  %724 = vmatpush1.msra.mxu0 %v639
  %725 = vmatprep.subr.mxu0 0.0
  %726 = vmatpush1.msra.mxu0 %v640
  %727 = vmatprep.mubr.f32.mxu0 %v15
  %728 = vmatmul.mubr.f32.gmra.mrb[0].mxu0 %v14
  %v729 = vpop.f32.mrb[0].mxu0
  %v730 = vadd.f32 0.0, %v729
  %v731 = vpop.f32.mrb[0].mxu0
  %732 = vdwg.mxu0
  %733 = vmatprep.subr.mxu0 0.0
  %734 = vmatpush1.msra.mxu0 %v641
  %735 = vmatprep.subr.mxu0 0.0
  %736 = vmatpush1.msra.mxu0 %v642
  %737 = vmatprep.subr.mxu0 0.0
  %738 = vmatpush1.msra.mxu0 %v643
  %739 = vmatprep.subr.mxu0 0.0
  %740 = vmatpush1.msra.mxu0 %v644
  %741 = vmatprep.subr.mxu0 0.0
  %742 = vmatpush1.msra.mxu0 %v645
  %743 = vmatprep.subr.mxu0 0.0
  %744 = vmatpush1.msra.mxu0 %v646
  %745 = vmatprep.subr.mxu0 0.0
  %746 = vmatpush1.msra.mxu0 %v647
  %747 = vmatprep.subr.mxu0 0.0
  %748 = vmatpush1.msra.mxu0 %v648
  %749 = vmatprep.subr.mxu0 0.0
  %750 = vmatpush1.msra.mxu0 %v649
  %751 = vmatprep.subr.mxu0 0.0
  %752 = vmatpush1.msra.mxu0 %v650
  %753 = vmatprep.subr.mxu0 0.0
  %754 = vmatpush1.msra.mxu0 %v651
  %755 = vmatprep.subr.mxu0 0.0
  %756 = vmatpush1.msra.mxu0 %v652
  %757 = vmatprep.subr.mxu0 0.0
  %758 = vmatpush1.msra.mxu0 %v653
  %759 = vmatprep.subr.mxu0 0.0
  %760 = vmatpush1.msra.mxu0 %v654
  %761 = vmatprep.subr.mxu0 0.0
  %762 = vmatpush1.msra.mxu0 %v655
  %763 = vmatprep.subr.mxu0 0.0
  %764 = vmatpush1.msra.mxu0 %v656
  %765 = vmatprep.subr.mxu0 0.0
  %766 = vmatpush1.msra.mxu0 %v657
  %767 = vmatprep.subr.mxu0 0.0
  %768 = vmatpush1.msra.mxu0 %v658
  %769 = vmatprep.subr.mxu0 0.0
  %770 = vmatpush1.msra.mxu0 %v659
  %771 = vmatprep.subr.mxu0 0.0
  %772 = vmatpush1.msra.mxu0 %v660
  %773 = vmatprep.subr.mxu0 0.0
  %774 = vmatpush1.msra.mxu0 %v661
  %775 = vmatprep.subr.mxu0 0.0
  %776 = vmatpush1.msra.mxu0 %v662
  %777 = vmatprep.subr.mxu0 0.0
  %778 = vmatpush1.msra.mxu0 0.0
  %779 = vmatprep.subr.mxu0 0.0
  %780 = vmatpush1.msra.mxu0 0.0
  %781 = vmatprep.subr.mxu0 0.0
  %782 = vmatpush1.msra.mxu0 0.0
  %783 = vmatprep.subr.mxu0 0.0
  %784 = vmatpush1.msra.mxu0 0.0
  %785 = vmatprep.subr.mxu0 0.0
  %786 = vmatpush1.msra.mxu0 0.0
  %787 = vmatprep.subr.mxu0 0.0
  %788 = vmatpush1.msra.mxu0 0.0
  %789 = vmatprep.subr.mxu0 0.0
  %790 = vmatpush1.msra.mxu0 0.0
  %791 = vmatprep.subr.mxu0 0.0
  %792 = vmatpush1.msra.mxu0 0.0
  %793 = vmatprep.subr.mxu0 0.0
  %794 = vmatpush1.msra.mxu0 0.0
  %795 = vmatprep.subr.mxu0 0.0
  %796 = vmatpush1.msra.mxu0 0.0
  %797 = vmatprep.mubr.f32.mxu0 %v74
  %798 = vmatmul.mubr.f32.gmra.mrb[0].mxu0 %v16
  %v799 = vpop.f32.mrb[0].mxu0
  %v800 = vadd.f32 %v730, %v799
  %v801 = vpop.f32.mrb[0].mxu0
  %802 = vdwg.mxu0
  %v803 = vmax.f32 %v607, %v800
  %s804 = scalar_lea.vmem %s0, 1728
  %v805 = vld [vmem:[%s804] sm:$0xff]
  %v806 = vld [vmem:[%s804 + $0x8] sm:$0xff]
  %v807 = vld [vmem:[%s804 + $0x10] sm:$0xff]
  %v808 = vld [vmem:[%s804 + $0x18] sm:$0xff]
  %v809 = vld [vmem:[%s804 + $0x20] sm:$0xff]
  %v810 = vld [vmem:[%s804 + $0x28] sm:$0xff]
  %v811 = vld [vmem:[%s804 + $0x30] sm:$0xff]
  %v812 = vld [vmem:[%s804 + $0x38] sm:$0xff]
  %v813 = vld [vmem:[%s804 + $0x40] sm:$0xff]
  %v814 = vld [vmem:[%s804 + $0x48] sm:$0xff]
  %v815 = vld [vmem:[%s804 + $0x50] sm:$0xff]
  %v816 = vld [vmem:[%s804 + $0x58] sm:$0xff]
  %v817 = vld [vmem:[%s804 + $0x60] sm:$0xff]
  %v818 = vld [vmem:[%s804 + $0x68] sm:$0xff]
  %v819 = vld [vmem:[%s804 + $0x70] sm:$0xff]
  %v820 = vld [vmem:[%s804 + $0x78] sm:$0xff]
  %v821 = vld [vmem:[%s804 + $0x80] sm:$0xff]
  %v822 = vld [vmem:[%s804 + $0x88] sm:$0xff]
  %v823 = vld [vmem:[%s804 + $0x90] sm:$0xff]
  %v824 = vld [vmem:[%s804 + $0x98] sm:$0xff]
  %v825 = vld [vmem:[%s804 + $0xa0] sm:$0xff]
  %v826 = vld [vmem:[%s804 + $0xa8] sm:$0xff]
  %v827 = vld [vmem:[%s804 + $0xb0] sm:$0xff]
  %v828 = vld [vmem:[%s804 + $0xb8] sm:$0xff]
  %v829 = vld [vmem:[%s804 + $0xc0] sm:$0xff]
  %v830 = vld [vmem:[%s804 + $0xc8] sm:$0xff]
  %v831 = vld [vmem:[%s804 + $0xd0] sm:$0xff]
  %v832 = vld [vmem:[%s804 + $0xd8] sm:$0xff]
  %v833 = vld [vmem:[%s804 + $0xe0] sm:$0xff]
  %v834 = vld [vmem:[%s804 + $0xe8] sm:$0xff]
  %v835 = vld [vmem:[%s804 + $0xf0] sm:$0xff]
  %v836 = vld [vmem:[%s804 + $0xf8] sm:$0xff]
  %v837 = vld [vmem:[%s804 + $0x100] sm:$0xff]
  %v838 = vld [vmem:[%s804 + $0x108] sm:$0xff]
  %v839 = vld [vmem:[%s804 + $0x110] sm:$0xff]
  %v840 = vld [vmem:[%s804 + $0x118] sm:$0xff]
  %v841 = vld [vmem:[%s804 + $0x120] sm:$0xff]
  %v842 = vld [vmem:[%s804 + $0x128] sm:$0xff]
  %v843 = vld [vmem:[%s804 + $0x130] sm:$0xff]
  %v844 = vld [vmem:[%s804 + $0x138] sm:$0xff]
  %v845 = vld [vmem:[%s804 + $0x140] sm:$0xff]
  %v846 = vld [vmem:[%s804 + $0x148] sm:$0xff]
  %v847 = vld [vmem:[%s804 + $0x150] sm:$0xff]
  %v848 = vld [vmem:[%s804 + $0x158] sm:$0xff]
  %v849 = vld [vmem:[%s804 + $0x160] sm:$0xff]
  %v850 = vld [vmem:[%s804 + $0x168] sm:$0xff]
  %v851 = vld [vmem:[%s804 + $0x170] sm:$0xff]
  %v852 = vld [vmem:[%s804 + $0x178] sm:$0xff]
  %v853 = vld [vmem:[%s804 + $0x180] sm:$0xff]
  %v854 = vld [vmem:[%s804 + $0x188] sm:$0xff]
  %v855 = vld [vmem:[%s804 + $0x190] sm:$0xff]
  %v856 = vld [vmem:[%s804 + $0x198] sm:$0xff]
  %v857 = vld [vmem:[%s804 + $0x1a0] sm:$0xff]
  %v858 = vld [vmem:[%s804 + $0x1a8] sm:$0xff]
  %859 = vmatprep.subr.mxu0 0.0
  %860 = vmatpush1.msra.mxu0 %v805
  %861 = vmatprep.subr.mxu0 0.0
  %862 = vmatpush1.msra.mxu0 %v806
  %863 = vmatprep.subr.mxu0 0.0
  %864 = vmatpush1.msra.mxu0 %v807
  %865 = vmatprep.subr.mxu0 0.0
  %866 = vmatpush1.msra.mxu0 %v808
  %867 = vmatprep.subr.mxu0 0.0
  %868 = vmatpush1.msra.mxu0 %v809
  %869 = vmatprep.subr.mxu0 0.0
  %870 = vmatpush1.msra.mxu0 %v810
  %871 = vmatprep.subr.mxu0 0.0
  %872 = vmatpush1.msra.mxu0 %v811
  %873 = vmatprep.subr.mxu0 0.0
  %874 = vmatpush1.msra.mxu0 %v812
  %875 = vmatprep.subr.mxu0 0.0
  %876 = vmatpush1.msra.mxu0 %v813
  %877 = vmatprep.subr.mxu0 0.0
  %878 = vmatpush1.msra.mxu0 %v814
  %879 = vmatprep.subr.mxu0 0.0
  %880 = vmatpush1.msra.mxu0 %v815
  %881 = vmatprep.subr.mxu0 0.0
  %882 = vmatpush1.msra.mxu0 %v816
  %883 = vmatprep.subr.mxu0 0.0
  %884 = vmatpush1.msra.mxu0 %v817
  %885 = vmatprep.subr.mxu0 0.0
  %886 = vmatpush1.msra.mxu0 %v818
  %887 = vmatprep.subr.mxu0 0.0
  %888 = vmatpush1.msra.mxu0 %v819
  %889 = vmatprep.subr.mxu0 0.0
  %890 = vmatpush1.msra.mxu0 %v820
  %891 = vmatprep.subr.mxu0 0.0
  %892 = vmatpush1.msra.mxu0 %v821
  %893 = vmatprep.subr.mxu0 0.0
  %894 = vmatpush1.msra.mxu0 %v822
  %895 = vmatprep.subr.mxu0 0.0
  %896 = vmatpush1.msra.mxu0 %v823
  %897 = vmatprep.subr.mxu0 0.0
  %898 = vmatpush1.msra.mxu0 %v824
  %899 = vmatprep.subr.mxu0 0.0
  %900 = vmatpush1.msra.mxu0 %v825
  %901 = vmatprep.subr.mxu0 0.0
  %902 = vmatpush1.msra.mxu0 %v826
  %903 = vmatprep.subr.mxu0 0.0
  %904 = vmatpush1.msra.mxu0 %v827
  %905 = vmatprep.subr.mxu0 0.0
  %906 = vmatpush1.msra.mxu0 %v828
  %907 = vmatprep.subr.mxu0 0.0
  %908 = vmatpush1.msra.mxu0 %v829
  %909 = vmatprep.subr.mxu0 0.0
  %910 = vmatpush1.msra.mxu0 %v830
  %911 = vmatprep.subr.mxu0 0.0
  %912 = vmatpush1.msra.mxu0 %v831
  %913 = vmatprep.subr.mxu0 0.0
  %914 = vmatpush1.msra.mxu0 %v832
  %915 = vmatprep.subr.mxu0 0.0
  %916 = vmatpush1.msra.mxu0 %v833
  %917 = vmatprep.subr.mxu0 0.0
  %918 = vmatpush1.msra.mxu0 %v834
  %919 = vmatprep.subr.mxu0 0.0
  %920 = vmatpush1.msra.mxu0 %v835
  %921 = vmatprep.subr.mxu0 0.0
  %922 = vmatpush1.msra.mxu0 %v836
  %923 = vmatprep.mubr.f32.mxu0 %v15
  %924 = vmatmul.mubr.f32.gmra.mrb[0].mxu0 %v14
  %v925 = vpop.f32.mrb[0].mxu0
  %v926 = vadd.f32 0.0, %v925
  %v927 = vpop.f32.mrb[0].mxu0
  %928 = vdwg.mxu0
  %929 = vmatprep.subr.mxu0 0.0
  %930 = vmatpush1.msra.mxu0 %v837
  %931 = vmatprep.subr.mxu0 0.0
  %932 = vmatpush1.msra.mxu0 %v838
  %933 = vmatprep.subr.mxu0 0.0
  %934 = vmatpush1.msra.mxu0 %v839
  %935 = vmatprep.subr.mxu0 0.0
  %936 = vmatpush1.msra.mxu0 %v840
  %937 = vmatprep.subr.mxu0 0.0
  %938 = vmatpush1.msra.mxu0 %v841
  %939 = vmatprep.subr.mxu0 0.0
  %940 = vmatpush1.msra.mxu0 %v842
  %941 = vmatprep.subr.mxu0 0.0
  %942 = vmatpush1.msra.mxu0 %v843
  %943 = vmatprep.subr.mxu0 0.0
  %944 = vmatpush1.msra.mxu0 %v844
  %945 = vmatprep.subr.mxu0 0.0
  %946 = vmatpush1.msra.mxu0 %v845
  %947 = vmatprep.subr.mxu0 0.0
  %948 = vmatpush1.msra.mxu0 %v846
  %949 = vmatprep.subr.mxu0 0.0
  %950 = vmatpush1.msra.mxu0 %v847
  %951 = vmatprep.subr.mxu0 0.0
  %952 = vmatpush1.msra.mxu0 %v848
  %953 = vmatprep.subr.mxu0 0.0
  %954 = vmatpush1.msra.mxu0 %v849
  %955 = vmatprep.subr.mxu0 0.0
  %956 = vmatpush1.msra.mxu0 %v850
  %957 = vmatprep.subr.mxu0 0.0
  %958 = vmatpush1.msra.mxu0 %v851
  %959 = vmatprep.subr.mxu0 0.0
  %960 = vmatpush1.msra.mxu0 %v852
  %961 = vmatprep.subr.mxu0 0.0
  %962 = vmatpush1.msra.mxu0 %v853
  %963 = vmatprep.subr.mxu0 0.0
  %964 = vmatpush1.msra.mxu0 %v854
  %965 = vmatprep.subr.mxu0 0.0
  %966 = vmatpush1.msra.mxu0 %v855
  %967 = vmatprep.subr.mxu0 0.0
  %968 = vmatpush1.msra.mxu0 %v856
  %969 = vmatprep.subr.mxu0 0.0
  %970 = vmatpush1.msra.mxu0 %v857
  %971 = vmatprep.subr.mxu0 0.0
  %972 = vmatpush1.msra.mxu0 %v858
  %973 = vmatprep.subr.mxu0 0.0
  %974 = vmatpush1.msra.mxu0 0.0
  %975 = vmatprep.subr.mxu0 0.0
  %976 = vmatpush1.msra.mxu0 0.0
  %977 = vmatprep.subr.mxu0 0.0
  %978 = vmatpush1.msra.mxu0 0.0
  %979 = vmatprep.subr.mxu0 0.0
  %980 = vmatpush1.msra.mxu0 0.0
  %981 = vmatprep.subr.mxu0 0.0
  %982 = vmatpush1.msra.mxu0 0.0
  %983 = vmatprep.subr.mxu0 0.0
  %984 = vmatpush1.msra.mxu0 0.0
  %985 = vmatprep.subr.mxu0 0.0
  %986 = vmatpush1.msra.mxu0 0.0
  %987 = vmatprep.subr.mxu0 0.0
  %988 = vmatpush1.msra.mxu0 0.0
  %989 = vmatprep.subr.mxu0 0.0
  %990 = vmatpush1.msra.mxu0 0.0
  %991 = vmatprep.subr.mxu0 0.0
  %992 = vmatpush1.msra.mxu0 0.0
  %993 = vmatprep.mubr.f32.mxu0 %v74
  %994 = vmatmul.mubr.f32.gmra.mrb[0].mxu0 %v16
  %v995 = vpop.f32.mrb[0].mxu0
  %v996 = vadd.f32 %v926, %v995
  %v997 = vpop.f32.mrb[0].mxu0
  %998 = vdwg.mxu0
  %v999 = vmax.f32 %v803, %v996
  %s1000 = scalar_lea.vmem %s0, 2160
  %v1001 = vld [vmem:[%s1000] sm:$0xff]
  %v1002 = vld [vmem:[%s1000 + $0x8] sm:$0xff]
  %v1003 = vld [vmem:[%s1000 + $0x10] sm:$0xff]
  %v1004 = vld [vmem:[%s1000 + $0x18] sm:$0xff]
  %v1005 = vld [vmem:[%s1000 + $0x20] sm:$0xff]
  %v1006 = vld [vmem:[%s1000 + $0x28] sm:$0xff]
  %v1007 = vld [vmem:[%s1000 + $0x30] sm:$0xff]
  %v1008 = vld [vmem:[%s1000 + $0x38] sm:$0xff]
  %v1009 = vld [vmem:[%s1000 + $0x40] sm:$0xff]
  %v1010 = vld [vmem:[%s1000 + $0x48] sm:$0xff]
  %v1011 = vld [vmem:[%s1000 + $0x50] sm:$0xff]
  %v1012 = vld [vmem:[%s1000 + $0x58] sm:$0xff]
  %v1013 = vld [vmem:[%s1000 + $0x60] sm:$0xff]
  %v1014 = vld [vmem:[%s1000 + $0x68] sm:$0xff]
  %v1015 = vld [vmem:[%s1000 + $0x70] sm:$0xff]
  %v1016 = vld [vmem:[%s1000 + $0x78] sm:$0xff]
  %v1017 = vld [vmem:[%s1000 + $0x80] sm:$0xff]
  %v1018 = vld [vmem:[%s1000 + $0x88] sm:$0xff]
  %v1019 = vld [vmem:[%s1000 + $0x90] sm:$0xff]
  %v1020 = vld [vmem:[%s1000 + $0x98] sm:$0xff]
  %v1021 = vld [vmem:[%s1000 + $0xa0] sm:$0xff]
  %v1022 = vld [vmem:[%s1000 + $0xa8] sm:$0xff]
  %v1023 = vld [vmem:[%s1000 + $0xb0] sm:$0xff]
  %v1024 = vld [vmem:[%s1000 + $0xb8] sm:$0xff]
  %v1025 = vld [vmem:[%s1000 + $0xc0] sm:$0xff]
  %v1026 = vld [vmem:[%s1000 + $0xc8] sm:$0xff]
  %v1027 = vld [vmem:[%s1000 + $0xd0] sm:$0xff]
  %v1028 = vld [vmem:[%s1000 + $0xd8] sm:$0xff]
  %v1029 = vld [vmem:[%s1000 + $0xe0] sm:$0xff]
  %v1030 = vld [vmem:[%s1000 + $0xe8] sm:$0xff]
  %v1031 = vld [vmem:[%s1000 + $0xf0] sm:$0xff]
  %v1032 = vld [vmem:[%s1000 + $0xf8] sm:$0xff]
  %v1033 = vld [vmem:[%s1000 + $0x100] sm:$0xff]
  %v1034 = vld [vmem:[%s1000 + $0x108] sm:$0xff]
  %v1035 = vld [vmem:[%s1000 + $0x110] sm:$0xff]
  %v1036 = vld [vmem:[%s1000 + $0x118] sm:$0xff]
  %v1037 = vld [vmem:[%s1000 + $0x120] sm:$0xff]
  %v1038 = vld [vmem:[%s1000 + $0x128] sm:$0xff]
  %v1039 = vld [vmem:[%s1000 + $0x130] sm:$0xff]
  %v1040 = vld [vmem:[%s1000 + $0x138] sm:$0xff]
  %v1041 = vld [vmem:[%s1000 + $0x140] sm:$0xff]
  %v1042 = vld [vmem:[%s1000 + $0x148] sm:$0xff]
  %v1043 = vld [vmem:[%s1000 + $0x150] sm:$0xff]
  %v1044 = vld [vmem:[%s1000 + $0x158] sm:$0xff]
  %v1045 = vld [vmem:[%s1000 + $0x160] sm:$0xff]
  %v1046 = vld [vmem:[%s1000 + $0x168] sm:$0xff]
  %v1047 = vld [vmem:[%s1000 + $0x170] sm:$0xff]
  %v1048 = vld [vmem:[%s1000 + $0x178] sm:$0xff]
  %v1049 = vld [vmem:[%s1000 + $0x180] sm:$0xff]
  %v1050 = vld [vmem:[%s1000 + $0x188] sm:$0xff]
  %v1051 = vld [vmem:[%s1000 + $0x190] sm:$0xff]
  %v1052 = vld [vmem:[%s1000 + $0x198] sm:$0xff]
  %v1053 = vld [vmem:[%s1000 + $0x1a0] sm:$0xff]
  %v1054 = vld [vmem:[%s1000 + $0x1a8] sm:$0xff]
  %1055 = vmatprep.subr.mxu0 0.0
  %1056 = vmatpush1.msra.mxu0 %v1001
  %1057 = vmatprep.subr.mxu0 0.0
  %1058 = vmatpush1.msra.mxu0 %v1002
  %1059 = vmatprep.subr.mxu0 0.0
  %1060 = vmatpush1.msra.mxu0 %v1003
  %1061 = vmatprep.subr.mxu0 0.0
  %1062 = vmatpush1.msra.mxu0 %v1004
  %1063 = vmatprep.subr.mxu0 0.0
  %1064 = vmatpush1.msra.mxu0 %v1005
  %1065 = vmatprep.subr.mxu0 0.0
  %1066 = vmatpush1.msra.mxu0 %v1006
  %1067 = vmatprep.subr.mxu0 0.0
  %1068 = vmatpush1.msra.mxu0 %v1007
  %1069 = vmatprep.subr.mxu0 0.0
  %1070 = vmatpush1.msra.mxu0 %v1008
  %1071 = vmatprep.subr.mxu0 0.0
  %1072 = vmatpush1.msra.mxu0 %v1009
  %1073 = vmatprep.subr.mxu0 0.0
  %1074 = vmatpush1.msra.mxu0 %v1010
  %1075 = vmatprep.subr.mxu0 0.0
  %1076 = vmatpush1.msra.mxu0 %v1011
  %1077 = vmatprep.subr.mxu0 0.0
  %1078 = vmatpush1.msra.mxu0 %v1012
  %1079 = vmatprep.subr.mxu0 0.0
  %1080 = vmatpush1.msra.mxu0 %v1013
  %1081 = vmatprep.subr.mxu0 0.0
  %1082 = vmatpush1.msra.mxu0 %v1014
  %1083 = vmatprep.subr.mxu0 0.0
  %1084 = vmatpush1.msra.mxu0 %v1015
  %1085 = vmatprep.subr.mxu0 0.0
  %1086 = vmatpush1.msra.mxu0 %v1016
  %1087 = vmatprep.subr.mxu0 0.0
  %1088 = vmatpush1.msra.mxu0 %v1017
  %1089 = vmatprep.subr.mxu0 0.0
  %1090 = vmatpush1.msra.mxu0 %v1018
  %1091 = vmatprep.subr.mxu0 0.0
  %1092 = vmatpush1.msra.mxu0 %v1019
  %1093 = vmatprep.subr.mxu0 0.0
  %1094 = vmatpush1.msra.mxu0 %v1020
  %1095 = vmatprep.subr.mxu0 0.0
  %1096 = vmatpush1.msra.mxu0 %v1021
  %1097 = vmatprep.subr.mxu0 0.0
  %1098 = vmatpush1.msra.mxu0 %v1022
  %1099 = vmatprep.subr.mxu0 0.0
  %1100 = vmatpush1.msra.mxu0 %v1023
  %1101 = vmatprep.subr.mxu0 0.0
  %1102 = vmatpush1.msra.mxu0 %v1024
  %1103 = vmatprep.subr.mxu0 0.0
  %1104 = vmatpush1.msra.mxu0 %v1025
  %1105 = vmatprep.subr.mxu0 0.0
  %1106 = vmatpush1.msra.mxu0 %v1026
  %1107 = vmatprep.subr.mxu0 0.0
  %1108 = vmatpush1.msra.mxu0 %v1027
  %1109 = vmatprep.subr.mxu0 0.0
  %1110 = vmatpush1.msra.mxu0 %v1028
  %1111 = vmatprep.subr.mxu0 0.0
  %1112 = vmatpush1.msra.mxu0 %v1029
  %1113 = vmatprep.subr.mxu0 0.0
  %1114 = vmatpush1.msra.mxu0 %v1030
  %1115 = vmatprep.subr.mxu0 0.0
  %1116 = vmatpush1.msra.mxu0 %v1031
  %1117 = vmatprep.subr.mxu0 0.0
  %1118 = vmatpush1.msra.mxu0 %v1032
  %1119 = vmatprep.mubr.f32.mxu0 %v15
  %1120 = vmatmul.mubr.f32.gmra.mrb[0].mxu0 %v14
  %v1121 = vpop.f32.mrb[0].mxu0
  %v1122 = vadd.f32 0.0, %v1121
  %v1123 = vpop.f32.mrb[0].mxu0
  %1124 = vdwg.mxu0
  %1125 = vmatprep.subr.mxu0 0.0
  %1126 = vmatpush1.msra.mxu0 %v1033
  %1127 = vmatprep.subr.mxu0 0.0
  %1128 = vmatpush1.msra.mxu0 %v1034
  %1129 = vmatprep.subr.mxu0 0.0
  %1130 = vmatpush1.msra.mxu0 %v1035
  %1131 = vmatprep.subr.mxu0 0.0
  %1132 = vmatpush1.msra.mxu0 %v1036
  %1133 = vmatprep.subr.mxu0 0.0
  %1134 = vmatpush1.msra.mxu0 %v1037
  %1135 = vmatprep.subr.mxu0 0.0
  %1136 = vmatpush1.msra.mxu0 %v1038
  %1137 = vmatprep.subr.mxu0 0.0
  %1138 = vmatpush1.msra.mxu0 %v1039
  %1139 = vmatprep.subr.mxu0 0.0
  %1140 = vmatpush1.msra.mxu0 %v1040
  %1141 = vmatprep.subr.mxu0 0.0
  %1142 = vmatpush1.msra.mxu0 %v1041
  %1143 = vmatprep.subr.mxu0 0.0
  %1144 = vmatpush1.msra.mxu0 %v1042
  %1145 = vmatprep.subr.mxu0 0.0
  %1146 = vmatpush1.msra.mxu0 %v1043
  %1147 = vmatprep.subr.mxu0 0.0
  %1148 = vmatpush1.msra.mxu0 %v1044
  %1149 = vmatprep.subr.mxu0 0.0
  %1150 = vmatpush1.msra.mxu0 %v1045
  %1151 = vmatprep.subr.mxu0 0.0
  %1152 = vmatpush1.msra.mxu0 %v1046
  %1153 = vmatprep.subr.mxu0 0.0
  %1154 = vmatpush1.msra.mxu0 %v1047
  %1155 = vmatprep.subr.mxu0 0.0
  %1156 = vmatpush1.msra.mxu0 %v1048
  %1157 = vmatprep.subr.mxu0 0.0
  %1158 = vmatpush1.msra.mxu0 %v1049
  %1159 = vmatprep.subr.mxu0 0.0
  %1160 = vmatpush1.msra.mxu0 %v1050
  %1161 = vmatprep.subr.mxu0 0.0
  %1162 = vmatpush1.msra.mxu0 %v1051
  %1163 = vmatprep.subr.mxu0 0.0
  %1164 = vmatpush1.msra.mxu0 %v1052
  %1165 = vmatprep.subr.mxu0 0.0
  %1166 = vmatpush1.msra.mxu0 %v1053
  %1167 = vmatprep.subr.mxu0 0.0
  %1168 = vmatpush1.msra.mxu0 %v1054
  %1169 = vmatprep.subr.mxu0 0.0
  %1170 = vmatpush1.msra.mxu0 0.0
  %1171 = vmatprep.subr.mxu0 0.0
  %1172 = vmatpush1.msra.mxu0 0.0
  %1173 = vmatprep.subr.mxu0 0.0
  %1174 = vmatpush1.msra.mxu0 0.0
  %1175 = vmatprep.subr.mxu0 0.0
  %1176 = vmatpush1.msra.mxu0 0.0
  %1177 = vmatprep.subr.mxu0 0.0
  %1178 = vmatpush1.msra.mxu0 0.0
  %1179 = vmatprep.subr.mxu0 0.0
  %1180 = vmatpush1.msra.mxu0 0.0
  %1181 = vmatprep.subr.mxu0 0.0
  %1182 = vmatpush1.msra.mxu0 0.0
  %1183 = vmatprep.subr.mxu0 0.0
  %1184 = vmatpush1.msra.mxu0 0.0
  %1185 = vmatprep.subr.mxu0 0.0
  %1186 = vmatpush1.msra.mxu0 0.0
  %1187 = vmatprep.subr.mxu0 0.0
  %1188 = vmatpush1.msra.mxu0 0.0
  %1189 = vmatprep.mubr.f32.mxu0 %v74
  %1190 = vmatmul.mubr.f32.gmra.mrb[0].mxu0 %v16
  %v1191 = vpop.f32.mrb[0].mxu0
  %v1192 = vadd.f32 %v1122, %v1191
  %v1193 = vpop.f32.mrb[0].mxu0
  %1194 = vdwg.mxu0
  %v1195 = vmax.f32 %v999, %v1192
  %s1196 = scalar_lea.vmem %s0, 2592
  %v1197 = vld [vmem:[%s1196] sm:$0xff]
  %v1198 = vld [vmem:[%s1196 + $0x8] sm:$0xff]
  %v1199 = vld [vmem:[%s1196 + $0x10] sm:$0xff]
  %v1200 = vld [vmem:[%s1196 + $0x18] sm:$0xff]
  %v1201 = vld [vmem:[%s1196 + $0x20] sm:$0xff]
  %v1202 = vld [vmem:[%s1196 + $0x28] sm:$0xff]
  %v1203 = vld [vmem:[%s1196 + $0x30] sm:$0xff]
  %v1204 = vld [vmem:[%s1196 + $0x38] sm:$0xff]
  %v1205 = vld [vmem:[%s1196 + $0x40] sm:$0xff]
  %v1206 = vld [vmem:[%s1196 + $0x48] sm:$0xff]
  %v1207 = vld [vmem:[%s1196 + $0x50] sm:$0xff]
  %v1208 = vld [vmem:[%s1196 + $0x58] sm:$0xff]
  %v1209 = vld [vmem:[%s1196 + $0x60] sm:$0xff]
  %v1210 = vld [vmem:[%s1196 + $0x68] sm:$0xff]
  %v1211 = vld [vmem:[%s1196 + $0x70] sm:$0xff]
  %v1212 = vld [vmem:[%s1196 + $0x78] sm:$0xff]
  %v1213 = vld [vmem:[%s1196 + $0x80] sm:$0xff]
  %v1214 = vld [vmem:[%s1196 + $0x88] sm:$0xff]
  %v1215 = vld [vmem:[%s1196 + $0x90] sm:$0xff]
  %v1216 = vld [vmem:[%s1196 + $0x98] sm:$0xff]
  %v1217 = vld [vmem:[%s1196 + $0xa0] sm:$0xff]
  %v1218 = vld [vmem:[%s1196 + $0xa8] sm:$0xff]
  %v1219 = vld [vmem:[%s1196 + $0xb0] sm:$0xff]
  %v1220 = vld [vmem:[%s1196 + $0xb8] sm:$0xff]
  %v1221 = vld [vmem:[%s1196 + $0xc0] sm:$0xff]
  %v1222 = vld [vmem:[%s1196 + $0xc8] sm:$0xff]
  %v1223 = vld [vmem:[%s1196 + $0xd0] sm:$0xff]
  %v1224 = vld [vmem:[%s1196 + $0xd8] sm:$0xff]
  %v1225 = vld [vmem:[%s1196 + $0xe0] sm:$0xff]
  %v1226 = vld [vmem:[%s1196 + $0xe8] sm:$0xff]
  %v1227 = vld [vmem:[%s1196 + $0xf0] sm:$0xff]
  %v1228 = vld [vmem:[%s1196 + $0xf8] sm:$0xff]
  %v1229 = vld [vmem:[%s1196 + $0x100] sm:$0xff]
  %v1230 = vld [vmem:[%s1196 + $0x108] sm:$0xff]
  %v1231 = vld [vmem:[%s1196 + $0x110] sm:$0xff]
  %v1232 = vld [vmem:[%s1196 + $0x118] sm:$0xff]
  %v1233 = vld [vmem:[%s1196 + $0x120] sm:$0xff]
  %v1234 = vld [vmem:[%s1196 + $0x128] sm:$0xff]
  %v1235 = vld [vmem:[%s1196 + $0x130] sm:$0xff]
  %v1236 = vld [vmem:[%s1196 + $0x138] sm:$0xff]
  %v1237 = vld [vmem:[%s1196 + $0x140] sm:$0xff]
  %v1238 = vld [vmem:[%s1196 + $0x148] sm:$0xff]
  %v1239 = vld [vmem:[%s1196 + $0x150] sm:$0xff]
  %v1240 = vld [vmem:[%s1196 + $0x158] sm:$0xff]
  %v1241 = vld [vmem:[%s1196 + $0x160] sm:$0xff]
  %v1242 = vld [vmem:[%s1196 + $0x168] sm:$0xff]
  %v1243 = vld [vmem:[%s1196 + $0x170] sm:$0xff]
  %v1244 = vld [vmem:[%s1196 + $0x178] sm:$0xff]
  %v1245 = vld [vmem:[%s1196 + $0x180] sm:$0xff]
  %v1246 = vld [vmem:[%s1196 + $0x188] sm:$0xff]
  %v1247 = vld [vmem:[%s1196 + $0x190] sm:$0xff]
  %v1248 = vld [vmem:[%s1196 + $0x198] sm:$0xff]
  %v1249 = vld [vmem:[%s1196 + $0x1a0] sm:$0xff]
  %v1250 = vld [vmem:[%s1196 + $0x1a8] sm:$0xff]
  %1251 = vmatprep.subr.mxu0 0.0
  %1252 = vmatpush1.msra.mxu0 %v1197
  %1253 = vmatprep.subr.mxu0 0.0
  %1254 = vmatpush1.msra.mxu0 %v1198
  %1255 = vmatprep.subr.mxu0 0.0
  %1256 = vmatpush1.msra.mxu0 %v1199
  %1257 = vmatprep.subr.mxu0 0.0
  %1258 = vmatpush1.msra.mxu0 %v1200
  %1259 = vmatprep.subr.mxu0 0.0
  %1260 = vmatpush1.msra.mxu0 %v1201
  %1261 = vmatprep.subr.mxu0 0.0
  %1262 = vmatpush1.msra.mxu0 %v1202
  %1263 = vmatprep.subr.mxu0 0.0
  %1264 = vmatpush1.msra.mxu0 %v1203
  %1265 = vmatprep.subr.mxu0 0.0
  %1266 = vmatpush1.msra.mxu0 %v1204
  %1267 = vmatprep.subr.mxu0 0.0
  %1268 = vmatpush1.msra.mxu0 %v1205
  %1269 = vmatprep.subr.mxu0 0.0
  %1270 = vmatpush1.msra.mxu0 %v1206
  %1271 = vmatprep.subr.mxu0 0.0
  %1272 = vmatpush1.msra.mxu0 %v1207
  %1273 = vmatprep.subr.mxu0 0.0
  %1274 = vmatpush1.msra.mxu0 %v1208
  %1275 = vmatprep.subr.mxu0 0.0
  %1276 = vmatpush1.msra.mxu0 %v1209
  %1277 = vmatprep.subr.mxu0 0.0
  %1278 = vmatpush1.msra.mxu0 %v1210
  %1279 = vmatprep.subr.mxu0 0.0
  %1280 = vmatpush1.msra.mxu0 %v1211
  %1281 = vmatprep.subr.mxu0 0.0
  %1282 = vmatpush1.msra.mxu0 %v1212
  %1283 = vmatprep.subr.mxu0 0.0
  %1284 = vmatpush1.msra.mxu0 %v1213
  %1285 = vmatprep.subr.mxu0 0.0
  %1286 = vmatpush1.msra.mxu0 %v1214
  %1287 = vmatprep.subr.mxu0 0.0
  %1288 = vmatpush1.msra.mxu0 %v1215
  %1289 = vmatprep.subr.mxu0 0.0
  %1290 = vmatpush1.msra.mxu0 %v1216
  %1291 = vmatprep.subr.mxu0 0.0
  %1292 = vmatpush1.msra.mxu0 %v1217
  %1293 = vmatprep.subr.mxu0 0.0
  %1294 = vmatpush1.msra.mxu0 %v1218
  %1295 = vmatprep.subr.mxu0 0.0
  %1296 = vmatpush1.msra.mxu0 %v1219
  %1297 = vmatprep.subr.mxu0 0.0
  %1298 = vmatpush1.msra.mxu0 %v1220
  %1299 = vmatprep.subr.mxu0 0.0
  %1300 = vmatpush1.msra.mxu0 %v1221
  %1301 = vmatprep.subr.mxu0 0.0
  %1302 = vmatpush1.msra.mxu0 %v1222
  %1303 = vmatprep.subr.mxu0 0.0
  %1304 = vmatpush1.msra.mxu0 %v1223
  %1305 = vmatprep.subr.mxu0 0.0
  %1306 = vmatpush1.msra.mxu0 %v1224
  %1307 = vmatprep.subr.mxu0 0.0
  %1308 = vmatpush1.msra.mxu0 %v1225
  %1309 = vmatprep.subr.mxu0 0.0
  %1310 = vmatpush1.msra.mxu0 %v1226
  %1311 = vmatprep.subr.mxu0 0.0
  %1312 = vmatpush1.msra.mxu0 %v1227
  %1313 = vmatprep.subr.mxu0 0.0
  %1314 = vmatpush1.msra.mxu0 %v1228
  %1315 = vmatprep.mubr.f32.mxu0 %v15
  %1316 = vmatmul.mubr.f32.gmra.mrb[0].mxu0 %v14
  %v1317 = vpop.f32.mrb[0].mxu0
  %v1318 = vadd.f32 0.0, %v1317
  %v1319 = vpop.f32.mrb[0].mxu0
  %1320 = vdwg.mxu0
  %1321 = vmatprep.subr.mxu0 0.0
  %1322 = vmatpush1.msra.mxu0 %v1229
  %1323 = vmatprep.subr.mxu0 0.0
  %1324 = vmatpush1.msra.mxu0 %v1230
  %1325 = vmatprep.subr.mxu0 0.0
  %1326 = vmatpush1.msra.mxu0 %v1231
  %1327 = vmatprep.subr.mxu0 0.0
  %1328 = vmatpush1.msra.mxu0 %v1232
  %1329 = vmatprep.subr.mxu0 0.0
  %1330 = vmatpush1.msra.mxu0 %v1233
  %1331 = vmatprep.subr.mxu0 0.0
  %1332 = vmatpush1.msra.mxu0 %v1234
  %1333 = vmatprep.subr.mxu0 0.0
  %1334 = vmatpush1.msra.mxu0 %v1235
  %1335 = vmatprep.subr.mxu0 0.0
  %1336 = vmatpush1.msra.mxu0 %v1236
  %1337 = vmatprep.subr.mxu0 0.0
  %1338 = vmatpush1.msra.mxu0 %v1237
  %1339 = vmatprep.subr.mxu0 0.0
  %1340 = vmatpush1.msra.mxu0 %v1238
  %1341 = vmatprep.subr.mxu0 0.0
  %1342 = vmatpush1.msra.mxu0 %v1239
  %1343 = vmatprep.subr.mxu0 0.0
  %1344 = vmatpush1.msra.mxu0 %v1240
  %1345 = vmatprep.subr.mxu0 0.0
  %1346 = vmatpush1.msra.mxu0 %v1241
  %1347 = vmatprep.subr.mxu0 0.0
  %1348 = vmatpush1.msra.mxu0 %v1242
  %1349 = vmatprep.subr.mxu0 0.0
  %1350 = vmatpush1.msra.mxu0 %v1243
  %1351 = vmatprep.subr.mxu0 0.0
  %1352 = vmatpush1.msra.mxu0 %v1244
  %1353 = vmatprep.subr.mxu0 0.0
  %1354 = vmatpush1.msra.mxu0 %v1245
  %1355 = vmatprep.subr.mxu0 0.0
  %1356 = vmatpush1.msra.mxu0 %v1246
  %1357 = vmatprep.subr.mxu0 0.0
  %1358 = vmatpush1.msra.mxu0 %v1247
  %1359 = vmatprep.subr.mxu0 0.0
  %1360 = vmatpush1.msra.mxu0 %v1248
  %1361 = vmatprep.subr.mxu0 0.0
  %1362 = vmatpush1.msra.mxu0 %v1249
  %1363 = vmatprep.subr.mxu0 0.0
  %1364 = vmatpush1.msra.mxu0 %v1250
  %1365 = vmatprep.subr.mxu0 0.0
  %1366 = vmatpush1.msra.mxu0 0.0
  %1367 = vmatprep.subr.mxu0 0.0
  %1368 = vmatpush1.msra.mxu0 0.0
  %1369 = vmatprep.subr.mxu0 0.0
  %1370 = vmatpush1.msra.mxu0 0.0
  %1371 = vmatprep.subr.mxu0 0.0
  %1372 = vmatpush1.msra.mxu0 0.0
  %1373 = vmatprep.subr.mxu0 0.0
  %1374 = vmatpush1.msra.mxu0 0.0
  %1375 = vmatprep.subr.mxu0 0.0
  %1376 = vmatpush1.msra.mxu0 0.0
  %1377 = vmatprep.subr.mxu0 0.0
  %1378 = vmatpush1.msra.mxu0 0.0
  %1379 = vmatprep.subr.mxu0 0.0
  %1380 = vmatpush1.msra.mxu0 0.0
  %1381 = vmatprep.subr.mxu0 0.0
  %1382 = vmatpush1.msra.mxu0 0.0
  %1383 = vmatprep.subr.mxu0 0.0
  %1384 = vmatpush1.msra.mxu0 0.0
  %1385 = vmatprep.mubr.f32.mxu0 %v74
  %1386 = vmatmul.mubr.f32.gmra.mrb[0].mxu0 %v16
  %v1387 = vpop.f32.mrb[0].mxu0
  %v1388 = vadd.f32 %v1318, %v1387
  %v1389 = vpop.f32.mrb[0].mxu0
  %1390 = vdwg.mxu0
  %v1391 = vmax.f32 %v1195, %v1388
  %s1392 = scalar_lea.vmem %s0, 3024
  %v1393 = vld [vmem:[%s1392] sm:$0xff]
  %v1394 = vld [vmem:[%s1392 + $0x8] sm:$0xff]
  %v1395 = vld [vmem:[%s1392 + $0x10] sm:$0xff]
  %v1396 = vld [vmem:[%s1392 + $0x18] sm:$0xff]
  %v1397 = vld [vmem:[%s1392 + $0x20] sm:$0xff]
  %v1398 = vld [vmem:[%s1392 + $0x28] sm:$0xff]
  %v1399 = vld [vmem:[%s1392 + $0x30] sm:$0xff]
  %v1400 = vld [vmem:[%s1392 + $0x38] sm:$0xff]
  %v1401 = vld [vmem:[%s1392 + $0x40] sm:$0xff]
  %v1402 = vld [vmem:[%s1392 + $0x48] sm:$0xff]
  %v1403 = vld [vmem:[%s1392 + $0x50] sm:$0xff]
  %v1404 = vld [vmem:[%s1392 + $0x58] sm:$0xff]
  %v1405 = vld [vmem:[%s1392 + $0x60] sm:$0xff]
  %v1406 = vld [vmem:[%s1392 + $0x68] sm:$0xff]
  %v1407 = vld [vmem:[%s1392 + $0x70] sm:$0xff]
  %v1408 = vld [vmem:[%s1392 + $0x78] sm:$0xff]
  %v1409 = vld [vmem:[%s1392 + $0x80] sm:$0xff]
  %v1410 = vld [vmem:[%s1392 + $0x88] sm:$0xff]
  %v1411 = vld [vmem:[%s1392 + $0x90] sm:$0xff]
  %v1412 = vld [vmem:[%s1392 + $0x98] sm:$0xff]
  %v1413 = vld [vmem:[%s1392 + $0xa0] sm:$0xff]
  %v1414 = vld [vmem:[%s1392 + $0xa8] sm:$0xff]
  %v1415 = vld [vmem:[%s1392 + $0xb0] sm:$0xff]
  %v1416 = vld [vmem:[%s1392 + $0xb8] sm:$0xff]
  %v1417 = vld [vmem:[%s1392 + $0xc0] sm:$0xff]
  %v1418 = vld [vmem:[%s1392 + $0xc8] sm:$0xff]
  %v1419 = vld [vmem:[%s1392 + $0xd0] sm:$0xff]
  %v1420 = vld [vmem:[%s1392 + $0xd8] sm:$0xff]
  %v1421 = vld [vmem:[%s1392 + $0xe0] sm:$0xff]
  %v1422 = vld [vmem:[%s1392 + $0xe8] sm:$0xff]
  %v1423 = vld [vmem:[%s1392 + $0xf0] sm:$0xff]
  %v1424 = vld [vmem:[%s1392 + $0xf8] sm:$0xff]
  %v1425 = vld [vmem:[%s1392 + $0x100] sm:$0xff]
  %v1426 = vld [vmem:[%s1392 + $0x108] sm:$0xff]
  %v1427 = vld [vmem:[%s1392 + $0x110] sm:$0xff]
  %v1428 = vld [vmem:[%s1392 + $0x118] sm:$0xff]
  %v1429 = vld [vmem:[%s1392 + $0x120] sm:$0xff]
  %v1430 = vld [vmem:[%s1392 + $0x128] sm:$0xff]
  %v1431 = vld [vmem:[%s1392 + $0x130] sm:$0xff]
  %v1432 = vld [vmem:[%s1392 + $0x138] sm:$0xff]
  %v1433 = vld [vmem:[%s1392 + $0x140] sm:$0xff]
  %v1434 = vld [vmem:[%s1392 + $0x148] sm:$0xff]
  %v1435 = vld [vmem:[%s1392 + $0x150] sm:$0xff]
  %v1436 = vld [vmem:[%s1392 + $0x158] sm:$0xff]
  %v1437 = vld [vmem:[%s1392 + $0x160] sm:$0xff]
  %v1438 = vld [vmem:[%s1392 + $0x168] sm:$0xff]
  %v1439 = vld [vmem:[%s1392 + $0x170] sm:$0xff]
  %v1440 = vld [vmem:[%s1392 + $0x178] sm:$0xff]
  %v1441 = vld [vmem:[%s1392 + $0x180] sm:$0xff]
  %v1442 = vld [vmem:[%s1392 + $0x188] sm:$0xff]
  %v1443 = vld [vmem:[%s1392 + $0x190] sm:$0xff]
  %v1444 = vld [vmem:[%s1392 + $0x198] sm:$0xff]
  %v1445 = vld [vmem:[%s1392 + $0x1a0] sm:$0xff]
  %v1446 = vld [vmem:[%s1392 + $0x1a8] sm:$0xff]
  %1447 = vmatprep.subr.mxu0 0.0
  %1448 = vmatpush1.msra.mxu0 %v1393
  %1449 = vmatprep.subr.mxu0 0.0
  %1450 = vmatpush1.msra.mxu0 %v1394
  %1451 = vmatprep.subr.mxu0 0.0
  %1452 = vmatpush1.msra.mxu0 %v1395
  %1453 = vmatprep.subr.mxu0 0.0
  %1454 = vmatpush1.msra.mxu0 %v1396
  %1455 = vmatprep.subr.mxu0 0.0
  %1456 = vmatpush1.msra.mxu0 %v1397
  %1457 = vmatprep.subr.mxu0 0.0
  %1458 = vmatpush1.msra.mxu0 %v1398
  %1459 = vmatprep.subr.mxu0 0.0
  %1460 = vmatpush1.msra.mxu0 %v1399
  %1461 = vmatprep.subr.mxu0 0.0
  %1462 = vmatpush1.msra.mxu0 %v1400
  %1463 = vmatprep.subr.mxu0 0.0
  %1464 = vmatpush1.msra.mxu0 %v1401
  %1465 = vmatprep.subr.mxu0 0.0
  %1466 = vmatpush1.msra.mxu0 %v1402
  %1467 = vmatprep.subr.mxu0 0.0
  %1468 = vmatpush1.msra.mxu0 %v1403
  %1469 = vmatprep.subr.mxu0 0.0
  %1470 = vmatpush1.msra.mxu0 %v1404
  %1471 = vmatprep.subr.mxu0 0.0
  %1472 = vmatpush1.msra.mxu0 %v1405
  %1473 = vmatprep.subr.mxu0 0.0
  %1474 = vmatpush1.msra.mxu0 %v1406
  %1475 = vmatprep.subr.mxu0 0.0
  %1476 = vmatpush1.msra.mxu0 %v1407
  %1477 = vmatprep.subr.mxu0 0.0
  %1478 = vmatpush1.msra.mxu0 %v1408
  %1479 = vmatprep.subr.mxu0 0.0
  %1480 = vmatpush1.msra.mxu0 %v1409
  %1481 = vmatprep.subr.mxu0 0.0
  %1482 = vmatpush1.msra.mxu0 %v1410
  %1483 = vmatprep.subr.mxu0 0.0
  %1484 = vmatpush1.msra.mxu0 %v1411
  %1485 = vmatprep.subr.mxu0 0.0
  %1486 = vmatpush1.msra.mxu0 %v1412
  %1487 = vmatprep.subr.mxu0 0.0
  %1488 = vmatpush1.msra.mxu0 %v1413
  %1489 = vmatprep.subr.mxu0 0.0
  %1490 = vmatpush1.msra.mxu0 %v1414
  %1491 = vmatprep.subr.mxu0 0.0
  %1492 = vmatpush1.msra.mxu0 %v1415
  %1493 = vmatprep.subr.mxu0 0.0
  %1494 = vmatpush1.msra.mxu0 %v1416
  %1495 = vmatprep.subr.mxu0 0.0
  %1496 = vmatpush1.msra.mxu0 %v1417
  %1497 = vmatprep.subr.mxu0 0.0
  %1498 = vmatpush1.msra.mxu0 %v1418
  %1499 = vmatprep.subr.mxu0 0.0
  %1500 = vmatpush1.msra.mxu0 %v1419
  %1501 = vmatprep.subr.mxu0 0.0
  %1502 = vmatpush1.msra.mxu0 %v1420
  %1503 = vmatprep.subr.mxu0 0.0
  %1504 = vmatpush1.msra.mxu0 %v1421
  %1505 = vmatprep.subr.mxu0 0.0
  %1506 = vmatpush1.msra.mxu0 %v1422
  %1507 = vmatprep.subr.mxu0 0.0
  %1508 = vmatpush1.msra.mxu0 %v1423
  %1509 = vmatprep.subr.mxu0 0.0
  %1510 = vmatpush1.msra.mxu0 %v1424
  %1511 = vmatprep.mubr.f32.mxu0 %v15
  %1512 = vmatmul.mubr.f32.gmra.mrb[0].mxu0 %v14
  %v1513 = vpop.f32.mrb[0].mxu0
  %v1514 = vadd.f32 0.0, %v1513
  %v1515 = vpop.f32.mrb[0].mxu0
  %1516 = vdwg.mxu0
  %1517 = vmatprep.subr.mxu0 0.0
  %1518 = vmatpush1.msra.mxu0 %v1425
  %1519 = vmatprep.subr.mxu0 0.0
  %1520 = vmatpush1.msra.mxu0 %v1426
  %1521 = vmatprep.subr.mxu0 0.0
  %1522 = vmatpush1.msra.mxu0 %v1427
  %1523 = vmatprep.subr.mxu0 0.0
  %1524 = vmatpush1.msra.mxu0 %v1428
  %1525 = vmatprep.subr.mxu0 0.0
  %1526 = vmatpush1.msra.mxu0 %v1429
  %1527 = vmatprep.subr.mxu0 0.0
  %1528 = vmatpush1.msra.mxu0 %v1430
  %1529 = vmatprep.subr.mxu0 0.0
  %1530 = vmatpush1.msra.mxu0 %v1431
  %1531 = vmatprep.subr.mxu0 0.0
  %1532 = vmatpush1.msra.mxu0 %v1432
  %1533 = vmatprep.subr.mxu0 0.0
  %1534 = vmatpush1.msra.mxu0 %v1433
  %1535 = vmatprep.subr.mxu0 0.0
  %1536 = vmatpush1.msra.mxu0 %v1434
  %1537 = vmatprep.subr.mxu0 0.0
  %1538 = vmatpush1.msra.mxu0 %v1435
  %1539 = vmatprep.subr.mxu0 0.0
  %1540 = vmatpush1.msra.mxu0 %v1436
  %1541 = vmatprep.subr.mxu0 0.0
  %1542 = vmatpush1.msra.mxu0 %v1437
  %1543 = vmatprep.subr.mxu0 0.0
  %1544 = vmatpush1.msra.mxu0 %v1438
  %1545 = vmatprep.subr.mxu0 0.0
  %1546 = vmatpush1.msra.mxu0 %v1439
  %1547 = vmatprep.subr.mxu0 0.0
  %1548 = vmatpush1.msra.mxu0 %v1440
  %1549 = vmatprep.subr.mxu0 0.0
  %1550 = vmatpush1.msra.mxu0 %v1441
  %1551 = vmatprep.subr.mxu0 0.0
  %1552 = vmatpush1.msra.mxu0 %v1442
  %1553 = vmatprep.subr.mxu0 0.0
  %1554 = vmatpush1.msra.mxu0 %v1443
  %1555 = vmatprep.subr.mxu0 0.0
  %1556 = vmatpush1.msra.mxu0 %v1444
  %1557 = vmatprep.subr.mxu0 0.0
  %1558 = vmatpush1.msra.mxu0 %v1445
  %1559 = vmatprep.subr.mxu0 0.0
  %1560 = vmatpush1.msra.mxu0 %v1446
  %1561 = vmatprep.subr.mxu0 0.0
  %1562 = vmatpush1.msra.mxu0 0.0
  %1563 = vmatprep.subr.mxu0 0.0
  %1564 = vmatpush1.msra.mxu0 0.0
  %1565 = vmatprep.subr.mxu0 0.0
  %1566 = vmatpush1.msra.mxu0 0.0
  %1567 = vmatprep.subr.mxu0 0.0
  %1568 = vmatpush1.msra.mxu0 0.0
  %1569 = vmatprep.subr.mxu0 0.0
  %1570 = vmatpush1.msra.mxu0 0.0
  %1571 = vmatprep.subr.mxu0 0.0
  %1572 = vmatpush1.msra.mxu0 0.0
  %1573 = vmatprep.subr.mxu0 0.0
  %1574 = vmatpush1.msra.mxu0 0.0
  %1575 = vmatprep.subr.mxu0 0.0
  %1576 = vmatpush1.msra.mxu0 0.0
  %1577 = vmatprep.subr.mxu0 0.0
  %1578 = vmatpush1.msra.mxu0 0.0
  %1579 = vmatprep.subr.mxu0 0.0
  %1580 = vmatpush1.msra.mxu0 0.0
  %1581 = vmatprep.mubr.f32.mxu0 %v74
  %1582 = vmatmul.mubr.f32.gmra.mrb[0].mxu0 %v16
  %v1583 = vpop.f32.mrb[0].mxu0
  %v1584 = vadd.f32 %v1514, %v1583
  %v1585 = vpop.f32.mrb[0].mxu0
  %1586 = vdwg.mxu0
  %v1587 = vmax.f32 %v1391, %v1584
  %s1588 = scalar_lea.vmem %s0, 3456
  %v1589 = vld [vmem:[%s1588] sm:$0xff]
  %v1590 = vld [vmem:[%s1588 + $0x8] sm:$0xff]
  %v1591 = vld [vmem:[%s1588 + $0x10] sm:$0xff]
  %v1592 = vld [vmem:[%s1588 + $0x18] sm:$0xff]
  %v1593 = vld [vmem:[%s1588 + $0x20] sm:$0xff]
  %v1594 = vld [vmem:[%s1588 + $0x28] sm:$0xff]
  %v1595 = vld [vmem:[%s1588 + $0x30] sm:$0xff]
  %v1596 = vld [vmem:[%s1588 + $0x38] sm:$0xff]
  %v1597 = vld [vmem:[%s1588 + $0x40] sm:$0xff]
  %v1598 = vld [vmem:[%s1588 + $0x48] sm:$0xff]
  %v1599 = vld [vmem:[%s1588 + $0x50] sm:$0xff]
  %v1600 = vld [vmem:[%s1588 + $0x58] sm:$0xff]
  %v1601 = vld [vmem:[%s1588 + $0x60] sm:$0xff]
  %v1602 = vld [vmem:[%s1588 + $0x68] sm:$0xff]
  %v1603 = vld [vmem:[%s1588 + $0x70] sm:$0xff]
  %v1604 = vld [vmem:[%s1588 + $0x78] sm:$0xff]
  %v1605 = vld [vmem:[%s1588 + $0x80] sm:$0xff]
  %v1606 = vld [vmem:[%s1588 + $0x88] sm:$0xff]
  %v1607 = vld [vmem:[%s1588 + $0x90] sm:$0xff]
  %v1608 = vld [vmem:[%s1588 + $0x98] sm:$0xff]
  %v1609 = vld [vmem:[%s1588 + $0xa0] sm:$0xff]
  %v1610 = vld [vmem:[%s1588 + $0xa8] sm:$0xff]
  %v1611 = vld [vmem:[%s1588 + $0xb0] sm:$0xff]
  %v1612 = vld [vmem:[%s1588 + $0xb8] sm:$0xff]
  %v1613 = vld [vmem:[%s1588 + $0xc0] sm:$0xff]
  %v1614 = vld [vmem:[%s1588 + $0xc8] sm:$0xff]
  %v1615 = vld [vmem:[%s1588 + $0xd0] sm:$0xff]
  %v1616 = vld [vmem:[%s1588 + $0xd8] sm:$0xff]
  %v1617 = vld [vmem:[%s1588 + $0xe0] sm:$0xff]
  %v1618 = vld [vmem:[%s1588 + $0xe8] sm:$0xff]
  %v1619 = vld [vmem:[%s1588 + $0xf0] sm:$0xff]
  %v1620 = vld [vmem:[%s1588 + $0xf8] sm:$0xff]
  %v1621 = vld [vmem:[%s1588 + $0x100] sm:$0xff]
  %v1622 = vld [vmem:[%s1588 + $0x108] sm:$0xff]
  %v1623 = vld [vmem:[%s1588 + $0x110] sm:$0xff]
  %v1624 = vld [vmem:[%s1588 + $0x118] sm:$0xff]
  %v1625 = vld [vmem:[%s1588 + $0x120] sm:$0xff]
  %v1626 = vld [vmem:[%s1588 + $0x128] sm:$0xff]
  %v1627 = vld [vmem:[%s1588 + $0x130] sm:$0xff]
  %v1628 = vld [vmem:[%s1588 + $0x138] sm:$0xff]
  %v1629 = vld [vmem:[%s1588 + $0x140] sm:$0xff]
  %v1630 = vld [vmem:[%s1588 + $0x148] sm:$0xff]
  %v1631 = vld [vmem:[%s1588 + $0x150] sm:$0xff]
  %v1632 = vld [vmem:[%s1588 + $0x158] sm:$0xff]
  %v1633 = vld [vmem:[%s1588 + $0x160] sm:$0xff]
  %v1634 = vld [vmem:[%s1588 + $0x168] sm:$0xff]
  %v1635 = vld [vmem:[%s1588 + $0x170] sm:$0xff]
  %v1636 = vld [vmem:[%s1588 + $0x178] sm:$0xff]
  %v1637 = vld [vmem:[%s1588 + $0x180] sm:$0xff]
  %v1638 = vld [vmem:[%s1588 + $0x188] sm:$0xff]
  %v1639 = vld [vmem:[%s1588 + $0x190] sm:$0xff]
  %v1640 = vld [vmem:[%s1588 + $0x198] sm:$0xff]
  %v1641 = vld [vmem:[%s1588 + $0x1a0] sm:$0xff]
  %v1642 = vld [vmem:[%s1588 + $0x1a8] sm:$0xff]
  %1643 = vmatprep.subr.mxu0 0.0
  %1644 = vmatpush1.msra.mxu0 %v1589
  %1645 = vmatprep.subr.mxu0 0.0
  %1646 = vmatpush1.msra.mxu0 %v1590
  %1647 = vmatprep.subr.mxu0 0.0
  %1648 = vmatpush1.msra.mxu0 %v1591
  %1649 = vmatprep.subr.mxu0 0.0
  %1650 = vmatpush1.msra.mxu0 %v1592
  %1651 = vmatprep.subr.mxu0 0.0
  %1652 = vmatpush1.msra.mxu0 %v1593
  %1653 = vmatprep.subr.mxu0 0.0
  %1654 = vmatpush1.msra.mxu0 %v1594
  %1655 = vmatprep.subr.mxu0 0.0
  %1656 = vmatpush1.msra.mxu0 %v1595
  %1657 = vmatprep.subr.mxu0 0.0
  %1658 = vmatpush1.msra.mxu0 %v1596
  %1659 = vmatprep.subr.mxu0 0.0
  %1660 = vmatpush1.msra.mxu0 %v1597
  %1661 = vmatprep.subr.mxu0 0.0
  %1662 = vmatpush1.msra.mxu0 %v1598
  %1663 = vmatprep.subr.mxu0 0.0
  %1664 = vmatpush1.msra.mxu0 %v1599
  %1665 = vmatprep.subr.mxu0 0.0
  %1666 = vmatpush1.msra.mxu0 %v1600
  %1667 = vmatprep.subr.mxu0 0.0
  %1668 = vmatpush1.msra.mxu0 %v1601
  %1669 = vmatprep.subr.mxu0 0.0
  %1670 = vmatpush1.msra.mxu0 %v1602
  %1671 = vmatprep.subr.mxu0 0.0
  %1672 = vmatpush1.msra.mxu0 %v1603
  %1673 = vmatprep.subr.mxu0 0.0
  %1674 = vmatpush1.msra.mxu0 %v1604
  %1675 = vmatprep.subr.mxu0 0.0
  %1676 = vmatpush1.msra.mxu0 %v1605
  %1677 = vmatprep.subr.mxu0 0.0
  %1678 = vmatpush1.msra.mxu0 %v1606
  %1679 = vmatprep.subr.mxu0 0.0
  %1680 = vmatpush1.msra.mxu0 %v1607
  %1681 = vmatprep.subr.mxu0 0.0
  %1682 = vmatpush1.msra.mxu0 %v1608
  %1683 = vmatprep.subr.mxu0 0.0
  %1684 = vmatpush1.msra.mxu0 %v1609
  %1685 = vmatprep.subr.mxu0 0.0
  %1686 = vmatpush1.msra.mxu0 %v1610
  %1687 = vmatprep.subr.mxu0 0.0
  %1688 = vmatpush1.msra.mxu0 %v1611
  %1689 = vmatprep.subr.mxu0 0.0
  %1690 = vmatpush1.msra.mxu0 %v1612
  %1691 = vmatprep.subr.mxu0 0.0
  %1692 = vmatpush1.msra.mxu0 %v1613
  %1693 = vmatprep.subr.mxu0 0.0
  %1694 = vmatpush1.msra.mxu0 %v1614
  %1695 = vmatprep.subr.mxu0 0.0
  %1696 = vmatpush1.msra.mxu0 %v1615
  %1697 = vmatprep.subr.mxu0 0.0
  %1698 = vmatpush1.msra.mxu0 %v1616
  %1699 = vmatprep.subr.mxu0 0.0
  %1700 = vmatpush1.msra.mxu0 %v1617
  %1701 = vmatprep.subr.mxu0 0.0
  %1702 = vmatpush1.msra.mxu0 %v1618
  %1703 = vmatprep.subr.mxu0 0.0
  %1704 = vmatpush1.msra.mxu0 %v1619
  %1705 = vmatprep.subr.mxu0 0.0
  %1706 = vmatpush1.msra.mxu0 %v1620
  %1707 = vmatprep.mubr.f32.mxu0 %v15
  %1708 = vmatmul.mubr.f32.gmra.mrb[0].mxu0 %v14
  %v1709 = vpop.f32.mrb[0].mxu0
  %v1710 = vadd.f32 0.0, %v1709
  %v1711 = vpop.f32.mrb[0].mxu0
  %1712 = vdwg.mxu0
  %1713 = vmatprep.subr.mxu0 0.0
  %1714 = vmatpush1.msra.mxu0 %v1621
  %1715 = vmatprep.subr.mxu0 0.0
  %1716 = vmatpush1.msra.mxu0 %v1622
  %1717 = vmatprep.subr.mxu0 0.0
  %1718 = vmatpush1.msra.mxu0 %v1623
  %1719 = vmatprep.subr.mxu0 0.0
  %1720 = vmatpush1.msra.mxu0 %v1624
  %1721 = vmatprep.subr.mxu0 0.0
  %1722 = vmatpush1.msra.mxu0 %v1625
  %1723 = vmatprep.subr.mxu0 0.0
  %1724 = vmatpush1.msra.mxu0 %v1626
  %1725 = vmatprep.subr.mxu0 0.0
  %1726 = vmatpush1.msra.mxu0 %v1627
  %1727 = vmatprep.subr.mxu0 0.0
  %1728 = vmatpush1.msra.mxu0 %v1628
  %1729 = vmatprep.subr.mxu0 0.0
  %1730 = vmatpush1.msra.mxu0 %v1629
  %1731 = vmatprep.subr.mxu0 0.0
  %1732 = vmatpush1.msra.mxu0 %v1630
  %1733 = vmatprep.subr.mxu0 0.0
  %1734 = vmatpush1.msra.mxu0 %v1631
  %1735 = vmatprep.subr.mxu0 0.0
  %1736 = vmatpush1.msra.mxu0 %v1632
  %1737 = vmatprep.subr.mxu0 0.0
  %1738 = vmatpush1.msra.mxu0 %v1633
  %1739 = vmatprep.subr.mxu0 0.0
  %1740 = vmatpush1.msra.mxu0 %v1634
  %1741 = vmatprep.subr.mxu0 0.0
  %1742 = vmatpush1.msra.mxu0 %v1635
  %1743 = vmatprep.subr.mxu0 0.0
  %1744 = vmatpush1.msra.mxu0 %v1636
  %1745 = vmatprep.subr.mxu0 0.0
  %1746 = vmatpush1.msra.mxu0 %v1637
  %1747 = vmatprep.subr.mxu0 0.0
  %1748 = vmatpush1.msra.mxu0 %v1638
  %1749 = vmatprep.subr.mxu0 0.0
  %1750 = vmatpush1.msra.mxu0 %v1639
  %1751 = vmatprep.subr.mxu0 0.0
  %1752 = vmatpush1.msra.mxu0 %v1640
  %1753 = vmatprep.subr.mxu0 0.0
  %1754 = vmatpush1.msra.mxu0 %v1641
  %1755 = vmatprep.subr.mxu0 0.0
  %1756 = vmatpush1.msra.mxu0 %v1642
  %1757 = vmatprep.subr.mxu0 0.0
  %1758 = vmatpush1.msra.mxu0 0.0
  %1759 = vmatprep.subr.mxu0 0.0
  %1760 = vmatpush1.msra.mxu0 0.0
  %1761 = vmatprep.subr.mxu0 0.0
  %1762 = vmatpush1.msra.mxu0 0.0
  %1763 = vmatprep.subr.mxu0 0.0
  %1764 = vmatpush1.msra.mxu0 0.0
  %1765 = vmatprep.subr.mxu0 0.0
  %1766 = vmatpush1.msra.mxu0 0.0
  %1767 = vmatprep.subr.mxu0 0.0
  %1768 = vmatpush1.msra.mxu0 0.0
  %1769 = vmatprep.subr.mxu0 0.0
  %1770 = vmatpush1.msra.mxu0 0.0
  %1771 = vmatprep.subr.mxu0 0.0
  %1772 = vmatpush1.msra.mxu0 0.0
  %1773 = vmatprep.subr.mxu0 0.0
  %1774 = vmatpush1.msra.mxu0 0.0
  %1775 = vmatprep.subr.mxu0 0.0
  %1776 = vmatpush1.msra.mxu0 0.0
  %1777 = vmatprep.mubr.f32.mxu0 %v74
  %1778 = vmatmul.mubr.f32.gmra.mrb[0].mxu0 %v16
  %v1779 = vpop.f32.mrb[0].mxu0
  %v1780 = vadd.f32 %v1710, %v1779
  %v1781 = vpop.f32.mrb[0].mxu0
  %1782 = vdwg.mxu0
  %v1783 = vmax.f32 %v1587, %v1780
  %v1784 = vld [vmem:[%s2] sm:$0xff]
  %1786 = vset.pattern.permute.xlu0 0
  %1787 = vperm.xlu0 %1786, %v1784
  %v1788 = vpop.permute.xlu0 %1787
  %v1790 = vadd.f32 %v1783, %v1788
  %v1791 = vmax.f32 %v1790, 0.0
  %vm1792 = vcmask 31744
  %1793 = vst.msk [vmem:[%s3] sm:$0xff] %vm1792, %v1791
  // Predicated region
  $region14: #{_lambda_.5} parent=0 // pred_check
    _
  $region15: #{_lambda_.5} parent=0 // pred_check_branch
    %1795 = sbr.rel (0) target = $region17
  $region16: #{_lambda_.5} parent=0 // pred_region
    _
  $region17: #{_lambda_.5} parent=0 // pred_fallthru
    _
  // Predicated region
  $region18: #{_lambda_.5} parent=0 // pred_check
    _
  $region19: #{_lambda_.5} parent=0 // pred_check_branch
    %1797 = sbr.rel (0) target = $region21
  $region20: #{_lambda_.5} parent=0 // pred_region
    _
  $region21: #{_lambda_.5} parent=0 // pred_fallthru
    _

</llo_original>
